<compile_context>
chip_gen: v5e
topology: v5e:2x2
jax: 0.10.0
libtpu: 0.0.40
codegen_flags: <defaults>
</compile_context>

<pallas_src>
import functools
import math

import jax
import jax.numpy as jnp
from jax.experimental import pallas as pl
from jax.experimental.pallas import tpu as pltpu


def _rewrite_attn_kernel(q_ref, kv_ref, wq_ref, bq_ref, wkv_ref, wo_ref,
                         bo_ref, out_ref, *, n_heads: int):
    """One block of Bt (padded) batch elements per grid step.

    q_ref  : (Bt, Lq, D)               kv_ref : (Bt, Lk, D)
    wq_ref : (D, D)   [1/sqrt(dk) pre-folded]    bq_ref : (1, D) f32 [scaled]
    wkv_ref: (D, 2D)  [Wk | Wv]                  wo_ref : (D, D)
    bo_ref : (1, D) f32  [= bo + bv @ wo : exact V-bias fold]
    out_ref: (Bt, D)  -- attention output already averaged over Lq.
    """
    Bt, Lq, D = q_ref.shape
    _, Lk, _ = kv_ref.shape
    H = n_heads
    dk = D // H
    cdt = wq_ref.dtype                       # matmul operand dtype (bf16 or f32)

    q2 = q_ref[...].reshape(Bt * Lq, D).astype(cdt)
    kv2 = kv_ref[...].reshape(Bt * Lk, D).astype(cdt)

    # Wide fused projections: two full-width matmuls feed the whole head loop.
    qp = jnp.dot(q2, wq_ref[...], preferred_element_type=jnp.float32) + bq_ref[...]
    kvp = jnp.dot(kv2, wkv_ref[...], preferred_element_type=jnp.float32)

    qp = qp.reshape(Bt, Lq, D).astype(cdt)
    kp = kvp[:, :D].reshape(Bt, Lk, D).astype(cdt)
    vp = kvp[:, D:].reshape(Bt, Lk, D).astype(cdt)

    # Per-head attention; heads are contiguous lane slices of the projections.
    # TODO(synk): switch the static unroll to lax.fori_loop (dynamic lane
    # offsets) if large Bt*Lk blocks start spilling vregs.
    head_sums = []
    for h in range(H):
        lo = h * dk
        qh = qp[:, :, lo:lo + dk]                     # (Bt, Lq, dk)
        kh = kp[:, :, lo:lo + dk]                     # (Bt, Lk, dk)
        vh = vp[:, :, lo:lo + dk]                     # (Bt, Lk, dk)
        # Key bias dropped and 1/sqrt(dk) pre-folded into Wq/bq (both exact).
        s = jnp.einsum("bqe,bke->bqk", qh, kh,
                       preferred_element_type=jnp.float32)
        m = jnp.max(s, axis=-1, keepdims=True)
        p = jnp.exp(s - m)
        denom = jnp.sum(p, axis=-1, keepdims=True)
        ctx = jnp.einsum("bqk,bke->bqe", p.astype(cdt), vh,
                         preferred_element_type=jnp.float32)
        ctx = ctx * pl.reciprocal(denom)              # exact; denom is (Bt,Lq,1)
        # Mean over Lq commutes with Wo: cheap sum here, 1/Lq folded at the end.
        head_sums.append(jnp.sum(ctx, axis=1))        # (Bt, dk)

    # concat(heads) @ Wo as one full-width matmul (concat on tiny post-mean data).
    ctx_sum = jnp.concatenate(head_sums, axis=-1)     # (Bt, D)
    out = jnp.dot(ctx_sum.astype(cdt), wo_ref[...],
                  preferred_element_type=jnp.float32)
    out_ref[...] = (out * (1.0 / Lq) + bo_ref[...]).astype(out_ref.dtype)


def _round_up(x, m):
    return ((x + m - 1) // m) * m


def _choose_block_batch(B, Lq):
    """~512 projection rows per grid step, sublane-aligned (multiple of 8)."""
    bt = max(1, 512 // max(Lq, 1))
    bt = max(8, (bt // 8) * 8)
    b_pad8 = _round_up(B, 8)
    bt = min(bt, b_pad8)
    # Keep >= 2 grid steps when the padded batch can be split: the single
    # 'parallel' axis is what shards work across v7x's two TensorCores.
    if bt >= b_pad8 and b_pad8 >= 16:
        bt = max(8, ((b_pad8 // 2) // 8) * 8)
    return bt


def rewrite_sequence_generator(query, proof_state, available_terms=None, *,
                               params, n_heads: int = 8,
                               compute_dtype=jnp.bfloat16):
    """Mirrors RewriteSequenceGenerator.forward (available_terms is unused there)."""
    del available_terms                      # accepted but ignored by forward()
    B, Lq, D = query.shape
    _, Lk, _ = proof_state.shape
    assert D % n_heads == 0, "d_model must be divisible by n_heads"
    dk = D // n_heads
    wq, bq, wk, bk, wv, bv, wo, bo = params
    del bk                                   # softmax-invariant, dropped exactly

    # ---- one-time weight packing (outside the kernel) -----------------------
    scale = 1.0 / math.sqrt(dk)
    wq_c = (wq * scale).astype(compute_dtype)                 # fold 1/sqrt(dk)
    bq_f = (bq * scale).astype(jnp.float32)
    wkv_c = jnp.concatenate([wk, wv], axis=1).astype(compute_dtype)   # (D, 2D)
    wo_c = wo.astype(compute_dtype)
    # V bias folded through attention (softmax rows sum to 1) and the Lq-mean:
    bo_f = (bo + bv @ wo).astype(jnp.float32)                 # (1, D), exact

    # ---- batch blocking & padding -------------------------------------------
    bt = _choose_block_batch(B, Lq)
    b_pad = _round_up(B, bt)
    if b_pad != B:
        pad = ((0, b_pad - B), (0, 0), (0, 0))
        query_p = jnp.pad(query, pad)
        state_p = jnp.pad(proof_state, pad)
    else:
        query_p, state_p = query, proof_state
    num_blocks = b_pad // bt

    # ---- explicit VMEM budget ------------------------------------------------
    w_itm = jnp.dtype(compute_dtype).itemsize
    in_itm = jnp.dtype(query.dtype).itemsize
    w_bytes = (wq_c.size + wkv_c.size + wo_c.size) * w_itm \
        + (bq_f.size + bo_f.size) * 4                         # single-buffered
    blk_bytes = 2 * bt * (Lq + Lk) * D * in_itm * 2           # double-buffered in
    out_bytes = 2 * bt * D * in_itm
    interm_bytes = 4 * bt * (Lq + 2 * Lk) * D * 4 + n_heads * bt * Lq * Lk * 4
    vmem_limit = int(min(max(w_bytes + blk_bytes + out_bytes + interm_bytes
                             + (4 << 20), 16 << 20), 64 << 20))

    kernel = functools.partial(_rewrite_attn_kernel, n_heads=n_heads)

    def _run(weight_mode):
        def wspec(shape):
            n = len(shape)
            return pl.BlockSpec(shape, lambda i, _n=n: (0,) * _n,
                                pipeline_mode=weight_mode)

        # TODO(synk): for very long proof states tile Lk with an online-softmax
        # (flash) loop and budget bt*Lk*D against v7x's 64 MiB VMEM.
        return pl.pallas_call(
            kernel,
            out_shape=jax.ShapeDtypeStruct((b_pad, D), query.dtype),
            grid_spec=pltpu.PrefetchScalarGridSpec(
                num_scalar_prefetch=0,
                grid=(num_blocks,),
                in_specs=[
                    pl.BlockSpec((bt, Lq, D), lambda i: (i, 0, 0)),   # query
                    pl.BlockSpec((bt, Lk, D), lambda i: (i, 0, 0)),   # proof_state
                    wspec((D, D)),                                    # Wq (scaled)
                    wspec((1, D)),                                    # bq (scaled)
                    wspec((D, 2 * D)),                                # [Wk|Wv]
                    wspec((D, D)),                                    # Wo
                    wspec((1, D)),                                    # bo_eff
                ],
                # 2-D sublane/lane-dense output block -> unmasked full-width stores.
                out_specs=pl.BlockSpec((bt, D), lambda i: (i, 0)),
            ),
            compiler_params=pltpu.CompilerParams(
                dimension_semantics=("parallel",),
                vmem_limit_bytes=vmem_limit),
        )(query_p, state_p, wq_c, bq_f, wkv_c, wo_c, bo_f)

    try:
        # Grid-invariant weights single-buffered: halves their VMEM footprint.
        out2d = _run(pl.Buffered(buffer_count=1))
    except Exception:
        # Fallback for runtimes that reject single-buffered pipeline_mode.
        out2d = _run(None)

    out = out2d[:B, None, :]                 # (B, 1, D); padded rows discarded
    return {"rewrite_representation": out,
            "sequence_length": jnp.array([3], dtype=jnp.int32)}


def init_params(key, d_model):
    """Deterministic parameter init (weights stored as (in, out), bias (1, out))."""
    keys = jax.random.split(key, 8)

    def lin(kw, kb):
        bound = 1.0 / math.sqrt(d_model)
        w = jax.random.uniform(kw, (d_model, d_model), jnp.float32, -bound, bound)
        b = jax.random.uniform(kb, (1, d_model), jnp.float32, -bound, bound)
        return w, b

    wq, bq = lin(keys[0], keys[1])
    wk, bk = lin(keys[2], keys[3])
    wv, bv = lin(keys[4], keys[5])
    wo, bo = lin(keys[6], keys[7])
    return (wq, bq, wk, bk, wv, bv, wo, bo)


def _reference(query, state, params, n_heads):
    """Pure-JAX reference: full MHA (with all biases) + mean over the query axis."""
    wq, bq, wk, bk, wv, bv, wo, bo = params
    B, Lq, D = query.shape
    dk = D // n_heads
    Q = query @ wq + bq
    K = state @ wk + bk
    V = state @ wv + bv
    Qh = Q.reshape(B, Lq, n_heads, dk).transpose(0, 2, 1, 3)
    Kh = K.reshape(B, -1, n_heads, dk).transpose(0, 2, 1, 3)
    Vh = V.reshape(B, -1, n_heads, dk).transpose(0, 2, 1, 3)
    scores = jnp.einsum("bhqd,bhkd->bhqk", Qh, Kh) / math.sqrt(dk)
    attn = jax.nn.softmax(scores, axis=-1)
    out = jnp.einsum("bhqk,bhkd->bhqd", attn, Vh)
    out = out.transpose(0, 2, 1, 3).reshape(B, Lq, D)
    focused = out @ wo + bo
    return jnp.mean(focused, axis=1, keepdims=True)


if __name__ == "__main__":
    B, Lq, Lk, D, H = 2, 8, 8, 32, 8

    key = jax.random.PRNGKey(0)
    k_q, k_s, k_p = jax.random.split(key, 3)

    query = jax.random.normal(k_q, (B, Lq, D), jnp.float32)
    proof_state = jax.random.normal(k_s, (B, Lk, D), jnp.float32)
    params = init_params(k_p, D)

    ref = _reference(query, proof_state, params, H)

    # f32-operand path: algebraic folds are exact, so this must match tightly.
    out32 = rewrite_sequence_generator(query, proof_state, params=params,
                                       n_heads=H, compute_dtype=jnp.float32)
    r32 = jax.block_until_ready(out32["rewrite_representation"])
    assert r32.shape == (B, 1, D)
    err32 = float(jnp.max(jnp.abs(r32 - ref)))
    assert err32 < 1e-4, f"f32 kernel mismatch vs reference: {err32}"

    # Default bf16-operand path (MXU-rate / VMEM-footprint optimized).
    out16 = rewrite_sequence_generator(query, proof_state, params=params,
                                       n_heads=H)
    r16 = jax.block_until_ready(out16["rewrite_representation"])
    assert r16.shape == (B, 1, D)
    err16 = float(jnp.max(jnp.abs(r16 - ref)))
    assert jnp.allclose(r16, ref, atol=5e-2, rtol=5e-2), \
        f"bf16 kernel mismatch vs reference: {err16}"

    assert out16["sequence_length"].shape == (1,)
    assert int(out16["sequence_length"][0]) == 3

    print("KERNEL_OK")
</pallas_src>

<mosaic_0001>
module attributes {stable_mosaic.version = 11 : i64} {
  func.func @_rewrite_attn_kernel(%arg0: i32, %arg1: memref<8x8x32xf32, #tpu.memory_space<vmem>>, %arg2: memref<8x8x32xf32, #tpu.memory_space<vmem>>, %arg3: memref<32x32xf32, #tpu.memory_space<vmem>>, %arg4: memref<1x32xf32, #tpu.memory_space<vmem>>, %arg5: memref<32x64xf32, #tpu.memory_space<vmem>>, %arg6: memref<32x32xf32, #tpu.memory_space<vmem>>, %arg7: memref<1x32xf32, #tpu.memory_space<vmem>>, %arg8: memref<8x32xf32, #tpu.memory_space<vmem>>) attributes {dimension_semantics = [#tpu.dimension_semantics<parallel>], iteration_bounds = array<i64: 1>, scalar_prefetch = 0 : i64, scratch_operands = 0 : i64, tpu.core_type = #tpu.core_type<tc>, window_params = [{transform_indices = @transform_0, window_bounds = array<i64: 8, 8, 32>}, {transform_indices = @transform_1, window_bounds = array<i64: 8, 8, 32>}, {pipeline_mode = #tpu.pipeline_mode<synchronous>, transform_indices = @transform_2, window_bounds = array<i64: 32, 32>}, {pipeline_mode = #tpu.pipeline_mode<synchronous>, transform_indices = @transform_3, window_bounds = array<i64: 1, 32>}, {pipeline_mode = #tpu.pipeline_mode<synchronous>, transform_indices = @transform_4, window_bounds = array<i64: 32, 64>}, {pipeline_mode = #tpu.pipeline_mode<synchronous>, transform_indices = @transform_5, window_bounds = array<i64: 32, 32>}, {pipeline_mode = #tpu.pipeline_mode<synchronous>, transform_indices = @transform_6, window_bounds = array<i64: 1, 32>}, {transform_indices = @transform_7, window_bounds = array<i64: 8, 32>}]} {
    %c0 = arith.constant 0 : index
    %c0_0 = arith.constant 0 : index
    %c0_1 = arith.constant 0 : index
    %0 = vector.load %arg1[%c0, %c0_0, %c0_1] : memref<8x8x32xf32, #tpu.memory_space<vmem>>, vector<8x8x32xf32>
    %1 = vector.shape_cast %0 : vector<8x8x32xf32> to vector<64x32xf32>
    %c0_2 = arith.constant 0 : index
    %c0_3 = arith.constant 0 : index
    %c0_4 = arith.constant 0 : index
    %2 = vector.load %arg2[%c0_2, %c0_3, %c0_4] : memref<8x8x32xf32, #tpu.memory_space<vmem>>, vector<8x8x32xf32>
    %3 = vector.shape_cast %2 : vector<8x8x32xf32> to vector<64x32xf32>
    %c0_5 = arith.constant 0 : index
    %c0_6 = arith.constant 0 : index
    %4 = vector.load %arg3[%c0_5, %c0_6] : memref<32x32xf32, #tpu.memory_space<vmem>>, vector<32x32xf32>
    %cst = arith.constant dense<0.000000e+00> : vector<64x32xf32>
    %5 = tpu.matmul %1, %4, %cst {dimension_numbers = #tpu.dot_dimension_numbers<[1], [0], [0], [1], [0, 0, 1, 1], [], []>} : vector<64x32xf32>, vector<32x32xf32>, vector<64x32xf32> -> vector<64x32xf32>
    %c0_7 = arith.constant 0 : index
    %c0_8 = arith.constant 0 : index
    %6 = vector.load %arg4[%c0_7, %c0_8] : memref<1x32xf32, #tpu.memory_space<vmem>>, vector<1x32xf32>
    %7 = vector.broadcast %6 : vector<1x32xf32> to vector<64x32xf32>
    %8 = arith.addf %5, %7 : vector<64x32xf32>
    %c0_9 = arith.constant 0 : index
    %c0_10 = arith.constant 0 : index
    %9 = vector.load %arg5[%c0_9, %c0_10] : memref<32x64xf32, #tpu.memory_space<vmem>>, vector<32x64xf32>
    %cst_11 = arith.constant dense<0.000000e+00> : vector<64x64xf32>
    %10 = tpu.matmul %3, %9, %cst_11 {dimension_numbers = #tpu.dot_dimension_numbers<[1], [0], [0], [1], [0, 0, 1, 1], [], []>} : vector<64x32xf32>, vector<32x64xf32>, vector<64x64xf32> -> vector<64x64xf32>
    %11 = vector.shape_cast %8 : vector<64x32xf32> to vector<8x8x32xf32>
    %12 = vector.extract_strided_slice %10 {offsets = [0, 0], sizes = [64, 32], strides = [1, 1]} : vector<64x64xf32> to vector<64x32xf32>
    %13 = vector.shape_cast %12 : vector<64x32xf32> to vector<8x8x32xf32>
    %14 = vector.extract_strided_slice %10 {offsets = [0, 32], sizes = [64, 32], strides = [1, 1]} : vector<64x64xf32> to vector<64x32xf32>
    %15 = vector.shape_cast %14 : vector<64x32xf32> to vector<8x8x32xf32>
    %16 = vector.extract_strided_slice %11 {offsets = [0, 0, 0], sizes = [8, 8, 4], strides = [1, 1, 1]} : vector<8x8x32xf32> to vector<8x8x4xf32>
    %17 = vector.extract_strided_slice %13 {offsets = [0, 0, 0], sizes = [8, 8, 4], strides = [1, 1, 1]} : vector<8x8x32xf32> to vector<8x8x4xf32>
    %18 = vector.extract_strided_slice %15 {offsets = [0, 0, 0], sizes = [8, 8, 4], strides = [1, 1, 1]} : vector<8x8x32xf32> to vector<8x8x4xf32>
    "tpu.trace_start"() <{level = 10 : i32, message = "bqe,bke->bqk"}> : () -> ()
    %cst_12 = arith.constant dense<0.000000e+00> : vector<8x8x8xf32>
    %19 = tpu.matmul %16, %17, %cst_12 {dimension_numbers = #tpu.dot_dimension_numbers<[2], [2], [1], [1], [0, 0, 0, 1, 1, 1], [0], [0]>} : vector<8x8x4xf32>, vector<8x8x4xf32>, vector<8x8x8xf32> -> vector<8x8x8xf32>
    "tpu.trace_stop"() : () -> ()
    %cst_13 = arith.constant dense<0xFF800000> : vector<8x8xf32>
    %20 = vector.multi_reduction <maximumf>, %19, %cst_13 [2] : vector<8x8x8xf32> to vector<8x8xf32>
    %21 = vector.shape_cast %20 : vector<8x8xf32> to vector<8x8x1xf32>
    %22 = vector.broadcast %21 : vector<8x8x1xf32> to vector<8x8x8xf32>
    %23 = arith.subf %19, %22 : vector<8x8x8xf32>
    %24 = math.exp %23 : vector<8x8x8xf32>
    %cst_14 = arith.constant dense<0.000000e+00> : vector<8x8xf32>
    %25 = vector.multi_reduction <add>, %24, %cst_14 [2] : vector<8x8x8xf32> to vector<8x8xf32>
    %26 = vector.shape_cast %25 : vector<8x8xf32> to vector<8x8x1xf32>
    "tpu.trace_start"() <{level = 10 : i32, message = "bqk,bke->bqe"}> : () -> ()
    %cst_15 = arith.constant dense<0.000000e+00> : vector<8x8x4xf32>
    %27 = tpu.matmul %24, %18, %cst_15 {dimension_numbers = #tpu.dot_dimension_numbers<[2], [1], [1], [2], [0, 0, 0, 1, 1, 2], [0], [0]>} : vector<8x8x8xf32>, vector<8x8x4xf32>, vector<8x8x4xf32> -> vector<8x8x4xf32>
    "tpu.trace_stop"() : () -> ()
    %28 = tpu.reciprocal %26 : vector<8x8x1xf32> -> vector<8x8x1xf32>
    %29 = vector.broadcast %28 : vector<8x8x1xf32> to vector<8x8x4xf32>
    %30 = arith.mulf %27, %29 : vector<8x8x4xf32>
    %cst_16 = arith.constant dense<0.000000e+00> : vector<8x4xf32>
    %31 = vector.multi_reduction <add>, %30, %cst_16 [1] : vector<8x8x4xf32> to vector<8x4xf32>
    %32 = vector.extract_strided_slice %11 {offsets = [0, 0, 4], sizes = [8, 8, 4], strides = [1, 1, 1]} : vector<8x8x32xf32> to vector<8x8x4xf32>
    %33 = vector.extract_strided_slice %13 {offsets = [0, 0, 4], sizes = [8, 8, 4], strides = [1, 1, 1]} : vector<8x8x32xf32> to vector<8x8x4xf32>
    %34 = vector.extract_strided_slice %15 {offsets = [0, 0, 4], sizes = [8, 8, 4], strides = [1, 1, 1]} : vector<8x8x32xf32> to vector<8x8x4xf32>
    "tpu.trace_start"() <{level = 10 : i32, message = "bqe,bke->bqk"}> : () -> ()
    %cst_17 = arith.constant dense<0.000000e+00> : vector<8x8x8xf32>
    %35 = tpu.matmul %32, %33, %cst_17 {dimension_numbers = #tpu.dot_dimension_numbers<[2], [2], [1], [1], [0, 0, 0, 1, 1, 1], [0], [0]>} : vector<8x8x4xf32>, vector<8x8x4xf32>, vector<8x8x8xf32> -> vector<8x8x8xf32>
    "tpu.trace_stop"() : () -> ()
    %cst_18 = arith.constant dense<0xFF800000> : vector<8x8xf32>
    %36 = vector.multi_reduction <maximumf>, %35, %cst_18 [2] : vector<8x8x8xf32> to vector<8x8xf32>
    %37 = vector.shape_cast %36 : vector<8x8xf32> to vector<8x8x1xf32>
    %38 = vector.broadcast %37 : vector<8x8x1xf32> to vector<8x8x8xf32>
    %39 = arith.subf %35, %38 : vector<8x8x8xf32>
    %40 = math.exp %39 : vector<8x8x8xf32>
    %cst_19 = arith.constant dense<0.000000e+00> : vector<8x8xf32>
    %41 = vector.multi_reduction <add>, %40, %cst_19 [2] : vector<8x8x8xf32> to vector<8x8xf32>
    %42 = vector.shape_cast %41 : vector<8x8xf32> to vector<8x8x1xf32>
    "tpu.trace_start"() <{level = 10 : i32, message = "bqk,bke->bqe"}> : () -> ()
    %cst_20 = arith.constant dense<0.000000e+00> : vector<8x8x4xf32>
    %43 = tpu.matmul %40, %34, %cst_20 {dimension_numbers = #tpu.dot_dimension_numbers<[2], [1], [1], [2], [0, 0, 0, 1, 1, 2], [0], [0]>} : vector<8x8x8xf32>, vector<8x8x4xf32>, vector<8x8x4xf32> -> vector<8x8x4xf32>
    "tpu.trace_stop"() : () -> ()
    %44 = tpu.reciprocal %42 : vector<8x8x1xf32> -> vector<8x8x1xf32>
    %45 = vector.broadcast %44 : vector<8x8x1xf32> to vector<8x8x4xf32>
    %46 = arith.mulf %43, %45 : vector<8x8x4xf32>
    %cst_21 = arith.constant dense<0.000000e+00> : vector<8x4xf32>
    %47 = vector.multi_reduction <add>, %46, %cst_21 [1] : vector<8x8x4xf32> to vector<8x4xf32>
    %48 = vector.extract_strided_slice %11 {offsets = [0, 0, 8], sizes = [8, 8, 4], strides = [1, 1, 1]} : vector<8x8x32xf32> to vector<8x8x4xf32>
    %49 = vector.extract_strided_slice %13 {offsets = [0, 0, 8], sizes = [8, 8, 4], strides = [1, 1, 1]} : vector<8x8x32xf32> to vector<8x8x4xf32>
    %50 = vector.extract_strided_slice %15 {offsets = [0, 0, 8], sizes = [8, 8, 4], strides = [1, 1, 1]} : vector<8x8x32xf32> to vector<8x8x4xf32>
    "tpu.trace_start"() <{level = 10 : i32, message = "bqe,bke->bqk"}> : () -> ()
    %cst_22 = arith.constant dense<0.000000e+00> : vector<8x8x8xf32>
    %51 = tpu.matmul %48, %49, %cst_22 {dimension_numbers = #tpu.dot_dimension_numbers<[2], [2], [1], [1], [0, 0, 0, 1, 1, 1], [0], [0]>} : vector<8x8x4xf32>, vector<8x8x4xf32>, vector<8x8x8xf32> -> vector<8x8x8xf32>
    "tpu.trace_stop"() : () -> ()
    %cst_23 = arith.constant dense<0xFF800000> : vector<8x8xf32>
    %52 = vector.multi_reduction <maximumf>, %51, %cst_23 [2] : vector<8x8x8xf32> to vector<8x8xf32>
    %53 = vector.shape_cast %52 : vector<8x8xf32> to vector<8x8x1xf32>
    %54 = vector.broadcast %53 : vector<8x8x1xf32> to vector<8x8x8xf32>
    %55 = arith.subf %51, %54 : vector<8x8x8xf32>
    %56 = math.exp %55 : vector<8x8x8xf32>
    %cst_24 = arith.constant dense<0.000000e+00> : vector<8x8xf32>
    %57 = vector.multi_reduction <add>, %56, %cst_24 [2] : vector<8x8x8xf32> to vector<8x8xf32>
    %58 = vector.shape_cast %57 : vector<8x8xf32> to vector<8x8x1xf32>
    "tpu.trace_start"() <{level = 10 : i32, message = "bqk,bke->bqe"}> : () -> ()
    %cst_25 = arith.constant dense<0.000000e+00> : vector<8x8x4xf32>
    %59 = tpu.matmul %56, %50, %cst_25 {dimension_numbers = #tpu.dot_dimension_numbers<[2], [1], [1], [2], [0, 0, 0, 1, 1, 2], [0], [0]>} : vector<8x8x8xf32>, vector<8x8x4xf32>, vector<8x8x4xf32> -> vector<8x8x4xf32>
    "tpu.trace_stop"() : () -> ()
    %60 = tpu.reciprocal %58 : vector<8x8x1xf32> -> vector<8x8x1xf32>
    %61 = vector.broadcast %60 : vector<8x8x1xf32> to vector<8x8x4xf32>
    %62 = arith.mulf %59, %61 : vector<8x8x4xf32>
    %cst_26 = arith.constant dense<0.000000e+00> : vector<8x4xf32>
    %63 = vector.multi_reduction <add>, %62, %cst_26 [1] : vector<8x8x4xf32> to vector<8x4xf32>
    %64 = vector.extract_strided_slice %11 {offsets = [0, 0, 12], sizes = [8, 8, 4], strides = [1, 1, 1]} : vector<8x8x32xf32> to vector<8x8x4xf32>
    %65 = vector.extract_strided_slice %13 {offsets = [0, 0, 12], sizes = [8, 8, 4], strides = [1, 1, 1]} : vector<8x8x32xf32> to vector<8x8x4xf32>
    %66 = vector.extract_strided_slice %15 {offsets = [0, 0, 12], sizes = [8, 8, 4], strides = [1, 1, 1]} : vector<8x8x32xf32> to vector<8x8x4xf32>
    "tpu.trace_start"() <{level = 10 : i32, message = "bqe,bke->bqk"}> : () -> ()
    %cst_27 = arith.constant dense<0.000000e+00> : vector<8x8x8xf32>
    %67 = tpu.matmul %64, %65, %cst_27 {dimension_numbers = #tpu.dot_dimension_numbers<[2], [2], [1], [1], [0, 0, 0, 1, 1, 1], [0], [0]>} : vector<8x8x4xf32>, vector<8x8x4xf32>, vector<8x8x8xf32> -> vector<8x8x8xf32>
    "tpu.trace_stop"() : () -> ()
    %cst_28 = arith.constant dense<0xFF800000> : vector<8x8xf32>
    %68 = vector.multi_reduction <maximumf>, %67, %cst_28 [2] : vector<8x8x8xf32> to vector<8x8xf32>
    %69 = vector.shape_cast %68 : vector<8x8xf32> to vector<8x8x1xf32>
    %70 = vector.broadcast %69 : vector<8x8x1xf32> to vector<8x8x8xf32>
    %71 = arith.subf %67, %70 : vector<8x8x8xf32>
    %72 = math.exp %71 : vector<8x8x8xf32>
    %cst_29 = arith.constant dense<0.000000e+00> : vector<8x8xf32>
    %73 = vector.multi_reduction <add>, %72, %cst_29 [2] : vector<8x8x8xf32> to vector<8x8xf32>
    %74 = vector.shape_cast %73 : vector<8x8xf32> to vector<8x8x1xf32>
    "tpu.trace_start"() <{level = 10 : i32, message = "bqk,bke->bqe"}> : () -> ()
    %cst_30 = arith.constant dense<0.000000e+00> : vector<8x8x4xf32>
    %75 = tpu.matmul %72, %66, %cst_30 {dimension_numbers = #tpu.dot_dimension_numbers<[2], [1], [1], [2], [0, 0, 0, 1, 1, 2], [0], [0]>} : vector<8x8x8xf32>, vector<8x8x4xf32>, vector<8x8x4xf32> -> vector<8x8x4xf32>
    "tpu.trace_stop"() : () -> ()
    %76 = tpu.reciprocal %74 : vector<8x8x1xf32> -> vector<8x8x1xf32>
    %77 = vector.broadcast %76 : vector<8x8x1xf32> to vector<8x8x4xf32>
    %78 = arith.mulf %75, %77 : vector<8x8x4xf32>
    %cst_31 = arith.constant dense<0.000000e+00> : vector<8x4xf32>
    %79 = vector.multi_reduction <add>, %78, %cst_31 [1] : vector<8x8x4xf32> to vector<8x4xf32>
    %80 = vector.extract_strided_slice %11 {offsets = [0, 0, 16], sizes = [8, 8, 4], strides = [1, 1, 1]} : vector<8x8x32xf32> to vector<8x8x4xf32>
    %81 = vector.extract_strided_slice %13 {offsets = [0, 0, 16], sizes = [8, 8, 4], strides = [1, 1, 1]} : vector<8x8x32xf32> to vector<8x8x4xf32>
    %82 = vector.extract_strided_slice %15 {offsets = [0, 0, 16], sizes = [8, 8, 4], strides = [1, 1, 1]} : vector<8x8x32xf32> to vector<8x8x4xf32>
    "tpu.trace_start"() <{level = 10 : i32, message = "bqe,bke->bqk"}> : () -> ()
    %cst_32 = arith.constant dense<0.000000e+00> : vector<8x8x8xf32>
    %83 = tpu.matmul %80, %81, %cst_32 {dimension_numbers = #tpu.dot_dimension_numbers<[2], [2], [1], [1], [0, 0, 0, 1, 1, 1], [0], [0]>} : vector<8x8x4xf32>, vector<8x8x4xf32>, vector<8x8x8xf32> -> vector<8x8x8xf32>
    "tpu.trace_stop"() : () -> ()
    %cst_33 = arith.constant dense<0xFF800000> : vector<8x8xf32>
    %84 = vector.multi_reduction <maximumf>, %83, %cst_33 [2] : vector<8x8x8xf32> to vector<8x8xf32>
    %85 = vector.shape_cast %84 : vector<8x8xf32> to vector<8x8x1xf32>
    %86 = vector.broadcast %85 : vector<8x8x1xf32> to vector<8x8x8xf32>
    %87 = arith.subf %83, %86 : vector<8x8x8xf32>
    %88 = math.exp %87 : vector<8x8x8xf32>
    %cst_34 = arith.constant dense<0.000000e+00> : vector<8x8xf32>
    %89 = vector.multi_reduction <add>, %88, %cst_34 [2] : vector<8x8x8xf32> to vector<8x8xf32>
    %90 = vector.shape_cast %89 : vector<8x8xf32> to vector<8x8x1xf32>
    "tpu.trace_start"() <{level = 10 : i32, message = "bqk,bke->bqe"}> : () -> ()
    %cst_35 = arith.constant dense<0.000000e+00> : vector<8x8x4xf32>
    %91 = tpu.matmul %88, %82, %cst_35 {dimension_numbers = #tpu.dot_dimension_numbers<[2], [1], [1], [2], [0, 0, 0, 1, 1, 2], [0], [0]>} : vector<8x8x8xf32>, vector<8x8x4xf32>, vector<8x8x4xf32> -> vector<8x8x4xf32>
    "tpu.trace_stop"() : () -> ()
    %92 = tpu.reciprocal %90 : vector<8x8x1xf32> -> vector<8x8x1xf32>
    %93 = vector.broadcast %92 : vector<8x8x1xf32> to vector<8x8x4xf32>
    %94 = arith.mulf %91, %93 : vector<8x8x4xf32>
    %cst_36 = arith.constant dense<0.000000e+00> : vector<8x4xf32>
    %95 = vector.multi_reduction <add>, %94, %cst_36 [1] : vector<8x8x4xf32> to vector<8x4xf32>
    %96 = vector.extract_strided_slice %11 {offsets = [0, 0, 20], sizes = [8, 8, 4], strides = [1, 1, 1]} : vector<8x8x32xf32> to vector<8x8x4xf32>
    %97 = vector.extract_strided_slice %13 {offsets = [0, 0, 20], sizes = [8, 8, 4], strides = [1, 1, 1]} : vector<8x8x32xf32> to vector<8x8x4xf32>
    %98 = vector.extract_strided_slice %15 {offsets = [0, 0, 20], sizes = [8, 8, 4], strides = [1, 1, 1]} : vector<8x8x32xf32> to vector<8x8x4xf32>
    "tpu.trace_start"() <{level = 10 : i32, message = "bqe,bke->bqk"}> : () -> ()
    %cst_37 = arith.constant dense<0.000000e+00> : vector<8x8x8xf32>
    %99 = tpu.matmul %96, %97, %cst_37 {dimension_numbers = #tpu.dot_dimension_numbers<[2], [2], [1], [1], [0, 0, 0, 1, 1, 1], [0], [0]>} : vector<8x8x4xf32>, vector<8x8x4xf32>, vector<8x8x8xf32> -> vector<8x8x8xf32>
    "tpu.trace_stop"() : () -> ()
    %cst_38 = arith.constant dense<0xFF800000> : vector<8x8xf32>
    %100 = vector.multi_reduction <maximumf>, %99, %cst_38 [2] : vector<8x8x8xf32> to vector<8x8xf32>
    %101 = vector.shape_cast %100 : vector<8x8xf32> to vector<8x8x1xf32>
    %102 = vector.broadcast %101 : vector<8x8x1xf32> to vector<8x8x8xf32>
    %103 = arith.subf %99, %102 : vector<8x8x8xf32>
    %104 = math.exp %103 : vector<8x8x8xf32>
    %cst_39 = arith.constant dense<0.000000e+00> : vector<8x8xf32>
    %105 = vector.multi_reduction <add>, %104, %cst_39 [2] : vector<8x8x8xf32> to vector<8x8xf32>
    %106 = vector.shape_cast %105 : vector<8x8xf32> to vector<8x8x1xf32>
    "tpu.trace_start"() <{level = 10 : i32, message = "bqk,bke->bqe"}> : () -> ()
    %cst_40 = arith.constant dense<0.000000e+00> : vector<8x8x4xf32>
    %107 = tpu.matmul %104, %98, %cst_40 {dimension_numbers = #tpu.dot_dimension_numbers<[2], [1], [1], [2], [0, 0, 0, 1, 1, 2], [0], [0]>} : vector<8x8x8xf32>, vector<8x8x4xf32>, vector<8x8x4xf32> -> vector<8x8x4xf32>
    "tpu.trace_stop"() : () -> ()
    %108 = tpu.reciprocal %106 : vector<8x8x1xf32> -> vector<8x8x1xf32>
    %109 = vector.broadcast %108 : vector<8x8x1xf32> to vector<8x8x4xf32>
    %110 = arith.mulf %107, %109 : vector<8x8x4xf32>
    %cst_41 = arith.constant dense<0.000000e+00> : vector<8x4xf32>
    %111 = vector.multi_reduction <add>, %110, %cst_41 [1] : vector<8x8x4xf32> to vector<8x4xf32>
    %112 = vector.extract_strided_slice %11 {offsets = [0, 0, 24], sizes = [8, 8, 4], strides = [1, 1, 1]} : vector<8x8x32xf32> to vector<8x8x4xf32>
    %113 = vector.extract_strided_slice %13 {offsets = [0, 0, 24], sizes = [8, 8, 4], strides = [1, 1, 1]} : vector<8x8x32xf32> to vector<8x8x4xf32>
    %114 = vector.extract_strided_slice %15 {offsets = [0, 0, 24], sizes = [8, 8, 4], strides = [1, 1, 1]} : vector<8x8x32xf32> to vector<8x8x4xf32>
    "tpu.trace_start"() <{level = 10 : i32, message = "bqe,bke->bqk"}> : () -> ()
    %cst_42 = arith.constant dense<0.000000e+00> : vector<8x8x8xf32>
    %115 = tpu.matmul %112, %113, %cst_42 {dimension_numbers = #tpu.dot_dimension_numbers<[2], [2], [1], [1], [0, 0, 0, 1, 1, 1], [0], [0]>} : vector<8x8x4xf32>, vector<8x8x4xf32>, vector<8x8x8xf32> -> vector<8x8x8xf32>
    "tpu.trace_stop"() : () -> ()
    %cst_43 = arith.constant dense<0xFF800000> : vector<8x8xf32>
    %116 = vector.multi_reduction <maximumf>, %115, %cst_43 [2] : vector<8x8x8xf32> to vector<8x8xf32>
    %117 = vector.shape_cast %116 : vector<8x8xf32> to vector<8x8x1xf32>
    %118 = vector.broadcast %117 : vector<8x8x1xf32> to vector<8x8x8xf32>
    %119 = arith.subf %115, %118 : vector<8x8x8xf32>
    %120 = math.exp %119 : vector<8x8x8xf32>
    %cst_44 = arith.constant dense<0.000000e+00> : vector<8x8xf32>
    %121 = vector.multi_reduction <add>, %120, %cst_44 [2] : vector<8x8x8xf32> to vector<8x8xf32>
    %122 = vector.shape_cast %121 : vector<8x8xf32> to vector<8x8x1xf32>
    "tpu.trace_start"() <{level = 10 : i32, message = "bqk,bke->bqe"}> : () -> ()
    %cst_45 = arith.constant dense<0.000000e+00> : vector<8x8x4xf32>
    %123 = tpu.matmul %120, %114, %cst_45 {dimension_numbers = #tpu.dot_dimension_numbers<[2], [1], [1], [2], [0, 0, 0, 1, 1, 2], [0], [0]>} : vector<8x8x8xf32>, vector<8x8x4xf32>, vector<8x8x4xf32> -> vector<8x8x4xf32>
    "tpu.trace_stop"() : () -> ()
    %124 = tpu.reciprocal %122 : vector<8x8x1xf32> -> vector<8x8x1xf32>
    %125 = vector.broadcast %124 : vector<8x8x1xf32> to vector<8x8x4xf32>
    %126 = arith.mulf %123, %125 : vector<8x8x4xf32>
    %cst_46 = arith.constant dense<0.000000e+00> : vector<8x4xf32>
    %127 = vector.multi_reduction <add>, %126, %cst_46 [1] : vector<8x8x4xf32> to vector<8x4xf32>
    %128 = vector.extract_strided_slice %11 {offsets = [0, 0, 28], sizes = [8, 8, 4], strides = [1, 1, 1]} : vector<8x8x32xf32> to vector<8x8x4xf32>
    %129 = vector.extract_strided_slice %13 {offsets = [0, 0, 28], sizes = [8, 8, 4], strides = [1, 1, 1]} : vector<8x8x32xf32> to vector<8x8x4xf32>
    %130 = vector.extract_strided_slice %15 {offsets = [0, 0, 28], sizes = [8, 8, 4], strides = [1, 1, 1]} : vector<8x8x32xf32> to vector<8x8x4xf32>
    "tpu.trace_start"() <{level = 10 : i32, message = "bqe,bke->bqk"}> : () -> ()
    %cst_47 = arith.constant dense<0.000000e+00> : vector<8x8x8xf32>
    %131 = tpu.matmul %128, %129, %cst_47 {dimension_numbers = #tpu.dot_dimension_numbers<[2], [2], [1], [1], [0, 0, 0, 1, 1, 1], [0], [0]>} : vector<8x8x4xf32>, vector<8x8x4xf32>, vector<8x8x8xf32> -> vector<8x8x8xf32>
    "tpu.trace_stop"() : () -> ()
    %cst_48 = arith.constant dense<0xFF800000> : vector<8x8xf32>
    %132 = vector.multi_reduction <maximumf>, %131, %cst_48 [2] : vector<8x8x8xf32> to vector<8x8xf32>
    %133 = vector.shape_cast %132 : vector<8x8xf32> to vector<8x8x1xf32>
    %134 = vector.broadcast %133 : vector<8x8x1xf32> to vector<8x8x8xf32>
    %135 = arith.subf %131, %134 : vector<8x8x8xf32>
    %136 = math.exp %135 : vector<8x8x8xf32>
    %cst_49 = arith.constant dense<0.000000e+00> : vector<8x8xf32>
    %137 = vector.multi_reduction <add>, %136, %cst_49 [2] : vector<8x8x8xf32> to vector<8x8xf32>
    %138 = vector.shape_cast %137 : vector<8x8xf32> to vector<8x8x1xf32>
    "tpu.trace_start"() <{level = 10 : i32, message = "bqk,bke->bqe"}> : () -> ()
    %cst_50 = arith.constant dense<0.000000e+00> : vector<8x8x4xf32>
    %139 = tpu.matmul %136, %130, %cst_50 {dimension_numbers = #tpu.dot_dimension_numbers<[2], [1], [1], [2], [0, 0, 0, 1, 1, 2], [0], [0]>} : vector<8x8x8xf32>, vector<8x8x4xf32>, vector<8x8x4xf32> -> vector<8x8x4xf32>
    "tpu.trace_stop"() : () -> ()
    %140 = tpu.reciprocal %138 : vector<8x8x1xf32> -> vector<8x8x1xf32>
    %141 = vector.broadcast %140 : vector<8x8x1xf32> to vector<8x8x4xf32>
    %142 = arith.mulf %139, %141 : vector<8x8x4xf32>
    %cst_51 = arith.constant dense<0.000000e+00> : vector<8x4xf32>
    %143 = vector.multi_reduction <add>, %142, %cst_51 [1] : vector<8x8x4xf32> to vector<8x4xf32>
    %144 = tpu.concatenate %31, %47, %63, %79, %95, %111, %127, %143 in 1 : vector<8x4xf32>, vector<8x4xf32>, vector<8x4xf32>, vector<8x4xf32>, vector<8x4xf32>, vector<8x4xf32>, vector<8x4xf32>, vector<8x4xf32> -> vector<8x32xf32>
    %c0_52 = arith.constant 0 : index
    %c0_53 = arith.constant 0 : index
    %145 = vector.load %arg6[%c0_52, %c0_53] : memref<32x32xf32, #tpu.memory_space<vmem>>, vector<32x32xf32>
    %cst_54 = arith.constant dense<0.000000e+00> : vector<8x32xf32>
    %146 = tpu.matmul %144, %145, %cst_54 {dimension_numbers = #tpu.dot_dimension_numbers<[1], [0], [0], [1], [0, 0, 1, 1], [], []>} : vector<8x32xf32>, vector<32x32xf32>, vector<8x32xf32> -> vector<8x32xf32>
    %cst_55 = arith.constant 1.250000e-01 : f32
    %147 = vector.broadcast %cst_55 : f32 to vector<8x32xf32>
    %148 = arith.mulf %146, %147 : vector<8x32xf32>
    %c0_56 = arith.constant 0 : index
    %c0_57 = arith.constant 0 : index
    %149 = vector.load %arg7[%c0_56, %c0_57] : memref<1x32xf32, #tpu.memory_space<vmem>>, vector<1x32xf32>
    %150 = vector.broadcast %149 : vector<1x32xf32> to vector<8x32xf32>
    %151 = arith.addf %148, %150 : vector<8x32xf32>
    %c0_58 = arith.constant 0 : index
    %c0_59 = arith.constant 0 : index
    %152 = vector.load %arg8[%c0_58, %c0_59] : memref<8x32xf32, #tpu.memory_space<vmem>>, vector<8x32xf32>
    tpu.vector_store %arg8[%c0_58, %c0_59], %151 {strides = array<i32>} : memref<8x32xf32, #tpu.memory_space<vmem>>, vector<8x32xf32>,
    return
  }
  func.func @transform_0(%arg0: i32) -> (i32, i32, i32) {
    %c0_i32 = arith.constant 0 : i32
    %c0_i32_0 = arith.constant 0 : i32
    %c0_i32_1 = arith.constant 0 : i32
    return %arg0, %c0_i32, %c0_i32_0 : i32, i32, i32
  }
  func.func @transform_1(%arg0: i32) -> (i32, i32, i32) {
    %c0_i32 = arith.constant 0 : i32
    %c0_i32_0 = arith.constant 0 : i32
    %c0_i32_1 = arith.constant 0 : i32
    return %arg0, %c0_i32, %c0_i32_0 : i32, i32, i32
  }
  func.func @transform_2(%arg0: i32) -> (i32, i32) {
    %c0_i32 = arith.constant 0 : i32
    %c0_i32_0 = arith.constant 0 : i32
    %c0_i32_1 = arith.constant 0 : i32
    return %c0_i32, %c0_i32_0 : i32, i32
  }
  func.func @transform_3(%arg0: i32) -> (i32, i32) {
    %c0_i32 = arith.constant 0 : i32
    %c0_i32_0 = arith.constant 0 : i32
    %c0_i32_1 = arith.constant 0 : i32
    return %c0_i32, %c0_i32_0 : i32, i32
  }
  func.func @transform_4(%arg0: i32) -> (i32, i32) {
    %c0_i32 = arith.constant 0 : i32
    %c0_i32_0 = arith.constant 0 : i32
    %c0_i32_1 = arith.constant 0 : i32
    return %c0_i32, %c0_i32_0 : i32, i32
  }
  func.func @transform_5(%arg0: i32) -> (i32, i32) {
    %c0_i32 = arith.constant 0 : i32
    %c0_i32_0 = arith.constant 0 : i32
    %c0_i32_1 = arith.constant 0 : i32
    return %c0_i32, %c0_i32_0 : i32, i32
  }
  func.func @transform_6(%arg0: i32) -> (i32, i32) {
    %c0_i32 = arith.constant 0 : i32
    %c0_i32_0 = arith.constant 0 : i32
    %c0_i32_1 = arith.constant 0 : i32
    return %c0_i32, %c0_i32_0 : i32, i32
  }
  func.func @transform_7(%arg0: i32) -> (i32, i32) {
    %c0_i32 = arith.constant 0 : i32
    %c0_i32_0 = arith.constant 0 : i32
    return %arg0, %c0_i32 : i32, i32
  }
}

module attributes {stable_mosaic.version = 11 : i64} {
  func.func @_rewrite_attn_kernel(%arg0: i32, %arg1: memref<8x8x32xf32, #tpu.memory_space<vmem>>, %arg2: memref<8x8x32xf32, #tpu.memory_space<vmem>>, %arg3: memref<32x32xf32, #tpu.memory_space<vmem>>, %arg4: memref<1x32xf32, #tpu.memory_space<vmem>>, %arg5: memref<32x64xf32, #tpu.memory_space<vmem>>, %arg6: memref<32x32xf32, #tpu.memory_space<vmem>>, %arg7: memref<1x32xf32, #tpu.memory_space<vmem>>, %arg8: memref<8x32xf32, #tpu.memory_space<vmem>>) attributes {dimension_semantics = [#tpu.dimension_semantics<parallel>], iteration_bounds = array<i64: 1>, scalar_prefetch = 0 : i64, scratch_operands = 0 : i64, tpu.core_type = #tpu.core_type<tc>, window_params = [{transform_indices = @transform_0, window_bounds = array<i64: 8, 8, 32>}, {transform_indices = @transform_1, window_bounds = array<i64: 8, 8, 32>}, {pipeline_mode = #tpu.pipeline_mode<synchronous>, transform_indices = @transform_2, window_bounds = array<i64: 32, 32>}, {pipeline_mode = #tpu.pipeline_mode<synchronous>, transform_indices = @transform_3, window_bounds = array<i64: 1, 32>}, {pipeline_mode = #tpu.pipeline_mode<synchronous>, transform_indices = @transform_4, window_bounds = array<i64: 32, 64>}, {pipeline_mode = #tpu.pipeline_mode<synchronous>, transform_indices = @transform_5, window_bounds = array<i64: 32, 32>}, {pipeline_mode = #tpu.pipeline_mode<synchronous>, transform_indices = @transform_6, window_bounds = array<i64: 1, 32>}, {transform_indices = @transform_7, window_bounds = array<i64: 8, 32>}]} {
    %c0 = arith.constant 0 : index
    %c0_0 = arith.constant 0 : index
    %c0_1 = arith.constant 0 : index
    %0 = vector.load %arg1[%c0, %c0_0, %c0_1] : memref<8x8x32xf32, #tpu.memory_space<vmem>>, vector<8x8x32xf32>
    %1 = vector.shape_cast %0 : vector<8x8x32xf32> to vector<64x32xf32>
    %c0_2 = arith.constant 0 : index
    %c0_3 = arith.constant 0 : index
    %c0_4 = arith.constant 0 : index
    %2 = vector.load %arg2[%c0_2, %c0_3, %c0_4] : memref<8x8x32xf32, #tpu.memory_space<vmem>>, vector<8x8x32xf32>
    %3 = vector.shape_cast %2 : vector<8x8x32xf32> to vector<64x32xf32>
    %c0_5 = arith.constant 0 : index
    %c0_6 = arith.constant 0 : index
    %4 = vector.load %arg3[%c0_5, %c0_6] : memref<32x32xf32, #tpu.memory_space<vmem>>, vector<32x32xf32>
    %cst = arith.constant dense<0.000000e+00> : vector<64x32xf32>
    %5 = tpu.matmul %1, %4, %cst {dimension_numbers = #tpu.dot_dimension_numbers<[1], [0], [0], [1], [0, 0, 1, 1], [], []>} : vector<64x32xf32>, vector<32x32xf32>, vector<64x32xf32> -> vector<64x32xf32>
    %c0_7 = arith.constant 0 : index
    %c0_8 = arith.constant 0 : index
    %6 = vector.load %arg4[%c0_7, %c0_8] : memref<1x32xf32, #tpu.memory_space<vmem>>, vector<1x32xf32>
    %7 = vector.broadcast %6 : vector<1x32xf32> to vector<64x32xf32>
    %8 = arith.addf %5, %7 : vector<64x32xf32>
    %c0_9 = arith.constant 0 : index
    %c0_10 = arith.constant 0 : index
    %9 = vector.load %arg5[%c0_9, %c0_10] : memref<32x64xf32, #tpu.memory_space<vmem>>, vector<32x64xf32>
    %cst_11 = arith.constant dense<0.000000e+00> : vector<64x64xf32>
    %10 = tpu.matmul %3, %9, %cst_11 {dimension_numbers = #tpu.dot_dimension_numbers<[1], [0], [0], [1], [0, 0, 1, 1], [], []>} : vector<64x32xf32>, vector<32x64xf32>, vector<64x64xf32> -> vector<64x64xf32>
    %11 = vector.shape_cast %8 : vector<64x32xf32> to vector<8x8x32xf32>
    %12 = vector.extract_strided_slice %10 {offsets = [0, 0], sizes = [64, 32], strides = [1, 1]} : vector<64x64xf32> to vector<64x32xf32>
    %13 = vector.shape_cast %12 : vector<64x32xf32> to vector<8x8x32xf32>
    %14 = vector.extract_strided_slice %10 {offsets = [0, 32], sizes = [64, 32], strides = [1, 1]} : vector<64x64xf32> to vector<64x32xf32>
    %15 = vector.shape_cast %14 : vector<64x32xf32> to vector<8x8x32xf32>
    %16 = vector.extract_strided_slice %11 {offsets = [0, 0, 0], sizes = [8, 8, 4], strides = [1, 1, 1]} : vector<8x8x32xf32> to vector<8x8x4xf32>
    %17 = vector.extract_strided_slice %13 {offsets = [0, 0, 0], sizes = [8, 8, 4], strides = [1, 1, 1]} : vector<8x8x32xf32> to vector<8x8x4xf32>
    %18 = vector.extract_strided_slice %15 {offsets = [0, 0, 0], sizes = [8, 8, 4], strides = [1, 1, 1]} : vector<8x8x32xf32> to vector<8x8x4xf32>
    "tpu.trace_start"() <{level = 10 : i32, message = "bqe,bke->bqk"}> : () -> ()
    %cst_12 = arith.constant dense<0.000000e+00> : vector<8x8x8xf32>
    %19 = tpu.matmul %16, %17, %cst_12 {dimension_numbers = #tpu.dot_dimension_numbers<[2], [2], [1], [1], [0, 0, 0, 1, 1, 1], [0], [0]>} : vector<8x8x4xf32>, vector<8x8x4xf32>, vector<8x8x8xf32> -> vector<8x8x8xf32>
    "tpu.trace_stop"() : () -> ()
    %cst_13 = arith.constant dense<0xFF800000> : vector<8x8xf32>
    %20 = vector.multi_reduction <maximumf>, %19, %cst_13 [2] : vector<8x8x8xf32> to vector<8x8xf32>
    %21 = vector.shape_cast %20 : vector<8x8xf32> to vector<8x8x1xf32>
    %22 = vector.broadcast %21 : vector<8x8x1xf32> to vector<8x8x8xf32>
    %23 = arith.subf %19, %22 : vector<8x8x8xf32>
    %24 = math.exp %23 : vector<8x8x8xf32>
    %cst_14 = arith.constant dense<0.000000e+00> : vector<8x8xf32>
    %25 = vector.multi_reduction <add>, %24, %cst_14 [2] : vector<8x8x8xf32> to vector<8x8xf32>
    %26 = vector.shape_cast %25 : vector<8x8xf32> to vector<8x8x1xf32>
    "tpu.trace_start"() <{level = 10 : i32, message = "bqk,bke->bqe"}> : () -> ()
    %cst_15 = arith.constant dense<0.000000e+00> : vector<8x8x4xf32>
    %27 = tpu.matmul %24, %18, %cst_15 {dimension_numbers = #tpu.dot_dimension_numbers<[2], [1], [1], [2], [0, 0, 0, 1, 1, 2], [0], [0]>} : vector<8x8x8xf32>, vector<8x8x4xf32>, vector<8x8x4xf32> -> vector<8x8x4xf32>
    "tpu.trace_stop"() : () -> ()
    %28 = tpu.reciprocal %26 : vector<8x8x1xf32> -> vector<8x8x1xf32>
    %29 = vector.broadcast %28 : vector<8x8x1xf32> to vector<8x8x4xf32>
    %30 = arith.mulf %27, %29 : vector<8x8x4xf32>
    %cst_16 = arith.constant dense<0.000000e+00> : vector<8x4xf32>
    %31 = vector.multi_reduction <add>, %30, %cst_16 [1] : vector<8x8x4xf32> to vector<8x4xf32>
    %32 = vector.extract_strided_slice %11 {offsets = [0, 0, 4], sizes = [8, 8, 4], strides = [1, 1, 1]} : vector<8x8x32xf32> to vector<8x8x4xf32>
    %33 = vector.extract_strided_slice %13 {offsets = [0, 0, 4], sizes = [8, 8, 4], strides = [1, 1, 1]} : vector<8x8x32xf32> to vector<8x8x4xf32>
    %34 = vector.extract_strided_slice %15 {offsets = [0, 0, 4], sizes = [8, 8, 4], strides = [1, 1, 1]} : vector<8x8x32xf32> to vector<8x8x4xf32>
    "tpu.trace_start"() <{level = 10 : i32, message = "bqe,bke->bqk"}> : () -> ()
    %cst_17 = arith.constant dense<0.000000e+00> : vector<8x8x8xf32>
    %35 = tpu.matmul %32, %33, %cst_17 {dimension_numbers = #tpu.dot_dimension_numbers<[2], [2], [1], [1], [0, 0, 0, 1, 1, 1], [0], [0]>} : vector<8x8x4xf32>, vector<8x8x4xf32>, vector<8x8x8xf32> -> vector<8x8x8xf32>
    "tpu.trace_stop"() : () -> ()
    %cst_18 = arith.constant dense<0xFF800000> : vector<8x8xf32>
    %36 = vector.multi_reduction <maximumf>, %35, %cst_18 [2] : vector<8x8x8xf32> to vector<8x8xf32>
    %37 = vector.shape_cast %36 : vector<8x8xf32> to vector<8x8x1xf32>
    %38 = vector.broadcast %37 : vector<8x8x1xf32> to vector<8x8x8xf32>
    %39 = arith.subf %35, %38 : vector<8x8x8xf32>
    %40 = math.exp %39 : vector<8x8x8xf32>
    %cst_19 = arith.constant dense<0.000000e+00> : vector<8x8xf32>
    %41 = vector.multi_reduction <add>, %40, %cst_19 [2] : vector<8x8x8xf32> to vector<8x8xf32>
    %42 = vector.shape_cast %41 : vector<8x8xf32> to vector<8x8x1xf32>
    "tpu.trace_start"() <{level = 10 : i32, message = "bqk,bke->bqe"}> : () -> ()
    %cst_20 = arith.constant dense<0.000000e+00> : vector<8x8x4xf32>
    %43 = tpu.matmul %40, %34, %cst_20 {dimension_numbers = #tpu.dot_dimension_numbers<[2], [1], [1], [2], [0, 0, 0, 1, 1, 2], [0], [0]>} : vector<8x8x8xf32>, vector<8x8x4xf32>, vector<8x8x4xf32> -> vector<8x8x4xf32>
    "tpu.trace_stop"() : () -> ()
    %44 = tpu.reciprocal %42 : vector<8x8x1xf32> -> vector<8x8x1xf32>
    %45 = vector.broadcast %44 : vector<8x8x1xf32> to vector<8x8x4xf32>
    %46 = arith.mulf %43, %45 : vector<8x8x4xf32>
    %cst_21 = arith.constant dense<0.000000e+00> : vector<8x4xf32>
    %47 = vector.multi_reduction <add>, %46, %cst_21 [1] : vector<8x8x4xf32> to vector<8x4xf32>
    %48 = vector.extract_strided_slice %11 {offsets = [0, 0, 8], sizes = [8, 8, 4], strides = [1, 1, 1]} : vector<8x8x32xf32> to vector<8x8x4xf32>
    %49 = vector.extract_strided_slice %13 {offsets = [0, 0, 8], sizes = [8, 8, 4], strides = [1, 1, 1]} : vector<8x8x32xf32> to vector<8x8x4xf32>
    %50 = vector.extract_strided_slice %15 {offsets = [0, 0, 8], sizes = [8, 8, 4], strides = [1, 1, 1]} : vector<8x8x32xf32> to vector<8x8x4xf32>
    "tpu.trace_start"() <{level = 10 : i32, message = "bqe,bke->bqk"}> : () -> ()
    %cst_22 = arith.constant dense<0.000000e+00> : vector<8x8x8xf32>
    %51 = tpu.matmul %48, %49, %cst_22 {dimension_numbers = #tpu.dot_dimension_numbers<[2], [2], [1], [1], [0, 0, 0, 1, 1, 1], [0], [0]>} : vector<8x8x4xf32>, vector<8x8x4xf32>, vector<8x8x8xf32> -> vector<8x8x8xf32>
    "tpu.trace_stop"() : () -> ()
    %cst_23 = arith.constant dense<0xFF800000> : vector<8x8xf32>
    %52 = vector.multi_reduction <maximumf>, %51, %cst_23 [2] : vector<8x8x8xf32> to vector<8x8xf32>
    %53 = vector.shape_cast %52 : vector<8x8xf32> to vector<8x8x1xf32>
    %54 = vector.broadcast %53 : vector<8x8x1xf32> to vector<8x8x8xf32>
    %55 = arith.subf %51, %54 : vector<8x8x8xf32>
    %56 = math.exp %55 : vector<8x8x8xf32>
    %cst_24 = arith.constant dense<0.000000e+00> : vector<8x8xf32>
    %57 = vector.multi_reduction <add>, %56, %cst_24 [2] : vector<8x8x8xf32> to vector<8x8xf32>
    %58 = vector.shape_cast %57 : vector<8x8xf32> to vector<8x8x1xf32>
    "tpu.trace_start"() <{level = 10 : i32, message = "bqk,bke->bqe"}> : () -> ()
    %cst_25 = arith.constant dense<0.000000e+00> : vector<8x8x4xf32>
    %59 = tpu.matmul %56, %50, %cst_25 {dimension_numbers = #tpu.dot_dimension_numbers<[2], [1], [1], [2], [0, 0, 0, 1, 1, 2], [0], [0]>} : vector<8x8x8xf32>, vector<8x8x4xf32>, vector<8x8x4xf32> -> vector<8x8x4xf32>
    "tpu.trace_stop"() : () -> ()
    %60 = tpu.reciprocal %58 : vector<8x8x1xf32> -> vector<8x8x1xf32>
    %61 = vector.broadcast %60 : vector<8x8x1xf32> to vector<8x8x4xf32>
    %62 = arith.mulf %59, %61 : vector<8x8x4xf32>
    %cst_26 = arith.constant dense<0.000000e+00> : vector<8x4xf32>
    %63 = vector.multi_reduction <add>, %62, %cst_26 [1] : vector<8x8x4xf32> to vector<8x4xf32>
    %64 = vector.extract_strided_slice %11 {offsets = [0, 0, 12], sizes = [8, 8, 4], strides = [1, 1, 1]} : vector<8x8x32xf32> to vector<8x8x4xf32>
    %65 = vector.extract_strided_slice %13 {offsets = [0, 0, 12], sizes = [8, 8, 4], strides = [1, 1, 1]} : vector<8x8x32xf32> to vector<8x8x4xf32>
    %66 = vector.extract_strided_slice %15 {offsets = [0, 0, 12], sizes = [8, 8, 4], strides = [1, 1, 1]} : vector<8x8x32xf32> to vector<8x8x4xf32>
    "tpu.trace_start"() <{level = 10 : i32, message = "bqe,bke->bqk"}> : () -> ()
    %cst_27 = arith.constant dense<0.000000e+00> : vector<8x8x8xf32>
    %67 = tpu.matmul %64, %65, %cst_27 {dimension_numbers = #tpu.dot_dimension_numbers<[2], [2], [1], [1], [0, 0, 0, 1, 1, 1], [0], [0]>} : vector<8x8x4xf32>, vector<8x8x4xf32>, vector<8x8x8xf32> -> vector<8x8x8xf32>
    "tpu.trace_stop"() : () -> ()
    %cst_28 = arith.constant dense<0xFF800000> : vector<8x8xf32>
    %68 = vector.multi_reduction <maximumf>, %67, %cst_28 [2] : vector<8x8x8xf32> to vector<8x8xf32>
    %69 = vector.shape_cast %68 : vector<8x8xf32> to vector<8x8x1xf32>
    %70 = vector.broadcast %69 : vector<8x8x1xf32> to vector<8x8x8xf32>
    %71 = arith.subf %67, %70 : vector<8x8x8xf32>
    %72 = math.exp %71 : vector<8x8x8xf32>
    %cst_29 = arith.constant dense<0.000000e+00> : vector<8x8xf32>
    %73 = vector.multi_reduction <add>, %72, %cst_29 [2] : vector<8x8x8xf32> to vector<8x8xf32>
    %74 = vector.shape_cast %73 : vector<8x8xf32> to vector<8x8x1xf32>
    "tpu.trace_start"() <{level = 10 : i32, message = "bqk,bke->bqe"}> : () -> ()
    %cst_30 = arith.constant dense<0.000000e+00> : vector<8x8x4xf32>
    %75 = tpu.matmul %72, %66, %cst_30 {dimension_numbers = #tpu.dot_dimension_numbers<[2], [1], [1], [2], [0, 0, 0, 1, 1, 2], [0], [0]>} : vector<8x8x8xf32>, vector<8x8x4xf32>, vector<8x8x4xf32> -> vector<8x8x4xf32>
    "tpu.trace_stop"() : () -> ()
    %76 = tpu.reciprocal %74 : vector<8x8x1xf32> -> vector<8x8x1xf32>
    %77 = vector.broadcast %76 : vector<8x8x1xf32> to vector<8x8x4xf32>
    %78 = arith.mulf %75, %77 : vector<8x8x4xf32>
    %cst_31 = arith.constant dense<0.000000e+00> : vector<8x4xf32>
    %79 = vector.multi_reduction <add>, %78, %cst_31 [1] : vector<8x8x4xf32> to vector<8x4xf32>
    %80 = vector.extract_strided_slice %11 {offsets = [0, 0, 16], sizes = [8, 8, 4], strides = [1, 1, 1]} : vector<8x8x32xf32> to vector<8x8x4xf32>
    %81 = vector.extract_strided_slice %13 {offsets = [0, 0, 16], sizes = [8, 8, 4], strides = [1, 1, 1]} : vector<8x8x32xf32> to vector<8x8x4xf32>
    %82 = vector.extract_strided_slice %15 {offsets = [0, 0, 16], sizes = [8, 8, 4], strides = [1, 1, 1]} : vector<8x8x32xf32> to vector<8x8x4xf32>
    "tpu.trace_start"() <{level = 10 : i32, message = "bqe,bke->bqk"}> : () -> ()
    %cst_32 = arith.constant dense<0.000000e+00> : vector<8x8x8xf32>
    %83 = tpu.matmul %80, %81, %cst_32 {dimension_numbers = #tpu.dot_dimension_numbers<[2], [2], [1], [1], [0, 0, 0, 1, 1, 1], [0], [0]>} : vector<8x8x4xf32>, vector<8x8x4xf32>, vector<8x8x8xf32> -> vector<8x8x8xf32>
    "tpu.trace_stop"() : () -> ()
    %cst_33 = arith.constant dense<0xFF800000> : vector<8x8xf32>
    %84 = vector.multi_reduction <maximumf>, %83, %cst_33 [2] : vector<8x8x8xf32> to vector<8x8xf32>
    %85 = vector.shape_cast %84 : vector<8x8xf32> to vector<8x8x1xf32>
    %86 = vector.broadcast %85 : vector<8x8x1xf32> to vector<8x8x8xf32>
    %87 = arith.subf %83, %86 : vector<8x8x8xf32>
    %88 = math.exp %87 : vector<8x8x8xf32>
    %cst_34 = arith.constant dense<0.000000e+00> : vector<8x8xf32>
    %89 = vector.multi_reduction <add>, %88, %cst_34 [2] : vector<8x8x8xf32> to vector<8x8xf32>
    %90 = vector.shape_cast %89 : vector<8x8xf32> to vector<8x8x1xf32>
    "tpu.trace_start"() <{level = 10 : i32, message = "bqk,bke->bqe"}> : () -> ()
    %cst_35 = arith.constant dense<0.000000e+00> : vector<8x8x4xf32>
    %91 = tpu.matmul %88, %82, %cst_35 {dimension_numbers = #tpu.dot_dimension_numbers<[2], [1], [1], [2], [0, 0, 0, 1, 1, 2], [0], [0]>} : vector<8x8x8xf32>, vector<8x8x4xf32>, vector<8x8x4xf32> -> vector<8x8x4xf32>
    "tpu.trace_stop"() : () -> ()
    %92 = tpu.reciprocal %90 : vector<8x8x1xf32> -> vector<8x8x1xf32>
    %93 = vector.broadcast %92 : vector<8x8x1xf32> to vector<8x8x4xf32>
    %94 = arith.mulf %91, %93 : vector<8x8x4xf32>
    %cst_36 = arith.constant dense<0.000000e+00> : vector<8x4xf32>
    %95 = vector.multi_reduction <add>, %94, %cst_36 [1] : vector<8x8x4xf32> to vector<8x4xf32>
    %96 = vector.extract_strided_slice %11 {offsets = [0, 0, 20], sizes = [8, 8, 4], strides = [1, 1, 1]} : vector<8x8x32xf32> to vector<8x8x4xf32>
    %97 = vector.extract_strided_slice %13 {offsets = [0, 0, 20], sizes = [8, 8, 4], strides = [1, 1, 1]} : vector<8x8x32xf32> to vector<8x8x4xf32>
    %98 = vector.extract_strided_slice %15 {offsets = [0, 0, 20], sizes = [8, 8, 4], strides = [1, 1, 1]} : vector<8x8x32xf32> to vector<8x8x4xf32>
    "tpu.trace_start"() <{level = 10 : i32, message = "bqe,bke->bqk"}> : () -> ()
    %cst_37 = arith.constant dense<0.000000e+00> : vector<8x8x8xf32>
    %99 = tpu.matmul %96, %97, %cst_37 {dimension_numbers = #tpu.dot_dimension_numbers<[2], [2], [1], [1], [0, 0, 0, 1, 1, 1], [0], [0]>} : vector<8x8x4xf32>, vector<8x8x4xf32>, vector<8x8x8xf32> -> vector<8x8x8xf32>
    "tpu.trace_stop"() : () -> ()
    %cst_38 = arith.constant dense<0xFF800000> : vector<8x8xf32>
    %100 = vector.multi_reduction <maximumf>, %99, %cst_38 [2] : vector<8x8x8xf32> to vector<8x8xf32>
    %101 = vector.shape_cast %100 : vector<8x8xf32> to vector<8x8x1xf32>
    %102 = vector.broadcast %101 : vector<8x8x1xf32> to vector<8x8x8xf32>
    %103 = arith.subf %99, %102 : vector<8x8x8xf32>
    %104 = math.exp %103 : vector<8x8x8xf32>
    %cst_39 = arith.constant dense<0.000000e+00> : vector<8x8xf32>
    %105 = vector.multi_reduction <add>, %104, %cst_39 [2] : vector<8x8x8xf32> to vector<8x8xf32>
    %106 = vector.shape_cast %105 : vector<8x8xf32> to vector<8x8x1xf32>
    "tpu.trace_start"() <{level = 10 : i32, message = "bqk,bke->bqe"}> : () -> ()
    %cst_40 = arith.constant dense<0.000000e+00> : vector<8x8x4xf32>
    %107 = tpu.matmul %104, %98, %cst_40 {dimension_numbers = #tpu.dot_dimension_numbers<[2], [1], [1], [2], [0, 0, 0, 1, 1, 2], [0], [0]>} : vector<8x8x8xf32>, vector<8x8x4xf32>, vector<8x8x4xf32> -> vector<8x8x4xf32>
    "tpu.trace_stop"() : () -> ()
    %108 = tpu.reciprocal %106 : vector<8x8x1xf32> -> vector<8x8x1xf32>
    %109 = vector.broadcast %108 : vector<8x8x1xf32> to vector<8x8x4xf32>
    %110 = arith.mulf %107, %109 : vector<8x8x4xf32>
    %cst_41 = arith.constant dense<0.000000e+00> : vector<8x4xf32>
    %111 = vector.multi_reduction <add>, %110, %cst_41 [1] : vector<8x8x4xf32> to vector<8x4xf32>
    %112 = vector.extract_strided_slice %11 {offsets = [0, 0, 24], sizes = [8, 8, 4], strides = [1, 1, 1]} : vector<8x8x32xf32> to vector<8x8x4xf32>
    %113 = vector.extract_strided_slice %13 {offsets = [0, 0, 24], sizes = [8, 8, 4], strides = [1, 1, 1]} : vector<8x8x32xf32> to vector<8x8x4xf32>
    %114 = vector.extract_strided_slice %15 {offsets = [0, 0, 24], sizes = [8, 8, 4], strides = [1, 1, 1]} : vector<8x8x32xf32> to vector<8x8x4xf32>
    "tpu.trace_start"() <{level = 10 : i32, message = "bqe,bke->bqk"}> : () -> ()
    %cst_42 = arith.constant dense<0.000000e+00> : vector<8x8x8xf32>
    %115 = tpu.matmul %112, %113, %cst_42 {dimension_numbers = #tpu.dot_dimension_numbers<[2], [2], [1], [1], [0, 0, 0, 1, 1, 1], [0], [0]>} : vector<8x8x4xf32>, vector<8x8x4xf32>, vector<8x8x8xf32> -> vector<8x8x8xf32>
    "tpu.trace_stop"() : () -> ()
    %cst_43 = arith.constant dense<0xFF800000> : vector<8x8xf32>
    %116 = vector.multi_reduction <maximumf>, %115, %cst_43 [2] : vector<8x8x8xf32> to vector<8x8xf32>
    %117 = vector.shape_cast %116 : vector<8x8xf32> to vector<8x8x1xf32>
    %118 = vector.broadcast %117 : vector<8x8x1xf32> to vector<8x8x8xf32>
    %119 = arith.subf %115, %118 : vector<8x8x8xf32>
    %120 = math.exp %119 : vector<8x8x8xf32>
    %cst_44 = arith.constant dense<0.000000e+00> : vector<8x8xf32>
    %121 = vector.multi_reduction <add>, %120, %cst_44 [2] : vector<8x8x8xf32> to vector<8x8xf32>
    %122 = vector.shape_cast %121 : vector<8x8xf32> to vector<8x8x1xf32>
    "tpu.trace_start"() <{level = 10 : i32, message = "bqk,bke->bqe"}> : () -> ()
    %cst_45 = arith.constant dense<0.000000e+00> : vector<8x8x4xf32>
    %123 = tpu.matmul %120, %114, %cst_45 {dimension_numbers = #tpu.dot_dimension_numbers<[2], [1], [1], [2], [0, 0, 0, 1, 1, 2], [0], [0]>} : vector<8x8x8xf32>, vector<8x8x4xf32>, vector<8x8x4xf32> -> vector<8x8x4xf32>
    "tpu.trace_stop"() : () -> ()
    %124 = tpu.reciprocal %122 : vector<8x8x1xf32> -> vector<8x8x1xf32>
    %125 = vector.broadcast %124 : vector<8x8x1xf32> to vector<8x8x4xf32>
    %126 = arith.mulf %123, %125 : vector<8x8x4xf32>
    %cst_46 = arith.constant dense<0.000000e+00> : vector<8x4xf32>
    %127 = vector.multi_reduction <add>, %126, %cst_46 [1] : vector<8x8x4xf32> to vector<8x4xf32>
    %128 = vector.extract_strided_slice %11 {offsets = [0, 0, 28], sizes = [8, 8, 4], strides = [1, 1, 1]} : vector<8x8x32xf32> to vector<8x8x4xf32>
    %129 = vector.extract_strided_slice %13 {offsets = [0, 0, 28], sizes = [8, 8, 4], strides = [1, 1, 1]} : vector<8x8x32xf32> to vector<8x8x4xf32>
    %130 = vector.extract_strided_slice %15 {offsets = [0, 0, 28], sizes = [8, 8, 4], strides = [1, 1, 1]} : vector<8x8x32xf32> to vector<8x8x4xf32>
    "tpu.trace_start"() <{level = 10 : i32, message = "bqe,bke->bqk"}> : () -> ()
    %cst_47 = arith.constant dense<0.000000e+00> : vector<8x8x8xf32>
    %131 = tpu.matmul %128, %129, %cst_47 {dimension_numbers = #tpu.dot_dimension_numbers<[2], [2], [1], [1], [0, 0, 0, 1, 1, 1], [0], [0]>} : vector<8x8x4xf32>, vector<8x8x4xf32>, vector<8x8x8xf32> -> vector<8x8x8xf32>
    "tpu.trace_stop"() : () -> ()
    %cst_48 = arith.constant dense<0xFF800000> : vector<8x8xf32>
    %132 = vector.multi_reduction <maximumf>, %131, %cst_48 [2] : vector<8x8x8xf32> to vector<8x8xf32>
    %133 = vector.shape_cast %132 : vector<8x8xf32> to vector<8x8x1xf32>
    %134 = vector.broadcast %133 : vector<8x8x1xf32> to vector<8x8x8xf32>
    %135 = arith.subf %131, %134 : vector<8x8x8xf32>
    %136 = math.exp %135 : vector<8x8x8xf32>
    %cst_49 = arith.constant dense<0.000000e+00> : vector<8x8xf32>
    %137 = vector.multi_reduction <add>, %136, %cst_49 [2] : vector<8x8x8xf32> to vector<8x8xf32>
    %138 = vector.shape_cast %137 : vector<8x8xf32> to vector<8x8x1xf32>
    "tpu.trace_start"() <{level = 10 : i32, message = "bqk,bke->bqe"}> : () -> ()
    %cst_50 = arith.constant dense<0.000000e+00> : vector<8x8x4xf32>
    %139 = tpu.matmul %136, %130, %cst_50 {dimension_numbers = #tpu.dot_dimension_numbers<[2], [1], [1], [2], [0, 0, 0, 1, 1, 2], [0], [0]>} : vector<8x8x8xf32>, vector<8x8x4xf32>, vector<8x8x4xf32> -> vector<8x8x4xf32>
    "tpu.trace_stop"() : () -> ()
    %140 = tpu.reciprocal %138 : vector<8x8x1xf32> -> vector<8x8x1xf32>
    %141 = vector.broadcast %140 : vector<8x8x1xf32> to vector<8x8x4xf32>
    %142 = arith.mulf %139, %141 : vector<8x8x4xf32>
    %cst_51 = arith.constant dense<0.000000e+00> : vector<8x4xf32>
    %143 = vector.multi_reduction <add>, %142, %cst_51 [1] : vector<8x8x4xf32> to vector<8x4xf32>
    %144 = tpu.concatenate %31, %47, %63, %79, %95, %111, %127, %143 in 1 : vector<8x4xf32>, vector<8x4xf32>, vector<8x4xf32>, vector<8x4xf32>, vector<8x4xf32>, vector<8x4xf32>, vector<8x4xf32>, vector<8x4xf32> -> vector<8x32xf32>
    %c0_52 = arith.constant 0 : index
    %c0_53 = arith.constant 0 : index
    %145 = vector.load %arg6[%c0_52, %c0_53] : memref<32x32xf32, #tpu.memory_space<vmem>>, vector<32x32xf32>
    %cst_54 = arith.constant dense<0.000000e+00> : vector<8x32xf32>
    %146 = tpu.matmul %144, %145, %cst_54 {dimension_numbers = #tpu.dot_dimension_numbers<[1], [0], [0], [1], [0, 0, 1, 1], [], []>} : vector<8x32xf32>, vector<32x32xf32>, vector<8x32xf32> -> vector<8x32xf32>
    %cst_55 = arith.constant 1.250000e-01 : f32
    %147 = vector.broadcast %cst_55 : f32 to vector<8x32xf32>
    %148 = arith.mulf %146, %147 : vector<8x32xf32>
    %c0_56 = arith.constant 0 : index
    %c0_57 = arith.constant 0 : index
    %149 = vector.load %arg7[%c0_56, %c0_57] : memref<1x32xf32, #tpu.memory_space<vmem>>, vector<1x32xf32>
    %150 = vector.broadcast %149 : vector<1x32xf32> to vector<8x32xf32>
    %151 = arith.addf %148, %150 : vector<8x32xf32>
    %c0_58 = arith.constant 0 : index
    %c0_59 = arith.constant 0 : index
    %152 = vector.load %arg8[%c0_58, %c0_59] : memref<8x32xf32, #tpu.memory_space<vmem>>, vector<8x32xf32>
    tpu.vector_store %arg8[%c0_58, %c0_59], %151 {strides = array<i32>} : memref<8x32xf32, #tpu.memory_space<vmem>>, vector<8x32xf32>,
    return
  }
  func.func @transform_0(%arg0: i32) -> (i32, i32, i32) {
    %c0_i32 = arith.constant 0 : i32
    %c0_i32_0 = arith.constant 0 : i32
    %c0_i32_1 = arith.constant 0 : i32
    return %arg0, %c0_i32, %c0_i32_0 : i32, i32, i32
  }
  func.func @transform_1(%arg0: i32) -> (i32, i32, i32) {
    %c0_i32 = arith.constant 0 : i32
    %c0_i32_0 = arith.constant 0 : i32
    %c0_i32_1 = arith.constant 0 : i32
    return %arg0, %c0_i32, %c0_i32_0 : i32, i32, i32
  }
  func.func @transform_2(%arg0: i32) -> (i32, i32) {
    %c0_i32 = arith.constant 0 : i32
    %c0_i32_0 = arith.constant 0 : i32
    %c0_i32_1 = arith.constant 0 : i32
    return %c0_i32, %c0_i32_0 : i32, i32
  }
  func.func @transform_3(%arg0: i32) -> (i32, i32) {
    %c0_i32 = arith.constant 0 : i32
    %c0_i32_0 = arith.constant 0 : i32
    %c0_i32_1 = arith.constant 0 : i32
    return %c0_i32, %c0_i32_0 : i32, i32
  }
  func.func @transform_4(%arg0: i32) -> (i32, i32) {
    %c0_i32 = arith.constant 0 : i32
    %c0_i32_0 = arith.constant 0 : i32
    %c0_i32_1 = arith.constant 0 : i32
    return %c0_i32, %c0_i32_0 : i32, i32
  }
  func.func @transform_5(%arg0: i32) -> (i32, i32) {
    %c0_i32 = arith.constant 0 : i32
    %c0_i32_0 = arith.constant 0 : i32
    %c0_i32_1 = arith.constant 0 : i32
    return %c0_i32, %c0_i32_0 : i32, i32
  }
  func.func @transform_6(%arg0: i32) -> (i32, i32) {
    %c0_i32 = arith.constant 0 : i32
    %c0_i32_0 = arith.constant 0 : i32
    %c0_i32_1 = arith.constant 0 : i32
    return %c0_i32, %c0_i32_0 : i32, i32
  }
  func.func @transform_7(%arg0: i32) -> (i32, i32) {
    %c0_i32 = arith.constant 0 : i32
    %c0_i32_0 = arith.constant 0 : i32
    return %arg0, %c0_i32 : i32, i32
  }
}

</mosaic_0001>

<llo_original>
// kernel: tpu_custom_call.1
$region0: #{tpu_custom_call.1}
  #allocation0 [shape = 'u32[]', space=smem, size = 0x4, offset = 0x4, fixed_abs, tag = 'smem constant byte address 0x4 - core index']
  #allocation1 [shape = 'u32[72,128]{1,0:T(1,128)}', space=vmem, size = 0x9000, scoped, tag = 'internal scratch']
  %s0 = inlined_call_operand.hbm [shape: f32[8,8,32], index: 0, kind: input, shape index: {}]
  %s1 = inlined_call_operand.hbm [shape: f32[8,8,32], index: 1, kind: input, shape index: {}]
  %s2 = inlined_call_operand.hbm [shape: f32[32,32], index: 2, kind: input, shape index: {}]
  %s3 = inlined_call_operand.vmem [shape: f32[1,32], index: 3, kind: input, shape index: {}]
  %s4 = inlined_call_operand.hbm [shape: f32[32,64], index: 4, kind: input, shape index: {}]
  %s5 = inlined_call_operand.hbm [shape: f32[32,32], index: 5, kind: input, shape index: {}]
  %s6 = inlined_call_operand.vmem [shape: f32[1,32], index: 6, kind: input, shape index: {}]
  %s7 = inlined_call_operand.hbm [shape: f32[8,32], index: 7, kind: output, shape index: {}]
  %s8 = sld [smem:[#allocation0]]
  $region58: #{tpu_custom_call.1} parent=0
    _
  %s10 = ssub.s32 1, %s8
  %s11 = scalar_select 0, %s10, %s8
  $region1: #{tpu_custom_call.1} parent=0
    #allocation2 [shape = 'u8[32768]{0}', space=vmem, size = 0x8000, scoped, tag = 'input window, operand 0, single buffered']
    #allocation3 [shape = 's32[1]{0}', space=sflag, size = 0x4, scoped, tag = 'scoped memory for tpu_custom_call.1']
    #allocation4 [shape = 's32[1]{0}', space=sflag, size = 0x4, scoped, tag = 'scoped memory for tpu_custom_call.1']
    #allocation5 [shape = 'u8[32768]{0}', space=vmem, size = 0x8000, scoped, tag = 'input window, operand 1, single buffered']
    #allocation6 [shape = 's32[1]{0}', space=sflag, size = 0x4, scoped, tag = 'scoped memory for tpu_custom_call.1']
    #allocation7 [shape = 'u8[16384]{0}', space=vmem, size = 0x4000, scoped, tag = 'input window, operand 2, single buffered']
    #allocation8 [shape = 'u8[16384]{0}', space=vmem, size = 0x4000, scoped, tag = 'input window, operand 4, single buffered']
    #allocation9 [shape = 's32[1]{0}', space=sflag, size = 0x4, scoped, tag = 'scoped memory for tpu_custom_call.1']
    #allocation10 [shape = 'u8[16384]{0}', space=vmem, size = 0x4000, scoped, tag = 'input window, operand 5, single buffered']
    #allocation11 [shape = 'u8[4096]{0}', space=vmem, size = 0x1000, scoped, tag = 'output window, operand 0, single buffered']
    %12 = vsyncpa [#allocation3], 0
    %13 = vsyncpa [#allocation6], 0
    %14 = vsyncpa [#allocation9], 0
    %15 = vsyncpa [#allocation4], 0
    // Predicated region
    $region2: #{tpu_custom_call.1} parent=1 // pred_check
      _
    $region3: #{tpu_custom_call.1} parent=1 // pred_check_branch
      %17 = sbr.rel (0) target = $region5
    $region4: #{tpu_custom_call.1} parent=1 // pred_region
      %19 = vsyncadd [#allocation3], 0
      %s20 = sshll.u32 %s0, 4
      %s21 = int_to_ptr.hbm [resolvable:$true] %s20
      %s22 = sshll.u32 [#allocation2], 4
      %s23 = int_to_ptr.vmem [resolvable:$true] %s22
      %28 = dma.hbm_to_vmem [thread:$0]  %s21, 1024, %s23, [#allocation3], 128, 128, 8
    $region5: #{tpu_custom_call.1} parent=1 // pred_fallthru
      _
    // Predicated region
    $region6: #{tpu_custom_call.1} parent=1 // pred_check
      _
    $region7: #{tpu_custom_call.1} parent=1 // pred_check_branch
      %30 = sbr.rel (0) target = $region9
    $region8: #{tpu_custom_call.1} parent=1 // pred_region
      %32 = vsyncadd [#allocation6], 0
      %s33 = sshll.u32 %s1, 4
      %s34 = int_to_ptr.hbm [resolvable:$true] %s33
      %s35 = sshll.u32 [#allocation5], 4
      %s36 = int_to_ptr.vmem [resolvable:$true] %s35
      %41 = dma.hbm_to_vmem [thread:$0]  %s34, 1024, %s36, [#allocation6], 128, 128, 8
    $region9: #{tpu_custom_call.1} parent=1 // pred_fallthru
      _
    // Predicated region
    $region10: #{tpu_custom_call.1} parent=1 // pred_check
      _
    $region11: #{tpu_custom_call.1} parent=1 // pred_check_branch
      %43 = sbr.rel (0) target = $region13
    $region12: #{tpu_custom_call.1} parent=1 // pred_region
      %45 = vsyncadd [#allocation6], 0
      %s46 = sshll.u32 %s2, 4
      %s47 = int_to_ptr.hbm [resolvable:$true] %s46
      %s48 = sshll.u32 [#allocation7], 4
      %s49 = int_to_ptr.vmem [resolvable:$true] %s48
      %54 = dma.hbm_to_vmem [thread:$0]  %s47, 512, %s49, [#allocation6], 128, 128, 8
    $region13: #{tpu_custom_call.1} parent=1 // pred_fallthru
      _
    // Predicated region
    $region14: #{tpu_custom_call.1} parent=1 // pred_check
      _
    $region15: #{tpu_custom_call.1} parent=1 // pred_check_branch
      %56 = sbr.rel (0) target = $region17
    $region16: #{tpu_custom_call.1} parent=1 // pred_region
      _
    $region17: #{tpu_custom_call.1} parent=1 // pred_fallthru
      _
    // Predicated region
    $region18: #{tpu_custom_call.1} parent=1 // pred_check
      _
    $region19: #{tpu_custom_call.1} parent=1 // pred_check_branch
      %58 = sbr.rel (0) target = $region21
    $region20: #{tpu_custom_call.1} parent=1 // pred_region
      %60 = vsyncadd [#allocation9], 0
      %s61 = sshll.u32 %s4, 4
      %s62 = int_to_ptr.hbm [resolvable:$true] %s61
      %s63 = sshll.u32 [#allocation8], 4
      %s64 = int_to_ptr.vmem [resolvable:$true] %s63
      %69 = dma.hbm_to_vmem [thread:$0]  %s62, 512, %s64, [#allocation9], 128, 128, 8
    $region21: #{tpu_custom_call.1} parent=1 // pred_fallthru
      _
    // Predicated region
    $region22: #{tpu_custom_call.1} parent=1 // pred_check
      _
    $region23: #{tpu_custom_call.1} parent=1 // pred_check_branch
      %71 = sbr.rel (0) target = $region25
    $region24: #{tpu_custom_call.1} parent=1 // pred_region
      %73 = vsyncadd [#allocation9], 0
      %s74 = sshll.u32 %s5, 4
      %s75 = int_to_ptr.hbm [resolvable:$true] %s74
      %s76 = sshll.u32 [#allocation10], 4
      %s77 = int_to_ptr.vmem [resolvable:$true] %s76
      %82 = dma.hbm_to_vmem [thread:$0]  %s75, 512, %s77, [#allocation9], 128, 128, 8
    $region25: #{tpu_custom_call.1} parent=1 // pred_fallthru
      _
    // Predicated region
    $region26: #{tpu_custom_call.1} parent=1 // pred_check
      _
    $region27: #{tpu_custom_call.1} parent=1 // pred_check_branch
      %84 = sbr.rel (0) target = $region29
    $region28: #{tpu_custom_call.1} parent=1 // pred_region
      _
    $region29: #{tpu_custom_call.1} parent=1 // pred_fallthru
      _
    // Predicated region
    $region30: #{tpu_custom_call.1} parent=1 // pred_check
      _
    $region31: #{tpu_custom_call.1} parent=1 // pred_check_branch
      %86 = sbr.rel (0) target = $region33
    $region32: #{tpu_custom_call.1} parent=1 // pred_region
      %88 = dma.done [#allocation3], 1024
    $region33: #{tpu_custom_call.1} parent=1 // pred_fallthru
      _
    // Predicated region
    $region34: #{tpu_custom_call.1} parent=1 // pred_check
      _
    $region35: #{tpu_custom_call.1} parent=1 // pred_check_branch
      %90 = sbr.rel (0) target = $region37
    $region36: #{tpu_custom_call.1} parent=1 // pred_region
      %92 = dma.done [#allocation6], 1024
    $region37: #{tpu_custom_call.1} parent=1 // pred_fallthru
      _
    // Predicated region
    $region38: #{tpu_custom_call.1} parent=1 // pred_check
      _
    $region39: #{tpu_custom_call.1} parent=1 // pred_check_branch
      %94 = sbr.rel (0) target = $region41
    $region40: #{tpu_custom_call.1} parent=1 // pred_region
      %96 = dma.done [#allocation6], 512
    $region41: #{tpu_custom_call.1} parent=1 // pred_fallthru
      _
    // Predicated region
    $region42: #{tpu_custom_call.1} parent=1 // pred_check
      _
    $region43: #{tpu_custom_call.1} parent=1 // pred_check_branch
      %98 = sbr.rel (0) target = $region45
    $region44: #{tpu_custom_call.1} parent=1 // pred_region
      %100 = dma.done [#allocation9], 512
    $region45: #{tpu_custom_call.1} parent=1 // pred_fallthru
      _
    // Predicated region
    $region46: #{tpu_custom_call.1} parent=1 // pred_check
      _
    $region47: #{tpu_custom_call.1} parent=1 // pred_check_branch
      %102 = sbr.rel (0) target = $region49
    $region48: #{tpu_custom_call.1} parent=1 // pred_region
      %104 = dma.done [#allocation9], 512
    $region49: #{tpu_custom_call.1} parent=1 // pred_fallthru
      _
    %v105 = vld [vmem:[#allocation2] sm:$0xff]
    %v106 = vld [vmem:[#allocation2 + $0x8] sm:$0xff]
    %v107 = vld [vmem:[#allocation2 + $0x10] sm:$0xff]
    %v108 = vld [vmem:[#allocation2 + $0x18] sm:$0xff]
    %v109 = vld [vmem:[#allocation2 + $0x20] sm:$0xff]
    %v110 = vld [vmem:[#allocation2 + $0x28] sm:$0xff]
    %v111 = vld [vmem:[#allocation2 + $0x30] sm:$0xff]
    %v112 = vld [vmem:[#allocation2 + $0x38] sm:$0xff]
    %v113 = vld [vmem:[#allocation5] sm:$0xff]
    %v114 = vld [vmem:[#allocation5 + $0x8] sm:$0xff]
    %v115 = vld [vmem:[#allocation5 + $0x10] sm:$0xff]
    %v116 = vld [vmem:[#allocation5 + $0x18] sm:$0xff]
    %v117 = vld [vmem:[#allocation5 + $0x20] sm:$0xff]
    %v118 = vld [vmem:[#allocation5 + $0x28] sm:$0xff]
    %v119 = vld [vmem:[#allocation5 + $0x30] sm:$0xff]
    %v120 = vld [vmem:[#allocation5 + $0x38] sm:$0xff]
    %v121 = vld [vmem:[#allocation7] sm:$0xff]
    %v122 = vld [vmem:[#allocation7 + $0x8] sm:$0xff]
    %v123 = vld [vmem:[#allocation7 + $0x10] sm:$0xff]
    %v124 = vld [vmem:[#allocation7 + $0x18] sm:$0xff]
    %v125 = vld [vmem:[%s3] sm:$0x1]
    %v127 = vperm.slane %v125, 0
    %vm129 = vcmask 261120
    %v131 = vsel %vm129, %v105, 0
    %v134 = vsel %vm129, %v106, 0
    %v137 = vsel %vm129, %v107, 0
    %v140 = vsel %vm129, %v108, 0
    %v143 = vsel %vm129, %v109, 0
    %v146 = vsel %vm129, %v110, 0
    %v149 = vsel %vm129, %v111, 0
    %v152 = vsel %vm129, %v112, 0
    %154 = vmatpush.msra.mxu0 0.0
    %155 = vmatpush.msra.mxu0 0.0
    %156 = vmatpush.msra.mxu0 0.0
    %157 = vmatpush.msra.mxu0 0.0
    %158 = vmatpush.msra.mxu0 0.0
    %159 = vmatpush.msra.mxu0 0.0
    %160 = vmatpush.msra.mxu0 0.0
    %161 = vmatpush.msra.mxu0 0.0
    %162 = vmatpush.msra.mxu0 0.0
    %163 = vmatpush.msra.mxu0 0.0
    %164 = vmatpush.msra.mxu0 0.0
    %165 = vmatpush.msra.mxu0 0.0
    %166 = vmatpush.msra.mxu0 %v124
    %167 = vmatpush.msra.mxu0 %v123
    %168 = vmatpush.msra.mxu0 %v122
    %169 = vmatpush.msra.mxu0 %v121
    %170 = vmatmul.f32.gmra.mxu0 %v131
    %v171 = vpop.f32.mrf.mxu0
    %v172 = vadd.f32 %v127, %v171
    %173 = vmatmul.f32.gmra.mxu0 %v134
    %v174 = vpop.f32.mrf.mxu0
    %v175 = vadd.f32 %v127, %v174
    %176 = vmatmul.f32.gmra.mxu0 %v137
    %v177 = vpop.f32.mrf.mxu0
    %v178 = vadd.f32 %v127, %v177
    %179 = vmatmul.f32.gmra.mxu0 %v140
    %v180 = vpop.f32.mrf.mxu0
    %v181 = vadd.f32 %v127, %v180
    %182 = vmatmul.f32.gmra.mxu0 %v143
    %v183 = vpop.f32.mrf.mxu0
    %v184 = vadd.f32 %v127, %v183
    %185 = vmatmul.f32.gmra.mxu0 %v146
    %v186 = vpop.f32.mrf.mxu0
    %v187 = vadd.f32 %v127, %v186
    %188 = vmatmul.f32.gmra.mxu0 %v149
    %v189 = vpop.f32.mrf.mxu0
    %v190 = vadd.f32 %v127, %v189
    %191 = vmatmul.f32.gmra.mxu0 %v152
    %v192 = vpop.f32.mrf.mxu0
    %v193 = vadd.f32 %v127, %v192
    %194 = vdwg.mxu0
    %v195 = vld [vmem:[#allocation8] sm:$0xff]
    %v196 = vld [vmem:[#allocation8 + $0x8] sm:$0xff]
    %v197 = vld [vmem:[#allocation8 + $0x10] sm:$0xff]
    %v198 = vld [vmem:[#allocation8 + $0x18] sm:$0xff]
    %v200 = vsel %vm129, %v113, 0
    %v203 = vsel %vm129, %v114, 0
    %v206 = vsel %vm129, %v115, 0
    %v209 = vsel %vm129, %v116, 0
    %v212 = vsel %vm129, %v117, 0
    %v215 = vsel %vm129, %v118, 0
    %v218 = vsel %vm129, %v119, 0
    %v221 = vsel %vm129, %v120, 0
    %223 = vmatpush.msra.mxu0 0.0
    %224 = vmatpush.msra.mxu0 0.0
    %225 = vmatpush.msra.mxu0 0.0
    %226 = vmatpush.msra.mxu0 0.0
    %227 = vmatpush.msra.mxu0 0.0
    %228 = vmatpush.msra.mxu0 0.0
    %229 = vmatpush.msra.mxu0 0.0
    %230 = vmatpush.msra.mxu0 0.0
    %231 = vmatpush.msra.mxu0 0.0
    %232 = vmatpush.msra.mxu0 0.0
    %233 = vmatpush.msra.mxu0 0.0
    %234 = vmatpush.msra.mxu0 0.0
    %235 = vmatpush.msra.mxu0 %v198
    %236 = vmatpush.msra.mxu0 %v197
    %237 = vmatpush.msra.mxu0 %v196
    %238 = vmatpush.msra.mxu0 %v195
    %239 = vmatmul.f32.gmra.mxu0 %v200
    %v240 = vpop.f32.mrf.mxu0
    %v241 = vadd.f32 0.0, %v240
    %242 = vmatmul.f32.gmra.mxu0 %v203
    %v243 = vpop.f32.mrf.mxu0
    %v244 = vadd.f32 0.0, %v243
    %245 = vmatmul.f32.gmra.mxu0 %v206
    %v246 = vpop.f32.mrf.mxu0
    %v247 = vadd.f32 0.0, %v246
    %248 = vmatmul.f32.gmra.mxu0 %v209
    %v249 = vpop.f32.mrf.mxu0
    %v250 = vadd.f32 0.0, %v249
    %251 = vmatmul.f32.gmra.mxu0 %v212
    %v252 = vpop.f32.mrf.mxu0
    %v253 = vadd.f32 0.0, %v252
    %254 = vmatmul.f32.gmra.mxu0 %v215
    %v255 = vpop.f32.mrf.mxu0
    %v256 = vadd.f32 0.0, %v255
    %257 = vmatmul.f32.gmra.mxu0 %v218
    %v258 = vpop.f32.mrf.mxu0
    %v259 = vadd.f32 0.0, %v258
    %260 = vmatmul.f32.gmra.mxu0 %v221
    %v261 = vpop.f32.mrf.mxu0
    %v262 = vadd.f32 0.0, %v261
    %263 = vdwg.mxu0
    %vm264 = vcmask 31744
    %v266 = vsel %vm264, %v172, 0
    %v269 = vsel %vm264, %v241, 0
    %271 = vmatpush.xpose.msra.mxu0 0.0
    %272 = vmatpush.xpose.msra.mxu0 0.0
    %273 = vmatpush.xpose.msra.mxu0 0.0
    %274 = vmatpush.xpose.msra.mxu0 0.0
    %275 = vmatpush.xpose.msra.mxu0 0.0
    %276 = vmatpush.xpose.msra.mxu0 0.0
    %277 = vmatpush.xpose.msra.mxu0 0.0
    %278 = vmatpush.xpose.msra.mxu0 0.0
    %279 = vmatpush.xpose.msra.mxu0 0.0
    %280 = vmatpush.xpose.msra.mxu0 0.0
    %281 = vmatpush.xpose.msra.mxu0 0.0
    %282 = vmatpush.xpose.msra.mxu0 0.0
    %283 = vmatpush.xpose.msra.mxu0 0.0
    %284 = vmatpush.xpose.msra.mxu0 0.0
    %285 = vmatpush.xpose.msra.mxu0 0.0
    %286 = vmatpush.xpose.msra.mxu0 %v269
    %287 = vmatmul.f32.gmra.mxu0 %v266
    %v288 = vpop.f32.mrf.mxu0
    %v289 = vadd.f32 0.0, %v288
    %290 = vdwg.mxu0
    %v292 = vsel %vm264, %v175, 0
    %v295 = vsel %vm264, %v244, 0
    %297 = vmatpush.xpose.msra.mxu0 0.0
    %298 = vmatpush.xpose.msra.mxu0 0.0
    %299 = vmatpush.xpose.msra.mxu0 0.0
    %300 = vmatpush.xpose.msra.mxu0 0.0
    %301 = vmatpush.xpose.msra.mxu0 0.0
    %302 = vmatpush.xpose.msra.mxu0 0.0
    %303 = vmatpush.xpose.msra.mxu0 0.0
    %304 = vmatpush.xpose.msra.mxu0 0.0
    %305 = vmatpush.xpose.msra.mxu0 0.0
    %306 = vmatpush.xpose.msra.mxu0 0.0
    %307 = vmatpush.xpose.msra.mxu0 0.0
    %308 = vmatpush.xpose.msra.mxu0 0.0
    %309 = vmatpush.xpose.msra.mxu0 0.0
    %310 = vmatpush.xpose.msra.mxu0 0.0
    %311 = vmatpush.xpose.msra.mxu0 0.0
    %312 = vmatpush.xpose.msra.mxu0 %v295
    %313 = vmatmul.f32.gmra.mxu0 %v292
    %v314 = vpop.f32.mrf.mxu0
    %v315 = vadd.f32 0.0, %v314
    %316 = vdwg.mxu0
    %v318 = vsel %vm264, %v178, 0
    %v321 = vsel %vm264, %v247, 0
    %323 = vmatpush.xpose.msra.mxu0 0.0
    %324 = vmatpush.xpose.msra.mxu0 0.0
    %325 = vmatpush.xpose.msra.mxu0 0.0
    %326 = vmatpush.xpose.msra.mxu0 0.0
    %327 = vmatpush.xpose.msra.mxu0 0.0
    %328 = vmatpush.xpose.msra.mxu0 0.0
    %329 = vmatpush.xpose.msra.mxu0 0.0
    %330 = vmatpush.xpose.msra.mxu0 0.0
    %331 = vmatpush.xpose.msra.mxu0 0.0
    %332 = vmatpush.xpose.msra.mxu0 0.0
    %333 = vmatpush.xpose.msra.mxu0 0.0
    %334 = vmatpush.xpose.msra.mxu0 0.0
    %335 = vmatpush.xpose.msra.mxu0 0.0
    %336 = vmatpush.xpose.msra.mxu0 0.0
    %337 = vmatpush.xpose.msra.mxu0 0.0
    %338 = vmatpush.xpose.msra.mxu0 %v321
    %339 = vmatmul.f32.gmra.mxu0 %v318
    %v340 = vpop.f32.mrf.mxu0
    %v341 = vadd.f32 0.0, %v340
    %342 = vdwg.mxu0
    %v344 = vsel %vm264, %v181, 0
    %v347 = vsel %vm264, %v250, 0
    %349 = vmatpush.xpose.msra.mxu0 0.0
    %350 = vmatpush.xpose.msra.mxu0 0.0
    %351 = vmatpush.xpose.msra.mxu0 0.0
    %352 = vmatpush.xpose.msra.mxu0 0.0
    %353 = vmatpush.xpose.msra.mxu0 0.0
    %354 = vmatpush.xpose.msra.mxu0 0.0
    %355 = vmatpush.xpose.msra.mxu0 0.0
    %356 = vmatpush.xpose.msra.mxu0 0.0
    %357 = vmatpush.xpose.msra.mxu0 0.0
    %358 = vmatpush.xpose.msra.mxu0 0.0
    %359 = vmatpush.xpose.msra.mxu0 0.0
    %360 = vmatpush.xpose.msra.mxu0 0.0
    %361 = vmatpush.xpose.msra.mxu0 0.0
    %362 = vmatpush.xpose.msra.mxu0 0.0
    %363 = vmatpush.xpose.msra.mxu0 0.0
    %364 = vmatpush.xpose.msra.mxu0 %v347
    %365 = vmatmul.f32.gmra.mxu0 %v344
    %v366 = vpop.f32.mrf.mxu0
    %v367 = vadd.f32 0.0, %v366
    %368 = vdwg.mxu0
    %v370 = vsel %vm264, %v184, 0
    %v373 = vsel %vm264, %v253, 0
    %375 = vmatpush.xpose.msra.mxu0 0.0
    %376 = vmatpush.xpose.msra.mxu0 0.0
    %377 = vmatpush.xpose.msra.mxu0 0.0
    %378 = vmatpush.xpose.msra.mxu0 0.0
    %379 = vmatpush.xpose.msra.mxu0 0.0
    %380 = vmatpush.xpose.msra.mxu0 0.0
    %381 = vmatpush.xpose.msra.mxu0 0.0
    %382 = vmatpush.xpose.msra.mxu0 0.0
    %383 = vmatpush.xpose.msra.mxu0 0.0
    %384 = vmatpush.xpose.msra.mxu0 0.0
    %385 = vmatpush.xpose.msra.mxu0 0.0
    %386 = vmatpush.xpose.msra.mxu0 0.0
    %387 = vmatpush.xpose.msra.mxu0 0.0
    %388 = vmatpush.xpose.msra.mxu0 0.0
    %389 = vmatpush.xpose.msra.mxu0 0.0
    %390 = vmatpush.xpose.msra.mxu0 %v373
    %391 = vmatmul.f32.gmra.mxu0 %v370
    %v392 = vpop.f32.mrf.mxu0
    %v393 = vadd.f32 0.0, %v392
    %394 = vdwg.mxu0
    %v396 = vsel %vm264, %v187, 0
    %v399 = vsel %vm264, %v256, 0
    %401 = vmatpush.xpose.msra.mxu0 0.0
    %402 = vmatpush.xpose.msra.mxu0 0.0
    %403 = vmatpush.xpose.msra.mxu0 0.0
    %404 = vmatpush.xpose.msra.mxu0 0.0
    %405 = vmatpush.xpose.msra.mxu0 0.0
    %406 = vmatpush.xpose.msra.mxu0 0.0
    %407 = vmatpush.xpose.msra.mxu0 0.0
    %408 = vmatpush.xpose.msra.mxu0 0.0
    %409 = vmatpush.xpose.msra.mxu0 0.0
    %410 = vmatpush.xpose.msra.mxu0 0.0
    %411 = vmatpush.xpose.msra.mxu0 0.0
    %412 = vmatpush.xpose.msra.mxu0 0.0
    %413 = vmatpush.xpose.msra.mxu0 0.0
    %414 = vmatpush.xpose.msra.mxu0 0.0
    %415 = vmatpush.xpose.msra.mxu0 0.0
    %416 = vmatpush.xpose.msra.mxu0 %v399
    %417 = vmatmul.f32.gmra.mxu0 %v396
    %v418 = vpop.f32.mrf.mxu0
    %v419 = vadd.f32 0.0, %v418
    %420 = vdwg.mxu0
    %v422 = vsel %vm264, %v190, 0
    %v425 = vsel %vm264, %v259, 0
    %427 = vmatpush.xpose.msra.mxu0 0.0
    %428 = vmatpush.xpose.msra.mxu0 0.0
    %429 = vmatpush.xpose.msra.mxu0 0.0
    %430 = vmatpush.xpose.msra.mxu0 0.0
    %431 = vmatpush.xpose.msra.mxu0 0.0
    %432 = vmatpush.xpose.msra.mxu0 0.0
    %433 = vmatpush.xpose.msra.mxu0 0.0
    %434 = vmatpush.xpose.msra.mxu0 0.0
    %435 = vmatpush.xpose.msra.mxu0 0.0
    %436 = vmatpush.xpose.msra.mxu0 0.0
    %437 = vmatpush.xpose.msra.mxu0 0.0
    %438 = vmatpush.xpose.msra.mxu0 0.0
    %439 = vmatpush.xpose.msra.mxu0 0.0
    %440 = vmatpush.xpose.msra.mxu0 0.0
    %441 = vmatpush.xpose.msra.mxu0 0.0
    %442 = vmatpush.xpose.msra.mxu0 %v425
    %443 = vmatmul.f32.gmra.mxu0 %v422
    %v444 = vpop.f32.mrf.mxu0
    %v445 = vadd.f32 0.0, %v444
    %446 = vdwg.mxu0
    %v448 = vsel %vm264, %v193, 0
    %v451 = vsel %vm264, %v262, 0
    %453 = vmatpush.xpose.msra.mxu0 0.0
    %454 = vmatpush.xpose.msra.mxu0 0.0
    %455 = vmatpush.xpose.msra.mxu0 0.0
    %456 = vmatpush.xpose.msra.mxu0 0.0
    %457 = vmatpush.xpose.msra.mxu0 0.0
    %458 = vmatpush.xpose.msra.mxu0 0.0
    %459 = vmatpush.xpose.msra.mxu0 0.0
    %460 = vmatpush.xpose.msra.mxu0 0.0
    %461 = vmatpush.xpose.msra.mxu0 0.0
    %462 = vmatpush.xpose.msra.mxu0 0.0
    %463 = vmatpush.xpose.msra.mxu0 0.0
    %464 = vmatpush.xpose.msra.mxu0 0.0
    %465 = vmatpush.xpose.msra.mxu0 0.0
    %466 = vmatpush.xpose.msra.mxu0 0.0
    %467 = vmatpush.xpose.msra.mxu0 0.0
    %468 = vmatpush.xpose.msra.mxu0 %v451
    %469 = vmatmul.f32.gmra.mxu0 %v448
    %v470 = vpop.f32.mrf.mxu0
    %v471 = vadd.f32 0.0, %v470
    %472 = vdwg.mxu0
    %vm473 = vcmask 64512
    %v474 = vsel %vm473, %v289, -inf
    %475 = vmax.xlane.f32.xlu0 %v474
    %v476 = vpop.xlane.xlu0 %475
    %v477 = vsel %vm473, %v315, -inf
    %478 = vmax.xlane.f32.xlu0 %v477
    %v479 = vpop.xlane.xlu0 %478
    %v480 = vsel %vm473, %v341, -inf
    %481 = vmax.xlane.f32.xlu0 %v480
    %v482 = vpop.xlane.xlu0 %481
    %v483 = vsel %vm473, %v367, -inf
    %484 = vmax.xlane.f32.xlu0 %v483
    %v485 = vpop.xlane.xlu0 %484
    %v486 = vsel %vm473, %v393, -inf
    %487 = vmax.xlane.f32.xlu0 %v486
    %v488 = vpop.xlane.xlu0 %487
    %v489 = vsel %vm473, %v419, -inf
    %490 = vmax.xlane.f32.xlu0 %v489
    %v491 = vpop.xlane.xlu0 %490
    %v492 = vsel %vm473, %v445, -inf
    %493 = vmax.xlane.f32.xlu0 %v492
    %v494 = vpop.xlane.xlu0 %493
    %v495 = vsel %vm473, %v471, -inf
    %496 = vmax.xlane.f32.xlu0 %v495
    %v497 = vpop.xlane.xlu0 %496
    %v498 = vsub.f32 %v289, %v476
    %v499 = vsub.f32 %v315, %v479
    %v500 = vsub.f32 %v341, %v482
    %v501 = vsub.f32 %v367, %v485
    %v502 = vsub.f32 %v393, %v488
    %v503 = vsub.f32 %v419, %v491
    %v504 = vsub.f32 %v445, %v494
    %v505 = vsub.f32 %v471, %v497
    %v506 = vmul.f32 %v498, 1.442695
    %v507 = vpow.pop %v506
    %v508 = vmul.f32 %v499, 1.442695
    %v509 = vpow.pop %v508
    %v510 = vmul.f32 %v500, 1.442695
    %v511 = vpow.pop %v510
    %v512 = vmul.f32 %v501, 1.442695
    %v513 = vpow.pop %v512
    %v514 = vmul.f32 %v502, 1.442695
    %v515 = vpow.pop %v514
    %v516 = vmul.f32 %v503, 1.442695
    %v517 = vpow.pop %v516
    %v518 = vmul.f32 %v504, 1.442695
    %v519 = vpow.pop %v518
    %v520 = vmul.f32 %v505, 1.442695
    %v521 = vpow.pop %v520
    %v522 = vsel %vm473, %v507, 0.0
    %523 = vadd.xlane.f32.xlu0 %v522
    %v524 = vpop.xlane.xlu0 %523
    %v525 = vsel %vm473, %v509, 0.0
    %526 = vadd.xlane.f32.xlu0 %v525
    %v527 = vpop.xlane.xlu0 %526
    %v528 = vsel %vm473, %v511, 0.0
    %529 = vadd.xlane.f32.xlu0 %v528
    %v530 = vpop.xlane.xlu0 %529
    %v531 = vsel %vm473, %v513, 0.0
    %532 = vadd.xlane.f32.xlu0 %v531
    %v533 = vpop.xlane.xlu0 %532
    %v534 = vsel %vm473, %v515, 0.0
    %535 = vadd.xlane.f32.xlu0 %v534
    %v536 = vpop.xlane.xlu0 %535
    %v537 = vsel %vm473, %v517, 0.0
    %538 = vadd.xlane.f32.xlu0 %v537
    %v539 = vpop.xlane.xlu0 %538
    %v540 = vsel %vm473, %v519, 0.0
    %541 = vadd.xlane.f32.xlu0 %v540
    %v542 = vpop.xlane.xlu0 %541
    %v543 = vsel %vm473, %v521, 0.0
    %544 = vadd.xlane.f32.xlu0 %v543
    %v545 = vpop.xlane.xlu0 %544
    %546 = vrot.lane.b32.xlu0 %v241, 96
    %v547 = vpop.permute.xlu0 %546
    %v550 = vsel %vm473, %v507, 0
    %552 = vmatpush.msra.mxu0 0.0
    %553 = vmatpush.msra.mxu0 0.0
    %554 = vmatpush.msra.mxu0 0.0
    %555 = vmatpush.msra.mxu0 0.0
    %556 = vmatpush.msra.mxu0 0.0
    %557 = vmatpush.msra.mxu0 0.0
    %558 = vmatpush.msra.mxu0 0.0
    %559 = vmatpush.msra.mxu0 0.0
    %560 = vmatpush.msra.mxu0 0.0
    %561 = vmatpush.msra.mxu0 0.0
    %562 = vmatpush.msra.mxu0 0.0
    %563 = vmatpush.msra.mxu0 0.0
    %564 = vmatpush.msra.mxu0 0.0
    %565 = vmatpush.msra.mxu0 0.0
    %566 = vmatpush.msra.mxu0 0.0
    %567 = vmatpush.msra.mxu0 %v547
    %568 = vmatmul.f32.gmra.mxu0 %v550
    %v569 = vpop.f32.mrf.mxu0
    %v570 = vadd.f32 0.0, %v569
    %571 = vdwg.mxu0
    %572 = vrot.lane.b32.xlu0 %v244, 96
    %v573 = vpop.permute.xlu0 %572
    %v576 = vsel %vm473, %v509, 0
    %578 = vmatpush.msra.mxu0 0.0
    %579 = vmatpush.msra.mxu0 0.0
    %580 = vmatpush.msra.mxu0 0.0
    %581 = vmatpush.msra.mxu0 0.0
    %582 = vmatpush.msra.mxu0 0.0
    %583 = vmatpush.msra.mxu0 0.0
    %584 = vmatpush.msra.mxu0 0.0
    %585 = vmatpush.msra.mxu0 0.0
    %586 = vmatpush.msra.mxu0 0.0
    %587 = vmatpush.msra.mxu0 0.0
    %588 = vmatpush.msra.mxu0 0.0
    %589 = vmatpush.msra.mxu0 0.0
    %590 = vmatpush.msra.mxu0 0.0
    %591 = vmatpush.msra.mxu0 0.0
    %592 = vmatpush.msra.mxu0 0.0
    %593 = vmatpush.msra.mxu0 %v573
    %594 = vmatmul.f32.gmra.mxu0 %v576
    %v595 = vpop.f32.mrf.mxu0
    %v596 = vadd.f32 0.0, %v595
    %597 = vdwg.mxu0
    %598 = vrot.lane.b32.xlu0 %v247, 96
    %v599 = vpop.permute.xlu0 %598
    %v602 = vsel %vm473, %v511, 0
    %604 = vmatpush.msra.mxu0 0.0
    %605 = vmatpush.msra.mxu0 0.0
    %606 = vmatpush.msra.mxu0 0.0
    %607 = vmatpush.msra.mxu0 0.0
    %608 = vmatpush.msra.mxu0 0.0
    %609 = vmatpush.msra.mxu0 0.0
    %610 = vmatpush.msra.mxu0 0.0
    %611 = vmatpush.msra.mxu0 0.0
    %612 = vmatpush.msra.mxu0 0.0
    %613 = vmatpush.msra.mxu0 0.0
    %614 = vmatpush.msra.mxu0 0.0
    %615 = vmatpush.msra.mxu0 0.0
    %616 = vmatpush.msra.mxu0 0.0
    %617 = vmatpush.msra.mxu0 0.0
    %618 = vmatpush.msra.mxu0 0.0
    %619 = vmatpush.msra.mxu0 %v599
    %620 = vmatmul.f32.gmra.mxu0 %v602
    %v621 = vpop.f32.mrf.mxu0
    %v622 = vadd.f32 0.0, %v621
    %623 = vdwg.mxu0
    %624 = vrot.lane.b32.xlu0 %v250, 96
    %v625 = vpop.permute.xlu0 %624
    %v628 = vsel %vm473, %v513, 0
    %630 = vmatpush.msra.mxu0 0.0
    %631 = vmatpush.msra.mxu0 0.0
    %632 = vmatpush.msra.mxu0 0.0
    %633 = vmatpush.msra.mxu0 0.0
    %634 = vmatpush.msra.mxu0 0.0
    %635 = vmatpush.msra.mxu0 0.0
    %636 = vmatpush.msra.mxu0 0.0
    %637 = vmatpush.msra.mxu0 0.0
    %638 = vmatpush.msra.mxu0 0.0
    %639 = vmatpush.msra.mxu0 0.0
    %640 = vmatpush.msra.mxu0 0.0
    %641 = vmatpush.msra.mxu0 0.0
    %642 = vmatpush.msra.mxu0 0.0
    %643 = vmatpush.msra.mxu0 0.0
    %644 = vmatpush.msra.mxu0 0.0
    %645 = vmatpush.msra.mxu0 %v625
    %646 = vmatmul.f32.gmra.mxu0 %v628
    %v647 = vpop.f32.mrf.mxu0
    %v648 = vadd.f32 0.0, %v647
    %649 = vdwg.mxu0
    %650 = vrot.lane.b32.xlu0 %v253, 96
    %v651 = vpop.permute.xlu0 %650
    %v654 = vsel %vm473, %v515, 0
    %656 = vmatpush.msra.mxu0 0.0
    %657 = vmatpush.msra.mxu0 0.0
    %658 = vmatpush.msra.mxu0 0.0
    %659 = vmatpush.msra.mxu0 0.0
    %660 = vmatpush.msra.mxu0 0.0
    %661 = vmatpush.msra.mxu0 0.0
    %662 = vmatpush.msra.mxu0 0.0
    %663 = vmatpush.msra.mxu0 0.0
    %664 = vmatpush.msra.mxu0 0.0
    %665 = vmatpush.msra.mxu0 0.0
    %666 = vmatpush.msra.mxu0 0.0
    %667 = vmatpush.msra.mxu0 0.0
    %668 = vmatpush.msra.mxu0 0.0
    %669 = vmatpush.msra.mxu0 0.0
    %670 = vmatpush.msra.mxu0 0.0
    %671 = vmatpush.msra.mxu0 %v651
    %672 = vmatmul.f32.gmra.mxu0 %v654
    %v673 = vpop.f32.mrf.mxu0
    %v674 = vadd.f32 0.0, %v673
    %675 = vdwg.mxu0
    %676 = vrot.lane.b32.xlu0 %v256, 96
    %v677 = vpop.permute.xlu0 %676
    %v680 = vsel %vm473, %v517, 0
    %682 = vmatpush.msra.mxu0 0.0
    %683 = vmatpush.msra.mxu0 0.0
    %684 = vmatpush.msra.mxu0 0.0
    %685 = vmatpush.msra.mxu0 0.0
    %686 = vmatpush.msra.mxu0 0.0
    %687 = vmatpush.msra.mxu0 0.0
    %688 = vmatpush.msra.mxu0 0.0
    %689 = vmatpush.msra.mxu0 0.0
    %690 = vmatpush.msra.mxu0 0.0
    %691 = vmatpush.msra.mxu0 0.0
    %692 = vmatpush.msra.mxu0 0.0
    %693 = vmatpush.msra.mxu0 0.0
    %694 = vmatpush.msra.mxu0 0.0
    %695 = vmatpush.msra.mxu0 0.0
    %696 = vmatpush.msra.mxu0 0.0
    %697 = vmatpush.msra.mxu0 %v677
    %698 = vmatmul.f32.gmra.mxu0 %v680
    %v699 = vpop.f32.mrf.mxu0
    %v700 = vadd.f32 0.0, %v699
    %701 = vdwg.mxu0
    %702 = vrot.lane.b32.xlu0 %v259, 96
    %v703 = vpop.permute.xlu0 %702
    %v706 = vsel %vm473, %v519, 0
    %708 = vmatpush.msra.mxu0 0.0
    %709 = vmatpush.msra.mxu0 0.0
    %710 = vmatpush.msra.mxu0 0.0
    %711 = vmatpush.msra.mxu0 0.0
    %712 = vmatpush.msra.mxu0 0.0
    %713 = vmatpush.msra.mxu0 0.0
    %714 = vmatpush.msra.mxu0 0.0
    %715 = vmatpush.msra.mxu0 0.0
    %716 = vmatpush.msra.mxu0 0.0
    %717 = vmatpush.msra.mxu0 0.0
    %718 = vmatpush.msra.mxu0 0.0
    %719 = vmatpush.msra.mxu0 0.0
    %720 = vmatpush.msra.mxu0 0.0
    %721 = vmatpush.msra.mxu0 0.0
    %722 = vmatpush.msra.mxu0 0.0
    %723 = vmatpush.msra.mxu0 %v703
    %724 = vmatmul.f32.gmra.mxu0 %v706
    %v725 = vpop.f32.mrf.mxu0
    %v726 = vadd.f32 0.0, %v725
    %727 = vdwg.mxu0
    %728 = vrot.lane.b32.xlu0 %v262, 96
    %v729 = vpop.permute.xlu0 %728
    %v732 = vsel %vm473, %v521, 0
    %734 = vmatpush.msra.mxu0 0.0
    %735 = vmatpush.msra.mxu0 0.0
    %736 = vmatpush.msra.mxu0 0.0
    %737 = vmatpush.msra.mxu0 0.0
    %738 = vmatpush.msra.mxu0 0.0
    %739 = vmatpush.msra.mxu0 0.0
    %740 = vmatpush.msra.mxu0 0.0
    %741 = vmatpush.msra.mxu0 0.0
    %742 = vmatpush.msra.mxu0 0.0
    %743 = vmatpush.msra.mxu0 0.0
    %744 = vmatpush.msra.mxu0 0.0
    %745 = vmatpush.msra.mxu0 0.0
    %746 = vmatpush.msra.mxu0 0.0
    %747 = vmatpush.msra.mxu0 0.0
    %748 = vmatpush.msra.mxu0 0.0
    %749 = vmatpush.msra.mxu0 %v729
    %750 = vmatmul.f32.gmra.mxu0 %v732
    %v751 = vpop.f32.mrf.mxu0
    %v752 = vadd.f32 0.0, %v751
    %753 = vdwg.mxu0
    %v754 = vrcp.pop %v524
    %v755 = vmul.f32 %v524, %v754
    %v756 = vsub.f32 1.0, %v755
    %v757 = vmul.f32 %v754, %v756
    %v758 = vadd.f32 %v754, %v757
    %vm759 = vweird.f32 %v524
    %vm760 = vweird.f32 %v754
    %vm761 = vmor %vm759, %vm760
    %v762 = vsel %vm761, %v754, %v758
    %v763 = vand.u32 2147483647, %v524
    %vm764 = vcmp.eq.f32.partialorder %v763, 8.507059e+37
    %v765 = vand.u32 %v524, 2147483648
    %v766 = vor.u32 1.1754944e-38, %v765
    %v767 = vsel %vm764, %v766, %v762
    %v768 = vrcp.pop %v527
    %v769 = vmul.f32 %v527, %v768
    %v770 = vsub.f32 1.0, %v769
    %v771 = vmul.f32 %v768, %v770
    %v772 = vadd.f32 %v768, %v771
    %vm773 = vweird.f32 %v527
    %vm774 = vweird.f32 %v768
    %vm775 = vmor %vm773, %vm774
    %v776 = vsel %vm775, %v768, %v772
    %v777 = vand.u32 2147483647, %v527
    %vm778 = vcmp.eq.f32.partialorder %v777, 8.507059e+37
    %v779 = vand.u32 %v527, 2147483648
    %v780 = vor.u32 1.1754944e-38, %v779
    %v781 = vsel %vm778, %v780, %v776
    %v782 = vrcp.pop %v530
    %v783 = vmul.f32 %v530, %v782
    %v784 = vsub.f32 1.0, %v783
    %v785 = vmul.f32 %v782, %v784
    %v786 = vadd.f32 %v782, %v785
    %vm787 = vweird.f32 %v530
    %vm788 = vweird.f32 %v782
    %vm789 = vmor %vm787, %vm788
    %v790 = vsel %vm789, %v782, %v786
    %v791 = vand.u32 2147483647, %v530
    %vm792 = vcmp.eq.f32.partialorder %v791, 8.507059e+37
    %v793 = vand.u32 %v530, 2147483648
    %v794 = vor.u32 1.1754944e-38, %v793
    %v795 = vsel %vm792, %v794, %v790
    %v796 = vrcp.pop %v533
    %v797 = vmul.f32 %v533, %v796
    %v798 = vsub.f32 1.0, %v797
    %v799 = vmul.f32 %v796, %v798
    %v800 = vadd.f32 %v796, %v799
    %vm801 = vweird.f32 %v533
    %vm802 = vweird.f32 %v796
    %vm803 = vmor %vm801, %vm802
    %v804 = vsel %vm803, %v796, %v800
    %v805 = vand.u32 2147483647, %v533
    %vm806 = vcmp.eq.f32.partialorder %v805, 8.507059e+37
    %v807 = vand.u32 %v533, 2147483648
    %v808 = vor.u32 1.1754944e-38, %v807
    %v809 = vsel %vm806, %v808, %v804
    %v810 = vrcp.pop %v536
    %v811 = vmul.f32 %v536, %v810
    %v812 = vsub.f32 1.0, %v811
    %v813 = vmul.f32 %v810, %v812
    %v814 = vadd.f32 %v810, %v813
    %vm815 = vweird.f32 %v536
    %vm816 = vweird.f32 %v810
    %vm817 = vmor %vm815, %vm816
    %v818 = vsel %vm817, %v810, %v814
    %v819 = vand.u32 2147483647, %v536
    %vm820 = vcmp.eq.f32.partialorder %v819, 8.507059e+37
    %v821 = vand.u32 %v536, 2147483648
    %v822 = vor.u32 1.1754944e-38, %v821
    %v823 = vsel %vm820, %v822, %v818
    %v824 = vrcp.pop %v539
    %v825 = vmul.f32 %v539, %v824
    %v826 = vsub.f32 1.0, %v825
    %v827 = vmul.f32 %v824, %v826
    %v828 = vadd.f32 %v824, %v827
    %vm829 = vweird.f32 %v539
    %vm830 = vweird.f32 %v824
    %vm831 = vmor %vm829, %vm830
    %v832 = vsel %vm831, %v824, %v828
    %v833 = vand.u32 2147483647, %v539
    %vm834 = vcmp.eq.f32.partialorder %v833, 8.507059e+37
    %v835 = vand.u32 %v539, 2147483648
    %v836 = vor.u32 1.1754944e-38, %v835
    %v837 = vsel %vm834, %v836, %v832
    %v838 = vrcp.pop %v542
    %v839 = vmul.f32 %v542, %v838
    %v840 = vsub.f32 1.0, %v839
    %v841 = vmul.f32 %v838, %v840
    %v842 = vadd.f32 %v838, %v841
    %vm843 = vweird.f32 %v542
    %vm844 = vweird.f32 %v838
    %vm845 = vmor %vm843, %vm844
    %v846 = vsel %vm845, %v838, %v842
    %v847 = vand.u32 2147483647, %v542
    %vm848 = vcmp.eq.f32.partialorder %v847, 8.507059e+37
    %v849 = vand.u32 %v542, 2147483648
    %v850 = vor.u32 1.1754944e-38, %v849
    %v851 = vsel %vm848, %v850, %v846
    %v852 = vrcp.pop %v545
    %v853 = vmul.f32 %v545, %v852
    %v854 = vsub.f32 1.0, %v853
    %v855 = vmul.f32 %v852, %v854
    %v856 = vadd.f32 %v852, %v855
    %vm857 = vweird.f32 %v545
    %vm858 = vweird.f32 %v852
    %vm859 = vmor %vm857, %vm858
    %v860 = vsel %vm859, %v852, %v856
    %v861 = vand.u32 2147483647, %v545
    %vm862 = vcmp.eq.f32.partialorder %v861, 8.507059e+37
    %v863 = vand.u32 %v545, 2147483648
    %v864 = vor.u32 1.1754944e-38, %v863
    %v865 = vsel %vm862, %v864, %v860
    %v866 = vmul.f32 %v570, %v767
    %v867 = vmul.f32 %v596, %v781
    %v868 = vmul.f32 %v622, %v795
    %v869 = vmul.f32 %v648, %v809
    %v870 = vmul.f32 %v674, %v823
    %v871 = vmul.f32 %v700, %v837
    %v872 = vmul.f32 %v726, %v851
    %v873 = vmul.f32 %v752, %v865
    %v874 = vsel %vm264, %v866, 0.0
    %v875 = vrot.slane %v874, 4
    %v876 = vadd.f32 %v874, %v875
    %v877 = vrot.slane %v876, 2
    %v878 = vadd.f32 %v876, %v877
    %v879 = vrot.slane %v878, 1
    %v880 = vadd.f32 %v878, %v879
    %v881 = vsel %vm264, %v867, 0.0
    %v882 = vrot.slane %v881, 4
    %v883 = vadd.f32 %v881, %v882
    %v884 = vrot.slane %v883, 2
    %v885 = vadd.f32 %v883, %v884
    %v886 = vrot.slane %v885, 1
    %v887 = vadd.f32 %v885, %v886
    %v888 = vsel %vm264, %v868, 0.0
    %v889 = vrot.slane %v888, 4
    %v890 = vadd.f32 %v888, %v889
    %v891 = vrot.slane %v890, 2
    %v892 = vadd.f32 %v890, %v891
    %v893 = vrot.slane %v892, 1
    %v894 = vadd.f32 %v892, %v893
    %v895 = vsel %vm264, %v869, 0.0
    %v896 = vrot.slane %v895, 4
    %v897 = vadd.f32 %v895, %v896
    %v898 = vrot.slane %v897, 2
    %v899 = vadd.f32 %v897, %v898
    %v900 = vrot.slane %v899, 1
    %v901 = vadd.f32 %v899, %v900
    %v902 = vsel %vm264, %v870, 0.0
    %v903 = vrot.slane %v902, 4
    %v904 = vadd.f32 %v902, %v903
    %v905 = vrot.slane %v904, 2
    %v906 = vadd.f32 %v904, %v905
    %v907 = vrot.slane %v906, 1
    %v908 = vadd.f32 %v906, %v907
    %v909 = vsel %vm264, %v871, 0.0
    %v910 = vrot.slane %v909, 4
    %v911 = vadd.f32 %v909, %v910
    %v912 = vrot.slane %v911, 2
    %v913 = vadd.f32 %v911, %v912
    %v914 = vrot.slane %v913, 1
    %v915 = vadd.f32 %v913, %v914
    %v916 = vsel %vm264, %v872, 0.0
    %v917 = vrot.slane %v916, 4
    %v918 = vadd.f32 %v916, %v917
    %v919 = vrot.slane %v918, 2
    %v920 = vadd.f32 %v918, %v919
    %v921 = vrot.slane %v920, 1
    %v922 = vadd.f32 %v920, %v921
    %v923 = vsel %vm264, %v873, 0.0
    %v924 = vrot.slane %v923, 4
    %v925 = vadd.f32 %v923, %v924
    %v926 = vrot.slane %v925, 2
    %v927 = vadd.f32 %v925, %v926
    %v928 = vrot.slane %v927, 1
    %v929 = vadd.f32 %v927, %v928
    %930 = vrot.lane.b32.xlu0 %v172, 124
    %v931 = vpop.permute.xlu0 %930
    %932 = vrot.lane.b32.xlu0 %v241, 124
    %v933 = vpop.permute.xlu0 %932
    %v934 = vsel %vm264, %v931, 0
    %v936 = vsel %vm264, %v933, 0
    %938 = vmatpush.xpose.msra.mxu0 0.0
    %939 = vmatpush.xpose.msra.mxu0 0.0
    %940 = vmatpush.xpose.msra.mxu0 0.0
    %941 = vmatpush.xpose.msra.mxu0 0.0
    %942 = vmatpush.xpose.msra.mxu0 0.0
    %943 = vmatpush.xpose.msra.mxu0 0.0
    %944 = vmatpush.xpose.msra.mxu0 0.0
    %945 = vmatpush.xpose.msra.mxu0 0.0
    %946 = vmatpush.xpose.msra.mxu0 0.0
    %947 = vmatpush.xpose.msra.mxu0 0.0
    %948 = vmatpush.xpose.msra.mxu0 0.0
    %949 = vmatpush.xpose.msra.mxu0 0.0
    %950 = vmatpush.xpose.msra.mxu0 0.0
    %951 = vmatpush.xpose.msra.mxu0 0.0
    %952 = vmatpush.xpose.msra.mxu0 0.0
    %953 = vmatpush.xpose.msra.mxu0 %v936
    %954 = vmatmul.f32.gmra.mxu0 %v934
    %v955 = vpop.f32.mrf.mxu0
    %v956 = vadd.f32 0.0, %v955
    %957 = vdwg.mxu0
    %958 = vrot.lane.b32.xlu0 %v175, 124
    %v959 = vpop.permute.xlu0 %958
    %960 = vrot.lane.b32.xlu0 %v244, 124
    %v961 = vpop.permute.xlu0 %960
    %v962 = vsel %vm264, %v959, 0
    %v964 = vsel %vm264, %v961, 0
    %966 = vmatpush.xpose.msra.mxu0 0.0
    %967 = vmatpush.xpose.msra.mxu0 0.0
    %968 = vmatpush.xpose.msra.mxu0 0.0
    %969 = vmatpush.xpose.msra.mxu0 0.0
    %970 = vmatpush.xpose.msra.mxu0 0.0
    %971 = vmatpush.xpose.msra.mxu0 0.0
    %972 = vmatpush.xpose.msra.mxu0 0.0
    %973 = vmatpush.xpose.msra.mxu0 0.0
    %974 = vmatpush.xpose.msra.mxu0 0.0
    %975 = vmatpush.xpose.msra.mxu0 0.0
    %976 = vmatpush.xpose.msra.mxu0 0.0
    %977 = vmatpush.xpose.msra.mxu0 0.0
    %978 = vmatpush.xpose.msra.mxu0 0.0
    %979 = vmatpush.xpose.msra.mxu0 0.0
    %980 = vmatpush.xpose.msra.mxu0 0.0
    %981 = vmatpush.xpose.msra.mxu0 %v964
    %982 = vmatmul.f32.gmra.mxu0 %v962
    %v983 = vpop.f32.mrf.mxu0
    %v984 = vadd.f32 0.0, %v983
    %985 = vdwg.mxu0
    %986 = vrot.lane.b32.xlu0 %v178, 124
    %v987 = vpop.permute.xlu0 %986
    %988 = vrot.lane.b32.xlu0 %v247, 124
    %v989 = vpop.permute.xlu0 %988
    %v990 = vsel %vm264, %v987, 0
    %v992 = vsel %vm264, %v989, 0
    %994 = vmatpush.xpose.msra.mxu0 0.0
    %995 = vmatpush.xpose.msra.mxu0 0.0
    %996 = vmatpush.xpose.msra.mxu0 0.0
    %997 = vmatpush.xpose.msra.mxu0 0.0
    %998 = vmatpush.xpose.msra.mxu0 0.0
    %999 = vmatpush.xpose.msra.mxu0 0.0
    %1000 = vmatpush.xpose.msra.mxu0 0.0
    %1001 = vmatpush.xpose.msra.mxu0 0.0
    %1002 = vmatpush.xpose.msra.mxu0 0.0
    %1003 = vmatpush.xpose.msra.mxu0 0.0
    %1004 = vmatpush.xpose.msra.mxu0 0.0
    %1005 = vmatpush.xpose.msra.mxu0 0.0
    %1006 = vmatpush.xpose.msra.mxu0 0.0
    %1007 = vmatpush.xpose.msra.mxu0 0.0
    %1008 = vmatpush.xpose.msra.mxu0 0.0
    %1009 = vmatpush.xpose.msra.mxu0 %v992
    %1010 = vmatmul.f32.gmra.mxu0 %v990
    %v1011 = vpop.f32.mrf.mxu0
    %v1012 = vadd.f32 0.0, %v1011
    %1013 = vdwg.mxu0
    %1014 = vrot.lane.b32.xlu0 %v181, 124
    %v1015 = vpop.permute.xlu0 %1014
    %1016 = vrot.lane.b32.xlu0 %v250, 124
    %v1017 = vpop.permute.xlu0 %1016
    %v1018 = vsel %vm264, %v1015, 0
    %v1020 = vsel %vm264, %v1017, 0
    %1022 = vmatpush.xpose.msra.mxu0 0.0
    %1023 = vmatpush.xpose.msra.mxu0 0.0
    %1024 = vmatpush.xpose.msra.mxu0 0.0
    %1025 = vmatpush.xpose.msra.mxu0 0.0
    %1026 = vmatpush.xpose.msra.mxu0 0.0
    %1027 = vmatpush.xpose.msra.mxu0 0.0
    %1028 = vmatpush.xpose.msra.mxu0 0.0
    %1029 = vmatpush.xpose.msra.mxu0 0.0
    %1030 = vmatpush.xpose.msra.mxu0 0.0
    %1031 = vmatpush.xpose.msra.mxu0 0.0
    %1032 = vmatpush.xpose.msra.mxu0 0.0
    %1033 = vmatpush.xpose.msra.mxu0 0.0
    %1034 = vmatpush.xpose.msra.mxu0 0.0
    %1035 = vmatpush.xpose.msra.mxu0 0.0
    %1036 = vmatpush.xpose.msra.mxu0 0.0
    %1037 = vmatpush.xpose.msra.mxu0 %v1020
    %1038 = vmatmul.f32.gmra.mxu0 %v1018
    %v1039 = vpop.f32.mrf.mxu0
    %v1040 = vadd.f32 0.0, %v1039
    %1041 = vdwg.mxu0
    %1042 = vrot.lane.b32.xlu0 %v184, 124
    %v1043 = vpop.permute.xlu0 %1042
    %1044 = vrot.lane.b32.xlu0 %v253, 124
    %v1045 = vpop.permute.xlu0 %1044
    %v1046 = vsel %vm264, %v1043, 0
    %v1048 = vsel %vm264, %v1045, 0
    %1050 = vmatpush.xpose.msra.mxu0 0.0
    %1051 = vmatpush.xpose.msra.mxu0 0.0
    %1052 = vmatpush.xpose.msra.mxu0 0.0
    %1053 = vmatpush.xpose.msra.mxu0 0.0
    %1054 = vmatpush.xpose.msra.mxu0 0.0
    %1055 = vmatpush.xpose.msra.mxu0 0.0
    %1056 = vmatpush.xpose.msra.mxu0 0.0
    %1057 = vmatpush.xpose.msra.mxu0 0.0
    %1058 = vmatpush.xpose.msra.mxu0 0.0
    %1059 = vmatpush.xpose.msra.mxu0 0.0
    %1060 = vmatpush.xpose.msra.mxu0 0.0
    %1061 = vmatpush.xpose.msra.mxu0 0.0
    %1062 = vmatpush.xpose.msra.mxu0 0.0
    %1063 = vmatpush.xpose.msra.mxu0 0.0
    %1064 = vmatpush.xpose.msra.mxu0 0.0
    %1065 = vmatpush.xpose.msra.mxu0 %v1048
    %1066 = vmatmul.f32.gmra.mxu0 %v1046
    %v1067 = vpop.f32.mrf.mxu0
    %v1068 = vadd.f32 0.0, %v1067
    %1069 = vdwg.mxu0
    %1070 = vrot.lane.b32.xlu0 %v187, 124
    %v1071 = vpop.permute.xlu0 %1070
    %1072 = vrot.lane.b32.xlu0 %v256, 124
    %v1073 = vpop.permute.xlu0 %1072
    %v1074 = vsel %vm264, %v1071, 0
    %v1076 = vsel %vm264, %v1073, 0
    %1078 = vmatpush.xpose.msra.mxu0 0.0
    %1079 = vmatpush.xpose.msra.mxu0 0.0
    %1080 = vmatpush.xpose.msra.mxu0 0.0
    %1081 = vmatpush.xpose.msra.mxu0 0.0
    %1082 = vmatpush.xpose.msra.mxu0 0.0
    %1083 = vmatpush.xpose.msra.mxu0 0.0
    %1084 = vmatpush.xpose.msra.mxu0 0.0
    %1085 = vmatpush.xpose.msra.mxu0 0.0
    %1086 = vmatpush.xpose.msra.mxu0 0.0
    %1087 = vmatpush.xpose.msra.mxu0 0.0
    %1088 = vmatpush.xpose.msra.mxu0 0.0
    %1089 = vmatpush.xpose.msra.mxu0 0.0
    %1090 = vmatpush.xpose.msra.mxu0 0.0
    %1091 = vmatpush.xpose.msra.mxu0 0.0
    %1092 = vmatpush.xpose.msra.mxu0 0.0
    %1093 = vmatpush.xpose.msra.mxu0 %v1076
    %1094 = vmatmul.f32.gmra.mxu0 %v1074
    %v1095 = vpop.f32.mrf.mxu0
    %v1096 = vadd.f32 0.0, %v1095
    %1097 = vdwg.mxu0
    %1098 = vrot.lane.b32.xlu0 %v190, 124
    %v1099 = vpop.permute.xlu0 %1098
    %1100 = vrot.lane.b32.xlu0 %v259, 124
    %v1101 = vpop.permute.xlu0 %1100
    %v1102 = vsel %vm264, %v1099, 0
    %v1104 = vsel %vm264, %v1101, 0
    %1106 = vmatpush.xpose.msra.mxu0 0.0
    %1107 = vmatpush.xpose.msra.mxu0 0.0
    %1108 = vmatpush.xpose.msra.mxu0 0.0
    %1109 = vmatpush.xpose.msra.mxu0 0.0
    %1110 = vmatpush.xpose.msra.mxu0 0.0
    %1111 = vmatpush.xpose.msra.mxu0 0.0
    %1112 = vmatpush.xpose.msra.mxu0 0.0
    %1113 = vmatpush.xpose.msra.mxu0 0.0
    %1114 = vmatpush.xpose.msra.mxu0 0.0
    %1115 = vmatpush.xpose.msra.mxu0 0.0
    %1116 = vmatpush.xpose.msra.mxu0 0.0
    %1117 = vmatpush.xpose.msra.mxu0 0.0
    %1118 = vmatpush.xpose.msra.mxu0 0.0
    %1119 = vmatpush.xpose.msra.mxu0 0.0
    %1120 = vmatpush.xpose.msra.mxu0 0.0
    %1121 = vmatpush.xpose.msra.mxu0 %v1104
    %1122 = vmatmul.f32.gmra.mxu0 %v1102
    %v1123 = vpop.f32.mrf.mxu0
    %v1124 = vadd.f32 0.0, %v1123
    %1125 = vdwg.mxu0
    %1126 = vrot.lane.b32.xlu0 %v193, 124
    %v1127 = vpop.permute.xlu0 %1126
    %1128 = vrot.lane.b32.xlu0 %v262, 124
    %v1129 = vpop.permute.xlu0 %1128
    %v1130 = vsel %vm264, %v1127, 0
    %v1132 = vsel %vm264, %v1129, 0
    %1134 = vmatpush.xpose.msra.mxu0 0.0
    %1135 = vmatpush.xpose.msra.mxu0 0.0
    %1136 = vmatpush.xpose.msra.mxu0 0.0
    %1137 = vmatpush.xpose.msra.mxu0 0.0
    %1138 = vmatpush.xpose.msra.mxu0 0.0
    %1139 = vmatpush.xpose.msra.mxu0 0.0
    %1140 = vmatpush.xpose.msra.mxu0 0.0
    %1141 = vmatpush.xpose.msra.mxu0 0.0
    %1142 = vmatpush.xpose.msra.mxu0 0.0
    %1143 = vmatpush.xpose.msra.mxu0 0.0
    %1144 = vmatpush.xpose.msra.mxu0 0.0
    %1145 = vmatpush.xpose.msra.mxu0 0.0
    %1146 = vmatpush.xpose.msra.mxu0 0.0
    %1147 = vmatpush.xpose.msra.mxu0 0.0
    %1148 = vmatpush.xpose.msra.mxu0 0.0
    %1149 = vmatpush.xpose.msra.mxu0 %v1132
    %1150 = vmatmul.f32.gmra.mxu0 %v1130
    %v1151 = vpop.f32.mrf.mxu0
    %v1152 = vadd.f32 0.0, %v1151
    %1153 = vdwg.mxu0
    %v1154 = vsel %vm473, %v956, -inf
    %1155 = vmax.xlane.f32.xlu0 %v1154
    %v1156 = vpop.xlane.xlu0 %1155
    %v1157 = vsel %vm473, %v984, -inf
    %1158 = vmax.xlane.f32.xlu0 %v1157
    %v1159 = vpop.xlane.xlu0 %1158
    %v1160 = vsel %vm473, %v1012, -inf
    %1161 = vmax.xlane.f32.xlu0 %v1160
    %v1162 = vpop.xlane.xlu0 %1161
    %v1163 = vsel %vm473, %v1040, -inf
    %1164 = vmax.xlane.f32.xlu0 %v1163
    %v1165 = vpop.xlane.xlu0 %1164
    %v1166 = vsel %vm473, %v1068, -inf
    %1167 = vmax.xlane.f32.xlu0 %v1166
    %v1168 = vpop.xlane.xlu0 %1167
    %v1169 = vsel %vm473, %v1096, -inf
    %1170 = vmax.xlane.f32.xlu0 %v1169
    %v1171 = vpop.xlane.xlu0 %1170
    %v1172 = vsel %vm473, %v1124, -inf
    %1173 = vmax.xlane.f32.xlu0 %v1172
    %v1174 = vpop.xlane.xlu0 %1173
    %v1175 = vsel %vm473, %v1152, -inf
    %1176 = vmax.xlane.f32.xlu0 %v1175
    %v1177 = vpop.xlane.xlu0 %1176
    %v1178 = vsub.f32 %v956, %v1156
    %v1179 = vsub.f32 %v984, %v1159
    %v1180 = vsub.f32 %v1012, %v1162
    %v1181 = vsub.f32 %v1040, %v1165
    %v1182 = vsub.f32 %v1068, %v1168
    %v1183 = vsub.f32 %v1096, %v1171
    %v1184 = vsub.f32 %v1124, %v1174
    %v1185 = vsub.f32 %v1152, %v1177
    %v1186 = vmul.f32 %v1178, 1.442695
    %v1187 = vpow.pop %v1186
    %v1188 = vmul.f32 %v1179, 1.442695
    %v1189 = vpow.pop %v1188
    %v1190 = vmul.f32 %v1180, 1.442695
    %v1191 = vpow.pop %v1190
    %v1192 = vmul.f32 %v1181, 1.442695
    %v1193 = vpow.pop %v1192
    %v1194 = vmul.f32 %v1182, 1.442695
    %v1195 = vpow.pop %v1194
    %v1196 = vmul.f32 %v1183, 1.442695
    %v1197 = vpow.pop %v1196
    %v1198 = vmul.f32 %v1184, 1.442695
    %v1199 = vpow.pop %v1198
    %v1200 = vmul.f32 %v1185, 1.442695
    %v1201 = vpow.pop %v1200
    %v1202 = vsel %vm473, %v1187, 0.0
    %1203 = vadd.xlane.f32.xlu0 %v1202
    %v1204 = vpop.xlane.xlu0 %1203
    %v1205 = vsel %vm473, %v1189, 0.0
    %1206 = vadd.xlane.f32.xlu0 %v1205
    %v1207 = vpop.xlane.xlu0 %1206
    %v1208 = vsel %vm473, %v1191, 0.0
    %1209 = vadd.xlane.f32.xlu0 %v1208
    %v1210 = vpop.xlane.xlu0 %1209
    %v1211 = vsel %vm473, %v1193, 0.0
    %1212 = vadd.xlane.f32.xlu0 %v1211
    %v1213 = vpop.xlane.xlu0 %1212
    %v1214 = vsel %vm473, %v1195, 0.0
    %1215 = vadd.xlane.f32.xlu0 %v1214
    %v1216 = vpop.xlane.xlu0 %1215
    %v1217 = vsel %vm473, %v1197, 0.0
    %1218 = vadd.xlane.f32.xlu0 %v1217
    %v1219 = vpop.xlane.xlu0 %1218
    %v1220 = vsel %vm473, %v1199, 0.0
    %1221 = vadd.xlane.f32.xlu0 %v1220
    %v1222 = vpop.xlane.xlu0 %1221
    %v1223 = vsel %vm473, %v1201, 0.0
    %1224 = vadd.xlane.f32.xlu0 %v1223
    %v1225 = vpop.xlane.xlu0 %1224
    %1226 = vrot.lane.b32.xlu0 %v241, 92
    %v1227 = vpop.permute.xlu0 %1226
    %v1230 = vsel %vm473, %v1187, 0
    %1232 = vmatpush.msra.mxu0 0.0
    %1233 = vmatpush.msra.mxu0 0.0
    %1234 = vmatpush.msra.mxu0 0.0
    %1235 = vmatpush.msra.mxu0 0.0
    %1236 = vmatpush.msra.mxu0 0.0
    %1237 = vmatpush.msra.mxu0 0.0
    %1238 = vmatpush.msra.mxu0 0.0
    %1239 = vmatpush.msra.mxu0 0.0
    %1240 = vmatpush.msra.mxu0 0.0
    %1241 = vmatpush.msra.mxu0 0.0
    %1242 = vmatpush.msra.mxu0 0.0
    %1243 = vmatpush.msra.mxu0 0.0
    %1244 = vmatpush.msra.mxu0 0.0
    %1245 = vmatpush.msra.mxu0 0.0
    %1246 = vmatpush.msra.mxu0 0.0
    %1247 = vmatpush.msra.mxu0 %v1227
    %1248 = vmatmul.f32.gmra.mxu0 %v1230
    %v1249 = vpop.f32.mrf.mxu0
    %v1250 = vadd.f32 0.0, %v1249
    %1251 = vdwg.mxu0
    %1252 = vrot.lane.b32.xlu0 %v244, 92
    %v1253 = vpop.permute.xlu0 %1252
    %v1256 = vsel %vm473, %v1189, 0
    %1258 = vmatpush.msra.mxu0 0.0
    %1259 = vmatpush.msra.mxu0 0.0
    %1260 = vmatpush.msra.mxu0 0.0
    %1261 = vmatpush.msra.mxu0 0.0
    %1262 = vmatpush.msra.mxu0 0.0
    %1263 = vmatpush.msra.mxu0 0.0
    %1264 = vmatpush.msra.mxu0 0.0
    %1265 = vmatpush.msra.mxu0 0.0
    %1266 = vmatpush.msra.mxu0 0.0
    %1267 = vmatpush.msra.mxu0 0.0
    %1268 = vmatpush.msra.mxu0 0.0
    %1269 = vmatpush.msra.mxu0 0.0
    %1270 = vmatpush.msra.mxu0 0.0
    %1271 = vmatpush.msra.mxu0 0.0
    %1272 = vmatpush.msra.mxu0 0.0
    %1273 = vmatpush.msra.mxu0 %v1253
    %1274 = vmatmul.f32.gmra.mxu0 %v1256
    %v1275 = vpop.f32.mrf.mxu0
    %v1276 = vadd.f32 0.0, %v1275
    %1277 = vdwg.mxu0
    %1278 = vrot.lane.b32.xlu0 %v247, 92
    %v1279 = vpop.permute.xlu0 %1278
    %v1282 = vsel %vm473, %v1191, 0
    %1284 = vmatpush.msra.mxu0 0.0
    %1285 = vmatpush.msra.mxu0 0.0
    %1286 = vmatpush.msra.mxu0 0.0
    %1287 = vmatpush.msra.mxu0 0.0
    %1288 = vmatpush.msra.mxu0 0.0
    %1289 = vmatpush.msra.mxu0 0.0
    %1290 = vmatpush.msra.mxu0 0.0
    %1291 = vmatpush.msra.mxu0 0.0
    %1292 = vmatpush.msra.mxu0 0.0
    %1293 = vmatpush.msra.mxu0 0.0
    %1294 = vmatpush.msra.mxu0 0.0
    %1295 = vmatpush.msra.mxu0 0.0
    %1296 = vmatpush.msra.mxu0 0.0
    %1297 = vmatpush.msra.mxu0 0.0
    %1298 = vmatpush.msra.mxu0 0.0
    %1299 = vmatpush.msra.mxu0 %v1279
    %1300 = vmatmul.f32.gmra.mxu0 %v1282
    %v1301 = vpop.f32.mrf.mxu0
    %v1302 = vadd.f32 0.0, %v1301
    %1303 = vdwg.mxu0
    %1304 = vrot.lane.b32.xlu0 %v250, 92
    %v1305 = vpop.permute.xlu0 %1304
    %v1308 = vsel %vm473, %v1193, 0
    %1310 = vmatpush.msra.mxu0 0.0
    %1311 = vmatpush.msra.mxu0 0.0
    %1312 = vmatpush.msra.mxu0 0.0
    %1313 = vmatpush.msra.mxu0 0.0
    %1314 = vmatpush.msra.mxu0 0.0
    %1315 = vmatpush.msra.mxu0 0.0
    %1316 = vmatpush.msra.mxu0 0.0
    %1317 = vmatpush.msra.mxu0 0.0
    %1318 = vmatpush.msra.mxu0 0.0
    %1319 = vmatpush.msra.mxu0 0.0
    %1320 = vmatpush.msra.mxu0 0.0
    %1321 = vmatpush.msra.mxu0 0.0
    %1322 = vmatpush.msra.mxu0 0.0
    %1323 = vmatpush.msra.mxu0 0.0
    %1324 = vmatpush.msra.mxu0 0.0
    %1325 = vmatpush.msra.mxu0 %v1305
    %1326 = vmatmul.f32.gmra.mxu0 %v1308
    %v1327 = vpop.f32.mrf.mxu0
    %v1328 = vadd.f32 0.0, %v1327
    %1329 = vdwg.mxu0
    %1330 = vrot.lane.b32.xlu0 %v253, 92
    %v1331 = vpop.permute.xlu0 %1330
    %v1334 = vsel %vm473, %v1195, 0
    %1336 = vmatpush.msra.mxu0 0.0
    %1337 = vmatpush.msra.mxu0 0.0
    %1338 = vmatpush.msra.mxu0 0.0
    %1339 = vmatpush.msra.mxu0 0.0
    %1340 = vmatpush.msra.mxu0 0.0
    %1341 = vmatpush.msra.mxu0 0.0
    %1342 = vmatpush.msra.mxu0 0.0
    %1343 = vmatpush.msra.mxu0 0.0
    %1344 = vmatpush.msra.mxu0 0.0
    %1345 = vmatpush.msra.mxu0 0.0
    %1346 = vmatpush.msra.mxu0 0.0
    %1347 = vmatpush.msra.mxu0 0.0
    %1348 = vmatpush.msra.mxu0 0.0
    %1349 = vmatpush.msra.mxu0 0.0
    %1350 = vmatpush.msra.mxu0 0.0
    %1351 = vmatpush.msra.mxu0 %v1331
    %1352 = vmatmul.f32.gmra.mxu0 %v1334
    %v1353 = vpop.f32.mrf.mxu0
    %v1354 = vadd.f32 0.0, %v1353
    %1355 = vdwg.mxu0
    %1356 = vrot.lane.b32.xlu0 %v256, 92
    %v1357 = vpop.permute.xlu0 %1356
    %v1360 = vsel %vm473, %v1197, 0
    %1362 = vmatpush.msra.mxu0 0.0
    %1363 = vmatpush.msra.mxu0 0.0
    %1364 = vmatpush.msra.mxu0 0.0
    %1365 = vmatpush.msra.mxu0 0.0
    %1366 = vmatpush.msra.mxu0 0.0
    %1367 = vmatpush.msra.mxu0 0.0
    %1368 = vmatpush.msra.mxu0 0.0
    %1369 = vmatpush.msra.mxu0 0.0
    %1370 = vmatpush.msra.mxu0 0.0
    %1371 = vmatpush.msra.mxu0 0.0
    %1372 = vmatpush.msra.mxu0 0.0
    %1373 = vmatpush.msra.mxu0 0.0
    %1374 = vmatpush.msra.mxu0 0.0
    %1375 = vmatpush.msra.mxu0 0.0
    %1376 = vmatpush.msra.mxu0 0.0
    %1377 = vmatpush.msra.mxu0 %v1357
    %1378 = vmatmul.f32.gmra.mxu0 %v1360
    %v1379 = vpop.f32.mrf.mxu0
    %v1380 = vadd.f32 0.0, %v1379
    %1381 = vdwg.mxu0
    %1382 = vrot.lane.b32.xlu0 %v259, 92
    %v1383 = vpop.permute.xlu0 %1382
    %v1386 = vsel %vm473, %v1199, 0
    %1388 = vmatpush.msra.mxu0 0.0
    %1389 = vmatpush.msra.mxu0 0.0
    %1390 = vmatpush.msra.mxu0 0.0
    %1391 = vmatpush.msra.mxu0 0.0
    %1392 = vmatpush.msra.mxu0 0.0
    %1393 = vmatpush.msra.mxu0 0.0
    %1394 = vmatpush.msra.mxu0 0.0
    %1395 = vmatpush.msra.mxu0 0.0
    %1396 = vmatpush.msra.mxu0 0.0
    %1397 = vmatpush.msra.mxu0 0.0
    %1398 = vmatpush.msra.mxu0 0.0
    %1399 = vmatpush.msra.mxu0 0.0
    %1400 = vmatpush.msra.mxu0 0.0
    %1401 = vmatpush.msra.mxu0 0.0
    %1402 = vmatpush.msra.mxu0 0.0
    %1403 = vmatpush.msra.mxu0 %v1383
    %1404 = vmatmul.f32.gmra.mxu0 %v1386
    %v1405 = vpop.f32.mrf.mxu0
    %v1406 = vadd.f32 0.0, %v1405
    %1407 = vdwg.mxu0
    %1408 = vrot.lane.b32.xlu0 %v262, 92
    %v1409 = vpop.permute.xlu0 %1408
    %v1412 = vsel %vm473, %v1201, 0
    %1414 = vmatpush.msra.mxu0 0.0
    %1415 = vmatpush.msra.mxu0 0.0
    %1416 = vmatpush.msra.mxu0 0.0
    %1417 = vmatpush.msra.mxu0 0.0
    %1418 = vmatpush.msra.mxu0 0.0
    %1419 = vmatpush.msra.mxu0 0.0
    %1420 = vmatpush.msra.mxu0 0.0
    %1421 = vmatpush.msra.mxu0 0.0
    %1422 = vmatpush.msra.mxu0 0.0
    %1423 = vmatpush.msra.mxu0 0.0
    %1424 = vmatpush.msra.mxu0 0.0
    %1425 = vmatpush.msra.mxu0 0.0
    %1426 = vmatpush.msra.mxu0 0.0
    %1427 = vmatpush.msra.mxu0 0.0
    %1428 = vmatpush.msra.mxu0 0.0
    %1429 = vmatpush.msra.mxu0 %v1409
    %1430 = vmatmul.f32.gmra.mxu0 %v1412
    %v1431 = vpop.f32.mrf.mxu0
    %v1432 = vadd.f32 0.0, %v1431
    %1433 = vdwg.mxu0
    %v1434 = vrcp.pop %v1204
    %v1435 = vmul.f32 %v1204, %v1434
    %v1436 = vsub.f32 1.0, %v1435
    %v1437 = vmul.f32 %v1434, %v1436
    %v1438 = vadd.f32 %v1434, %v1437
    %vm1439 = vweird.f32 %v1204
    %vm1440 = vweird.f32 %v1434
    %vm1441 = vmor %vm1439, %vm1440
    %v1442 = vsel %vm1441, %v1434, %v1438
    %v1443 = vand.u32 2147483647, %v1204
    %vm1444 = vcmp.eq.f32.partialorder %v1443, 8.507059e+37
    %v1445 = vand.u32 %v1204, 2147483648
    %v1446 = vor.u32 1.1754944e-38, %v1445
    %v1447 = vsel %vm1444, %v1446, %v1442
    %v1448 = vrcp.pop %v1207
    %v1449 = vmul.f32 %v1207, %v1448
    %v1450 = vsub.f32 1.0, %v1449
    %v1451 = vmul.f32 %v1448, %v1450
    %v1452 = vadd.f32 %v1448, %v1451
    %vm1453 = vweird.f32 %v1207
    %vm1454 = vweird.f32 %v1448
    %vm1455 = vmor %vm1453, %vm1454
    %v1456 = vsel %vm1455, %v1448, %v1452
    %v1457 = vand.u32 2147483647, %v1207
    %vm1458 = vcmp.eq.f32.partialorder %v1457, 8.507059e+37
    %v1459 = vand.u32 %v1207, 2147483648
    %v1460 = vor.u32 1.1754944e-38, %v1459
    %v1461 = vsel %vm1458, %v1460, %v1456
    %v1462 = vrcp.pop %v1210
    %v1463 = vmul.f32 %v1210, %v1462
    %v1464 = vsub.f32 1.0, %v1463
    %v1465 = vmul.f32 %v1462, %v1464
    %v1466 = vadd.f32 %v1462, %v1465
    %vm1467 = vweird.f32 %v1210
    %vm1468 = vweird.f32 %v1462
    %vm1469 = vmor %vm1467, %vm1468
    %v1470 = vsel %vm1469, %v1462, %v1466
    %v1471 = vand.u32 2147483647, %v1210
    %vm1472 = vcmp.eq.f32.partialorder %v1471, 8.507059e+37
    %v1473 = vand.u32 %v1210, 2147483648
    %v1474 = vor.u32 1.1754944e-38, %v1473
    %v1475 = vsel %vm1472, %v1474, %v1470
    %v1476 = vrcp.pop %v1213
    %v1477 = vmul.f32 %v1213, %v1476
    %v1478 = vsub.f32 1.0, %v1477
    %v1479 = vmul.f32 %v1476, %v1478
    %v1480 = vadd.f32 %v1476, %v1479
    %vm1481 = vweird.f32 %v1213
    %vm1482 = vweird.f32 %v1476
    %vm1483 = vmor %vm1481, %vm1482
    %v1484 = vsel %vm1483, %v1476, %v1480
    %v1485 = vand.u32 2147483647, %v1213
    %vm1486 = vcmp.eq.f32.partialorder %v1485, 8.507059e+37
    %v1487 = vand.u32 %v1213, 2147483648
    %v1488 = vor.u32 1.1754944e-38, %v1487
    %v1489 = vsel %vm1486, %v1488, %v1484
    %v1490 = vrcp.pop %v1216
    %v1491 = vmul.f32 %v1216, %v1490
    %v1492 = vsub.f32 1.0, %v1491
    %v1493 = vmul.f32 %v1490, %v1492
    %v1494 = vadd.f32 %v1490, %v1493
    %vm1495 = vweird.f32 %v1216
    %vm1496 = vweird.f32 %v1490
    %vm1497 = vmor %vm1495, %vm1496
    %v1498 = vsel %vm1497, %v1490, %v1494
    %v1499 = vand.u32 2147483647, %v1216
    %vm1500 = vcmp.eq.f32.partialorder %v1499, 8.507059e+37
    %v1501 = vand.u32 %v1216, 2147483648
    %v1502 = vor.u32 1.1754944e-38, %v1501
    %v1503 = vsel %vm1500, %v1502, %v1498
    %v1504 = vrcp.pop %v1219
    %v1505 = vmul.f32 %v1219, %v1504
    %v1506 = vsub.f32 1.0, %v1505
    %v1507 = vmul.f32 %v1504, %v1506
    %v1508 = vadd.f32 %v1504, %v1507
    %vm1509 = vweird.f32 %v1219
    %vm1510 = vweird.f32 %v1504
    %vm1511 = vmor %vm1509, %vm1510
    %v1512 = vsel %vm1511, %v1504, %v1508
    %v1513 = vand.u32 2147483647, %v1219
    %vm1514 = vcmp.eq.f32.partialorder %v1513, 8.507059e+37
    %v1515 = vand.u32 %v1219, 2147483648
    %v1516 = vor.u32 1.1754944e-38, %v1515
    %v1517 = vsel %vm1514, %v1516, %v1512
    %v1518 = vrcp.pop %v1222
    %v1519 = vmul.f32 %v1222, %v1518
    %v1520 = vsub.f32 1.0, %v1519
    %v1521 = vmul.f32 %v1518, %v1520
    %v1522 = vadd.f32 %v1518, %v1521
    %vm1523 = vweird.f32 %v1222
    %vm1524 = vweird.f32 %v1518
    %vm1525 = vmor %vm1523, %vm1524
    %v1526 = vsel %vm1525, %v1518, %v1522
    %v1527 = vand.u32 2147483647, %v1222
    %vm1528 = vcmp.eq.f32.partialorder %v1527, 8.507059e+37
    %v1529 = vand.u32 %v1222, 2147483648
    %v1530 = vor.u32 1.1754944e-38, %v1529
    %v1531 = vsel %vm1528, %v1530, %v1526
    %v1532 = vrcp.pop %v1225
    %v1533 = vmul.f32 %v1225, %v1532
    %v1534 = vsub.f32 1.0, %v1533
    %v1535 = vmul.f32 %v1532, %v1534
    %v1536 = vadd.f32 %v1532, %v1535
    %vm1537 = vweird.f32 %v1225
    %vm1538 = vweird.f32 %v1532
    %vm1539 = vmor %vm1537, %vm1538
    %v1540 = vsel %vm1539, %v1532, %v1536
    %v1541 = vand.u32 2147483647, %v1225
    %vm1542 = vcmp.eq.f32.partialorder %v1541, 8.507059e+37
    %v1543 = vand.u32 %v1225, 2147483648
    %v1544 = vor.u32 1.1754944e-38, %v1543
    %v1545 = vsel %vm1542, %v1544, %v1540
    %v1546 = vmul.f32 %v1250, %v1447
    %v1547 = vmul.f32 %v1276, %v1461
    %v1548 = vmul.f32 %v1302, %v1475
    %v1549 = vmul.f32 %v1328, %v1489
    %v1550 = vmul.f32 %v1354, %v1503
    %v1551 = vmul.f32 %v1380, %v1517
    %v1552 = vmul.f32 %v1406, %v1531
    %v1553 = vmul.f32 %v1432, %v1545
    %v1554 = vsel %vm264, %v1546, 0.0
    %v1555 = vrot.slane %v1554, 4
    %v1556 = vadd.f32 %v1554, %v1555
    %v1557 = vrot.slane %v1556, 2
    %v1558 = vadd.f32 %v1556, %v1557
    %v1559 = vrot.slane %v1558, 1
    %v1560 = vadd.f32 %v1558, %v1559
    %v1561 = vsel %vm264, %v1547, 0.0
    %v1562 = vrot.slane %v1561, 4
    %v1563 = vadd.f32 %v1561, %v1562
    %v1564 = vrot.slane %v1563, 2
    %v1565 = vadd.f32 %v1563, %v1564
    %v1566 = vrot.slane %v1565, 1
    %v1567 = vadd.f32 %v1565, %v1566
    %v1568 = vsel %vm264, %v1548, 0.0
    %v1569 = vrot.slane %v1568, 4
    %v1570 = vadd.f32 %v1568, %v1569
    %v1571 = vrot.slane %v1570, 2
    %v1572 = vadd.f32 %v1570, %v1571
    %v1573 = vrot.slane %v1572, 1
    %v1574 = vadd.f32 %v1572, %v1573
    %v1575 = vsel %vm264, %v1549, 0.0
    %v1576 = vrot.slane %v1575, 4
    %v1577 = vadd.f32 %v1575, %v1576
    %v1578 = vrot.slane %v1577, 2
    %v1579 = vadd.f32 %v1577, %v1578
    %v1580 = vrot.slane %v1579, 1
    %v1581 = vadd.f32 %v1579, %v1580
    %v1582 = vsel %vm264, %v1550, 0.0
    %v1583 = vrot.slane %v1582, 4
    %v1584 = vadd.f32 %v1582, %v1583
    %v1585 = vrot.slane %v1584, 2
    %v1586 = vadd.f32 %v1584, %v1585
    %v1587 = vrot.slane %v1586, 1
    %v1588 = vadd.f32 %v1586, %v1587
    %v1589 = vsel %vm264, %v1551, 0.0
    %v1590 = vrot.slane %v1589, 4
    %v1591 = vadd.f32 %v1589, %v1590
    %v1592 = vrot.slane %v1591, 2
    %v1593 = vadd.f32 %v1591, %v1592
    %v1594 = vrot.slane %v1593, 1
    %v1595 = vadd.f32 %v1593, %v1594
    %v1596 = vsel %vm264, %v1552, 0.0
    %v1597 = vrot.slane %v1596, 4
    %v1598 = vadd.f32 %v1596, %v1597
    %v1599 = vrot.slane %v1598, 2
    %v1600 = vadd.f32 %v1598, %v1599
    %v1601 = vrot.slane %v1600, 1
    %v1602 = vadd.f32 %v1600, %v1601
    %v1603 = vsel %vm264, %v1553, 0.0
    %v1604 = vrot.slane %v1603, 4
    %v1605 = vadd.f32 %v1603, %v1604
    %v1606 = vrot.slane %v1605, 2
    %v1607 = vadd.f32 %v1605, %v1606
    %v1608 = vrot.slane %v1607, 1
    %v1609 = vadd.f32 %v1607, %v1608
    %1610 = vrot.lane.b32.xlu0 %v172, 120
    %v1611 = vpop.permute.xlu0 %1610
    %1612 = vrot.lane.b32.xlu0 %v241, 120
    %v1613 = vpop.permute.xlu0 %1612
    %v1614 = vsel %vm264, %v1611, 0
    %v1616 = vsel %vm264, %v1613, 0
    %1618 = vmatpush.xpose.msra.mxu0 0.0
    %1619 = vmatpush.xpose.msra.mxu0 0.0
    %1620 = vmatpush.xpose.msra.mxu0 0.0
    %1621 = vmatpush.xpose.msra.mxu0 0.0
    %1622 = vmatpush.xpose.msra.mxu0 0.0
    %1623 = vmatpush.xpose.msra.mxu0 0.0
    %1624 = vmatpush.xpose.msra.mxu0 0.0
    %1625 = vmatpush.xpose.msra.mxu0 0.0
    %1626 = vmatpush.xpose.msra.mxu0 0.0
    %1627 = vmatpush.xpose.msra.mxu0 0.0
    %1628 = vmatpush.xpose.msra.mxu0 0.0
    %1629 = vmatpush.xpose.msra.mxu0 0.0
    %1630 = vmatpush.xpose.msra.mxu0 0.0
    %1631 = vmatpush.xpose.msra.mxu0 0.0
    %1632 = vmatpush.xpose.msra.mxu0 0.0
    %1633 = vmatpush.xpose.msra.mxu0 %v1616
    %1634 = vmatmul.f32.gmra.mxu0 %v1614
    %v1635 = vpop.f32.mrf.mxu0
    %v1636 = vadd.f32 0.0, %v1635
    %1637 = vdwg.mxu0
    %1638 = vrot.lane.b32.xlu0 %v175, 120
    %v1639 = vpop.permute.xlu0 %1638
    %1640 = vrot.lane.b32.xlu0 %v244, 120
    %v1641 = vpop.permute.xlu0 %1640
    %v1642 = vsel %vm264, %v1639, 0
    %v1644 = vsel %vm264, %v1641, 0
    %1646 = vmatpush.xpose.msra.mxu0 0.0
    %1647 = vmatpush.xpose.msra.mxu0 0.0
    %1648 = vmatpush.xpose.msra.mxu0 0.0
    %1649 = vmatpush.xpose.msra.mxu0 0.0
    %1650 = vmatpush.xpose.msra.mxu0 0.0
    %1651 = vmatpush.xpose.msra.mxu0 0.0
    %1652 = vmatpush.xpose.msra.mxu0 0.0
    %1653 = vmatpush.xpose.msra.mxu0 0.0
    %1654 = vmatpush.xpose.msra.mxu0 0.0
    %1655 = vmatpush.xpose.msra.mxu0 0.0
    %1656 = vmatpush.xpose.msra.mxu0 0.0
    %1657 = vmatpush.xpose.msra.mxu0 0.0
    %1658 = vmatpush.xpose.msra.mxu0 0.0
    %1659 = vmatpush.xpose.msra.mxu0 0.0
    %1660 = vmatpush.xpose.msra.mxu0 0.0
    %1661 = vmatpush.xpose.msra.mxu0 %v1644
    %1662 = vmatmul.f32.gmra.mxu0 %v1642
    %v1663 = vpop.f32.mrf.mxu0
    %v1664 = vadd.f32 0.0, %v1663
    %1665 = vdwg.mxu0
    %1666 = vrot.lane.b32.xlu0 %v178, 120
    %v1667 = vpop.permute.xlu0 %1666
    %1668 = vrot.lane.b32.xlu0 %v247, 120
    %v1669 = vpop.permute.xlu0 %1668
    %v1670 = vsel %vm264, %v1667, 0
    %v1672 = vsel %vm264, %v1669, 0
    %1674 = vmatpush.xpose.msra.mxu0 0.0
    %1675 = vmatpush.xpose.msra.mxu0 0.0
    %1676 = vmatpush.xpose.msra.mxu0 0.0
    %1677 = vmatpush.xpose.msra.mxu0 0.0
    %1678 = vmatpush.xpose.msra.mxu0 0.0
    %1679 = vmatpush.xpose.msra.mxu0 0.0
    %1680 = vmatpush.xpose.msra.mxu0 0.0
    %1681 = vmatpush.xpose.msra.mxu0 0.0
    %1682 = vmatpush.xpose.msra.mxu0 0.0
    %1683 = vmatpush.xpose.msra.mxu0 0.0
    %1684 = vmatpush.xpose.msra.mxu0 0.0
    %1685 = vmatpush.xpose.msra.mxu0 0.0
    %1686 = vmatpush.xpose.msra.mxu0 0.0
    %1687 = vmatpush.xpose.msra.mxu0 0.0
    %1688 = vmatpush.xpose.msra.mxu0 0.0
    %1689 = vmatpush.xpose.msra.mxu0 %v1672
    %1690 = vmatmul.f32.gmra.mxu0 %v1670
    %v1691 = vpop.f32.mrf.mxu0
    %v1692 = vadd.f32 0.0, %v1691
    %1693 = vdwg.mxu0
    %1694 = vrot.lane.b32.xlu0 %v181, 120
    %v1695 = vpop.permute.xlu0 %1694
    %1696 = vrot.lane.b32.xlu0 %v250, 120
    %v1697 = vpop.permute.xlu0 %1696
    %v1698 = vsel %vm264, %v1695, 0
    %v1700 = vsel %vm264, %v1697, 0
    %1702 = vmatpush.xpose.msra.mxu0 0.0
    %1703 = vmatpush.xpose.msra.mxu0 0.0
    %1704 = vmatpush.xpose.msra.mxu0 0.0
    %1705 = vmatpush.xpose.msra.mxu0 0.0
    %1706 = vmatpush.xpose.msra.mxu0 0.0
    %1707 = vmatpush.xpose.msra.mxu0 0.0
    %1708 = vmatpush.xpose.msra.mxu0 0.0
    %1709 = vmatpush.xpose.msra.mxu0 0.0
    %1710 = vmatpush.xpose.msra.mxu0 0.0
    %1711 = vmatpush.xpose.msra.mxu0 0.0
    %1712 = vmatpush.xpose.msra.mxu0 0.0
    %1713 = vmatpush.xpose.msra.mxu0 0.0
    %1714 = vmatpush.xpose.msra.mxu0 0.0
    %1715 = vmatpush.xpose.msra.mxu0 0.0
    %1716 = vmatpush.xpose.msra.mxu0 0.0
    %1717 = vmatpush.xpose.msra.mxu0 %v1700
    %1718 = vmatmul.f32.gmra.mxu0 %v1698
    %v1719 = vpop.f32.mrf.mxu0
    %v1720 = vadd.f32 0.0, %v1719
    %1721 = vdwg.mxu0
    %1722 = vrot.lane.b32.xlu0 %v184, 120
    %v1723 = vpop.permute.xlu0 %1722
    %1724 = vrot.lane.b32.xlu0 %v253, 120
    %v1725 = vpop.permute.xlu0 %1724
    %v1726 = vsel %vm264, %v1723, 0
    %v1728 = vsel %vm264, %v1725, 0
    %1730 = vmatpush.xpose.msra.mxu0 0.0
    %1731 = vmatpush.xpose.msra.mxu0 0.0
    %1732 = vmatpush.xpose.msra.mxu0 0.0
    %1733 = vmatpush.xpose.msra.mxu0 0.0
    %1734 = vmatpush.xpose.msra.mxu0 0.0
    %1735 = vmatpush.xpose.msra.mxu0 0.0
    %1736 = vmatpush.xpose.msra.mxu0 0.0
    %1737 = vmatpush.xpose.msra.mxu0 0.0
    %1738 = vmatpush.xpose.msra.mxu0 0.0
    %1739 = vmatpush.xpose.msra.mxu0 0.0
    %1740 = vmatpush.xpose.msra.mxu0 0.0
    %1741 = vmatpush.xpose.msra.mxu0 0.0
    %1742 = vmatpush.xpose.msra.mxu0 0.0
    %1743 = vmatpush.xpose.msra.mxu0 0.0
    %1744 = vmatpush.xpose.msra.mxu0 0.0
    %1745 = vmatpush.xpose.msra.mxu0 %v1728
    %1746 = vmatmul.f32.gmra.mxu0 %v1726
    %v1747 = vpop.f32.mrf.mxu0
    %v1748 = vadd.f32 0.0, %v1747
    %1749 = vdwg.mxu0
    %1750 = vrot.lane.b32.xlu0 %v187, 120
    %v1751 = vpop.permute.xlu0 %1750
    %1752 = vrot.lane.b32.xlu0 %v256, 120
    %v1753 = vpop.permute.xlu0 %1752
    %v1754 = vsel %vm264, %v1751, 0
    %v1756 = vsel %vm264, %v1753, 0
    %1758 = vmatpush.xpose.msra.mxu0 0.0
    %1759 = vmatpush.xpose.msra.mxu0 0.0
    %1760 = vmatpush.xpose.msra.mxu0 0.0
    %1761 = vmatpush.xpose.msra.mxu0 0.0
    %1762 = vmatpush.xpose.msra.mxu0 0.0
    %1763 = vmatpush.xpose.msra.mxu0 0.0
    %1764 = vmatpush.xpose.msra.mxu0 0.0
    %1765 = vmatpush.xpose.msra.mxu0 0.0
    %1766 = vmatpush.xpose.msra.mxu0 0.0
    %1767 = vmatpush.xpose.msra.mxu0 0.0
    %1768 = vmatpush.xpose.msra.mxu0 0.0
    %1769 = vmatpush.xpose.msra.mxu0 0.0
    %1770 = vmatpush.xpose.msra.mxu0 0.0
    %1771 = vmatpush.xpose.msra.mxu0 0.0
    %1772 = vmatpush.xpose.msra.mxu0 0.0
    %1773 = vmatpush.xpose.msra.mxu0 %v1756
    %1774 = vmatmul.f32.gmra.mxu0 %v1754
    %v1775 = vpop.f32.mrf.mxu0
    %v1776 = vadd.f32 0.0, %v1775
    %1777 = vdwg.mxu0
    %1778 = vrot.lane.b32.xlu0 %v190, 120
    %v1779 = vpop.permute.xlu0 %1778
    %1780 = vrot.lane.b32.xlu0 %v259, 120
    %v1781 = vpop.permute.xlu0 %1780
    %v1782 = vsel %vm264, %v1779, 0
    %v1784 = vsel %vm264, %v1781, 0
    %1786 = vmatpush.xpose.msra.mxu0 0.0
    %1787 = vmatpush.xpose.msra.mxu0 0.0
    %1788 = vmatpush.xpose.msra.mxu0 0.0
    %1789 = vmatpush.xpose.msra.mxu0 0.0
    %1790 = vmatpush.xpose.msra.mxu0 0.0
    %1791 = vmatpush.xpose.msra.mxu0 0.0
    %1792 = vmatpush.xpose.msra.mxu0 0.0
    %1793 = vmatpush.xpose.msra.mxu0 0.0
    %1794 = vmatpush.xpose.msra.mxu0 0.0
    %1795 = vmatpush.xpose.msra.mxu0 0.0
    %1796 = vmatpush.xpose.msra.mxu0 0.0
    %1797 = vmatpush.xpose.msra.mxu0 0.0
    %1798 = vmatpush.xpose.msra.mxu0 0.0
    %1799 = vmatpush.xpose.msra.mxu0 0.0
    %1800 = vmatpush.xpose.msra.mxu0 0.0
    %1801 = vmatpush.xpose.msra.mxu0 %v1784
    %1802 = vmatmul.f32.gmra.mxu0 %v1782
    %v1803 = vpop.f32.mrf.mxu0
    %v1804 = vadd.f32 0.0, %v1803
    %1805 = vdwg.mxu0
    %1806 = vrot.lane.b32.xlu0 %v193, 120
    %v1807 = vpop.permute.xlu0 %1806
    %1808 = vrot.lane.b32.xlu0 %v262, 120
    %v1809 = vpop.permute.xlu0 %1808
    %v1810 = vsel %vm264, %v1807, 0
    %v1812 = vsel %vm264, %v1809, 0
    %1814 = vmatpush.xpose.msra.mxu0 0.0
    %1815 = vmatpush.xpose.msra.mxu0 0.0
    %1816 = vmatpush.xpose.msra.mxu0 0.0
    %1817 = vmatpush.xpose.msra.mxu0 0.0
    %1818 = vmatpush.xpose.msra.mxu0 0.0
    %1819 = vmatpush.xpose.msra.mxu0 0.0
    %1820 = vmatpush.xpose.msra.mxu0 0.0
    %1821 = vmatpush.xpose.msra.mxu0 0.0
    %1822 = vmatpush.xpose.msra.mxu0 0.0
    %1823 = vmatpush.xpose.msra.mxu0 0.0
    %1824 = vmatpush.xpose.msra.mxu0 0.0
    %1825 = vmatpush.xpose.msra.mxu0 0.0
    %1826 = vmatpush.xpose.msra.mxu0 0.0
    %1827 = vmatpush.xpose.msra.mxu0 0.0
    %1828 = vmatpush.xpose.msra.mxu0 0.0
    %1829 = vmatpush.xpose.msra.mxu0 %v1812
    %1830 = vmatmul.f32.gmra.mxu0 %v1810
    %v1831 = vpop.f32.mrf.mxu0
    %v1832 = vadd.f32 0.0, %v1831
    %1833 = vdwg.mxu0
    %v1834 = vsel %vm473, %v1636, -inf
    %1835 = vmax.xlane.f32.xlu0 %v1834
    %v1836 = vpop.xlane.xlu0 %1835
    %v1837 = vsel %vm473, %v1664, -inf
    %1838 = vmax.xlane.f32.xlu0 %v1837
    %v1839 = vpop.xlane.xlu0 %1838
    %v1840 = vsel %vm473, %v1692, -inf
    %1841 = vmax.xlane.f32.xlu0 %v1840
    %v1842 = vpop.xlane.xlu0 %1841
    %v1843 = vsel %vm473, %v1720, -inf
    %1844 = vmax.xlane.f32.xlu0 %v1843
    %v1845 = vpop.xlane.xlu0 %1844
    %v1846 = vsel %vm473, %v1748, -inf
    %1847 = vmax.xlane.f32.xlu0 %v1846
    %v1848 = vpop.xlane.xlu0 %1847
    %v1849 = vsel %vm473, %v1776, -inf
    %1850 = vmax.xlane.f32.xlu0 %v1849
    %v1851 = vpop.xlane.xlu0 %1850
    %v1852 = vsel %vm473, %v1804, -inf
    %1853 = vmax.xlane.f32.xlu0 %v1852
    %v1854 = vpop.xlane.xlu0 %1853
    %v1855 = vsel %vm473, %v1832, -inf
    %1856 = vmax.xlane.f32.xlu0 %v1855
    %v1857 = vpop.xlane.xlu0 %1856
    %v1858 = vsub.f32 %v1636, %v1836
    %v1859 = vsub.f32 %v1664, %v1839
    %v1860 = vsub.f32 %v1692, %v1842
    %v1861 = vsub.f32 %v1720, %v1845
    %v1862 = vsub.f32 %v1748, %v1848
    %v1863 = vsub.f32 %v1776, %v1851
    %v1864 = vsub.f32 %v1804, %v1854
    %v1865 = vsub.f32 %v1832, %v1857
    %v1866 = vmul.f32 %v1858, 1.442695
    %v1867 = vpow.pop %v1866
    %v1868 = vmul.f32 %v1859, 1.442695
    %v1869 = vpow.pop %v1868
    %v1870 = vmul.f32 %v1860, 1.442695
    %v1871 = vpow.pop %v1870
    %v1872 = vmul.f32 %v1861, 1.442695
    %v1873 = vpow.pop %v1872
    %v1874 = vmul.f32 %v1862, 1.442695
    %v1875 = vpow.pop %v1874
    %v1876 = vmul.f32 %v1863, 1.442695
    %v1877 = vpow.pop %v1876
    %v1878 = vmul.f32 %v1864, 1.442695
    %v1879 = vpow.pop %v1878
    %v1880 = vmul.f32 %v1865, 1.442695
    %v1881 = vpow.pop %v1880
    %v1882 = vsel %vm473, %v1867, 0.0
    %1883 = vadd.xlane.f32.xlu0 %v1882
    %v1884 = vpop.xlane.xlu0 %1883
    %v1885 = vsel %vm473, %v1869, 0.0
    %1886 = vadd.xlane.f32.xlu0 %v1885
    %v1887 = vpop.xlane.xlu0 %1886
    %v1888 = vsel %vm473, %v1871, 0.0
    %1889 = vadd.xlane.f32.xlu0 %v1888
    %v1890 = vpop.xlane.xlu0 %1889
    %v1891 = vsel %vm473, %v1873, 0.0
    %1892 = vadd.xlane.f32.xlu0 %v1891
    %v1893 = vpop.xlane.xlu0 %1892
    %v1894 = vsel %vm473, %v1875, 0.0
    %1895 = vadd.xlane.f32.xlu0 %v1894
    %v1896 = vpop.xlane.xlu0 %1895
    %v1897 = vsel %vm473, %v1877, 0.0
    %1898 = vadd.xlane.f32.xlu0 %v1897
    %v1899 = vpop.xlane.xlu0 %1898
    %v1900 = vsel %vm473, %v1879, 0.0
    %1901 = vadd.xlane.f32.xlu0 %v1900
    %v1902 = vpop.xlane.xlu0 %1901
    %v1903 = vsel %vm473, %v1881, 0.0
    %1904 = vadd.xlane.f32.xlu0 %v1903
    %v1905 = vpop.xlane.xlu0 %1904
    %1906 = vrot.lane.b32.xlu0 %v241, 88
    %v1907 = vpop.permute.xlu0 %1906
    %v1910 = vsel %vm473, %v1867, 0
    %1912 = vmatpush.msra.mxu0 0.0
    %1913 = vmatpush.msra.mxu0 0.0
    %1914 = vmatpush.msra.mxu0 0.0
    %1915 = vmatpush.msra.mxu0 0.0
    %1916 = vmatpush.msra.mxu0 0.0
    %1917 = vmatpush.msra.mxu0 0.0
    %1918 = vmatpush.msra.mxu0 0.0
    %1919 = vmatpush.msra.mxu0 0.0
    %1920 = vmatpush.msra.mxu0 0.0
    %1921 = vmatpush.msra.mxu0 0.0
    %1922 = vmatpush.msra.mxu0 0.0
    %1923 = vmatpush.msra.mxu0 0.0
    %1924 = vmatpush.msra.mxu0 0.0
    %1925 = vmatpush.msra.mxu0 0.0
    %1926 = vmatpush.msra.mxu0 0.0
    %1927 = vmatpush.msra.mxu0 %v1907
    %1928 = vmatmul.f32.gmra.mxu0 %v1910
    %v1929 = vpop.f32.mrf.mxu0
    %v1930 = vadd.f32 0.0, %v1929
    %1931 = vdwg.mxu0
    %1932 = vrot.lane.b32.xlu0 %v244, 88
    %v1933 = vpop.permute.xlu0 %1932
    %v1936 = vsel %vm473, %v1869, 0
    %1938 = vmatpush.msra.mxu0 0.0
    %1939 = vmatpush.msra.mxu0 0.0
    %1940 = vmatpush.msra.mxu0 0.0
    %1941 = vmatpush.msra.mxu0 0.0
    %1942 = vmatpush.msra.mxu0 0.0
    %1943 = vmatpush.msra.mxu0 0.0
    %1944 = vmatpush.msra.mxu0 0.0
    %1945 = vmatpush.msra.mxu0 0.0
    %1946 = vmatpush.msra.mxu0 0.0
    %1947 = vmatpush.msra.mxu0 0.0
    %1948 = vmatpush.msra.mxu0 0.0
    %1949 = vmatpush.msra.mxu0 0.0
    %1950 = vmatpush.msra.mxu0 0.0
    %1951 = vmatpush.msra.mxu0 0.0
    %1952 = vmatpush.msra.mxu0 0.0
    %1953 = vmatpush.msra.mxu0 %v1933
    %1954 = vmatmul.f32.gmra.mxu0 %v1936
    %v1955 = vpop.f32.mrf.mxu0
    %v1956 = vadd.f32 0.0, %v1955
    %1957 = vdwg.mxu0
    %1958 = vrot.lane.b32.xlu0 %v247, 88
    %v1959 = vpop.permute.xlu0 %1958
    %v1962 = vsel %vm473, %v1871, 0
    %1964 = vmatpush.msra.mxu0 0.0
    %1965 = vmatpush.msra.mxu0 0.0
    %1966 = vmatpush.msra.mxu0 0.0
    %1967 = vmatpush.msra.mxu0 0.0
    %1968 = vmatpush.msra.mxu0 0.0
    %1969 = vmatpush.msra.mxu0 0.0
    %1970 = vmatpush.msra.mxu0 0.0
    %1971 = vmatpush.msra.mxu0 0.0
    %1972 = vmatpush.msra.mxu0 0.0
    %1973 = vmatpush.msra.mxu0 0.0
    %1974 = vmatpush.msra.mxu0 0.0
    %1975 = vmatpush.msra.mxu0 0.0
    %1976 = vmatpush.msra.mxu0 0.0
    %1977 = vmatpush.msra.mxu0 0.0
    %1978 = vmatpush.msra.mxu0 0.0
    %1979 = vmatpush.msra.mxu0 %v1959
    %1980 = vmatmul.f32.gmra.mxu0 %v1962
    %v1981 = vpop.f32.mrf.mxu0
    %v1982 = vadd.f32 0.0, %v1981
    %1983 = vdwg.mxu0
    %1984 = vrot.lane.b32.xlu0 %v250, 88
    %v1985 = vpop.permute.xlu0 %1984
    %v1988 = vsel %vm473, %v1873, 0
    %1990 = vmatpush.msra.mxu0 0.0
    %1991 = vmatpush.msra.mxu0 0.0
    %1992 = vmatpush.msra.mxu0 0.0
    %1993 = vmatpush.msra.mxu0 0.0
    %1994 = vmatpush.msra.mxu0 0.0
    %1995 = vmatpush.msra.mxu0 0.0
    %1996 = vmatpush.msra.mxu0 0.0
    %1997 = vmatpush.msra.mxu0 0.0
    %1998 = vmatpush.msra.mxu0 0.0
    %1999 = vmatpush.msra.mxu0 0.0
    %2000 = vmatpush.msra.mxu0 0.0
    %2001 = vmatpush.msra.mxu0 0.0
    %2002 = vmatpush.msra.mxu0 0.0
    %2003 = vmatpush.msra.mxu0 0.0
    %2004 = vmatpush.msra.mxu0 0.0
    %2005 = vmatpush.msra.mxu0 %v1985
    %2006 = vmatmul.f32.gmra.mxu0 %v1988
    %v2007 = vpop.f32.mrf.mxu0
    %v2008 = vadd.f32 0.0, %v2007
    %2009 = vdwg.mxu0
    %2010 = vrot.lane.b32.xlu0 %v253, 88
    %v2011 = vpop.permute.xlu0 %2010
    %v2014 = vsel %vm473, %v1875, 0
    %2016 = vmatpush.msra.mxu0 0.0
    %2017 = vmatpush.msra.mxu0 0.0
    %2018 = vmatpush.msra.mxu0 0.0
    %2019 = vmatpush.msra.mxu0 0.0
    %2020 = vmatpush.msra.mxu0 0.0
    %2021 = vmatpush.msra.mxu0 0.0
    %2022 = vmatpush.msra.mxu0 0.0
    %2023 = vmatpush.msra.mxu0 0.0
    %2024 = vmatpush.msra.mxu0 0.0
    %2025 = vmatpush.msra.mxu0 0.0
    %2026 = vmatpush.msra.mxu0 0.0
    %2027 = vmatpush.msra.mxu0 0.0
    %2028 = vmatpush.msra.mxu0 0.0
    %2029 = vmatpush.msra.mxu0 0.0
    %2030 = vmatpush.msra.mxu0 0.0
    %2031 = vmatpush.msra.mxu0 %v2011
    %2032 = vmatmul.f32.gmra.mxu0 %v2014
    %v2033 = vpop.f32.mrf.mxu0
    %v2034 = vadd.f32 0.0, %v2033
    %2035 = vdwg.mxu0
    %2036 = vrot.lane.b32.xlu0 %v256, 88
    %v2037 = vpop.permute.xlu0 %2036
    %v2040 = vsel %vm473, %v1877, 0
    %2042 = vmatpush.msra.mxu0 0.0
    %2043 = vmatpush.msra.mxu0 0.0
    %2044 = vmatpush.msra.mxu0 0.0
    %2045 = vmatpush.msra.mxu0 0.0
    %2046 = vmatpush.msra.mxu0 0.0
    %2047 = vmatpush.msra.mxu0 0.0
    %2048 = vmatpush.msra.mxu0 0.0
    %2049 = vmatpush.msra.mxu0 0.0
    %2050 = vmatpush.msra.mxu0 0.0
    %2051 = vmatpush.msra.mxu0 0.0
    %2052 = vmatpush.msra.mxu0 0.0
    %2053 = vmatpush.msra.mxu0 0.0
    %2054 = vmatpush.msra.mxu0 0.0
    %2055 = vmatpush.msra.mxu0 0.0
    %2056 = vmatpush.msra.mxu0 0.0
    %2057 = vmatpush.msra.mxu0 %v2037
    %2058 = vmatmul.f32.gmra.mxu0 %v2040
    %v2059 = vpop.f32.mrf.mxu0
    %v2060 = vadd.f32 0.0, %v2059
    %2061 = vdwg.mxu0
    %2062 = vrot.lane.b32.xlu0 %v259, 88
    %v2063 = vpop.permute.xlu0 %2062
    %v2066 = vsel %vm473, %v1879, 0
    %2068 = vmatpush.msra.mxu0 0.0
    %2069 = vmatpush.msra.mxu0 0.0
    %2070 = vmatpush.msra.mxu0 0.0
    %2071 = vmatpush.msra.mxu0 0.0
    %2072 = vmatpush.msra.mxu0 0.0
    %2073 = vmatpush.msra.mxu0 0.0
    %2074 = vmatpush.msra.mxu0 0.0
    %2075 = vmatpush.msra.mxu0 0.0
    %2076 = vmatpush.msra.mxu0 0.0
    %2077 = vmatpush.msra.mxu0 0.0
    %2078 = vmatpush.msra.mxu0 0.0
    %2079 = vmatpush.msra.mxu0 0.0
    %2080 = vmatpush.msra.mxu0 0.0
    %2081 = vmatpush.msra.mxu0 0.0
    %2082 = vmatpush.msra.mxu0 0.0
    %2083 = vmatpush.msra.mxu0 %v2063
    %2084 = vmatmul.f32.gmra.mxu0 %v2066
    %v2085 = vpop.f32.mrf.mxu0
    %v2086 = vadd.f32 0.0, %v2085
    %2087 = vdwg.mxu0
    %2088 = vrot.lane.b32.xlu0 %v262, 88
    %v2089 = vpop.permute.xlu0 %2088
    %v2092 = vsel %vm473, %v1881, 0
    %2094 = vmatpush.msra.mxu0 0.0
    %2095 = vmatpush.msra.mxu0 0.0
    %2096 = vmatpush.msra.mxu0 0.0
    %2097 = vmatpush.msra.mxu0 0.0
    %2098 = vmatpush.msra.mxu0 0.0
    %2099 = vmatpush.msra.mxu0 0.0
    %2100 = vmatpush.msra.mxu0 0.0
    %2101 = vmatpush.msra.mxu0 0.0
    %2102 = vmatpush.msra.mxu0 0.0
    %2103 = vmatpush.msra.mxu0 0.0
    %2104 = vmatpush.msra.mxu0 0.0
    %2105 = vmatpush.msra.mxu0 0.0
    %2106 = vmatpush.msra.mxu0 0.0
    %2107 = vmatpush.msra.mxu0 0.0
    %2108 = vmatpush.msra.mxu0 0.0
    %2109 = vmatpush.msra.mxu0 %v2089
    %2110 = vmatmul.f32.gmra.mxu0 %v2092
    %v2111 = vpop.f32.mrf.mxu0
    %v2112 = vadd.f32 0.0, %v2111
    %2113 = vdwg.mxu0
    %v2114 = vrcp.pop %v1884
    %v2115 = vmul.f32 %v1884, %v2114
    %v2116 = vsub.f32 1.0, %v2115
    %v2117 = vmul.f32 %v2114, %v2116
    %v2118 = vadd.f32 %v2114, %v2117
    %vm2119 = vweird.f32 %v1884
    %vm2120 = vweird.f32 %v2114
    %vm2121 = vmor %vm2119, %vm2120
    %v2122 = vsel %vm2121, %v2114, %v2118
    %v2123 = vand.u32 2147483647, %v1884
    %vm2124 = vcmp.eq.f32.partialorder %v2123, 8.507059e+37
    %v2125 = vand.u32 %v1884, 2147483648
    %v2126 = vor.u32 1.1754944e-38, %v2125
    %v2127 = vsel %vm2124, %v2126, %v2122
    %v2128 = vrcp.pop %v1887
    %v2129 = vmul.f32 %v1887, %v2128
    %v2130 = vsub.f32 1.0, %v2129
    %v2131 = vmul.f32 %v2128, %v2130
    %v2132 = vadd.f32 %v2128, %v2131
    %vm2133 = vweird.f32 %v1887
    %vm2134 = vweird.f32 %v2128
    %vm2135 = vmor %vm2133, %vm2134
    %v2136 = vsel %vm2135, %v2128, %v2132
    %v2137 = vand.u32 2147483647, %v1887
    %vm2138 = vcmp.eq.f32.partialorder %v2137, 8.507059e+37
    %v2139 = vand.u32 %v1887, 2147483648
    %v2140 = vor.u32 1.1754944e-38, %v2139
    %v2141 = vsel %vm2138, %v2140, %v2136
    %v2142 = vrcp.pop %v1890
    %v2143 = vmul.f32 %v1890, %v2142
    %v2144 = vsub.f32 1.0, %v2143
    %v2145 = vmul.f32 %v2142, %v2144
    %v2146 = vadd.f32 %v2142, %v2145
    %vm2147 = vweird.f32 %v1890
    %vm2148 = vweird.f32 %v2142
    %vm2149 = vmor %vm2147, %vm2148
    %v2150 = vsel %vm2149, %v2142, %v2146
    %v2151 = vand.u32 2147483647, %v1890
    %vm2152 = vcmp.eq.f32.partialorder %v2151, 8.507059e+37
    %v2153 = vand.u32 %v1890, 2147483648
    %v2154 = vor.u32 1.1754944e-38, %v2153
    %v2155 = vsel %vm2152, %v2154, %v2150
    %v2156 = vrcp.pop %v1893
    %v2157 = vmul.f32 %v1893, %v2156
    %v2158 = vsub.f32 1.0, %v2157
    %v2159 = vmul.f32 %v2156, %v2158
    %v2160 = vadd.f32 %v2156, %v2159
    %vm2161 = vweird.f32 %v1893
    %vm2162 = vweird.f32 %v2156
    %vm2163 = vmor %vm2161, %vm2162
    %v2164 = vsel %vm2163, %v2156, %v2160
    %v2165 = vand.u32 2147483647, %v1893
    %vm2166 = vcmp.eq.f32.partialorder %v2165, 8.507059e+37
    %v2167 = vand.u32 %v1893, 2147483648
    %v2168 = vor.u32 1.1754944e-38, %v2167
    %v2169 = vsel %vm2166, %v2168, %v2164
    %v2170 = vrcp.pop %v1896
    %v2171 = vmul.f32 %v1896, %v2170
    %v2172 = vsub.f32 1.0, %v2171
    %v2173 = vmul.f32 %v2170, %v2172
    %v2174 = vadd.f32 %v2170, %v2173
    %vm2175 = vweird.f32 %v1896
    %vm2176 = vweird.f32 %v2170
    %vm2177 = vmor %vm2175, %vm2176
    %v2178 = vsel %vm2177, %v2170, %v2174
    %v2179 = vand.u32 2147483647, %v1896
    %vm2180 = vcmp.eq.f32.partialorder %v2179, 8.507059e+37
    %v2181 = vand.u32 %v1896, 2147483648
    %v2182 = vor.u32 1.1754944e-38, %v2181
    %v2183 = vsel %vm2180, %v2182, %v2178
    %v2184 = vrcp.pop %v1899
    %v2185 = vmul.f32 %v1899, %v2184
    %v2186 = vsub.f32 1.0, %v2185
    %v2187 = vmul.f32 %v2184, %v2186
    %v2188 = vadd.f32 %v2184, %v2187
    %vm2189 = vweird.f32 %v1899
    %vm2190 = vweird.f32 %v2184
    %vm2191 = vmor %vm2189, %vm2190
    %v2192 = vsel %vm2191, %v2184, %v2188
    %v2193 = vand.u32 2147483647, %v1899
    %vm2194 = vcmp.eq.f32.partialorder %v2193, 8.507059e+37
    %v2195 = vand.u32 %v1899, 2147483648
    %v2196 = vor.u32 1.1754944e-38, %v2195
    %v2197 = vsel %vm2194, %v2196, %v2192
    %v2198 = vrcp.pop %v1902
    %v2199 = vmul.f32 %v1902, %v2198
    %v2200 = vsub.f32 1.0, %v2199
    %v2201 = vmul.f32 %v2198, %v2200
    %v2202 = vadd.f32 %v2198, %v2201
    %vm2203 = vweird.f32 %v1902
    %vm2204 = vweird.f32 %v2198
    %vm2205 = vmor %vm2203, %vm2204
    %v2206 = vsel %vm2205, %v2198, %v2202
    %v2207 = vand.u32 2147483647, %v1902
    %vm2208 = vcmp.eq.f32.partialorder %v2207, 8.507059e+37
    %v2209 = vand.u32 %v1902, 2147483648
    %v2210 = vor.u32 1.1754944e-38, %v2209
    %v2211 = vsel %vm2208, %v2210, %v2206
    %v2212 = vrcp.pop %v1905
    %v2213 = vmul.f32 %v1905, %v2212
    %v2214 = vsub.f32 1.0, %v2213
    %v2215 = vmul.f32 %v2212, %v2214
    %v2216 = vadd.f32 %v2212, %v2215
    %vm2217 = vweird.f32 %v1905
    %vm2218 = vweird.f32 %v2212
    %vm2219 = vmor %vm2217, %vm2218
    %v2220 = vsel %vm2219, %v2212, %v2216
    %v2221 = vand.u32 2147483647, %v1905
    %vm2222 = vcmp.eq.f32.partialorder %v2221, 8.507059e+37
    %v2223 = vand.u32 %v1905, 2147483648
    %v2224 = vor.u32 1.1754944e-38, %v2223
    %v2225 = vsel %vm2222, %v2224, %v2220
    %v2226 = vmul.f32 %v1930, %v2127
    %v2227 = vmul.f32 %v1956, %v2141
    %v2228 = vmul.f32 %v1982, %v2155
    %v2229 = vmul.f32 %v2008, %v2169
    %v2230 = vmul.f32 %v2034, %v2183
    %v2231 = vmul.f32 %v2060, %v2197
    %v2232 = vmul.f32 %v2086, %v2211
    %v2233 = vmul.f32 %v2112, %v2225
    %v2234 = vsel %vm264, %v2226, 0.0
    %v2235 = vrot.slane %v2234, 4
    %v2236 = vadd.f32 %v2234, %v2235
    %v2237 = vrot.slane %v2236, 2
    %v2238 = vadd.f32 %v2236, %v2237
    %v2239 = vrot.slane %v2238, 1
    %v2240 = vadd.f32 %v2238, %v2239
    %v2241 = vsel %vm264, %v2227, 0.0
    %v2242 = vrot.slane %v2241, 4
    %v2243 = vadd.f32 %v2241, %v2242
    %v2244 = vrot.slane %v2243, 2
    %v2245 = vadd.f32 %v2243, %v2244
    %v2246 = vrot.slane %v2245, 1
    %v2247 = vadd.f32 %v2245, %v2246
    %v2248 = vsel %vm264, %v2228, 0.0
    %v2249 = vrot.slane %v2248, 4
    %v2250 = vadd.f32 %v2248, %v2249
    %v2251 = vrot.slane %v2250, 2
    %v2252 = vadd.f32 %v2250, %v2251
    %v2253 = vrot.slane %v2252, 1
    %v2254 = vadd.f32 %v2252, %v2253
    %v2255 = vsel %vm264, %v2229, 0.0
    %v2256 = vrot.slane %v2255, 4
    %v2257 = vadd.f32 %v2255, %v2256
    %v2258 = vrot.slane %v2257, 2
    %v2259 = vadd.f32 %v2257, %v2258
    %v2260 = vrot.slane %v2259, 1
    %v2261 = vadd.f32 %v2259, %v2260
    %v2262 = vsel %vm264, %v2230, 0.0
    %v2263 = vrot.slane %v2262, 4
    %v2264 = vadd.f32 %v2262, %v2263
    %v2265 = vrot.slane %v2264, 2
    %v2266 = vadd.f32 %v2264, %v2265
    %v2267 = vrot.slane %v2266, 1
    %v2268 = vadd.f32 %v2266, %v2267
    %v2269 = vsel %vm264, %v2231, 0.0
    %v2270 = vrot.slane %v2269, 4
    %v2271 = vadd.f32 %v2269, %v2270
    %v2272 = vrot.slane %v2271, 2
    %v2273 = vadd.f32 %v2271, %v2272
    %v2274 = vrot.slane %v2273, 1
    %v2275 = vadd.f32 %v2273, %v2274
    %v2276 = vsel %vm264, %v2232, 0.0
    %v2277 = vrot.slane %v2276, 4
    %v2278 = vadd.f32 %v2276, %v2277
    %v2279 = vrot.slane %v2278, 2
    %v2280 = vadd.f32 %v2278, %v2279
    %v2281 = vrot.slane %v2280, 1
    %v2282 = vadd.f32 %v2280, %v2281
    %v2283 = vsel %vm264, %v2233, 0.0
    %v2284 = vrot.slane %v2283, 4
    %v2285 = vadd.f32 %v2283, %v2284
    %v2286 = vrot.slane %v2285, 2
    %v2287 = vadd.f32 %v2285, %v2286
    %v2288 = vrot.slane %v2287, 1
    %v2289 = vadd.f32 %v2287, %v2288
    %2290 = vrot.lane.b32.xlu0 %v172, 116
    %v2291 = vpop.permute.xlu0 %2290
    %2292 = vrot.lane.b32.xlu0 %v241, 116
    %v2293 = vpop.permute.xlu0 %2292
    %v2294 = vsel %vm264, %v2291, 0
    %v2296 = vsel %vm264, %v2293, 0
    %2298 = vmatpush.xpose.msra.mxu0 0.0
    %2299 = vmatpush.xpose.msra.mxu0 0.0
    %2300 = vmatpush.xpose.msra.mxu0 0.0
    %2301 = vmatpush.xpose.msra.mxu0 0.0
    %2302 = vmatpush.xpose.msra.mxu0 0.0
    %2303 = vmatpush.xpose.msra.mxu0 0.0
    %2304 = vmatpush.xpose.msra.mxu0 0.0
    %2305 = vmatpush.xpose.msra.mxu0 0.0
    %2306 = vmatpush.xpose.msra.mxu0 0.0
    %2307 = vmatpush.xpose.msra.mxu0 0.0
    %2308 = vmatpush.xpose.msra.mxu0 0.0
    %2309 = vmatpush.xpose.msra.mxu0 0.0
    %2310 = vmatpush.xpose.msra.mxu0 0.0
    %2311 = vmatpush.xpose.msra.mxu0 0.0
    %2312 = vmatpush.xpose.msra.mxu0 0.0
    %2313 = vmatpush.xpose.msra.mxu0 %v2296
    %2314 = vmatmul.f32.gmra.mxu0 %v2294
    %v2315 = vpop.f32.mrf.mxu0
    %v2316 = vadd.f32 0.0, %v2315
    %2317 = vdwg.mxu0
    %2318 = vrot.lane.b32.xlu0 %v175, 116
    %v2319 = vpop.permute.xlu0 %2318
    %2320 = vrot.lane.b32.xlu0 %v244, 116
    %v2321 = vpop.permute.xlu0 %2320
    %v2322 = vsel %vm264, %v2319, 0
    %v2324 = vsel %vm264, %v2321, 0
    %2326 = vmatpush.xpose.msra.mxu0 0.0
    %2327 = vmatpush.xpose.msra.mxu0 0.0
    %2328 = vmatpush.xpose.msra.mxu0 0.0
    %2329 = vmatpush.xpose.msra.mxu0 0.0
    %2330 = vmatpush.xpose.msra.mxu0 0.0
    %2331 = vmatpush.xpose.msra.mxu0 0.0
    %2332 = vmatpush.xpose.msra.mxu0 0.0
    %2333 = vmatpush.xpose.msra.mxu0 0.0
    %2334 = vmatpush.xpose.msra.mxu0 0.0
    %2335 = vmatpush.xpose.msra.mxu0 0.0
    %2336 = vmatpush.xpose.msra.mxu0 0.0
    %2337 = vmatpush.xpose.msra.mxu0 0.0
    %2338 = vmatpush.xpose.msra.mxu0 0.0
    %2339 = vmatpush.xpose.msra.mxu0 0.0
    %2340 = vmatpush.xpose.msra.mxu0 0.0
    %2341 = vmatpush.xpose.msra.mxu0 %v2324
    %2342 = vmatmul.f32.gmra.mxu0 %v2322
    %v2343 = vpop.f32.mrf.mxu0
    %v2344 = vadd.f32 0.0, %v2343
    %2345 = vdwg.mxu0
    %2346 = vrot.lane.b32.xlu0 %v178, 116
    %v2347 = vpop.permute.xlu0 %2346
    %2348 = vrot.lane.b32.xlu0 %v247, 116
    %v2349 = vpop.permute.xlu0 %2348
    %v2350 = vsel %vm264, %v2347, 0
    %v2352 = vsel %vm264, %v2349, 0
    %2354 = vmatpush.xpose.msra.mxu0 0.0
    %2355 = vmatpush.xpose.msra.mxu0 0.0
    %2356 = vmatpush.xpose.msra.mxu0 0.0
    %2357 = vmatpush.xpose.msra.mxu0 0.0
    %2358 = vmatpush.xpose.msra.mxu0 0.0
    %2359 = vmatpush.xpose.msra.mxu0 0.0
    %2360 = vmatpush.xpose.msra.mxu0 0.0
    %2361 = vmatpush.xpose.msra.mxu0 0.0
    %2362 = vmatpush.xpose.msra.mxu0 0.0
    %2363 = vmatpush.xpose.msra.mxu0 0.0
    %2364 = vmatpush.xpose.msra.mxu0 0.0
    %2365 = vmatpush.xpose.msra.mxu0 0.0
    %2366 = vmatpush.xpose.msra.mxu0 0.0
    %2367 = vmatpush.xpose.msra.mxu0 0.0
    %2368 = vmatpush.xpose.msra.mxu0 0.0
    %2369 = vmatpush.xpose.msra.mxu0 %v2352
    %2370 = vmatmul.f32.gmra.mxu0 %v2350
    %v2371 = vpop.f32.mrf.mxu0
    %v2372 = vadd.f32 0.0, %v2371
    %2373 = vdwg.mxu0
    %2374 = vrot.lane.b32.xlu0 %v181, 116
    %v2375 = vpop.permute.xlu0 %2374
    %2376 = vrot.lane.b32.xlu0 %v250, 116
    %v2377 = vpop.permute.xlu0 %2376
    %v2378 = vsel %vm264, %v2375, 0
    %v2380 = vsel %vm264, %v2377, 0
    %2382 = vmatpush.xpose.msra.mxu0 0.0
    %2383 = vmatpush.xpose.msra.mxu0 0.0
    %2384 = vmatpush.xpose.msra.mxu0 0.0
    %2385 = vmatpush.xpose.msra.mxu0 0.0
    %2386 = vmatpush.xpose.msra.mxu0 0.0
    %2387 = vmatpush.xpose.msra.mxu0 0.0
    %2388 = vmatpush.xpose.msra.mxu0 0.0
    %2389 = vmatpush.xpose.msra.mxu0 0.0
    %2390 = vmatpush.xpose.msra.mxu0 0.0
    %2391 = vmatpush.xpose.msra.mxu0 0.0
    %2392 = vmatpush.xpose.msra.mxu0 0.0
    %2393 = vmatpush.xpose.msra.mxu0 0.0
    %2394 = vmatpush.xpose.msra.mxu0 0.0
    %2395 = vmatpush.xpose.msra.mxu0 0.0
    %2396 = vmatpush.xpose.msra.mxu0 0.0
    %2397 = vmatpush.xpose.msra.mxu0 %v2380
    %2398 = vmatmul.f32.gmra.mxu0 %v2378
    %v2399 = vpop.f32.mrf.mxu0
    %v2400 = vadd.f32 0.0, %v2399
    %2401 = vdwg.mxu0
    %2402 = vrot.lane.b32.xlu0 %v184, 116
    %v2403 = vpop.permute.xlu0 %2402
    %2404 = vrot.lane.b32.xlu0 %v253, 116
    %v2405 = vpop.permute.xlu0 %2404
    %v2406 = vsel %vm264, %v2403, 0
    %v2408 = vsel %vm264, %v2405, 0
    %2410 = vmatpush.xpose.msra.mxu0 0.0
    %2411 = vmatpush.xpose.msra.mxu0 0.0
    %2412 = vmatpush.xpose.msra.mxu0 0.0
    %2413 = vmatpush.xpose.msra.mxu0 0.0
    %2414 = vmatpush.xpose.msra.mxu0 0.0
    %2415 = vmatpush.xpose.msra.mxu0 0.0
    %2416 = vmatpush.xpose.msra.mxu0 0.0
    %2417 = vmatpush.xpose.msra.mxu0 0.0
    %2418 = vmatpush.xpose.msra.mxu0 0.0
    %2419 = vmatpush.xpose.msra.mxu0 0.0
    %2420 = vmatpush.xpose.msra.mxu0 0.0
    %2421 = vmatpush.xpose.msra.mxu0 0.0
    %2422 = vmatpush.xpose.msra.mxu0 0.0
    %2423 = vmatpush.xpose.msra.mxu0 0.0
    %2424 = vmatpush.xpose.msra.mxu0 0.0
    %2425 = vmatpush.xpose.msra.mxu0 %v2408
    %2426 = vmatmul.f32.gmra.mxu0 %v2406
    %v2427 = vpop.f32.mrf.mxu0
    %v2428 = vadd.f32 0.0, %v2427
    %2429 = vdwg.mxu0
    %2430 = vrot.lane.b32.xlu0 %v187, 116
    %v2431 = vpop.permute.xlu0 %2430
    %2432 = vrot.lane.b32.xlu0 %v256, 116
    %v2433 = vpop.permute.xlu0 %2432
    %v2434 = vsel %vm264, %v2431, 0
    %v2436 = vsel %vm264, %v2433, 0
    %2438 = vmatpush.xpose.msra.mxu0 0.0
    %2439 = vmatpush.xpose.msra.mxu0 0.0
    %2440 = vmatpush.xpose.msra.mxu0 0.0
    %2441 = vmatpush.xpose.msra.mxu0 0.0
    %2442 = vmatpush.xpose.msra.mxu0 0.0
    %2443 = vmatpush.xpose.msra.mxu0 0.0
    %2444 = vmatpush.xpose.msra.mxu0 0.0
    %2445 = vmatpush.xpose.msra.mxu0 0.0
    %2446 = vmatpush.xpose.msra.mxu0 0.0
    %2447 = vmatpush.xpose.msra.mxu0 0.0
    %2448 = vmatpush.xpose.msra.mxu0 0.0
    %2449 = vmatpush.xpose.msra.mxu0 0.0
    %2450 = vmatpush.xpose.msra.mxu0 0.0
    %2451 = vmatpush.xpose.msra.mxu0 0.0
    %2452 = vmatpush.xpose.msra.mxu0 0.0
    %2453 = vmatpush.xpose.msra.mxu0 %v2436
    %2454 = vmatmul.f32.gmra.mxu0 %v2434
    %v2455 = vpop.f32.mrf.mxu0
    %v2456 = vadd.f32 0.0, %v2455
    %2457 = vdwg.mxu0
    %2458 = vrot.lane.b32.xlu0 %v190, 116
    %v2459 = vpop.permute.xlu0 %2458
    %2460 = vrot.lane.b32.xlu0 %v259, 116
    %v2461 = vpop.permute.xlu0 %2460
    %v2462 = vsel %vm264, %v2459, 0
    %v2464 = vsel %vm264, %v2461, 0
    %2466 = vmatpush.xpose.msra.mxu0 0.0
    %2467 = vmatpush.xpose.msra.mxu0 0.0
    %2468 = vmatpush.xpose.msra.mxu0 0.0
    %2469 = vmatpush.xpose.msra.mxu0 0.0
    %2470 = vmatpush.xpose.msra.mxu0 0.0
    %2471 = vmatpush.xpose.msra.mxu0 0.0
    %2472 = vmatpush.xpose.msra.mxu0 0.0
    %2473 = vmatpush.xpose.msra.mxu0 0.0
    %2474 = vmatpush.xpose.msra.mxu0 0.0
    %2475 = vmatpush.xpose.msra.mxu0 0.0
    %2476 = vmatpush.xpose.msra.mxu0 0.0
    %2477 = vmatpush.xpose.msra.mxu0 0.0
    %2478 = vmatpush.xpose.msra.mxu0 0.0
    %2479 = vmatpush.xpose.msra.mxu0 0.0
    %2480 = vmatpush.xpose.msra.mxu0 0.0
    %2481 = vmatpush.xpose.msra.mxu0 %v2464
    %2482 = vmatmul.f32.gmra.mxu0 %v2462
    %v2483 = vpop.f32.mrf.mxu0
    %v2484 = vadd.f32 0.0, %v2483
    %2485 = vdwg.mxu0
    %2486 = vrot.lane.b32.xlu0 %v193, 116
    %v2487 = vpop.permute.xlu0 %2486
    %2488 = vrot.lane.b32.xlu0 %v262, 116
    %v2489 = vpop.permute.xlu0 %2488
    %v2490 = vsel %vm264, %v2487, 0
    %v2492 = vsel %vm264, %v2489, 0
    %2494 = vmatpush.xpose.msra.mxu0 0.0
    %2495 = vmatpush.xpose.msra.mxu0 0.0
    %2496 = vmatpush.xpose.msra.mxu0 0.0
    %2497 = vmatpush.xpose.msra.mxu0 0.0
    %2498 = vmatpush.xpose.msra.mxu0 0.0
    %2499 = vmatpush.xpose.msra.mxu0 0.0
    %2500 = vmatpush.xpose.msra.mxu0 0.0
    %2501 = vmatpush.xpose.msra.mxu0 0.0
    %2502 = vmatpush.xpose.msra.mxu0 0.0
    %2503 = vmatpush.xpose.msra.mxu0 0.0
    %2504 = vmatpush.xpose.msra.mxu0 0.0
    %2505 = vmatpush.xpose.msra.mxu0 0.0
    %2506 = vmatpush.xpose.msra.mxu0 0.0
    %2507 = vmatpush.xpose.msra.mxu0 0.0
    %2508 = vmatpush.xpose.msra.mxu0 0.0
    %2509 = vmatpush.xpose.msra.mxu0 %v2492
    %2510 = vmatmul.f32.gmra.mxu0 %v2490
    %v2511 = vpop.f32.mrf.mxu0
    %v2512 = vadd.f32 0.0, %v2511
    %2513 = vdwg.mxu0
    %v2514 = vsel %vm473, %v2316, -inf
    %2515 = vmax.xlane.f32.xlu0 %v2514
    %v2516 = vpop.xlane.xlu0 %2515
    %v2517 = vsel %vm473, %v2344, -inf
    %2518 = vmax.xlane.f32.xlu0 %v2517
    %v2519 = vpop.xlane.xlu0 %2518
    %v2520 = vsel %vm473, %v2372, -inf
    %2521 = vmax.xlane.f32.xlu0 %v2520
    %v2522 = vpop.xlane.xlu0 %2521
    %v2523 = vsel %vm473, %v2400, -inf
    %2524 = vmax.xlane.f32.xlu0 %v2523
    %v2525 = vpop.xlane.xlu0 %2524
    %v2526 = vsel %vm473, %v2428, -inf
    %2527 = vmax.xlane.f32.xlu0 %v2526
    %v2528 = vpop.xlane.xlu0 %2527
    %v2529 = vsel %vm473, %v2456, -inf
    %2530 = vmax.xlane.f32.xlu0 %v2529
    %v2531 = vpop.xlane.xlu0 %2530
    %v2532 = vsel %vm473, %v2484, -inf
    %2533 = vmax.xlane.f32.xlu0 %v2532
    %v2534 = vpop.xlane.xlu0 %2533
    %v2535 = vsel %vm473, %v2512, -inf
    %2536 = vmax.xlane.f32.xlu0 %v2535
    %v2537 = vpop.xlane.xlu0 %2536
    %v2538 = vsub.f32 %v2316, %v2516
    %v2539 = vsub.f32 %v2344, %v2519
    %v2540 = vsub.f32 %v2372, %v2522
    %v2541 = vsub.f32 %v2400, %v2525
    %v2542 = vsub.f32 %v2428, %v2528
    %v2543 = vsub.f32 %v2456, %v2531
    %v2544 = vsub.f32 %v2484, %v2534
    %v2545 = vsub.f32 %v2512, %v2537
    %v2546 = vmul.f32 %v2538, 1.442695
    %v2547 = vpow.pop %v2546
    %v2548 = vmul.f32 %v2539, 1.442695
    %v2549 = vpow.pop %v2548
    %v2550 = vmul.f32 %v2540, 1.442695
    %v2551 = vpow.pop %v2550
    %v2552 = vmul.f32 %v2541, 1.442695
    %v2553 = vpow.pop %v2552
    %v2554 = vmul.f32 %v2542, 1.442695
    %v2555 = vpow.pop %v2554
    %v2556 = vmul.f32 %v2543, 1.442695
    %v2557 = vpow.pop %v2556
    %v2558 = vmul.f32 %v2544, 1.442695
    %v2559 = vpow.pop %v2558
    %v2560 = vmul.f32 %v2545, 1.442695
    %v2561 = vpow.pop %v2560
    %v2562 = vsel %vm473, %v2547, 0.0
    %2563 = vadd.xlane.f32.xlu0 %v2562
    %v2564 = vpop.xlane.xlu0 %2563
    %v2565 = vsel %vm473, %v2549, 0.0
    %2566 = vadd.xlane.f32.xlu0 %v2565
    %v2567 = vpop.xlane.xlu0 %2566
    %v2568 = vsel %vm473, %v2551, 0.0
    %2569 = vadd.xlane.f32.xlu0 %v2568
    %v2570 = vpop.xlane.xlu0 %2569
    %v2571 = vsel %vm473, %v2553, 0.0
    %2572 = vadd.xlane.f32.xlu0 %v2571
    %v2573 = vpop.xlane.xlu0 %2572
    %v2574 = vsel %vm473, %v2555, 0.0
    %2575 = vadd.xlane.f32.xlu0 %v2574
    %v2576 = vpop.xlane.xlu0 %2575
    %v2577 = vsel %vm473, %v2557, 0.0
    %2578 = vadd.xlane.f32.xlu0 %v2577
    %v2579 = vpop.xlane.xlu0 %2578
    %v2580 = vsel %vm473, %v2559, 0.0
    %2581 = vadd.xlane.f32.xlu0 %v2580
    %v2582 = vpop.xlane.xlu0 %2581
    %v2583 = vsel %vm473, %v2561, 0.0
    %2584 = vadd.xlane.f32.xlu0 %v2583
    %v2585 = vpop.xlane.xlu0 %2584
    %2586 = vrot.lane.b32.xlu0 %v241, 84
    %v2587 = vpop.permute.xlu0 %2586
    %v2590 = vsel %vm473, %v2547, 0
    %2592 = vmatpush.msra.mxu0 0.0
    %2593 = vmatpush.msra.mxu0 0.0
    %2594 = vmatpush.msra.mxu0 0.0
    %2595 = vmatpush.msra.mxu0 0.0
    %2596 = vmatpush.msra.mxu0 0.0
    %2597 = vmatpush.msra.mxu0 0.0
    %2598 = vmatpush.msra.mxu0 0.0
    %2599 = vmatpush.msra.mxu0 0.0
    %2600 = vmatpush.msra.mxu0 0.0
    %2601 = vmatpush.msra.mxu0 0.0
    %2602 = vmatpush.msra.mxu0 0.0
    %2603 = vmatpush.msra.mxu0 0.0
    %2604 = vmatpush.msra.mxu0 0.0
    %2605 = vmatpush.msra.mxu0 0.0
    %2606 = vmatpush.msra.mxu0 0.0
    %2607 = vmatpush.msra.mxu0 %v2587
    %2608 = vmatmul.f32.gmra.mxu0 %v2590
    %v2609 = vpop.f32.mrf.mxu0
    %v2610 = vadd.f32 0.0, %v2609
    %2611 = vdwg.mxu0
    %2612 = vrot.lane.b32.xlu0 %v244, 84
    %v2613 = vpop.permute.xlu0 %2612
    %v2616 = vsel %vm473, %v2549, 0
    %2618 = vmatpush.msra.mxu0 0.0
    %2619 = vmatpush.msra.mxu0 0.0
    %2620 = vmatpush.msra.mxu0 0.0
    %2621 = vmatpush.msra.mxu0 0.0
    %2622 = vmatpush.msra.mxu0 0.0
    %2623 = vmatpush.msra.mxu0 0.0
    %2624 = vmatpush.msra.mxu0 0.0
    %2625 = vmatpush.msra.mxu0 0.0
    %2626 = vmatpush.msra.mxu0 0.0
    %2627 = vmatpush.msra.mxu0 0.0
    %2628 = vmatpush.msra.mxu0 0.0
    %2629 = vmatpush.msra.mxu0 0.0
    %2630 = vmatpush.msra.mxu0 0.0
    %2631 = vmatpush.msra.mxu0 0.0
    %2632 = vmatpush.msra.mxu0 0.0
    %2633 = vmatpush.msra.mxu0 %v2613
    %2634 = vmatmul.f32.gmra.mxu0 %v2616
    %v2635 = vpop.f32.mrf.mxu0
    %v2636 = vadd.f32 0.0, %v2635
    %2637 = vdwg.mxu0
    %2638 = vrot.lane.b32.xlu0 %v247, 84
    %v2639 = vpop.permute.xlu0 %2638
    %v2642 = vsel %vm473, %v2551, 0
    %2644 = vmatpush.msra.mxu0 0.0
    %2645 = vmatpush.msra.mxu0 0.0
    %2646 = vmatpush.msra.mxu0 0.0
    %2647 = vmatpush.msra.mxu0 0.0
    %2648 = vmatpush.msra.mxu0 0.0
    %2649 = vmatpush.msra.mxu0 0.0
    %2650 = vmatpush.msra.mxu0 0.0
    %2651 = vmatpush.msra.mxu0 0.0
    %2652 = vmatpush.msra.mxu0 0.0
    %2653 = vmatpush.msra.mxu0 0.0
    %2654 = vmatpush.msra.mxu0 0.0
    %2655 = vmatpush.msra.mxu0 0.0
    %2656 = vmatpush.msra.mxu0 0.0
    %2657 = vmatpush.msra.mxu0 0.0
    %2658 = vmatpush.msra.mxu0 0.0
    %2659 = vmatpush.msra.mxu0 %v2639
    %2660 = vmatmul.f32.gmra.mxu0 %v2642
    %v2661 = vpop.f32.mrf.mxu0
    %v2662 = vadd.f32 0.0, %v2661
    %2663 = vdwg.mxu0
    %2664 = vrot.lane.b32.xlu0 %v250, 84
    %v2665 = vpop.permute.xlu0 %2664
    %v2668 = vsel %vm473, %v2553, 0
    %2670 = vmatpush.msra.mxu0 0.0
    %2671 = vmatpush.msra.mxu0 0.0
    %2672 = vmatpush.msra.mxu0 0.0
    %2673 = vmatpush.msra.mxu0 0.0
    %2674 = vmatpush.msra.mxu0 0.0
    %2675 = vmatpush.msra.mxu0 0.0
    %2676 = vmatpush.msra.mxu0 0.0
    %2677 = vmatpush.msra.mxu0 0.0
    %2678 = vmatpush.msra.mxu0 0.0
    %2679 = vmatpush.msra.mxu0 0.0
    %2680 = vmatpush.msra.mxu0 0.0
    %2681 = vmatpush.msra.mxu0 0.0
    %2682 = vmatpush.msra.mxu0 0.0
    %2683 = vmatpush.msra.mxu0 0.0
    %2684 = vmatpush.msra.mxu0 0.0
    %2685 = vmatpush.msra.mxu0 %v2665
    %2686 = vmatmul.f32.gmra.mxu0 %v2668
    %v2687 = vpop.f32.mrf.mxu0
    %v2688 = vadd.f32 0.0, %v2687
    %2689 = vdwg.mxu0
    %2690 = vrot.lane.b32.xlu0 %v253, 84
    %v2691 = vpop.permute.xlu0 %2690
    %v2694 = vsel %vm473, %v2555, 0
    %2696 = vmatpush.msra.mxu0 0.0
    %2697 = vmatpush.msra.mxu0 0.0
    %2698 = vmatpush.msra.mxu0 0.0
    %2699 = vmatpush.msra.mxu0 0.0
    %2700 = vmatpush.msra.mxu0 0.0
    %2701 = vmatpush.msra.mxu0 0.0
    %2702 = vmatpush.msra.mxu0 0.0
    %2703 = vmatpush.msra.mxu0 0.0
    %2704 = vmatpush.msra.mxu0 0.0
    %2705 = vmatpush.msra.mxu0 0.0
    %2706 = vmatpush.msra.mxu0 0.0
    %2707 = vmatpush.msra.mxu0 0.0
    %2708 = vmatpush.msra.mxu0 0.0
    %2709 = vmatpush.msra.mxu0 0.0
    %2710 = vmatpush.msra.mxu0 0.0
    %2711 = vmatpush.msra.mxu0 %v2691
    %2712 = vmatmul.f32.gmra.mxu0 %v2694
    %v2713 = vpop.f32.mrf.mxu0
    %v2714 = vadd.f32 0.0, %v2713
    %2715 = vdwg.mxu0
    %2716 = vrot.lane.b32.xlu0 %v256, 84
    %v2717 = vpop.permute.xlu0 %2716
    %v2720 = vsel %vm473, %v2557, 0
    %2722 = vmatpush.msra.mxu0 0.0
    %2723 = vmatpush.msra.mxu0 0.0
    %2724 = vmatpush.msra.mxu0 0.0
    %2725 = vmatpush.msra.mxu0 0.0
    %2726 = vmatpush.msra.mxu0 0.0
    %2727 = vmatpush.msra.mxu0 0.0
    %2728 = vmatpush.msra.mxu0 0.0
    %2729 = vmatpush.msra.mxu0 0.0
    %2730 = vmatpush.msra.mxu0 0.0
    %2731 = vmatpush.msra.mxu0 0.0
    %2732 = vmatpush.msra.mxu0 0.0
    %2733 = vmatpush.msra.mxu0 0.0
    %2734 = vmatpush.msra.mxu0 0.0
    %2735 = vmatpush.msra.mxu0 0.0
    %2736 = vmatpush.msra.mxu0 0.0
    %2737 = vmatpush.msra.mxu0 %v2717
    %2738 = vmatmul.f32.gmra.mxu0 %v2720
    %v2739 = vpop.f32.mrf.mxu0
    %v2740 = vadd.f32 0.0, %v2739
    %2741 = vdwg.mxu0
    %2742 = vrot.lane.b32.xlu0 %v259, 84
    %v2743 = vpop.permute.xlu0 %2742
    %v2746 = vsel %vm473, %v2559, 0
    %2748 = vmatpush.msra.mxu0 0.0
    %2749 = vmatpush.msra.mxu0 0.0
    %2750 = vmatpush.msra.mxu0 0.0
    %2751 = vmatpush.msra.mxu0 0.0
    %2752 = vmatpush.msra.mxu0 0.0
    %2753 = vmatpush.msra.mxu0 0.0
    %2754 = vmatpush.msra.mxu0 0.0
    %2755 = vmatpush.msra.mxu0 0.0
    %2756 = vmatpush.msra.mxu0 0.0
    %2757 = vmatpush.msra.mxu0 0.0
    %2758 = vmatpush.msra.mxu0 0.0
    %2759 = vmatpush.msra.mxu0 0.0
    %2760 = vmatpush.msra.mxu0 0.0
    %2761 = vmatpush.msra.mxu0 0.0
    %2762 = vmatpush.msra.mxu0 0.0
    %2763 = vmatpush.msra.mxu0 %v2743
    %2764 = vmatmul.f32.gmra.mxu0 %v2746
    %v2765 = vpop.f32.mrf.mxu0
    %v2766 = vadd.f32 0.0, %v2765
    %2767 = vdwg.mxu0
    %2768 = vrot.lane.b32.xlu0 %v262, 84
    %v2769 = vpop.permute.xlu0 %2768
    %v2772 = vsel %vm473, %v2561, 0
    %2774 = vmatpush.msra.mxu0 0.0
    %2775 = vmatpush.msra.mxu0 0.0
    %2776 = vmatpush.msra.mxu0 0.0
    %2777 = vmatpush.msra.mxu0 0.0
    %2778 = vmatpush.msra.mxu0 0.0
    %2779 = vmatpush.msra.mxu0 0.0
    %2780 = vmatpush.msra.mxu0 0.0
    %2781 = vmatpush.msra.mxu0 0.0
    %2782 = vmatpush.msra.mxu0 0.0
    %2783 = vmatpush.msra.mxu0 0.0
    %2784 = vmatpush.msra.mxu0 0.0
    %2785 = vmatpush.msra.mxu0 0.0
    %2786 = vmatpush.msra.mxu0 0.0
    %2787 = vmatpush.msra.mxu0 0.0
    %2788 = vmatpush.msra.mxu0 0.0
    %2789 = vmatpush.msra.mxu0 %v2769
    %2790 = vmatmul.f32.gmra.mxu0 %v2772
    %v2791 = vpop.f32.mrf.mxu0
    %v2792 = vadd.f32 0.0, %v2791
    %2793 = vdwg.mxu0
    %v2794 = vrcp.pop %v2564
    %v2795 = vmul.f32 %v2564, %v2794
    %v2796 = vsub.f32 1.0, %v2795
    %v2797 = vmul.f32 %v2794, %v2796
    %v2798 = vadd.f32 %v2794, %v2797
    %vm2799 = vweird.f32 %v2564
    %vm2800 = vweird.f32 %v2794
    %vm2801 = vmor %vm2799, %vm2800
    %v2802 = vsel %vm2801, %v2794, %v2798
    %v2803 = vand.u32 2147483647, %v2564
    %vm2804 = vcmp.eq.f32.partialorder %v2803, 8.507059e+37
    %v2805 = vand.u32 %v2564, 2147483648
    %v2806 = vor.u32 1.1754944e-38, %v2805
    %v2807 = vsel %vm2804, %v2806, %v2802
    %v2808 = vrcp.pop %v2567
    %v2809 = vmul.f32 %v2567, %v2808
    %v2810 = vsub.f32 1.0, %v2809
    %v2811 = vmul.f32 %v2808, %v2810
    %v2812 = vadd.f32 %v2808, %v2811
    %vm2813 = vweird.f32 %v2567
    %vm2814 = vweird.f32 %v2808
    %vm2815 = vmor %vm2813, %vm2814
    %v2816 = vsel %vm2815, %v2808, %v2812
    %v2817 = vand.u32 2147483647, %v2567
    %vm2818 = vcmp.eq.f32.partialorder %v2817, 8.507059e+37
    %v2819 = vand.u32 %v2567, 2147483648
    %v2820 = vor.u32 1.1754944e-38, %v2819
    %v2821 = vsel %vm2818, %v2820, %v2816
    %v2822 = vrcp.pop %v2570
    %v2823 = vmul.f32 %v2570, %v2822
    %v2824 = vsub.f32 1.0, %v2823
    %v2825 = vmul.f32 %v2822, %v2824
    %v2826 = vadd.f32 %v2822, %v2825
    %vm2827 = vweird.f32 %v2570
    %vm2828 = vweird.f32 %v2822
    %vm2829 = vmor %vm2827, %vm2828
    %v2830 = vsel %vm2829, %v2822, %v2826
    %v2831 = vand.u32 2147483647, %v2570
    %vm2832 = vcmp.eq.f32.partialorder %v2831, 8.507059e+37
    %v2833 = vand.u32 %v2570, 2147483648
    %v2834 = vor.u32 1.1754944e-38, %v2833
    %v2835 = vsel %vm2832, %v2834, %v2830
    %v2836 = vrcp.pop %v2573
    %v2837 = vmul.f32 %v2573, %v2836
    %v2838 = vsub.f32 1.0, %v2837
    %v2839 = vmul.f32 %v2836, %v2838
    %v2840 = vadd.f32 %v2836, %v2839
    %vm2841 = vweird.f32 %v2573
    %vm2842 = vweird.f32 %v2836
    %vm2843 = vmor %vm2841, %vm2842
    %v2844 = vsel %vm2843, %v2836, %v2840
    %v2845 = vand.u32 2147483647, %v2573
    %vm2846 = vcmp.eq.f32.partialorder %v2845, 8.507059e+37
    %v2847 = vand.u32 %v2573, 2147483648
    %v2848 = vor.u32 1.1754944e-38, %v2847
    %v2849 = vsel %vm2846, %v2848, %v2844
    %v2850 = vrcp.pop %v2576
    %v2851 = vmul.f32 %v2576, %v2850
    %v2852 = vsub.f32 1.0, %v2851
    %v2853 = vmul.f32 %v2850, %v2852
    %v2854 = vadd.f32 %v2850, %v2853
    %vm2855 = vweird.f32 %v2576
    %vm2856 = vweird.f32 %v2850
    %vm2857 = vmor %vm2855, %vm2856
    %v2858 = vsel %vm2857, %v2850, %v2854
    %v2859 = vand.u32 2147483647, %v2576
    %vm2860 = vcmp.eq.f32.partialorder %v2859, 8.507059e+37
    %v2861 = vand.u32 %v2576, 2147483648
    %v2862 = vor.u32 1.1754944e-38, %v2861
    %v2863 = vsel %vm2860, %v2862, %v2858
    %v2864 = vrcp.pop %v2579
    %v2865 = vmul.f32 %v2579, %v2864
    %v2866 = vsub.f32 1.0, %v2865
    %v2867 = vmul.f32 %v2864, %v2866
    %v2868 = vadd.f32 %v2864, %v2867
    %vm2869 = vweird.f32 %v2579
    %vm2870 = vweird.f32 %v2864
    %vm2871 = vmor %vm2869, %vm2870
    %v2872 = vsel %vm2871, %v2864, %v2868
    %v2873 = vand.u32 2147483647, %v2579
    %vm2874 = vcmp.eq.f32.partialorder %v2873, 8.507059e+37
    %v2875 = vand.u32 %v2579, 2147483648
    %v2876 = vor.u32 1.1754944e-38, %v2875
    %v2877 = vsel %vm2874, %v2876, %v2872
    %v2878 = vrcp.pop %v2582
    %v2879 = vmul.f32 %v2582, %v2878
    %v2880 = vsub.f32 1.0, %v2879
    %v2881 = vmul.f32 %v2878, %v2880
    %v2882 = vadd.f32 %v2878, %v2881
    %vm2883 = vweird.f32 %v2582
    %vm2884 = vweird.f32 %v2878
    %vm2885 = vmor %vm2883, %vm2884
    %v2886 = vsel %vm2885, %v2878, %v2882
    %v2887 = vand.u32 2147483647, %v2582
    %vm2888 = vcmp.eq.f32.partialorder %v2887, 8.507059e+37
    %v2889 = vand.u32 %v2582, 2147483648
    %v2890 = vor.u32 1.1754944e-38, %v2889
    %v2891 = vsel %vm2888, %v2890, %v2886
    %v2892 = vrcp.pop %v2585
    %v2893 = vmul.f32 %v2585, %v2892
    %v2894 = vsub.f32 1.0, %v2893
    %v2895 = vmul.f32 %v2892, %v2894
    %v2896 = vadd.f32 %v2892, %v2895
    %vm2897 = vweird.f32 %v2585
    %vm2898 = vweird.f32 %v2892
    %vm2899 = vmor %vm2897, %vm2898
    %v2900 = vsel %vm2899, %v2892, %v2896
    %v2901 = vand.u32 2147483647, %v2585
    %vm2902 = vcmp.eq.f32.partialorder %v2901, 8.507059e+37
    %v2903 = vand.u32 %v2585, 2147483648
    %v2904 = vor.u32 1.1754944e-38, %v2903
    %v2905 = vsel %vm2902, %v2904, %v2900
    %v2906 = vmul.f32 %v2610, %v2807
    %v2907 = vmul.f32 %v2636, %v2821
    %v2908 = vmul.f32 %v2662, %v2835
    %v2909 = vmul.f32 %v2688, %v2849
    %v2910 = vmul.f32 %v2714, %v2863
    %v2911 = vmul.f32 %v2740, %v2877
    %v2912 = vmul.f32 %v2766, %v2891
    %v2913 = vmul.f32 %v2792, %v2905
    %v2914 = vsel %vm264, %v2906, 0.0
    %v2915 = vrot.slane %v2914, 4
    %v2916 = vadd.f32 %v2914, %v2915
    %v2917 = vrot.slane %v2916, 2
    %v2918 = vadd.f32 %v2916, %v2917
    %v2919 = vrot.slane %v2918, 1
    %v2920 = vadd.f32 %v2918, %v2919
    %v2921 = vsel %vm264, %v2907, 0.0
    %v2922 = vrot.slane %v2921, 4
    %v2923 = vadd.f32 %v2921, %v2922
    %v2924 = vrot.slane %v2923, 2
    %v2925 = vadd.f32 %v2923, %v2924
    %v2926 = vrot.slane %v2925, 1
    %v2927 = vadd.f32 %v2925, %v2926
    %v2928 = vsel %vm264, %v2908, 0.0
    %v2929 = vrot.slane %v2928, 4
    %v2930 = vadd.f32 %v2928, %v2929
    %v2931 = vrot.slane %v2930, 2
    %v2932 = vadd.f32 %v2930, %v2931
    %v2933 = vrot.slane %v2932, 1
    %v2934 = vadd.f32 %v2932, %v2933
    %v2935 = vsel %vm264, %v2909, 0.0
    %v2936 = vrot.slane %v2935, 4
    %v2937 = vadd.f32 %v2935, %v2936
    %v2938 = vrot.slane %v2937, 2
    %v2939 = vadd.f32 %v2937, %v2938
    %v2940 = vrot.slane %v2939, 1
    %v2941 = vadd.f32 %v2939, %v2940
    %v2942 = vsel %vm264, %v2910, 0.0
    %v2943 = vrot.slane %v2942, 4
    %v2944 = vadd.f32 %v2942, %v2943
    %v2945 = vrot.slane %v2944, 2
    %v2946 = vadd.f32 %v2944, %v2945
    %v2947 = vrot.slane %v2946, 1
    %v2948 = vadd.f32 %v2946, %v2947
    %v2949 = vsel %vm264, %v2911, 0.0
    %v2950 = vrot.slane %v2949, 4
    %v2951 = vadd.f32 %v2949, %v2950
    %v2952 = vrot.slane %v2951, 2
    %v2953 = vadd.f32 %v2951, %v2952
    %v2954 = vrot.slane %v2953, 1
    %v2955 = vadd.f32 %v2953, %v2954
    %v2956 = vsel %vm264, %v2912, 0.0
    %v2957 = vrot.slane %v2956, 4
    %v2958 = vadd.f32 %v2956, %v2957
    %v2959 = vrot.slane %v2958, 2
    %v2960 = vadd.f32 %v2958, %v2959
    %v2961 = vrot.slane %v2960, 1
    %v2962 = vadd.f32 %v2960, %v2961
    %v2963 = vsel %vm264, %v2913, 0.0
    %v2964 = vrot.slane %v2963, 4
    %v2965 = vadd.f32 %v2963, %v2964
    %v2966 = vrot.slane %v2965, 2
    %v2967 = vadd.f32 %v2965, %v2966
    %v2968 = vrot.slane %v2967, 1
    %v2969 = vadd.f32 %v2967, %v2968
    %2970 = vrot.lane.b32.xlu0 %v172, 112
    %v2971 = vpop.permute.xlu0 %2970
    %2972 = vrot.lane.b32.xlu0 %v241, 112
    %v2973 = vpop.permute.xlu0 %2972
    %v2974 = vsel %vm264, %v2971, 0
    %v2976 = vsel %vm264, %v2973, 0
    %2978 = vmatpush.xpose.msra.mxu0 0.0
    %2979 = vmatpush.xpose.msra.mxu0 0.0
    %2980 = vmatpush.xpose.msra.mxu0 0.0
    %2981 = vmatpush.xpose.msra.mxu0 0.0
    %2982 = vmatpush.xpose.msra.mxu0 0.0
    %2983 = vmatpush.xpose.msra.mxu0 0.0
    %2984 = vmatpush.xpose.msra.mxu0 0.0
    %2985 = vmatpush.xpose.msra.mxu0 0.0
    %2986 = vmatpush.xpose.msra.mxu0 0.0
    %2987 = vmatpush.xpose.msra.mxu0 0.0
    %2988 = vmatpush.xpose.msra.mxu0 0.0
    %2989 = vmatpush.xpose.msra.mxu0 0.0
    %2990 = vmatpush.xpose.msra.mxu0 0.0
    %2991 = vmatpush.xpose.msra.mxu0 0.0
    %2992 = vmatpush.xpose.msra.mxu0 0.0
    %2993 = vmatpush.xpose.msra.mxu0 %v2976
    %2994 = vmatmul.f32.gmra.mxu0 %v2974
    %v2995 = vpop.f32.mrf.mxu0
    %v2996 = vadd.f32 0.0, %v2995
    %2997 = vdwg.mxu0
    %2998 = vrot.lane.b32.xlu0 %v175, 112
    %v2999 = vpop.permute.xlu0 %2998
    %3000 = vrot.lane.b32.xlu0 %v244, 112
    %v3001 = vpop.permute.xlu0 %3000
    %v3002 = vsel %vm264, %v2999, 0
    %v3004 = vsel %vm264, %v3001, 0
    %3006 = vmatpush.xpose.msra.mxu0 0.0
    %3007 = vmatpush.xpose.msra.mxu0 0.0
    %3008 = vmatpush.xpose.msra.mxu0 0.0
    %3009 = vmatpush.xpose.msra.mxu0 0.0
    %3010 = vmatpush.xpose.msra.mxu0 0.0
    %3011 = vmatpush.xpose.msra.mxu0 0.0
    %3012 = vmatpush.xpose.msra.mxu0 0.0
    %3013 = vmatpush.xpose.msra.mxu0 0.0
    %3014 = vmatpush.xpose.msra.mxu0 0.0
    %3015 = vmatpush.xpose.msra.mxu0 0.0
    %3016 = vmatpush.xpose.msra.mxu0 0.0
    %3017 = vmatpush.xpose.msra.mxu0 0.0
    %3018 = vmatpush.xpose.msra.mxu0 0.0
    %3019 = vmatpush.xpose.msra.mxu0 0.0
    %3020 = vmatpush.xpose.msra.mxu0 0.0
    %3021 = vmatpush.xpose.msra.mxu0 %v3004
    %3022 = vmatmul.f32.gmra.mxu0 %v3002
    %v3023 = vpop.f32.mrf.mxu0
    %v3024 = vadd.f32 0.0, %v3023
    %3025 = vdwg.mxu0
    %3026 = vrot.lane.b32.xlu0 %v178, 112
    %v3027 = vpop.permute.xlu0 %3026
    %3028 = vrot.lane.b32.xlu0 %v247, 112
    %v3029 = vpop.permute.xlu0 %3028
    %v3030 = vsel %vm264, %v3027, 0
    %v3032 = vsel %vm264, %v3029, 0
    %3034 = vmatpush.xpose.msra.mxu0 0.0
    %3035 = vmatpush.xpose.msra.mxu0 0.0
    %3036 = vmatpush.xpose.msra.mxu0 0.0
    %3037 = vmatpush.xpose.msra.mxu0 0.0
    %3038 = vmatpush.xpose.msra.mxu0 0.0
    %3039 = vmatpush.xpose.msra.mxu0 0.0
    %3040 = vmatpush.xpose.msra.mxu0 0.0
    %3041 = vmatpush.xpose.msra.mxu0 0.0
    %3042 = vmatpush.xpose.msra.mxu0 0.0
    %3043 = vmatpush.xpose.msra.mxu0 0.0
    %3044 = vmatpush.xpose.msra.mxu0 0.0
    %3045 = vmatpush.xpose.msra.mxu0 0.0
    %3046 = vmatpush.xpose.msra.mxu0 0.0
    %3047 = vmatpush.xpose.msra.mxu0 0.0
    %3048 = vmatpush.xpose.msra.mxu0 0.0
    %3049 = vmatpush.xpose.msra.mxu0 %v3032
    %3050 = vmatmul.f32.gmra.mxu0 %v3030
    %v3051 = vpop.f32.mrf.mxu0
    %v3052 = vadd.f32 0.0, %v3051
    %3053 = vdwg.mxu0
    %3054 = vrot.lane.b32.xlu0 %v181, 112
    %v3055 = vpop.permute.xlu0 %3054
    %3056 = vrot.lane.b32.xlu0 %v250, 112
    %v3057 = vpop.permute.xlu0 %3056
    %v3058 = vsel %vm264, %v3055, 0
    %v3060 = vsel %vm264, %v3057, 0
    %3062 = vmatpush.xpose.msra.mxu0 0.0
    %3063 = vmatpush.xpose.msra.mxu0 0.0
    %3064 = vmatpush.xpose.msra.mxu0 0.0
    %3065 = vmatpush.xpose.msra.mxu0 0.0
    %3066 = vmatpush.xpose.msra.mxu0 0.0
    %3067 = vmatpush.xpose.msra.mxu0 0.0
    %3068 = vmatpush.xpose.msra.mxu0 0.0
    %3069 = vmatpush.xpose.msra.mxu0 0.0
    %3070 = vmatpush.xpose.msra.mxu0 0.0
    %3071 = vmatpush.xpose.msra.mxu0 0.0
    %3072 = vmatpush.xpose.msra.mxu0 0.0
    %3073 = vmatpush.xpose.msra.mxu0 0.0
    %3074 = vmatpush.xpose.msra.mxu0 0.0
    %3075 = vmatpush.xpose.msra.mxu0 0.0
    %3076 = vmatpush.xpose.msra.mxu0 0.0
    %3077 = vmatpush.xpose.msra.mxu0 %v3060
    %3078 = vmatmul.f32.gmra.mxu0 %v3058
    %v3079 = vpop.f32.mrf.mxu0
    %v3080 = vadd.f32 0.0, %v3079
    %3081 = vdwg.mxu0
    %3082 = vrot.lane.b32.xlu0 %v184, 112
    %v3083 = vpop.permute.xlu0 %3082
    %3084 = vrot.lane.b32.xlu0 %v253, 112
    %v3085 = vpop.permute.xlu0 %3084
    %v3086 = vsel %vm264, %v3083, 0
    %v3088 = vsel %vm264, %v3085, 0
    %3090 = vmatpush.xpose.msra.mxu0 0.0
    %3091 = vmatpush.xpose.msra.mxu0 0.0
    %3092 = vmatpush.xpose.msra.mxu0 0.0
    %3093 = vmatpush.xpose.msra.mxu0 0.0
    %3094 = vmatpush.xpose.msra.mxu0 0.0
    %3095 = vmatpush.xpose.msra.mxu0 0.0
    %3096 = vmatpush.xpose.msra.mxu0 0.0
    %3097 = vmatpush.xpose.msra.mxu0 0.0
    %3098 = vmatpush.xpose.msra.mxu0 0.0
    %3099 = vmatpush.xpose.msra.mxu0 0.0
    %3100 = vmatpush.xpose.msra.mxu0 0.0
    %3101 = vmatpush.xpose.msra.mxu0 0.0
    %3102 = vmatpush.xpose.msra.mxu0 0.0
    %3103 = vmatpush.xpose.msra.mxu0 0.0
    %3104 = vmatpush.xpose.msra.mxu0 0.0
    %3105 = vmatpush.xpose.msra.mxu0 %v3088
    %3106 = vmatmul.f32.gmra.mxu0 %v3086
    %v3107 = vpop.f32.mrf.mxu0
    %v3108 = vadd.f32 0.0, %v3107
    %3109 = vdwg.mxu0
    %3110 = vrot.lane.b32.xlu0 %v187, 112
    %v3111 = vpop.permute.xlu0 %3110
    %3112 = vrot.lane.b32.xlu0 %v256, 112
    %v3113 = vpop.permute.xlu0 %3112
    %v3114 = vsel %vm264, %v3111, 0
    %v3116 = vsel %vm264, %v3113, 0
    %3118 = vmatpush.xpose.msra.mxu0 0.0
    %3119 = vmatpush.xpose.msra.mxu0 0.0
    %3120 = vmatpush.xpose.msra.mxu0 0.0
    %3121 = vmatpush.xpose.msra.mxu0 0.0
    %3122 = vmatpush.xpose.msra.mxu0 0.0
    %3123 = vmatpush.xpose.msra.mxu0 0.0
    %3124 = vmatpush.xpose.msra.mxu0 0.0
    %3125 = vmatpush.xpose.msra.mxu0 0.0
    %3126 = vmatpush.xpose.msra.mxu0 0.0
    %3127 = vmatpush.xpose.msra.mxu0 0.0
    %3128 = vmatpush.xpose.msra.mxu0 0.0
    %3129 = vmatpush.xpose.msra.mxu0 0.0
    %3130 = vmatpush.xpose.msra.mxu0 0.0
    %3131 = vmatpush.xpose.msra.mxu0 0.0
    %3132 = vmatpush.xpose.msra.mxu0 0.0
    %3133 = vmatpush.xpose.msra.mxu0 %v3116
    %3134 = vmatmul.f32.gmra.mxu0 %v3114
    %v3135 = vpop.f32.mrf.mxu0
    %v3136 = vadd.f32 0.0, %v3135
    %3137 = vdwg.mxu0
    %3138 = vrot.lane.b32.xlu0 %v190, 112
    %v3139 = vpop.permute.xlu0 %3138
    %3140 = vrot.lane.b32.xlu0 %v259, 112
    %v3141 = vpop.permute.xlu0 %3140
    %v3142 = vsel %vm264, %v3139, 0
    %v3144 = vsel %vm264, %v3141, 0
    %3146 = vmatpush.xpose.msra.mxu0 0.0
    %3147 = vmatpush.xpose.msra.mxu0 0.0
    %3148 = vmatpush.xpose.msra.mxu0 0.0
    %3149 = vmatpush.xpose.msra.mxu0 0.0
    %3150 = vmatpush.xpose.msra.mxu0 0.0
    %3151 = vmatpush.xpose.msra.mxu0 0.0
    %3152 = vmatpush.xpose.msra.mxu0 0.0
    %3153 = vmatpush.xpose.msra.mxu0 0.0
    %3154 = vmatpush.xpose.msra.mxu0 0.0
    %3155 = vmatpush.xpose.msra.mxu0 0.0
    %3156 = vmatpush.xpose.msra.mxu0 0.0
    %3157 = vmatpush.xpose.msra.mxu0 0.0
    %3158 = vmatpush.xpose.msra.mxu0 0.0
    %3159 = vmatpush.xpose.msra.mxu0 0.0
    %3160 = vmatpush.xpose.msra.mxu0 0.0
    %3161 = vmatpush.xpose.msra.mxu0 %v3144
    %3162 = vmatmul.f32.gmra.mxu0 %v3142
    %v3163 = vpop.f32.mrf.mxu0
    %v3164 = vadd.f32 0.0, %v3163
    %3165 = vdwg.mxu0
    %3166 = vrot.lane.b32.xlu0 %v193, 112
    %v3167 = vpop.permute.xlu0 %3166
    %3168 = vrot.lane.b32.xlu0 %v262, 112
    %v3169 = vpop.permute.xlu0 %3168
    %v3170 = vsel %vm264, %v3167, 0
    %v3172 = vsel %vm264, %v3169, 0
    %3174 = vmatpush.xpose.msra.mxu0 0.0
    %3175 = vmatpush.xpose.msra.mxu0 0.0
    %3176 = vmatpush.xpose.msra.mxu0 0.0
    %3177 = vmatpush.xpose.msra.mxu0 0.0
    %3178 = vmatpush.xpose.msra.mxu0 0.0
    %3179 = vmatpush.xpose.msra.mxu0 0.0
    %3180 = vmatpush.xpose.msra.mxu0 0.0
    %3181 = vmatpush.xpose.msra.mxu0 0.0
    %3182 = vmatpush.xpose.msra.mxu0 0.0
    %3183 = vmatpush.xpose.msra.mxu0 0.0
    %3184 = vmatpush.xpose.msra.mxu0 0.0
    %3185 = vmatpush.xpose.msra.mxu0 0.0
    %3186 = vmatpush.xpose.msra.mxu0 0.0
    %3187 = vmatpush.xpose.msra.mxu0 0.0
    %3188 = vmatpush.xpose.msra.mxu0 0.0
    %3189 = vmatpush.xpose.msra.mxu0 %v3172
    %3190 = vmatmul.f32.gmra.mxu0 %v3170
    %v3191 = vpop.f32.mrf.mxu0
    %v3192 = vadd.f32 0.0, %v3191
    %3193 = vdwg.mxu0
    %v3194 = vsel %vm473, %v2996, -inf
    %3195 = vmax.xlane.f32.xlu0 %v3194
    %v3196 = vpop.xlane.xlu0 %3195
    %v3197 = vsel %vm473, %v3024, -inf
    %3198 = vmax.xlane.f32.xlu0 %v3197
    %v3199 = vpop.xlane.xlu0 %3198
    %v3200 = vsel %vm473, %v3052, -inf
    %3201 = vmax.xlane.f32.xlu0 %v3200
    %v3202 = vpop.xlane.xlu0 %3201
    %v3203 = vsel %vm473, %v3080, -inf
    %3204 = vmax.xlane.f32.xlu0 %v3203
    %v3205 = vpop.xlane.xlu0 %3204
    %v3206 = vsel %vm473, %v3108, -inf
    %3207 = vmax.xlane.f32.xlu0 %v3206
    %v3208 = vpop.xlane.xlu0 %3207
    %v3209 = vsel %vm473, %v3136, -inf
    %3210 = vmax.xlane.f32.xlu0 %v3209
    %v3211 = vpop.xlane.xlu0 %3210
    %v3212 = vsel %vm473, %v3164, -inf
    %3213 = vmax.xlane.f32.xlu0 %v3212
    %v3214 = vpop.xlane.xlu0 %3213
    %v3215 = vsel %vm473, %v3192, -inf
    %3216 = vmax.xlane.f32.xlu0 %v3215
    %v3217 = vpop.xlane.xlu0 %3216
    %v3218 = vsub.f32 %v2996, %v3196
    %v3219 = vsub.f32 %v3024, %v3199
    %v3220 = vsub.f32 %v3052, %v3202
    %v3221 = vsub.f32 %v3080, %v3205
    %v3222 = vsub.f32 %v3108, %v3208
    %v3223 = vsub.f32 %v3136, %v3211
    %v3224 = vsub.f32 %v3164, %v3214
    %v3225 = vsub.f32 %v3192, %v3217
    %v3226 = vmul.f32 %v3218, 1.442695
    %v3227 = vpow.pop %v3226
    %v3228 = vmul.f32 %v3219, 1.442695
    %v3229 = vpow.pop %v3228
    %v3230 = vmul.f32 %v3220, 1.442695
    %v3231 = vpow.pop %v3230
    %v3232 = vmul.f32 %v3221, 1.442695
    %v3233 = vpow.pop %v3232
    %v3234 = vmul.f32 %v3222, 1.442695
    %v3235 = vpow.pop %v3234
    %v3236 = vmul.f32 %v3223, 1.442695
    %v3237 = vpow.pop %v3236
    %v3238 = vmul.f32 %v3224, 1.442695
    %v3239 = vpow.pop %v3238
    %v3240 = vmul.f32 %v3225, 1.442695
    %v3241 = vpow.pop %v3240
    %v3242 = vsel %vm473, %v3227, 0.0
    %3243 = vadd.xlane.f32.xlu0 %v3242
    %v3244 = vpop.xlane.xlu0 %3243
    %v3245 = vsel %vm473, %v3229, 0.0
    %3246 = vadd.xlane.f32.xlu0 %v3245
    %v3247 = vpop.xlane.xlu0 %3246
    %v3248 = vsel %vm473, %v3231, 0.0
    %3249 = vadd.xlane.f32.xlu0 %v3248
    %v3250 = vpop.xlane.xlu0 %3249
    %v3251 = vsel %vm473, %v3233, 0.0
    %3252 = vadd.xlane.f32.xlu0 %v3251
    %v3253 = vpop.xlane.xlu0 %3252
    %v3254 = vsel %vm473, %v3235, 0.0
    %3255 = vadd.xlane.f32.xlu0 %v3254
    %v3256 = vpop.xlane.xlu0 %3255
    %v3257 = vsel %vm473, %v3237, 0.0
    %3258 = vadd.xlane.f32.xlu0 %v3257
    %v3259 = vpop.xlane.xlu0 %3258
    %v3260 = vsel %vm473, %v3239, 0.0
    %3261 = vadd.xlane.f32.xlu0 %v3260
    %v3262 = vpop.xlane.xlu0 %3261
    %v3263 = vsel %vm473, %v3241, 0.0
    %3264 = vadd.xlane.f32.xlu0 %v3263
    %v3265 = vpop.xlane.xlu0 %3264
    %3266 = vrot.lane.b32.xlu0 %v241, 80
    %v3267 = vpop.permute.xlu0 %3266
    %v3270 = vsel %vm473, %v3227, 0
    %3272 = vmatpush.msra.mxu0 0.0
    %3273 = vmatpush.msra.mxu0 0.0
    %3274 = vmatpush.msra.mxu0 0.0
    %3275 = vmatpush.msra.mxu0 0.0
    %3276 = vmatpush.msra.mxu0 0.0
    %3277 = vmatpush.msra.mxu0 0.0
    %3278 = vmatpush.msra.mxu0 0.0
    %3279 = vmatpush.msra.mxu0 0.0
    %3280 = vmatpush.msra.mxu0 0.0
    %3281 = vmatpush.msra.mxu0 0.0
    %3282 = vmatpush.msra.mxu0 0.0
    %3283 = vmatpush.msra.mxu0 0.0
    %3284 = vmatpush.msra.mxu0 0.0
    %3285 = vmatpush.msra.mxu0 0.0
    %3286 = vmatpush.msra.mxu0 0.0
    %3287 = vmatpush.msra.mxu0 %v3267
    %3288 = vmatmul.f32.gmra.mxu0 %v3270
    %v3289 = vpop.f32.mrf.mxu0
    %v3290 = vadd.f32 0.0, %v3289
    %3291 = vdwg.mxu0
    %3292 = vrot.lane.b32.xlu0 %v244, 80
    %v3293 = vpop.permute.xlu0 %3292
    %v3296 = vsel %vm473, %v3229, 0
    %3298 = vmatpush.msra.mxu0 0.0
    %3299 = vmatpush.msra.mxu0 0.0
    %3300 = vmatpush.msra.mxu0 0.0
    %3301 = vmatpush.msra.mxu0 0.0
    %3302 = vmatpush.msra.mxu0 0.0
    %3303 = vmatpush.msra.mxu0 0.0
    %3304 = vmatpush.msra.mxu0 0.0
    %3305 = vmatpush.msra.mxu0 0.0
    %3306 = vmatpush.msra.mxu0 0.0
    %3307 = vmatpush.msra.mxu0 0.0
    %3308 = vmatpush.msra.mxu0 0.0
    %3309 = vmatpush.msra.mxu0 0.0
    %3310 = vmatpush.msra.mxu0 0.0
    %3311 = vmatpush.msra.mxu0 0.0
    %3312 = vmatpush.msra.mxu0 0.0
    %3313 = vmatpush.msra.mxu0 %v3293
    %3314 = vmatmul.f32.gmra.mxu0 %v3296
    %v3315 = vpop.f32.mrf.mxu0
    %v3316 = vadd.f32 0.0, %v3315
    %3317 = vdwg.mxu0
    %3318 = vrot.lane.b32.xlu0 %v247, 80
    %v3319 = vpop.permute.xlu0 %3318
    %v3322 = vsel %vm473, %v3231, 0
    %3324 = vmatpush.msra.mxu0 0.0
    %3325 = vmatpush.msra.mxu0 0.0
    %3326 = vmatpush.msra.mxu0 0.0
    %3327 = vmatpush.msra.mxu0 0.0
    %3328 = vmatpush.msra.mxu0 0.0
    %3329 = vmatpush.msra.mxu0 0.0
    %3330 = vmatpush.msra.mxu0 0.0
    %3331 = vmatpush.msra.mxu0 0.0
    %3332 = vmatpush.msra.mxu0 0.0
    %3333 = vmatpush.msra.mxu0 0.0
    %3334 = vmatpush.msra.mxu0 0.0
    %3335 = vmatpush.msra.mxu0 0.0
    %3336 = vmatpush.msra.mxu0 0.0
    %3337 = vmatpush.msra.mxu0 0.0
    %3338 = vmatpush.msra.mxu0 0.0
    %3339 = vmatpush.msra.mxu0 %v3319
    %3340 = vmatmul.f32.gmra.mxu0 %v3322
    %v3341 = vpop.f32.mrf.mxu0
    %v3342 = vadd.f32 0.0, %v3341
    %3343 = vdwg.mxu0
    %3344 = vrot.lane.b32.xlu0 %v250, 80
    %v3345 = vpop.permute.xlu0 %3344
    %v3348 = vsel %vm473, %v3233, 0
    %3350 = vmatpush.msra.mxu0 0.0
    %3351 = vmatpush.msra.mxu0 0.0
    %3352 = vmatpush.msra.mxu0 0.0
    %3353 = vmatpush.msra.mxu0 0.0
    %3354 = vmatpush.msra.mxu0 0.0
    %3355 = vmatpush.msra.mxu0 0.0
    %3356 = vmatpush.msra.mxu0 0.0
    %3357 = vmatpush.msra.mxu0 0.0
    %3358 = vmatpush.msra.mxu0 0.0
    %3359 = vmatpush.msra.mxu0 0.0
    %3360 = vmatpush.msra.mxu0 0.0
    %3361 = vmatpush.msra.mxu0 0.0
    %3362 = vmatpush.msra.mxu0 0.0
    %3363 = vmatpush.msra.mxu0 0.0
    %3364 = vmatpush.msra.mxu0 0.0
    %3365 = vmatpush.msra.mxu0 %v3345
    %3366 = vmatmul.f32.gmra.mxu0 %v3348
    %v3367 = vpop.f32.mrf.mxu0
    %v3368 = vadd.f32 0.0, %v3367
    %3369 = vdwg.mxu0
    %3370 = vrot.lane.b32.xlu0 %v253, 80
    %v3371 = vpop.permute.xlu0 %3370
    %v3374 = vsel %vm473, %v3235, 0
    %3376 = vmatpush.msra.mxu0 0.0
    %3377 = vmatpush.msra.mxu0 0.0
    %3378 = vmatpush.msra.mxu0 0.0
    %3379 = vmatpush.msra.mxu0 0.0
    %3380 = vmatpush.msra.mxu0 0.0
    %3381 = vmatpush.msra.mxu0 0.0
    %3382 = vmatpush.msra.mxu0 0.0
    %3383 = vmatpush.msra.mxu0 0.0
    %3384 = vmatpush.msra.mxu0 0.0
    %3385 = vmatpush.msra.mxu0 0.0
    %3386 = vmatpush.msra.mxu0 0.0
    %3387 = vmatpush.msra.mxu0 0.0
    %3388 = vmatpush.msra.mxu0 0.0
    %3389 = vmatpush.msra.mxu0 0.0
    %3390 = vmatpush.msra.mxu0 0.0
    %3391 = vmatpush.msra.mxu0 %v3371
    %3392 = vmatmul.f32.gmra.mxu0 %v3374
    %v3393 = vpop.f32.mrf.mxu0
    %v3394 = vadd.f32 0.0, %v3393
    %3395 = vdwg.mxu0
    %3396 = vrot.lane.b32.xlu0 %v256, 80
    %v3397 = vpop.permute.xlu0 %3396
    %v3400 = vsel %vm473, %v3237, 0
    %3402 = vmatpush.msra.mxu0 0.0
    %3403 = vmatpush.msra.mxu0 0.0
    %3404 = vmatpush.msra.mxu0 0.0
    %3405 = vmatpush.msra.mxu0 0.0
    %3406 = vmatpush.msra.mxu0 0.0
    %3407 = vmatpush.msra.mxu0 0.0
    %3408 = vmatpush.msra.mxu0 0.0
    %3409 = vmatpush.msra.mxu0 0.0
    %3410 = vmatpush.msra.mxu0 0.0
    %3411 = vmatpush.msra.mxu0 0.0
    %3412 = vmatpush.msra.mxu0 0.0
    %3413 = vmatpush.msra.mxu0 0.0
    %3414 = vmatpush.msra.mxu0 0.0
    %3415 = vmatpush.msra.mxu0 0.0
    %3416 = vmatpush.msra.mxu0 0.0
    %3417 = vmatpush.msra.mxu0 %v3397
    %3418 = vmatmul.f32.gmra.mxu0 %v3400
    %v3419 = vpop.f32.mrf.mxu0
    %v3420 = vadd.f32 0.0, %v3419
    %3421 = vdwg.mxu0
    %3422 = vrot.lane.b32.xlu0 %v259, 80
    %v3423 = vpop.permute.xlu0 %3422
    %v3426 = vsel %vm473, %v3239, 0
    %3428 = vmatpush.msra.mxu0 0.0
    %3429 = vmatpush.msra.mxu0 0.0
    %3430 = vmatpush.msra.mxu0 0.0
    %3431 = vmatpush.msra.mxu0 0.0
    %3432 = vmatpush.msra.mxu0 0.0
    %3433 = vmatpush.msra.mxu0 0.0
    %3434 = vmatpush.msra.mxu0 0.0
    %3435 = vmatpush.msra.mxu0 0.0
    %3436 = vmatpush.msra.mxu0 0.0
    %3437 = vmatpush.msra.mxu0 0.0
    %3438 = vmatpush.msra.mxu0 0.0
    %3439 = vmatpush.msra.mxu0 0.0
    %3440 = vmatpush.msra.mxu0 0.0
    %3441 = vmatpush.msra.mxu0 0.0
    %3442 = vmatpush.msra.mxu0 0.0
    %3443 = vmatpush.msra.mxu0 %v3423
    %3444 = vmatmul.f32.gmra.mxu0 %v3426
    %v3445 = vpop.f32.mrf.mxu0
    %v3446 = vadd.f32 0.0, %v3445
    %3447 = vdwg.mxu0
    %3448 = vrot.lane.b32.xlu0 %v262, 80
    %v3449 = vpop.permute.xlu0 %3448
    %v3452 = vsel %vm473, %v3241, 0
    %3454 = vmatpush.msra.mxu0 0.0
    %3455 = vmatpush.msra.mxu0 0.0
    %3456 = vmatpush.msra.mxu0 0.0
    %3457 = vmatpush.msra.mxu0 0.0
    %3458 = vmatpush.msra.mxu0 0.0
    %3459 = vmatpush.msra.mxu0 0.0
    %3460 = vmatpush.msra.mxu0 0.0
    %3461 = vmatpush.msra.mxu0 0.0
    %3462 = vmatpush.msra.mxu0 0.0
    %3463 = vmatpush.msra.mxu0 0.0
    %3464 = vmatpush.msra.mxu0 0.0
    %3465 = vmatpush.msra.mxu0 0.0
    %3466 = vmatpush.msra.mxu0 0.0
    %3467 = vmatpush.msra.mxu0 0.0
    %3468 = vmatpush.msra.mxu0 0.0
    %3469 = vmatpush.msra.mxu0 %v3449
    %3470 = vmatmul.f32.gmra.mxu0 %v3452
    %v3471 = vpop.f32.mrf.mxu0
    %v3472 = vadd.f32 0.0, %v3471
    %3473 = vdwg.mxu0
    %v3474 = vrcp.pop %v3244
    %v3475 = vmul.f32 %v3244, %v3474
    %v3476 = vsub.f32 1.0, %v3475
    %v3477 = vmul.f32 %v3474, %v3476
    %v3478 = vadd.f32 %v3474, %v3477
    %vm3479 = vweird.f32 %v3244
    %vm3480 = vweird.f32 %v3474
    %vm3481 = vmor %vm3479, %vm3480
    %v3482 = vsel %vm3481, %v3474, %v3478
    %v3483 = vand.u32 2147483647, %v3244
    %vm3484 = vcmp.eq.f32.partialorder %v3483, 8.507059e+37
    %v3485 = vand.u32 %v3244, 2147483648
    %v3486 = vor.u32 1.1754944e-38, %v3485
    %v3487 = vsel %vm3484, %v3486, %v3482
    %v3488 = vrcp.pop %v3247
    %v3489 = vmul.f32 %v3247, %v3488
    %v3490 = vsub.f32 1.0, %v3489
    %v3491 = vmul.f32 %v3488, %v3490
    %v3492 = vadd.f32 %v3488, %v3491
    %vm3493 = vweird.f32 %v3247
    %vm3494 = vweird.f32 %v3488
    %vm3495 = vmor %vm3493, %vm3494
    %v3496 = vsel %vm3495, %v3488, %v3492
    %v3497 = vand.u32 2147483647, %v3247
    %vm3498 = vcmp.eq.f32.partialorder %v3497, 8.507059e+37
    %v3499 = vand.u32 %v3247, 2147483648
    %v3500 = vor.u32 1.1754944e-38, %v3499
    %v3501 = vsel %vm3498, %v3500, %v3496
    %v3502 = vrcp.pop %v3250
    %v3503 = vmul.f32 %v3250, %v3502
    %v3504 = vsub.f32 1.0, %v3503
    %v3505 = vmul.f32 %v3502, %v3504
    %v3506 = vadd.f32 %v3502, %v3505
    %vm3507 = vweird.f32 %v3250
    %vm3508 = vweird.f32 %v3502
    %vm3509 = vmor %vm3507, %vm3508
    %v3510 = vsel %vm3509, %v3502, %v3506
    %v3511 = vand.u32 2147483647, %v3250
    %vm3512 = vcmp.eq.f32.partialorder %v3511, 8.507059e+37
    %v3513 = vand.u32 %v3250, 2147483648
    %v3514 = vor.u32 1.1754944e-38, %v3513
    %v3515 = vsel %vm3512, %v3514, %v3510
    %v3516 = vrcp.pop %v3253
    %v3517 = vmul.f32 %v3253, %v3516
    %v3518 = vsub.f32 1.0, %v3517
    %v3519 = vmul.f32 %v3516, %v3518
    %v3520 = vadd.f32 %v3516, %v3519
    %vm3521 = vweird.f32 %v3253
    %vm3522 = vweird.f32 %v3516
    %vm3523 = vmor %vm3521, %vm3522
    %v3524 = vsel %vm3523, %v3516, %v3520
    %v3525 = vand.u32 2147483647, %v3253
    %vm3526 = vcmp.eq.f32.partialorder %v3525, 8.507059e+37
    %v3527 = vand.u32 %v3253, 2147483648
    %v3528 = vor.u32 1.1754944e-38, %v3527
    %v3529 = vsel %vm3526, %v3528, %v3524
    %v3530 = vrcp.pop %v3256
    %v3531 = vmul.f32 %v3256, %v3530
    %v3532 = vsub.f32 1.0, %v3531
    %v3533 = vmul.f32 %v3530, %v3532
    %v3534 = vadd.f32 %v3530, %v3533
    %vm3535 = vweird.f32 %v3256
    %vm3536 = vweird.f32 %v3530
    %vm3537 = vmor %vm3535, %vm3536
    %v3538 = vsel %vm3537, %v3530, %v3534
    %v3539 = vand.u32 2147483647, %v3256
    %vm3540 = vcmp.eq.f32.partialorder %v3539, 8.507059e+37
    %v3541 = vand.u32 %v3256, 2147483648
    %v3542 = vor.u32 1.1754944e-38, %v3541
    %v3543 = vsel %vm3540, %v3542, %v3538
    %v3544 = vrcp.pop %v3259
    %v3545 = vmul.f32 %v3259, %v3544
    %v3546 = vsub.f32 1.0, %v3545
    %v3547 = vmul.f32 %v3544, %v3546
    %v3548 = vadd.f32 %v3544, %v3547
    %vm3549 = vweird.f32 %v3259
    %vm3550 = vweird.f32 %v3544
    %vm3551 = vmor %vm3549, %vm3550
    %v3552 = vsel %vm3551, %v3544, %v3548
    %v3553 = vand.u32 2147483647, %v3259
    %vm3554 = vcmp.eq.f32.partialorder %v3553, 8.507059e+37
    %v3555 = vand.u32 %v3259, 2147483648
    %v3556 = vor.u32 1.1754944e-38, %v3555
    %v3557 = vsel %vm3554, %v3556, %v3552
    %v3558 = vrcp.pop %v3262
    %v3559 = vmul.f32 %v3262, %v3558
    %v3560 = vsub.f32 1.0, %v3559
    %v3561 = vmul.f32 %v3558, %v3560
    %v3562 = vadd.f32 %v3558, %v3561
    %vm3563 = vweird.f32 %v3262
    %vm3564 = vweird.f32 %v3558
    %vm3565 = vmor %vm3563, %vm3564
    %v3566 = vsel %vm3565, %v3558, %v3562
    %v3567 = vand.u32 2147483647, %v3262
    %vm3568 = vcmp.eq.f32.partialorder %v3567, 8.507059e+37
    %v3569 = vand.u32 %v3262, 2147483648
    %v3570 = vor.u32 1.1754944e-38, %v3569
    %v3571 = vsel %vm3568, %v3570, %v3566
    %v3572 = vrcp.pop %v3265
    %v3573 = vmul.f32 %v3265, %v3572
    %v3574 = vsub.f32 1.0, %v3573
    %v3575 = vmul.f32 %v3572, %v3574
    %v3576 = vadd.f32 %v3572, %v3575
    %vm3577 = vweird.f32 %v3265
    %vm3578 = vweird.f32 %v3572
    %vm3579 = vmor %vm3577, %vm3578
    %v3580 = vsel %vm3579, %v3572, %v3576
    %v3581 = vand.u32 2147483647, %v3265
    %vm3582 = vcmp.eq.f32.partialorder %v3581, 8.507059e+37
    %v3583 = vand.u32 %v3265, 2147483648
    %v3584 = vor.u32 1.1754944e-38, %v3583
    %v3585 = vsel %vm3582, %v3584, %v3580
    %v3586 = vmul.f32 %v3290, %v3487
    %v3587 = vmul.f32 %v3316, %v3501
    %v3588 = vmul.f32 %v3342, %v3515
    %v3589 = vmul.f32 %v3368, %v3529
    %v3590 = vmul.f32 %v3394, %v3543
    %v3591 = vmul.f32 %v3420, %v3557
    %v3592 = vmul.f32 %v3446, %v3571
    %v3593 = vmul.f32 %v3472, %v3585
    %v3594 = vsel %vm264, %v3586, 0.0
    %v3595 = vrot.slane %v3594, 4
    %v3596 = vadd.f32 %v3594, %v3595
    %v3597 = vrot.slane %v3596, 2
    %v3598 = vadd.f32 %v3596, %v3597
    %v3599 = vrot.slane %v3598, 1
    %v3600 = vadd.f32 %v3598, %v3599
    %v3601 = vsel %vm264, %v3587, 0.0
    %v3602 = vrot.slane %v3601, 4
    %v3603 = vadd.f32 %v3601, %v3602
    %v3604 = vrot.slane %v3603, 2
    %v3605 = vadd.f32 %v3603, %v3604
    %v3606 = vrot.slane %v3605, 1
    %v3607 = vadd.f32 %v3605, %v3606
    %v3608 = vsel %vm264, %v3588, 0.0
    %v3609 = vrot.slane %v3608, 4
    %v3610 = vadd.f32 %v3608, %v3609
    %v3611 = vrot.slane %v3610, 2
    %v3612 = vadd.f32 %v3610, %v3611
    %v3613 = vrot.slane %v3612, 1
    %v3614 = vadd.f32 %v3612, %v3613
    %v3615 = vsel %vm264, %v3589, 0.0
    %v3616 = vrot.slane %v3615, 4
    %v3617 = vadd.f32 %v3615, %v3616
    %v3618 = vrot.slane %v3617, 2
    %v3619 = vadd.f32 %v3617, %v3618
    %v3620 = vrot.slane %v3619, 1
    %v3621 = vadd.f32 %v3619, %v3620
    %v3622 = vsel %vm264, %v3590, 0.0
    %v3623 = vrot.slane %v3622, 4
    %v3624 = vadd.f32 %v3622, %v3623
    %v3625 = vrot.slane %v3624, 2
    %v3626 = vadd.f32 %v3624, %v3625
    %v3627 = vrot.slane %v3626, 1
    %v3628 = vadd.f32 %v3626, %v3627
    %v3629 = vsel %vm264, %v3591, 0.0
    %v3630 = vrot.slane %v3629, 4
    %v3631 = vadd.f32 %v3629, %v3630
    %v3632 = vrot.slane %v3631, 2
    %v3633 = vadd.f32 %v3631, %v3632
    %v3634 = vrot.slane %v3633, 1
    %v3635 = vadd.f32 %v3633, %v3634
    %v3636 = vsel %vm264, %v3592, 0.0
    %v3637 = vrot.slane %v3636, 4
    %v3638 = vadd.f32 %v3636, %v3637
    %v3639 = vrot.slane %v3638, 2
    %v3640 = vadd.f32 %v3638, %v3639
    %v3641 = vrot.slane %v3640, 1
    %v3642 = vadd.f32 %v3640, %v3641
    %v3643 = vsel %vm264, %v3593, 0.0
    %v3644 = vrot.slane %v3643, 4
    %v3645 = vadd.f32 %v3643, %v3644
    %v3646 = vrot.slane %v3645, 2
    %v3647 = vadd.f32 %v3645, %v3646
    %v3648 = vrot.slane %v3647, 1
    %v3649 = vadd.f32 %v3647, %v3648
    %3650 = vrot.lane.b32.xlu0 %v172, 108
    %v3651 = vpop.permute.xlu0 %3650
    %3652 = vrot.lane.b32.xlu0 %v241, 108
    %v3653 = vpop.permute.xlu0 %3652
    %v3654 = vsel %vm264, %v3651, 0
    %v3656 = vsel %vm264, %v3653, 0
    %3658 = vmatpush.xpose.msra.mxu0 0.0
    %3659 = vmatpush.xpose.msra.mxu0 0.0
    %3660 = vmatpush.xpose.msra.mxu0 0.0
    %3661 = vmatpush.xpose.msra.mxu0 0.0
    %3662 = vmatpush.xpose.msra.mxu0 0.0
    %3663 = vmatpush.xpose.msra.mxu0 0.0
    %3664 = vmatpush.xpose.msra.mxu0 0.0
    %3665 = vmatpush.xpose.msra.mxu0 0.0
    %3666 = vmatpush.xpose.msra.mxu0 0.0
    %3667 = vmatpush.xpose.msra.mxu0 0.0
    %3668 = vmatpush.xpose.msra.mxu0 0.0
    %3669 = vmatpush.xpose.msra.mxu0 0.0
    %3670 = vmatpush.xpose.msra.mxu0 0.0
    %3671 = vmatpush.xpose.msra.mxu0 0.0
    %3672 = vmatpush.xpose.msra.mxu0 0.0
    %3673 = vmatpush.xpose.msra.mxu0 %v3656
    %3674 = vmatmul.f32.gmra.mxu0 %v3654
    %v3675 = vpop.f32.mrf.mxu0
    %v3676 = vadd.f32 0.0, %v3675
    %3677 = vdwg.mxu0
    %3678 = vrot.lane.b32.xlu0 %v175, 108
    %v3679 = vpop.permute.xlu0 %3678
    %3680 = vrot.lane.b32.xlu0 %v244, 108
    %v3681 = vpop.permute.xlu0 %3680
    %v3682 = vsel %vm264, %v3679, 0
    %v3684 = vsel %vm264, %v3681, 0
    %3686 = vmatpush.xpose.msra.mxu0 0.0
    %3687 = vmatpush.xpose.msra.mxu0 0.0
    %3688 = vmatpush.xpose.msra.mxu0 0.0
    %3689 = vmatpush.xpose.msra.mxu0 0.0
    %3690 = vmatpush.xpose.msra.mxu0 0.0
    %3691 = vmatpush.xpose.msra.mxu0 0.0
    %3692 = vmatpush.xpose.msra.mxu0 0.0
    %3693 = vmatpush.xpose.msra.mxu0 0.0
    %3694 = vmatpush.xpose.msra.mxu0 0.0
    %3695 = vmatpush.xpose.msra.mxu0 0.0
    %3696 = vmatpush.xpose.msra.mxu0 0.0
    %3697 = vmatpush.xpose.msra.mxu0 0.0
    %3698 = vmatpush.xpose.msra.mxu0 0.0
    %3699 = vmatpush.xpose.msra.mxu0 0.0
    %3700 = vmatpush.xpose.msra.mxu0 0.0
    %3701 = vmatpush.xpose.msra.mxu0 %v3684
    %3702 = vmatmul.f32.gmra.mxu0 %v3682
    %v3703 = vpop.f32.mrf.mxu0
    %v3704 = vadd.f32 0.0, %v3703
    %3705 = vdwg.mxu0
    %3706 = vrot.lane.b32.xlu0 %v178, 108
    %v3707 = vpop.permute.xlu0 %3706
    %3708 = vrot.lane.b32.xlu0 %v247, 108
    %v3709 = vpop.permute.xlu0 %3708
    %v3710 = vsel %vm264, %v3707, 0
    %v3712 = vsel %vm264, %v3709, 0
    %3714 = vmatpush.xpose.msra.mxu0 0.0
    %3715 = vmatpush.xpose.msra.mxu0 0.0
    %3716 = vmatpush.xpose.msra.mxu0 0.0
    %3717 = vmatpush.xpose.msra.mxu0 0.0
    %3718 = vmatpush.xpose.msra.mxu0 0.0
    %3719 = vmatpush.xpose.msra.mxu0 0.0
    %3720 = vmatpush.xpose.msra.mxu0 0.0
    %3721 = vmatpush.xpose.msra.mxu0 0.0
    %3722 = vmatpush.xpose.msra.mxu0 0.0
    %3723 = vmatpush.xpose.msra.mxu0 0.0
    %3724 = vmatpush.xpose.msra.mxu0 0.0
    %3725 = vmatpush.xpose.msra.mxu0 0.0
    %3726 = vmatpush.xpose.msra.mxu0 0.0
    %3727 = vmatpush.xpose.msra.mxu0 0.0
    %3728 = vmatpush.xpose.msra.mxu0 0.0
    %3729 = vmatpush.xpose.msra.mxu0 %v3712
    %3730 = vmatmul.f32.gmra.mxu0 %v3710
    %v3731 = vpop.f32.mrf.mxu0
    %v3732 = vadd.f32 0.0, %v3731
    %3733 = vdwg.mxu0
    %3734 = vrot.lane.b32.xlu0 %v181, 108
    %v3735 = vpop.permute.xlu0 %3734
    %3736 = vrot.lane.b32.xlu0 %v250, 108
    %v3737 = vpop.permute.xlu0 %3736
    %v3738 = vsel %vm264, %v3735, 0
    %v3740 = vsel %vm264, %v3737, 0
    %3742 = vmatpush.xpose.msra.mxu0 0.0
    %3743 = vmatpush.xpose.msra.mxu0 0.0
    %3744 = vmatpush.xpose.msra.mxu0 0.0
    %3745 = vmatpush.xpose.msra.mxu0 0.0
    %3746 = vmatpush.xpose.msra.mxu0 0.0
    %3747 = vmatpush.xpose.msra.mxu0 0.0
    %3748 = vmatpush.xpose.msra.mxu0 0.0
    %3749 = vmatpush.xpose.msra.mxu0 0.0
    %3750 = vmatpush.xpose.msra.mxu0 0.0
    %3751 = vmatpush.xpose.msra.mxu0 0.0
    %3752 = vmatpush.xpose.msra.mxu0 0.0
    %3753 = vmatpush.xpose.msra.mxu0 0.0
    %3754 = vmatpush.xpose.msra.mxu0 0.0
    %3755 = vmatpush.xpose.msra.mxu0 0.0
    %3756 = vmatpush.xpose.msra.mxu0 0.0
    %3757 = vmatpush.xpose.msra.mxu0 %v3740
    %3758 = vmatmul.f32.gmra.mxu0 %v3738
    %v3759 = vpop.f32.mrf.mxu0
    %v3760 = vadd.f32 0.0, %v3759
    %3761 = vdwg.mxu0
    %3762 = vrot.lane.b32.xlu0 %v184, 108
    %v3763 = vpop.permute.xlu0 %3762
    %3764 = vrot.lane.b32.xlu0 %v253, 108
    %v3765 = vpop.permute.xlu0 %3764
    %v3766 = vsel %vm264, %v3763, 0
    %v3768 = vsel %vm264, %v3765, 0
    %3770 = vmatpush.xpose.msra.mxu0 0.0
    %3771 = vmatpush.xpose.msra.mxu0 0.0
    %3772 = vmatpush.xpose.msra.mxu0 0.0
    %3773 = vmatpush.xpose.msra.mxu0 0.0
    %3774 = vmatpush.xpose.msra.mxu0 0.0
    %3775 = vmatpush.xpose.msra.mxu0 0.0
    %3776 = vmatpush.xpose.msra.mxu0 0.0
    %3777 = vmatpush.xpose.msra.mxu0 0.0
    %3778 = vmatpush.xpose.msra.mxu0 0.0
    %3779 = vmatpush.xpose.msra.mxu0 0.0
    %3780 = vmatpush.xpose.msra.mxu0 0.0
    %3781 = vmatpush.xpose.msra.mxu0 0.0
    %3782 = vmatpush.xpose.msra.mxu0 0.0
    %3783 = vmatpush.xpose.msra.mxu0 0.0
    %3784 = vmatpush.xpose.msra.mxu0 0.0
    %3785 = vmatpush.xpose.msra.mxu0 %v3768
    %3786 = vmatmul.f32.gmra.mxu0 %v3766
    %v3787 = vpop.f32.mrf.mxu0
    %v3788 = vadd.f32 0.0, %v3787
    %3789 = vdwg.mxu0
    %3790 = vrot.lane.b32.xlu0 %v187, 108
    %v3791 = vpop.permute.xlu0 %3790
    %3792 = vrot.lane.b32.xlu0 %v256, 108
    %v3793 = vpop.permute.xlu0 %3792
    %v3794 = vsel %vm264, %v3791, 0
    %v3796 = vsel %vm264, %v3793, 0
    %3798 = vmatpush.xpose.msra.mxu0 0.0
    %3799 = vmatpush.xpose.msra.mxu0 0.0
    %3800 = vmatpush.xpose.msra.mxu0 0.0
    %3801 = vmatpush.xpose.msra.mxu0 0.0
    %3802 = vmatpush.xpose.msra.mxu0 0.0
    %3803 = vmatpush.xpose.msra.mxu0 0.0
    %3804 = vmatpush.xpose.msra.mxu0 0.0
    %3805 = vmatpush.xpose.msra.mxu0 0.0
    %3806 = vmatpush.xpose.msra.mxu0 0.0
    %3807 = vmatpush.xpose.msra.mxu0 0.0
    %3808 = vmatpush.xpose.msra.mxu0 0.0
    %3809 = vmatpush.xpose.msra.mxu0 0.0
    %3810 = vmatpush.xpose.msra.mxu0 0.0
    %3811 = vmatpush.xpose.msra.mxu0 0.0
    %3812 = vmatpush.xpose.msra.mxu0 0.0
    %3813 = vmatpush.xpose.msra.mxu0 %v3796
    %3814 = vmatmul.f32.gmra.mxu0 %v3794
    %v3815 = vpop.f32.mrf.mxu0
    %v3816 = vadd.f32 0.0, %v3815
    %3817 = vdwg.mxu0
    %3818 = vrot.lane.b32.xlu0 %v190, 108
    %v3819 = vpop.permute.xlu0 %3818
    %3820 = vrot.lane.b32.xlu0 %v259, 108
    %v3821 = vpop.permute.xlu0 %3820
    %v3822 = vsel %vm264, %v3819, 0
    %v3824 = vsel %vm264, %v3821, 0
    %3826 = vmatpush.xpose.msra.mxu0 0.0
    %3827 = vmatpush.xpose.msra.mxu0 0.0
    %3828 = vmatpush.xpose.msra.mxu0 0.0
    %3829 = vmatpush.xpose.msra.mxu0 0.0
    %3830 = vmatpush.xpose.msra.mxu0 0.0
    %3831 = vmatpush.xpose.msra.mxu0 0.0
    %3832 = vmatpush.xpose.msra.mxu0 0.0
    %3833 = vmatpush.xpose.msra.mxu0 0.0
    %3834 = vmatpush.xpose.msra.mxu0 0.0
    %3835 = vmatpush.xpose.msra.mxu0 0.0
    %3836 = vmatpush.xpose.msra.mxu0 0.0
    %3837 = vmatpush.xpose.msra.mxu0 0.0
    %3838 = vmatpush.xpose.msra.mxu0 0.0
    %3839 = vmatpush.xpose.msra.mxu0 0.0
    %3840 = vmatpush.xpose.msra.mxu0 0.0
    %3841 = vmatpush.xpose.msra.mxu0 %v3824
    %3842 = vmatmul.f32.gmra.mxu0 %v3822
    %v3843 = vpop.f32.mrf.mxu0
    %v3844 = vadd.f32 0.0, %v3843
    %3845 = vdwg.mxu0
    %3846 = vrot.lane.b32.xlu0 %v193, 108
    %v3847 = vpop.permute.xlu0 %3846
    %3848 = vrot.lane.b32.xlu0 %v262, 108
    %v3849 = vpop.permute.xlu0 %3848
    %v3850 = vsel %vm264, %v3847, 0
    %v3852 = vsel %vm264, %v3849, 0
    %3854 = vmatpush.xpose.msra.mxu0 0.0
    %3855 = vmatpush.xpose.msra.mxu0 0.0
    %3856 = vmatpush.xpose.msra.mxu0 0.0
    %3857 = vmatpush.xpose.msra.mxu0 0.0
    %3858 = vmatpush.xpose.msra.mxu0 0.0
    %3859 = vmatpush.xpose.msra.mxu0 0.0
    %3860 = vmatpush.xpose.msra.mxu0 0.0
    %3861 = vmatpush.xpose.msra.mxu0 0.0
    %3862 = vmatpush.xpose.msra.mxu0 0.0
    %3863 = vmatpush.xpose.msra.mxu0 0.0
    %3864 = vmatpush.xpose.msra.mxu0 0.0
    %3865 = vmatpush.xpose.msra.mxu0 0.0
    %3866 = vmatpush.xpose.msra.mxu0 0.0
    %3867 = vmatpush.xpose.msra.mxu0 0.0
    %3868 = vmatpush.xpose.msra.mxu0 0.0
    %3869 = vmatpush.xpose.msra.mxu0 %v3852
    %3870 = vmatmul.f32.gmra.mxu0 %v3850
    %v3871 = vpop.f32.mrf.mxu0
    %v3872 = vadd.f32 0.0, %v3871
    %3873 = vdwg.mxu0
    %v3874 = vsel %vm473, %v3676, -inf
    %3875 = vmax.xlane.f32.xlu0 %v3874
    %v3876 = vpop.xlane.xlu0 %3875
    %v3877 = vsel %vm473, %v3704, -inf
    %3878 = vmax.xlane.f32.xlu0 %v3877
    %v3879 = vpop.xlane.xlu0 %3878
    %v3880 = vsel %vm473, %v3732, -inf
    %3881 = vmax.xlane.f32.xlu0 %v3880
    %v3882 = vpop.xlane.xlu0 %3881
    %v3883 = vsel %vm473, %v3760, -inf
    %3884 = vmax.xlane.f32.xlu0 %v3883
    %v3885 = vpop.xlane.xlu0 %3884
    %v3886 = vsel %vm473, %v3788, -inf
    %3887 = vmax.xlane.f32.xlu0 %v3886
    %v3888 = vpop.xlane.xlu0 %3887
    %v3889 = vsel %vm473, %v3816, -inf
    %3890 = vmax.xlane.f32.xlu0 %v3889
    %v3891 = vpop.xlane.xlu0 %3890
    %v3892 = vsel %vm473, %v3844, -inf
    %3893 = vmax.xlane.f32.xlu0 %v3892
    %v3894 = vpop.xlane.xlu0 %3893
    %v3895 = vsel %vm473, %v3872, -inf
    %3896 = vmax.xlane.f32.xlu0 %v3895
    %v3897 = vpop.xlane.xlu0 %3896
    %v3898 = vsub.f32 %v3676, %v3876
    %v3899 = vsub.f32 %v3704, %v3879
    %v3900 = vsub.f32 %v3732, %v3882
    %v3901 = vsub.f32 %v3760, %v3885
    %v3902 = vsub.f32 %v3788, %v3888
    %v3903 = vsub.f32 %v3816, %v3891
    %v3904 = vsub.f32 %v3844, %v3894
    %v3905 = vsub.f32 %v3872, %v3897
    %v3906 = vmul.f32 %v3898, 1.442695
    %v3907 = vpow.pop %v3906
    %v3908 = vmul.f32 %v3899, 1.442695
    %v3909 = vpow.pop %v3908
    %v3910 = vmul.f32 %v3900, 1.442695
    %v3911 = vpow.pop %v3910
    %v3912 = vmul.f32 %v3901, 1.442695
    %v3913 = vpow.pop %v3912
    %v3914 = vmul.f32 %v3902, 1.442695
    %v3915 = vpow.pop %v3914
    %v3916 = vmul.f32 %v3903, 1.442695
    %v3917 = vpow.pop %v3916
    %v3918 = vmul.f32 %v3904, 1.442695
    %v3919 = vpow.pop %v3918
    %v3920 = vmul.f32 %v3905, 1.442695
    %v3921 = vpow.pop %v3920
    %v3922 = vsel %vm473, %v3907, 0.0
    %3923 = vadd.xlane.f32.xlu0 %v3922
    %v3924 = vpop.xlane.xlu0 %3923
    %v3925 = vsel %vm473, %v3909, 0.0
    %3926 = vadd.xlane.f32.xlu0 %v3925
    %v3927 = vpop.xlane.xlu0 %3926
    %v3928 = vsel %vm473, %v3911, 0.0
    %3929 = vadd.xlane.f32.xlu0 %v3928
    %v3930 = vpop.xlane.xlu0 %3929
    %v3931 = vsel %vm473, %v3913, 0.0
    %3932 = vadd.xlane.f32.xlu0 %v3931
    %v3933 = vpop.xlane.xlu0 %3932
    %v3934 = vsel %vm473, %v3915, 0.0
    %3935 = vadd.xlane.f32.xlu0 %v3934
    %v3936 = vpop.xlane.xlu0 %3935
    %v3937 = vsel %vm473, %v3917, 0.0
    %3938 = vadd.xlane.f32.xlu0 %v3937
    %v3939 = vpop.xlane.xlu0 %3938
    %v3940 = vsel %vm473, %v3919, 0.0
    %3941 = vadd.xlane.f32.xlu0 %v3940
    %v3942 = vpop.xlane.xlu0 %3941
    %v3943 = vsel %vm473, %v3921, 0.0
    %3944 = vadd.xlane.f32.xlu0 %v3943
    %v3945 = vpop.xlane.xlu0 %3944
    %3946 = vrot.lane.b32.xlu0 %v241, 76
    %v3947 = vpop.permute.xlu0 %3946
    %v3950 = vsel %vm473, %v3907, 0
    %3952 = vmatpush.msra.mxu0 0.0
    %3953 = vmatpush.msra.mxu0 0.0
    %3954 = vmatpush.msra.mxu0 0.0
    %3955 = vmatpush.msra.mxu0 0.0
    %3956 = vmatpush.msra.mxu0 0.0
    %3957 = vmatpush.msra.mxu0 0.0
    %3958 = vmatpush.msra.mxu0 0.0
    %3959 = vmatpush.msra.mxu0 0.0
    %3960 = vmatpush.msra.mxu0 0.0
    %3961 = vmatpush.msra.mxu0 0.0
    %3962 = vmatpush.msra.mxu0 0.0
    %3963 = vmatpush.msra.mxu0 0.0
    %3964 = vmatpush.msra.mxu0 0.0
    %3965 = vmatpush.msra.mxu0 0.0
    %3966 = vmatpush.msra.mxu0 0.0
    %3967 = vmatpush.msra.mxu0 %v3947
    %3968 = vmatmul.f32.gmra.mxu0 %v3950
    %v3969 = vpop.f32.mrf.mxu0
    %v3970 = vadd.f32 0.0, %v3969
    %3971 = vdwg.mxu0
    %3972 = vrot.lane.b32.xlu0 %v244, 76
    %v3973 = vpop.permute.xlu0 %3972
    %v3976 = vsel %vm473, %v3909, 0
    %3978 = vmatpush.msra.mxu0 0.0
    %3979 = vmatpush.msra.mxu0 0.0
    %3980 = vmatpush.msra.mxu0 0.0
    %3981 = vmatpush.msra.mxu0 0.0
    %3982 = vmatpush.msra.mxu0 0.0
    %3983 = vmatpush.msra.mxu0 0.0
    %3984 = vmatpush.msra.mxu0 0.0
    %3985 = vmatpush.msra.mxu0 0.0
    %3986 = vmatpush.msra.mxu0 0.0
    %3987 = vmatpush.msra.mxu0 0.0
    %3988 = vmatpush.msra.mxu0 0.0
    %3989 = vmatpush.msra.mxu0 0.0
    %3990 = vmatpush.msra.mxu0 0.0
    %3991 = vmatpush.msra.mxu0 0.0
    %3992 = vmatpush.msra.mxu0 0.0
    %3993 = vmatpush.msra.mxu0 %v3973
    %3994 = vmatmul.f32.gmra.mxu0 %v3976
    %v3995 = vpop.f32.mrf.mxu0
    %v3996 = vadd.f32 0.0, %v3995
    %3997 = vdwg.mxu0
    %3998 = vrot.lane.b32.xlu0 %v247, 76
    %v3999 = vpop.permute.xlu0 %3998
    %v4002 = vsel %vm473, %v3911, 0
    %4004 = vmatpush.msra.mxu0 0.0
    %4005 = vmatpush.msra.mxu0 0.0
    %4006 = vmatpush.msra.mxu0 0.0
    %4007 = vmatpush.msra.mxu0 0.0
    %4008 = vmatpush.msra.mxu0 0.0
    %4009 = vmatpush.msra.mxu0 0.0
    %4010 = vmatpush.msra.mxu0 0.0
    %4011 = vmatpush.msra.mxu0 0.0
    %4012 = vmatpush.msra.mxu0 0.0
    %4013 = vmatpush.msra.mxu0 0.0
    %4014 = vmatpush.msra.mxu0 0.0
    %4015 = vmatpush.msra.mxu0 0.0
    %4016 = vmatpush.msra.mxu0 0.0
    %4017 = vmatpush.msra.mxu0 0.0
    %4018 = vmatpush.msra.mxu0 0.0
    %4019 = vmatpush.msra.mxu0 %v3999
    %4020 = vmatmul.f32.gmra.mxu0 %v4002
    %v4021 = vpop.f32.mrf.mxu0
    %v4022 = vadd.f32 0.0, %v4021
    %4023 = vdwg.mxu0
    %4024 = vrot.lane.b32.xlu0 %v250, 76
    %v4025 = vpop.permute.xlu0 %4024
    %v4028 = vsel %vm473, %v3913, 0
    %4030 = vmatpush.msra.mxu0 0.0
    %4031 = vmatpush.msra.mxu0 0.0
    %4032 = vmatpush.msra.mxu0 0.0
    %4033 = vmatpush.msra.mxu0 0.0
    %4034 = vmatpush.msra.mxu0 0.0
    %4035 = vmatpush.msra.mxu0 0.0
    %4036 = vmatpush.msra.mxu0 0.0
    %4037 = vmatpush.msra.mxu0 0.0
    %4038 = vmatpush.msra.mxu0 0.0
    %4039 = vmatpush.msra.mxu0 0.0
    %4040 = vmatpush.msra.mxu0 0.0
    %4041 = vmatpush.msra.mxu0 0.0
    %4042 = vmatpush.msra.mxu0 0.0
    %4043 = vmatpush.msra.mxu0 0.0
    %4044 = vmatpush.msra.mxu0 0.0
    %4045 = vmatpush.msra.mxu0 %v4025
    %4046 = vmatmul.f32.gmra.mxu0 %v4028
    %v4047 = vpop.f32.mrf.mxu0
    %v4048 = vadd.f32 0.0, %v4047
    %4049 = vdwg.mxu0
    %4050 = vrot.lane.b32.xlu0 %v253, 76
    %v4051 = vpop.permute.xlu0 %4050
    %v4054 = vsel %vm473, %v3915, 0
    %4056 = vmatpush.msra.mxu0 0.0
    %4057 = vmatpush.msra.mxu0 0.0
    %4058 = vmatpush.msra.mxu0 0.0
    %4059 = vmatpush.msra.mxu0 0.0
    %4060 = vmatpush.msra.mxu0 0.0
    %4061 = vmatpush.msra.mxu0 0.0
    %4062 = vmatpush.msra.mxu0 0.0
    %4063 = vmatpush.msra.mxu0 0.0
    %4064 = vmatpush.msra.mxu0 0.0
    %4065 = vmatpush.msra.mxu0 0.0
    %4066 = vmatpush.msra.mxu0 0.0
    %4067 = vmatpush.msra.mxu0 0.0
    %4068 = vmatpush.msra.mxu0 0.0
    %4069 = vmatpush.msra.mxu0 0.0
    %4070 = vmatpush.msra.mxu0 0.0
    %4071 = vmatpush.msra.mxu0 %v4051
    %4072 = vmatmul.f32.gmra.mxu0 %v4054
    %v4073 = vpop.f32.mrf.mxu0
    %v4074 = vadd.f32 0.0, %v4073
    %4075 = vdwg.mxu0
    %4076 = vrot.lane.b32.xlu0 %v256, 76
    %v4077 = vpop.permute.xlu0 %4076
    %v4080 = vsel %vm473, %v3917, 0
    %4082 = vmatpush.msra.mxu0 0.0
    %4083 = vmatpush.msra.mxu0 0.0
    %4084 = vmatpush.msra.mxu0 0.0
    %4085 = vmatpush.msra.mxu0 0.0
    %4086 = vmatpush.msra.mxu0 0.0
    %4087 = vmatpush.msra.mxu0 0.0
    %4088 = vmatpush.msra.mxu0 0.0
    %4089 = vmatpush.msra.mxu0 0.0
    %4090 = vmatpush.msra.mxu0 0.0
    %4091 = vmatpush.msra.mxu0 0.0
    %4092 = vmatpush.msra.mxu0 0.0
    %4093 = vmatpush.msra.mxu0 0.0
    %4094 = vmatpush.msra.mxu0 0.0
    %4095 = vmatpush.msra.mxu0 0.0
    %4096 = vmatpush.msra.mxu0 0.0
    %4097 = vmatpush.msra.mxu0 %v4077
    %4098 = vmatmul.f32.gmra.mxu0 %v4080
    %v4099 = vpop.f32.mrf.mxu0
    %v4100 = vadd.f32 0.0, %v4099
    %4101 = vdwg.mxu0
    %4102 = vrot.lane.b32.xlu0 %v259, 76
    %v4103 = vpop.permute.xlu0 %4102
    %v4106 = vsel %vm473, %v3919, 0
    %4108 = vmatpush.msra.mxu0 0.0
    %4109 = vmatpush.msra.mxu0 0.0
    %4110 = vmatpush.msra.mxu0 0.0
    %4111 = vmatpush.msra.mxu0 0.0
    %4112 = vmatpush.msra.mxu0 0.0
    %4113 = vmatpush.msra.mxu0 0.0
    %4114 = vmatpush.msra.mxu0 0.0
    %4115 = vmatpush.msra.mxu0 0.0
    %4116 = vmatpush.msra.mxu0 0.0
    %4117 = vmatpush.msra.mxu0 0.0
    %4118 = vmatpush.msra.mxu0 0.0
    %4119 = vmatpush.msra.mxu0 0.0
    %4120 = vmatpush.msra.mxu0 0.0
    %4121 = vmatpush.msra.mxu0 0.0
    %4122 = vmatpush.msra.mxu0 0.0
    %4123 = vmatpush.msra.mxu0 %v4103
    %4124 = vmatmul.f32.gmra.mxu0 %v4106
    %v4125 = vpop.f32.mrf.mxu0
    %v4126 = vadd.f32 0.0, %v4125
    %4127 = vdwg.mxu0
    %4128 = vrot.lane.b32.xlu0 %v262, 76
    %v4129 = vpop.permute.xlu0 %4128
    %v4132 = vsel %vm473, %v3921, 0
    %4134 = vmatpush.msra.mxu0 0.0
    %4135 = vmatpush.msra.mxu0 0.0
    %4136 = vmatpush.msra.mxu0 0.0
    %4137 = vmatpush.msra.mxu0 0.0
    %4138 = vmatpush.msra.mxu0 0.0
    %4139 = vmatpush.msra.mxu0 0.0
    %4140 = vmatpush.msra.mxu0 0.0
    %4141 = vmatpush.msra.mxu0 0.0
    %4142 = vmatpush.msra.mxu0 0.0
    %4143 = vmatpush.msra.mxu0 0.0
    %4144 = vmatpush.msra.mxu0 0.0
    %4145 = vmatpush.msra.mxu0 0.0
    %4146 = vmatpush.msra.mxu0 0.0
    %4147 = vmatpush.msra.mxu0 0.0
    %4148 = vmatpush.msra.mxu0 0.0
    %4149 = vmatpush.msra.mxu0 %v4129
    %4150 = vmatmul.f32.gmra.mxu0 %v4132
    %v4151 = vpop.f32.mrf.mxu0
    %v4152 = vadd.f32 0.0, %v4151
    %4153 = vdwg.mxu0
    %v4154 = vrcp.pop %v3924
    %v4155 = vmul.f32 %v3924, %v4154
    %v4156 = vsub.f32 1.0, %v4155
    %v4157 = vmul.f32 %v4154, %v4156
    %v4158 = vadd.f32 %v4154, %v4157
    %vm4159 = vweird.f32 %v3924
    %vm4160 = vweird.f32 %v4154
    %vm4161 = vmor %vm4159, %vm4160
    %v4162 = vsel %vm4161, %v4154, %v4158
    %v4163 = vand.u32 2147483647, %v3924
    %vm4164 = vcmp.eq.f32.partialorder %v4163, 8.507059e+37
    %v4165 = vand.u32 %v3924, 2147483648
    %v4166 = vor.u32 1.1754944e-38, %v4165
    %v4167 = vsel %vm4164, %v4166, %v4162
    %v4168 = vrcp.pop %v3927
    %v4169 = vmul.f32 %v3927, %v4168
    %v4170 = vsub.f32 1.0, %v4169
    %v4171 = vmul.f32 %v4168, %v4170
    %v4172 = vadd.f32 %v4168, %v4171
    %vm4173 = vweird.f32 %v3927
    %vm4174 = vweird.f32 %v4168
    %vm4175 = vmor %vm4173, %vm4174
    %v4176 = vsel %vm4175, %v4168, %v4172
    %v4177 = vand.u32 2147483647, %v3927
    %vm4178 = vcmp.eq.f32.partialorder %v4177, 8.507059e+37
    %v4179 = vand.u32 %v3927, 2147483648
    %v4180 = vor.u32 1.1754944e-38, %v4179
    %v4181 = vsel %vm4178, %v4180, %v4176
    %v4182 = vrcp.pop %v3930
    %v4183 = vmul.f32 %v3930, %v4182
    %v4184 = vsub.f32 1.0, %v4183
    %v4185 = vmul.f32 %v4182, %v4184
    %v4186 = vadd.f32 %v4182, %v4185
    %vm4187 = vweird.f32 %v3930
    %vm4188 = vweird.f32 %v4182
    %vm4189 = vmor %vm4187, %vm4188
    %v4190 = vsel %vm4189, %v4182, %v4186
    %v4191 = vand.u32 2147483647, %v3930
    %vm4192 = vcmp.eq.f32.partialorder %v4191, 8.507059e+37
    %v4193 = vand.u32 %v3930, 2147483648
    %v4194 = vor.u32 1.1754944e-38, %v4193
    %v4195 = vsel %vm4192, %v4194, %v4190
    %v4196 = vrcp.pop %v3933
    %v4197 = vmul.f32 %v3933, %v4196
    %v4198 = vsub.f32 1.0, %v4197
    %v4199 = vmul.f32 %v4196, %v4198
    %v4200 = vadd.f32 %v4196, %v4199
    %vm4201 = vweird.f32 %v3933
    %vm4202 = vweird.f32 %v4196
    %vm4203 = vmor %vm4201, %vm4202
    %v4204 = vsel %vm4203, %v4196, %v4200
    %v4205 = vand.u32 2147483647, %v3933
    %vm4206 = vcmp.eq.f32.partialorder %v4205, 8.507059e+37
    %v4207 = vand.u32 %v3933, 2147483648
    %v4208 = vor.u32 1.1754944e-38, %v4207
    %v4209 = vsel %vm4206, %v4208, %v4204
    %v4210 = vrcp.pop %v3936
    %v4211 = vmul.f32 %v3936, %v4210
    %v4212 = vsub.f32 1.0, %v4211
    %v4213 = vmul.f32 %v4210, %v4212
    %v4214 = vadd.f32 %v4210, %v4213
    %vm4215 = vweird.f32 %v3936
    %vm4216 = vweird.f32 %v4210
    %vm4217 = vmor %vm4215, %vm4216
    %v4218 = vsel %vm4217, %v4210, %v4214
    %v4219 = vand.u32 2147483647, %v3936
    %vm4220 = vcmp.eq.f32.partialorder %v4219, 8.507059e+37
    %v4221 = vand.u32 %v3936, 2147483648
    %v4222 = vor.u32 1.1754944e-38, %v4221
    %v4223 = vsel %vm4220, %v4222, %v4218
    %v4224 = vrcp.pop %v3939
    %v4225 = vmul.f32 %v3939, %v4224
    %v4226 = vsub.f32 1.0, %v4225
    %v4227 = vmul.f32 %v4224, %v4226
    %v4228 = vadd.f32 %v4224, %v4227
    %vm4229 = vweird.f32 %v3939
    %vm4230 = vweird.f32 %v4224
    %vm4231 = vmor %vm4229, %vm4230
    %v4232 = vsel %vm4231, %v4224, %v4228
    %v4233 = vand.u32 2147483647, %v3939
    %vm4234 = vcmp.eq.f32.partialorder %v4233, 8.507059e+37
    %v4235 = vand.u32 %v3939, 2147483648
    %v4236 = vor.u32 1.1754944e-38, %v4235
    %v4237 = vsel %vm4234, %v4236, %v4232
    %v4238 = vrcp.pop %v3942
    %v4239 = vmul.f32 %v3942, %v4238
    %v4240 = vsub.f32 1.0, %v4239
    %v4241 = vmul.f32 %v4238, %v4240
    %v4242 = vadd.f32 %v4238, %v4241
    %vm4243 = vweird.f32 %v3942
    %vm4244 = vweird.f32 %v4238
    %vm4245 = vmor %vm4243, %vm4244
    %v4246 = vsel %vm4245, %v4238, %v4242
    %v4247 = vand.u32 2147483647, %v3942
    %vm4248 = vcmp.eq.f32.partialorder %v4247, 8.507059e+37
    %v4249 = vand.u32 %v3942, 2147483648
    %v4250 = vor.u32 1.1754944e-38, %v4249
    %v4251 = vsel %vm4248, %v4250, %v4246
    %v4252 = vrcp.pop %v3945
    %v4253 = vmul.f32 %v3945, %v4252
    %v4254 = vsub.f32 1.0, %v4253
    %v4255 = vmul.f32 %v4252, %v4254
    %v4256 = vadd.f32 %v4252, %v4255
    %vm4257 = vweird.f32 %v3945
    %vm4258 = vweird.f32 %v4252
    %vm4259 = vmor %vm4257, %vm4258
    %v4260 = vsel %vm4259, %v4252, %v4256
    %v4261 = vand.u32 2147483647, %v3945
    %vm4262 = vcmp.eq.f32.partialorder %v4261, 8.507059e+37
    %v4263 = vand.u32 %v3945, 2147483648
    %v4264 = vor.u32 1.1754944e-38, %v4263
    %v4265 = vsel %vm4262, %v4264, %v4260
    %v4266 = vmul.f32 %v3970, %v4167
    %v4267 = vmul.f32 %v3996, %v4181
    %v4268 = vmul.f32 %v4022, %v4195
    %v4269 = vmul.f32 %v4048, %v4209
    %v4270 = vmul.f32 %v4074, %v4223
    %v4271 = vmul.f32 %v4100, %v4237
    %v4272 = vmul.f32 %v4126, %v4251
    %v4273 = vmul.f32 %v4152, %v4265
    %v4274 = vsel %vm264, %v4266, 0.0
    %v4275 = vrot.slane %v4274, 4
    %v4276 = vadd.f32 %v4274, %v4275
    %v4277 = vrot.slane %v4276, 2
    %v4278 = vadd.f32 %v4276, %v4277
    %v4279 = vrot.slane %v4278, 1
    %v4280 = vadd.f32 %v4278, %v4279
    %v4281 = vsel %vm264, %v4267, 0.0
    %v4282 = vrot.slane %v4281, 4
    %v4283 = vadd.f32 %v4281, %v4282
    %v4284 = vrot.slane %v4283, 2
    %v4285 = vadd.f32 %v4283, %v4284
    %v4286 = vrot.slane %v4285, 1
    %v4287 = vadd.f32 %v4285, %v4286
    %v4288 = vsel %vm264, %v4268, 0.0
    %v4289 = vrot.slane %v4288, 4
    %v4290 = vadd.f32 %v4288, %v4289
    %v4291 = vrot.slane %v4290, 2
    %v4292 = vadd.f32 %v4290, %v4291
    %v4293 = vrot.slane %v4292, 1
    %v4294 = vadd.f32 %v4292, %v4293
    %v4295 = vsel %vm264, %v4269, 0.0
    %v4296 = vrot.slane %v4295, 4
    %v4297 = vadd.f32 %v4295, %v4296
    %v4298 = vrot.slane %v4297, 2
    %v4299 = vadd.f32 %v4297, %v4298
    %v4300 = vrot.slane %v4299, 1
    %v4301 = vadd.f32 %v4299, %v4300
    %v4302 = vsel %vm264, %v4270, 0.0
    %v4303 = vrot.slane %v4302, 4
    %v4304 = vadd.f32 %v4302, %v4303
    %v4305 = vrot.slane %v4304, 2
    %v4306 = vadd.f32 %v4304, %v4305
    %v4307 = vrot.slane %v4306, 1
    %v4308 = vadd.f32 %v4306, %v4307
    %v4309 = vsel %vm264, %v4271, 0.0
    %v4310 = vrot.slane %v4309, 4
    %v4311 = vadd.f32 %v4309, %v4310
    %v4312 = vrot.slane %v4311, 2
    %v4313 = vadd.f32 %v4311, %v4312
    %v4314 = vrot.slane %v4313, 1
    %v4315 = vadd.f32 %v4313, %v4314
    %v4316 = vsel %vm264, %v4272, 0.0
    %v4317 = vrot.slane %v4316, 4
    %v4318 = vadd.f32 %v4316, %v4317
    %v4319 = vrot.slane %v4318, 2
    %v4320 = vadd.f32 %v4318, %v4319
    %v4321 = vrot.slane %v4320, 1
    %v4322 = vadd.f32 %v4320, %v4321
    %v4323 = vsel %vm264, %v4273, 0.0
    %v4324 = vrot.slane %v4323, 4
    %v4325 = vadd.f32 %v4323, %v4324
    %v4326 = vrot.slane %v4325, 2
    %v4327 = vadd.f32 %v4325, %v4326
    %v4328 = vrot.slane %v4327, 1
    %v4329 = vadd.f32 %v4327, %v4328
    %4330 = vrot.lane.b32.xlu0 %v172, 104
    %v4331 = vpop.permute.xlu0 %4330
    %4332 = vrot.lane.b32.xlu0 %v241, 104
    %v4333 = vpop.permute.xlu0 %4332
    %v4334 = vsel %vm264, %v4331, 0
    %v4336 = vsel %vm264, %v4333, 0
    %4338 = vmatpush.xpose.msra.mxu0 0.0
    %4339 = vmatpush.xpose.msra.mxu0 0.0
    %4340 = vmatpush.xpose.msra.mxu0 0.0
    %4341 = vmatpush.xpose.msra.mxu0 0.0
    %4342 = vmatpush.xpose.msra.mxu0 0.0
    %4343 = vmatpush.xpose.msra.mxu0 0.0
    %4344 = vmatpush.xpose.msra.mxu0 0.0
    %4345 = vmatpush.xpose.msra.mxu0 0.0
    %4346 = vmatpush.xpose.msra.mxu0 0.0
    %4347 = vmatpush.xpose.msra.mxu0 0.0
    %4348 = vmatpush.xpose.msra.mxu0 0.0
    %4349 = vmatpush.xpose.msra.mxu0 0.0
    %4350 = vmatpush.xpose.msra.mxu0 0.0
    %4351 = vmatpush.xpose.msra.mxu0 0.0
    %4352 = vmatpush.xpose.msra.mxu0 0.0
    %4353 = vmatpush.xpose.msra.mxu0 %v4336
    %4354 = vmatmul.f32.gmra.mxu0 %v4334
    %v4355 = vpop.f32.mrf.mxu0
    %v4356 = vadd.f32 0.0, %v4355
    %4357 = vdwg.mxu0
    %4358 = vrot.lane.b32.xlu0 %v175, 104
    %v4359 = vpop.permute.xlu0 %4358
    %4360 = vrot.lane.b32.xlu0 %v244, 104
    %v4361 = vpop.permute.xlu0 %4360
    %v4362 = vsel %vm264, %v4359, 0
    %v4364 = vsel %vm264, %v4361, 0
    %4366 = vmatpush.xpose.msra.mxu0 0.0
    %4367 = vmatpush.xpose.msra.mxu0 0.0
    %4368 = vmatpush.xpose.msra.mxu0 0.0
    %4369 = vmatpush.xpose.msra.mxu0 0.0
    %4370 = vmatpush.xpose.msra.mxu0 0.0
    %4371 = vmatpush.xpose.msra.mxu0 0.0
    %4372 = vmatpush.xpose.msra.mxu0 0.0
    %4373 = vmatpush.xpose.msra.mxu0 0.0
    %4374 = vmatpush.xpose.msra.mxu0 0.0
    %4375 = vmatpush.xpose.msra.mxu0 0.0
    %4376 = vmatpush.xpose.msra.mxu0 0.0
    %4377 = vmatpush.xpose.msra.mxu0 0.0
    %4378 = vmatpush.xpose.msra.mxu0 0.0
    %4379 = vmatpush.xpose.msra.mxu0 0.0
    %4380 = vmatpush.xpose.msra.mxu0 0.0
    %4381 = vmatpush.xpose.msra.mxu0 %v4364
    %4382 = vmatmul.f32.gmra.mxu0 %v4362
    %v4383 = vpop.f32.mrf.mxu0
    %v4384 = vadd.f32 0.0, %v4383
    %4385 = vdwg.mxu0
    %4386 = vrot.lane.b32.xlu0 %v178, 104
    %v4387 = vpop.permute.xlu0 %4386
    %4388 = vrot.lane.b32.xlu0 %v247, 104
    %v4389 = vpop.permute.xlu0 %4388
    %v4390 = vsel %vm264, %v4387, 0
    %v4392 = vsel %vm264, %v4389, 0
    %4394 = vmatpush.xpose.msra.mxu0 0.0
    %4395 = vmatpush.xpose.msra.mxu0 0.0
    %4396 = vmatpush.xpose.msra.mxu0 0.0
    %4397 = vmatpush.xpose.msra.mxu0 0.0
    %4398 = vmatpush.xpose.msra.mxu0 0.0
    %4399 = vmatpush.xpose.msra.mxu0 0.0
    %4400 = vmatpush.xpose.msra.mxu0 0.0
    %4401 = vmatpush.xpose.msra.mxu0 0.0
    %4402 = vmatpush.xpose.msra.mxu0 0.0
    %4403 = vmatpush.xpose.msra.mxu0 0.0
    %4404 = vmatpush.xpose.msra.mxu0 0.0
    %4405 = vmatpush.xpose.msra.mxu0 0.0
    %4406 = vmatpush.xpose.msra.mxu0 0.0
    %4407 = vmatpush.xpose.msra.mxu0 0.0
    %4408 = vmatpush.xpose.msra.mxu0 0.0
    %4409 = vmatpush.xpose.msra.mxu0 %v4392
    %4410 = vmatmul.f32.gmra.mxu0 %v4390
    %v4411 = vpop.f32.mrf.mxu0
    %v4412 = vadd.f32 0.0, %v4411
    %4413 = vdwg.mxu0
    %4414 = vrot.lane.b32.xlu0 %v181, 104
    %v4415 = vpop.permute.xlu0 %4414
    %4416 = vrot.lane.b32.xlu0 %v250, 104
    %v4417 = vpop.permute.xlu0 %4416
    %v4418 = vsel %vm264, %v4415, 0
    %v4420 = vsel %vm264, %v4417, 0
    %4422 = vmatpush.xpose.msra.mxu0 0.0
    %4423 = vmatpush.xpose.msra.mxu0 0.0
    %4424 = vmatpush.xpose.msra.mxu0 0.0
    %4425 = vmatpush.xpose.msra.mxu0 0.0
    %4426 = vmatpush.xpose.msra.mxu0 0.0
    %4427 = vmatpush.xpose.msra.mxu0 0.0
    %4428 = vmatpush.xpose.msra.mxu0 0.0
    %4429 = vmatpush.xpose.msra.mxu0 0.0
    %4430 = vmatpush.xpose.msra.mxu0 0.0
    %4431 = vmatpush.xpose.msra.mxu0 0.0
    %4432 = vmatpush.xpose.msra.mxu0 0.0
    %4433 = vmatpush.xpose.msra.mxu0 0.0
    %4434 = vmatpush.xpose.msra.mxu0 0.0
    %4435 = vmatpush.xpose.msra.mxu0 0.0
    %4436 = vmatpush.xpose.msra.mxu0 0.0
    %4437 = vmatpush.xpose.msra.mxu0 %v4420
    %4438 = vmatmul.f32.gmra.mxu0 %v4418
    %v4439 = vpop.f32.mrf.mxu0
    %v4440 = vadd.f32 0.0, %v4439
    %4441 = vdwg.mxu0
    %4442 = vrot.lane.b32.xlu0 %v184, 104
    %v4443 = vpop.permute.xlu0 %4442
    %4444 = vrot.lane.b32.xlu0 %v253, 104
    %v4445 = vpop.permute.xlu0 %4444
    %v4446 = vsel %vm264, %v4443, 0
    %v4448 = vsel %vm264, %v4445, 0
    %4450 = vmatpush.xpose.msra.mxu0 0.0
    %4451 = vmatpush.xpose.msra.mxu0 0.0
    %4452 = vmatpush.xpose.msra.mxu0 0.0
    %4453 = vmatpush.xpose.msra.mxu0 0.0
    %4454 = vmatpush.xpose.msra.mxu0 0.0
    %4455 = vmatpush.xpose.msra.mxu0 0.0
    %4456 = vmatpush.xpose.msra.mxu0 0.0
    %4457 = vmatpush.xpose.msra.mxu0 0.0
    %4458 = vmatpush.xpose.msra.mxu0 0.0
    %4459 = vmatpush.xpose.msra.mxu0 0.0
    %4460 = vmatpush.xpose.msra.mxu0 0.0
    %4461 = vmatpush.xpose.msra.mxu0 0.0
    %4462 = vmatpush.xpose.msra.mxu0 0.0
    %4463 = vmatpush.xpose.msra.mxu0 0.0
    %4464 = vmatpush.xpose.msra.mxu0 0.0
    %4465 = vmatpush.xpose.msra.mxu0 %v4448
    %4466 = vmatmul.f32.gmra.mxu0 %v4446
    %v4467 = vpop.f32.mrf.mxu0
    %v4468 = vadd.f32 0.0, %v4467
    %4469 = vdwg.mxu0
    %4470 = vrot.lane.b32.xlu0 %v187, 104
    %v4471 = vpop.permute.xlu0 %4470
    %4472 = vrot.lane.b32.xlu0 %v256, 104
    %v4473 = vpop.permute.xlu0 %4472
    %v4474 = vsel %vm264, %v4471, 0
    %v4476 = vsel %vm264, %v4473, 0
    %4478 = vmatpush.xpose.msra.mxu0 0.0
    %4479 = vmatpush.xpose.msra.mxu0 0.0
    %4480 = vmatpush.xpose.msra.mxu0 0.0
    %4481 = vmatpush.xpose.msra.mxu0 0.0
    %4482 = vmatpush.xpose.msra.mxu0 0.0
    %4483 = vmatpush.xpose.msra.mxu0 0.0
    %4484 = vmatpush.xpose.msra.mxu0 0.0
    %4485 = vmatpush.xpose.msra.mxu0 0.0
    %4486 = vmatpush.xpose.msra.mxu0 0.0
    %4487 = vmatpush.xpose.msra.mxu0 0.0
    %4488 = vmatpush.xpose.msra.mxu0 0.0
    %4489 = vmatpush.xpose.msra.mxu0 0.0
    %4490 = vmatpush.xpose.msra.mxu0 0.0
    %4491 = vmatpush.xpose.msra.mxu0 0.0
    %4492 = vmatpush.xpose.msra.mxu0 0.0
    %4493 = vmatpush.xpose.msra.mxu0 %v4476
    %4494 = vmatmul.f32.gmra.mxu0 %v4474
    %v4495 = vpop.f32.mrf.mxu0
    %v4496 = vadd.f32 0.0, %v4495
    %4497 = vdwg.mxu0
    %4498 = vrot.lane.b32.xlu0 %v190, 104
    %v4499 = vpop.permute.xlu0 %4498
    %4500 = vrot.lane.b32.xlu0 %v259, 104
    %v4501 = vpop.permute.xlu0 %4500
    %v4502 = vsel %vm264, %v4499, 0
    %v4504 = vsel %vm264, %v4501, 0
    %4506 = vmatpush.xpose.msra.mxu0 0.0
    %4507 = vmatpush.xpose.msra.mxu0 0.0
    %4508 = vmatpush.xpose.msra.mxu0 0.0
    %4509 = vmatpush.xpose.msra.mxu0 0.0
    %4510 = vmatpush.xpose.msra.mxu0 0.0
    %4511 = vmatpush.xpose.msra.mxu0 0.0
    %4512 = vmatpush.xpose.msra.mxu0 0.0
    %4513 = vmatpush.xpose.msra.mxu0 0.0
    %4514 = vmatpush.xpose.msra.mxu0 0.0
    %4515 = vmatpush.xpose.msra.mxu0 0.0
    %4516 = vmatpush.xpose.msra.mxu0 0.0
    %4517 = vmatpush.xpose.msra.mxu0 0.0
    %4518 = vmatpush.xpose.msra.mxu0 0.0
    %4519 = vmatpush.xpose.msra.mxu0 0.0
    %4520 = vmatpush.xpose.msra.mxu0 0.0
    %4521 = vmatpush.xpose.msra.mxu0 %v4504
    %4522 = vmatmul.f32.gmra.mxu0 %v4502
    %v4523 = vpop.f32.mrf.mxu0
    %v4524 = vadd.f32 0.0, %v4523
    %4525 = vdwg.mxu0
    %4526 = vrot.lane.b32.xlu0 %v193, 104
    %v4527 = vpop.permute.xlu0 %4526
    %4528 = vrot.lane.b32.xlu0 %v262, 104
    %v4529 = vpop.permute.xlu0 %4528
    %v4530 = vsel %vm264, %v4527, 0
    %v4532 = vsel %vm264, %v4529, 0
    %4534 = vmatpush.xpose.msra.mxu0 0.0
    %4535 = vmatpush.xpose.msra.mxu0 0.0
    %4536 = vmatpush.xpose.msra.mxu0 0.0
    %4537 = vmatpush.xpose.msra.mxu0 0.0
    %4538 = vmatpush.xpose.msra.mxu0 0.0
    %4539 = vmatpush.xpose.msra.mxu0 0.0
    %4540 = vmatpush.xpose.msra.mxu0 0.0
    %4541 = vmatpush.xpose.msra.mxu0 0.0
    %4542 = vmatpush.xpose.msra.mxu0 0.0
    %4543 = vmatpush.xpose.msra.mxu0 0.0
    %4544 = vmatpush.xpose.msra.mxu0 0.0
    %4545 = vmatpush.xpose.msra.mxu0 0.0
    %4546 = vmatpush.xpose.msra.mxu0 0.0
    %4547 = vmatpush.xpose.msra.mxu0 0.0
    %4548 = vmatpush.xpose.msra.mxu0 0.0
    %4549 = vmatpush.xpose.msra.mxu0 %v4532
    %4550 = vmatmul.f32.gmra.mxu0 %v4530
    %v4551 = vpop.f32.mrf.mxu0
    %v4552 = vadd.f32 0.0, %v4551
    %4553 = vdwg.mxu0
    %v4554 = vsel %vm473, %v4356, -inf
    %4555 = vmax.xlane.f32.xlu0 %v4554
    %v4556 = vpop.xlane.xlu0 %4555
    %v4557 = vsel %vm473, %v4384, -inf
    %4558 = vmax.xlane.f32.xlu0 %v4557
    %v4559 = vpop.xlane.xlu0 %4558
    %v4560 = vsel %vm473, %v4412, -inf
    %4561 = vmax.xlane.f32.xlu0 %v4560
    %v4562 = vpop.xlane.xlu0 %4561
    %v4563 = vsel %vm473, %v4440, -inf
    %4564 = vmax.xlane.f32.xlu0 %v4563
    %v4565 = vpop.xlane.xlu0 %4564
    %v4566 = vsel %vm473, %v4468, -inf
    %4567 = vmax.xlane.f32.xlu0 %v4566
    %v4568 = vpop.xlane.xlu0 %4567
    %v4569 = vsel %vm473, %v4496, -inf
    %4570 = vmax.xlane.f32.xlu0 %v4569
    %v4571 = vpop.xlane.xlu0 %4570
    %v4572 = vsel %vm473, %v4524, -inf
    %4573 = vmax.xlane.f32.xlu0 %v4572
    %v4574 = vpop.xlane.xlu0 %4573
    %v4575 = vsel %vm473, %v4552, -inf
    %4576 = vmax.xlane.f32.xlu0 %v4575
    %v4577 = vpop.xlane.xlu0 %4576
    %v4578 = vsub.f32 %v4356, %v4556
    %v4579 = vsub.f32 %v4384, %v4559
    %v4580 = vsub.f32 %v4412, %v4562
    %v4581 = vsub.f32 %v4440, %v4565
    %v4582 = vsub.f32 %v4468, %v4568
    %v4583 = vsub.f32 %v4496, %v4571
    %v4584 = vsub.f32 %v4524, %v4574
    %v4585 = vsub.f32 %v4552, %v4577
    %v4586 = vmul.f32 %v4578, 1.442695
    %v4587 = vpow.pop %v4586
    %v4588 = vmul.f32 %v4579, 1.442695
    %v4589 = vpow.pop %v4588
    %v4590 = vmul.f32 %v4580, 1.442695
    %v4591 = vpow.pop %v4590
    %v4592 = vmul.f32 %v4581, 1.442695
    %v4593 = vpow.pop %v4592
    %v4594 = vmul.f32 %v4582, 1.442695
    %v4595 = vpow.pop %v4594
    %v4596 = vmul.f32 %v4583, 1.442695
    %v4597 = vpow.pop %v4596
    %v4598 = vmul.f32 %v4584, 1.442695
    %v4599 = vpow.pop %v4598
    %v4600 = vmul.f32 %v4585, 1.442695
    %v4601 = vpow.pop %v4600
    %v4602 = vsel %vm473, %v4587, 0.0
    %4603 = vadd.xlane.f32.xlu0 %v4602
    %v4604 = vpop.xlane.xlu0 %4603
    %v4605 = vsel %vm473, %v4589, 0.0
    %4606 = vadd.xlane.f32.xlu0 %v4605
    %v4607 = vpop.xlane.xlu0 %4606
    %v4608 = vsel %vm473, %v4591, 0.0
    %4609 = vadd.xlane.f32.xlu0 %v4608
    %v4610 = vpop.xlane.xlu0 %4609
    %v4611 = vsel %vm473, %v4593, 0.0
    %4612 = vadd.xlane.f32.xlu0 %v4611
    %v4613 = vpop.xlane.xlu0 %4612
    %v4614 = vsel %vm473, %v4595, 0.0
    %4615 = vadd.xlane.f32.xlu0 %v4614
    %v4616 = vpop.xlane.xlu0 %4615
    %v4617 = vsel %vm473, %v4597, 0.0
    %4618 = vadd.xlane.f32.xlu0 %v4617
    %v4619 = vpop.xlane.xlu0 %4618
    %v4620 = vsel %vm473, %v4599, 0.0
    %4621 = vadd.xlane.f32.xlu0 %v4620
    %v4622 = vpop.xlane.xlu0 %4621
    %v4623 = vsel %vm473, %v4601, 0.0
    %4624 = vadd.xlane.f32.xlu0 %v4623
    %v4625 = vpop.xlane.xlu0 %4624
    %4626 = vrot.lane.b32.xlu0 %v241, 72
    %v4627 = vpop.permute.xlu0 %4626
    %v4630 = vsel %vm473, %v4587, 0
    %4632 = vmatpush.msra.mxu0 0.0
    %4633 = vmatpush.msra.mxu0 0.0
    %4634 = vmatpush.msra.mxu0 0.0
    %4635 = vmatpush.msra.mxu0 0.0
    %4636 = vmatpush.msra.mxu0 0.0
    %4637 = vmatpush.msra.mxu0 0.0
    %4638 = vmatpush.msra.mxu0 0.0
    %4639 = vmatpush.msra.mxu0 0.0
    %4640 = vmatpush.msra.mxu0 0.0
    %4641 = vmatpush.msra.mxu0 0.0
    %4642 = vmatpush.msra.mxu0 0.0
    %4643 = vmatpush.msra.mxu0 0.0
    %4644 = vmatpush.msra.mxu0 0.0
    %4645 = vmatpush.msra.mxu0 0.0
    %4646 = vmatpush.msra.mxu0 0.0
    %4647 = vmatpush.msra.mxu0 %v4627
    %4648 = vmatmul.f32.gmra.mxu0 %v4630
    %v4649 = vpop.f32.mrf.mxu0
    %v4650 = vadd.f32 0.0, %v4649
    %4651 = vdwg.mxu0
    %4652 = vrot.lane.b32.xlu0 %v244, 72
    %v4653 = vpop.permute.xlu0 %4652
    %v4656 = vsel %vm473, %v4589, 0
    %4658 = vmatpush.msra.mxu0 0.0
    %4659 = vmatpush.msra.mxu0 0.0
    %4660 = vmatpush.msra.mxu0 0.0
    %4661 = vmatpush.msra.mxu0 0.0
    %4662 = vmatpush.msra.mxu0 0.0
    %4663 = vmatpush.msra.mxu0 0.0
    %4664 = vmatpush.msra.mxu0 0.0
    %4665 = vmatpush.msra.mxu0 0.0
    %4666 = vmatpush.msra.mxu0 0.0
    %4667 = vmatpush.msra.mxu0 0.0
    %4668 = vmatpush.msra.mxu0 0.0
    %4669 = vmatpush.msra.mxu0 0.0
    %4670 = vmatpush.msra.mxu0 0.0
    %4671 = vmatpush.msra.mxu0 0.0
    %4672 = vmatpush.msra.mxu0 0.0
    %4673 = vmatpush.msra.mxu0 %v4653
    %4674 = vmatmul.f32.gmra.mxu0 %v4656
    %v4675 = vpop.f32.mrf.mxu0
    %v4676 = vadd.f32 0.0, %v4675
    %4677 = vdwg.mxu0
    %4678 = vrot.lane.b32.xlu0 %v247, 72
    %v4679 = vpop.permute.xlu0 %4678
    %v4682 = vsel %vm473, %v4591, 0
    %4684 = vmatpush.msra.mxu0 0.0
    %4685 = vmatpush.msra.mxu0 0.0
    %4686 = vmatpush.msra.mxu0 0.0
    %4687 = vmatpush.msra.mxu0 0.0
    %4688 = vmatpush.msra.mxu0 0.0
    %4689 = vmatpush.msra.mxu0 0.0
    %4690 = vmatpush.msra.mxu0 0.0
    %4691 = vmatpush.msra.mxu0 0.0
    %4692 = vmatpush.msra.mxu0 0.0
    %4693 = vmatpush.msra.mxu0 0.0
    %4694 = vmatpush.msra.mxu0 0.0
    %4695 = vmatpush.msra.mxu0 0.0
    %4696 = vmatpush.msra.mxu0 0.0
    %4697 = vmatpush.msra.mxu0 0.0
    %4698 = vmatpush.msra.mxu0 0.0
    %4699 = vmatpush.msra.mxu0 %v4679
    %4700 = vmatmul.f32.gmra.mxu0 %v4682
    %v4701 = vpop.f32.mrf.mxu0
    %v4702 = vadd.f32 0.0, %v4701
    %4703 = vdwg.mxu0
    %4704 = vrot.lane.b32.xlu0 %v250, 72
    %v4705 = vpop.permute.xlu0 %4704
    %v4708 = vsel %vm473, %v4593, 0
    %4710 = vmatpush.msra.mxu0 0.0
    %4711 = vmatpush.msra.mxu0 0.0
    %4712 = vmatpush.msra.mxu0 0.0
    %4713 = vmatpush.msra.mxu0 0.0
    %4714 = vmatpush.msra.mxu0 0.0
    %4715 = vmatpush.msra.mxu0 0.0
    %4716 = vmatpush.msra.mxu0 0.0
    %4717 = vmatpush.msra.mxu0 0.0
    %4718 = vmatpush.msra.mxu0 0.0
    %4719 = vmatpush.msra.mxu0 0.0
    %4720 = vmatpush.msra.mxu0 0.0
    %4721 = vmatpush.msra.mxu0 0.0
    %4722 = vmatpush.msra.mxu0 0.0
    %4723 = vmatpush.msra.mxu0 0.0
    %4724 = vmatpush.msra.mxu0 0.0
    %4725 = vmatpush.msra.mxu0 %v4705
    %4726 = vmatmul.f32.gmra.mxu0 %v4708
    %v4727 = vpop.f32.mrf.mxu0
    %v4728 = vadd.f32 0.0, %v4727
    %4729 = vdwg.mxu0
    %4730 = vrot.lane.b32.xlu0 %v253, 72
    %v4731 = vpop.permute.xlu0 %4730
    %v4734 = vsel %vm473, %v4595, 0
    %4736 = vmatpush.msra.mxu0 0.0
    %4737 = vmatpush.msra.mxu0 0.0
    %4738 = vmatpush.msra.mxu0 0.0
    %4739 = vmatpush.msra.mxu0 0.0
    %4740 = vmatpush.msra.mxu0 0.0
    %4741 = vmatpush.msra.mxu0 0.0
    %4742 = vmatpush.msra.mxu0 0.0
    %4743 = vmatpush.msra.mxu0 0.0
    %4744 = vmatpush.msra.mxu0 0.0
    %4745 = vmatpush.msra.mxu0 0.0
    %4746 = vmatpush.msra.mxu0 0.0
    %4747 = vmatpush.msra.mxu0 0.0
    %4748 = vmatpush.msra.mxu0 0.0
    %4749 = vmatpush.msra.mxu0 0.0
    %4750 = vmatpush.msra.mxu0 0.0
    %4751 = vmatpush.msra.mxu0 %v4731
    %4752 = vmatmul.f32.gmra.mxu0 %v4734
    %v4753 = vpop.f32.mrf.mxu0
    %v4754 = vadd.f32 0.0, %v4753
    %4755 = vdwg.mxu0
    %4756 = vrot.lane.b32.xlu0 %v256, 72
    %v4757 = vpop.permute.xlu0 %4756
    %v4760 = vsel %vm473, %v4597, 0
    %4762 = vmatpush.msra.mxu0 0.0
    %4763 = vmatpush.msra.mxu0 0.0
    %4764 = vmatpush.msra.mxu0 0.0
    %4765 = vmatpush.msra.mxu0 0.0
    %4766 = vmatpush.msra.mxu0 0.0
    %4767 = vmatpush.msra.mxu0 0.0
    %4768 = vmatpush.msra.mxu0 0.0
    %4769 = vmatpush.msra.mxu0 0.0
    %4770 = vmatpush.msra.mxu0 0.0
    %4771 = vmatpush.msra.mxu0 0.0
    %4772 = vmatpush.msra.mxu0 0.0
    %4773 = vmatpush.msra.mxu0 0.0
    %4774 = vmatpush.msra.mxu0 0.0
    %4775 = vmatpush.msra.mxu0 0.0
    %4776 = vmatpush.msra.mxu0 0.0
    %4777 = vmatpush.msra.mxu0 %v4757
    %4778 = vmatmul.f32.gmra.mxu0 %v4760
    %v4779 = vpop.f32.mrf.mxu0
    %v4780 = vadd.f32 0.0, %v4779
    %4781 = vdwg.mxu0
    %4782 = vrot.lane.b32.xlu0 %v259, 72
    %v4783 = vpop.permute.xlu0 %4782
    %v4786 = vsel %vm473, %v4599, 0
    %4788 = vmatpush.msra.mxu0 0.0
    %4789 = vmatpush.msra.mxu0 0.0
    %4790 = vmatpush.msra.mxu0 0.0
    %4791 = vmatpush.msra.mxu0 0.0
    %4792 = vmatpush.msra.mxu0 0.0
    %4793 = vmatpush.msra.mxu0 0.0
    %4794 = vmatpush.msra.mxu0 0.0
    %4795 = vmatpush.msra.mxu0 0.0
    %4796 = vmatpush.msra.mxu0 0.0
    %4797 = vmatpush.msra.mxu0 0.0
    %4798 = vmatpush.msra.mxu0 0.0
    %4799 = vmatpush.msra.mxu0 0.0
    %4800 = vmatpush.msra.mxu0 0.0
    %4801 = vmatpush.msra.mxu0 0.0
    %4802 = vmatpush.msra.mxu0 0.0
    %4803 = vmatpush.msra.mxu0 %v4783
    %4804 = vmatmul.f32.gmra.mxu0 %v4786
    %v4805 = vpop.f32.mrf.mxu0
    %v4806 = vadd.f32 0.0, %v4805
    %4807 = vdwg.mxu0
    %4808 = vrot.lane.b32.xlu0 %v262, 72
    %v4809 = vpop.permute.xlu0 %4808
    %v4812 = vsel %vm473, %v4601, 0
    %4814 = vmatpush.msra.mxu0 0.0
    %4815 = vmatpush.msra.mxu0 0.0
    %4816 = vmatpush.msra.mxu0 0.0
    %4817 = vmatpush.msra.mxu0 0.0
    %4818 = vmatpush.msra.mxu0 0.0
    %4819 = vmatpush.msra.mxu0 0.0
    %4820 = vmatpush.msra.mxu0 0.0
    %4821 = vmatpush.msra.mxu0 0.0
    %4822 = vmatpush.msra.mxu0 0.0
    %4823 = vmatpush.msra.mxu0 0.0
    %4824 = vmatpush.msra.mxu0 0.0
    %4825 = vmatpush.msra.mxu0 0.0
    %4826 = vmatpush.msra.mxu0 0.0
    %4827 = vmatpush.msra.mxu0 0.0
    %4828 = vmatpush.msra.mxu0 0.0
    %4829 = vmatpush.msra.mxu0 %v4809
    %4830 = vmatmul.f32.gmra.mxu0 %v4812
    %v4831 = vpop.f32.mrf.mxu0
    %v4832 = vadd.f32 0.0, %v4831
    %4833 = vdwg.mxu0
    %v4834 = vrcp.pop %v4604
    %v4835 = vmul.f32 %v4604, %v4834
    %v4836 = vsub.f32 1.0, %v4835
    %v4837 = vmul.f32 %v4834, %v4836
    %v4838 = vadd.f32 %v4834, %v4837
    %vm4839 = vweird.f32 %v4604
    %vm4840 = vweird.f32 %v4834
    %vm4841 = vmor %vm4839, %vm4840
    %v4842 = vsel %vm4841, %v4834, %v4838
    %v4843 = vand.u32 2147483647, %v4604
    %vm4844 = vcmp.eq.f32.partialorder %v4843, 8.507059e+37
    %v4845 = vand.u32 %v4604, 2147483648
    %v4846 = vor.u32 1.1754944e-38, %v4845
    %v4847 = vsel %vm4844, %v4846, %v4842
    %v4848 = vrcp.pop %v4607
    %v4849 = vmul.f32 %v4607, %v4848
    %v4850 = vsub.f32 1.0, %v4849
    %v4851 = vmul.f32 %v4848, %v4850
    %v4852 = vadd.f32 %v4848, %v4851
    %vm4853 = vweird.f32 %v4607
    %vm4854 = vweird.f32 %v4848
    %vm4855 = vmor %vm4853, %vm4854
    %v4856 = vsel %vm4855, %v4848, %v4852
    %v4857 = vand.u32 2147483647, %v4607
    %vm4858 = vcmp.eq.f32.partialorder %v4857, 8.507059e+37
    %v4859 = vand.u32 %v4607, 2147483648
    %v4860 = vor.u32 1.1754944e-38, %v4859
    %v4861 = vsel %vm4858, %v4860, %v4856
    %v4862 = vrcp.pop %v4610
    %v4863 = vmul.f32 %v4610, %v4862
    %v4864 = vsub.f32 1.0, %v4863
    %v4865 = vmul.f32 %v4862, %v4864
    %v4866 = vadd.f32 %v4862, %v4865
    %vm4867 = vweird.f32 %v4610
    %vm4868 = vweird.f32 %v4862
    %vm4869 = vmor %vm4867, %vm4868
    %v4870 = vsel %vm4869, %v4862, %v4866
    %v4871 = vand.u32 2147483647, %v4610
    %vm4872 = vcmp.eq.f32.partialorder %v4871, 8.507059e+37
    %v4873 = vand.u32 %v4610, 2147483648
    %v4874 = vor.u32 1.1754944e-38, %v4873
    %v4875 = vsel %vm4872, %v4874, %v4870
    %v4876 = vrcp.pop %v4613
    %v4877 = vmul.f32 %v4613, %v4876
    %v4878 = vsub.f32 1.0, %v4877
    %v4879 = vmul.f32 %v4876, %v4878
    %v4880 = vadd.f32 %v4876, %v4879
    %vm4881 = vweird.f32 %v4613
    %vm4882 = vweird.f32 %v4876
    %vm4883 = vmor %vm4881, %vm4882
    %v4884 = vsel %vm4883, %v4876, %v4880
    %v4885 = vand.u32 2147483647, %v4613
    %vm4886 = vcmp.eq.f32.partialorder %v4885, 8.507059e+37
    %v4887 = vand.u32 %v4613, 2147483648
    %v4888 = vor.u32 1.1754944e-38, %v4887
    %v4889 = vsel %vm4886, %v4888, %v4884
    %v4890 = vrcp.pop %v4616
    %v4891 = vmul.f32 %v4616, %v4890
    %v4892 = vsub.f32 1.0, %v4891
    %v4893 = vmul.f32 %v4890, %v4892
    %v4894 = vadd.f32 %v4890, %v4893
    %vm4895 = vweird.f32 %v4616
    %vm4896 = vweird.f32 %v4890
    %vm4897 = vmor %vm4895, %vm4896
    %v4898 = vsel %vm4897, %v4890, %v4894
    %v4899 = vand.u32 2147483647, %v4616
    %vm4900 = vcmp.eq.f32.partialorder %v4899, 8.507059e+37
    %v4901 = vand.u32 %v4616, 2147483648
    %v4902 = vor.u32 1.1754944e-38, %v4901
    %v4903 = vsel %vm4900, %v4902, %v4898
    %v4904 = vrcp.pop %v4619
    %v4905 = vmul.f32 %v4619, %v4904
    %v4906 = vsub.f32 1.0, %v4905
    %v4907 = vmul.f32 %v4904, %v4906
    %v4908 = vadd.f32 %v4904, %v4907
    %vm4909 = vweird.f32 %v4619
    %vm4910 = vweird.f32 %v4904
    %vm4911 = vmor %vm4909, %vm4910
    %v4912 = vsel %vm4911, %v4904, %v4908
    %v4913 = vand.u32 2147483647, %v4619
    %vm4914 = vcmp.eq.f32.partialorder %v4913, 8.507059e+37
    %v4915 = vand.u32 %v4619, 2147483648
    %v4916 = vor.u32 1.1754944e-38, %v4915
    %v4917 = vsel %vm4914, %v4916, %v4912
    %v4918 = vrcp.pop %v4622
    %v4919 = vmul.f32 %v4622, %v4918
    %v4920 = vsub.f32 1.0, %v4919
    %v4921 = vmul.f32 %v4918, %v4920
    %v4922 = vadd.f32 %v4918, %v4921
    %vm4923 = vweird.f32 %v4622
    %vm4924 = vweird.f32 %v4918
    %vm4925 = vmor %vm4923, %vm4924
    %v4926 = vsel %vm4925, %v4918, %v4922
    %v4927 = vand.u32 2147483647, %v4622
    %vm4928 = vcmp.eq.f32.partialorder %v4927, 8.507059e+37
    %v4929 = vand.u32 %v4622, 2147483648
    %v4930 = vor.u32 1.1754944e-38, %v4929
    %v4931 = vsel %vm4928, %v4930, %v4926
    %v4932 = vrcp.pop %v4625
    %v4933 = vmul.f32 %v4625, %v4932
    %v4934 = vsub.f32 1.0, %v4933
    %v4935 = vmul.f32 %v4932, %v4934
    %v4936 = vadd.f32 %v4932, %v4935
    %vm4937 = vweird.f32 %v4625
    %vm4938 = vweird.f32 %v4932
    %vm4939 = vmor %vm4937, %vm4938
    %v4940 = vsel %vm4939, %v4932, %v4936
    %v4941 = vand.u32 2147483647, %v4625
    %vm4942 = vcmp.eq.f32.partialorder %v4941, 8.507059e+37
    %v4943 = vand.u32 %v4625, 2147483648
    %v4944 = vor.u32 1.1754944e-38, %v4943
    %v4945 = vsel %vm4942, %v4944, %v4940
    %v4946 = vmul.f32 %v4650, %v4847
    %v4947 = vmul.f32 %v4676, %v4861
    %v4948 = vmul.f32 %v4702, %v4875
    %v4949 = vmul.f32 %v4728, %v4889
    %v4950 = vmul.f32 %v4754, %v4903
    %v4951 = vmul.f32 %v4780, %v4917
    %v4952 = vmul.f32 %v4806, %v4931
    %v4953 = vmul.f32 %v4832, %v4945
    %v4954 = vsel %vm264, %v4946, 0.0
    %v4955 = vrot.slane %v4954, 4
    %v4956 = vadd.f32 %v4954, %v4955
    %v4957 = vrot.slane %v4956, 2
    %v4958 = vadd.f32 %v4956, %v4957
    %v4959 = vrot.slane %v4958, 1
    %v4960 = vadd.f32 %v4958, %v4959
    %v4961 = vsel %vm264, %v4947, 0.0
    %v4962 = vrot.slane %v4961, 4
    %v4963 = vadd.f32 %v4961, %v4962
    %v4964 = vrot.slane %v4963, 2
    %v4965 = vadd.f32 %v4963, %v4964
    %v4966 = vrot.slane %v4965, 1
    %v4967 = vadd.f32 %v4965, %v4966
    %v4968 = vsel %vm264, %v4948, 0.0
    %v4969 = vrot.slane %v4968, 4
    %v4970 = vadd.f32 %v4968, %v4969
    %v4971 = vrot.slane %v4970, 2
    %v4972 = vadd.f32 %v4970, %v4971
    %v4973 = vrot.slane %v4972, 1
    %v4974 = vadd.f32 %v4972, %v4973
    %v4975 = vsel %vm264, %v4949, 0.0
    %v4976 = vrot.slane %v4975, 4
    %v4977 = vadd.f32 %v4975, %v4976
    %v4978 = vrot.slane %v4977, 2
    %v4979 = vadd.f32 %v4977, %v4978
    %v4980 = vrot.slane %v4979, 1
    %v4981 = vadd.f32 %v4979, %v4980
    %v4982 = vsel %vm264, %v4950, 0.0
    %v4983 = vrot.slane %v4982, 4
    %v4984 = vadd.f32 %v4982, %v4983
    %v4985 = vrot.slane %v4984, 2
    %v4986 = vadd.f32 %v4984, %v4985
    %v4987 = vrot.slane %v4986, 1
    %v4988 = vadd.f32 %v4986, %v4987
    %v4989 = vsel %vm264, %v4951, 0.0
    %v4990 = vrot.slane %v4989, 4
    %v4991 = vadd.f32 %v4989, %v4990
    %v4992 = vrot.slane %v4991, 2
    %v4993 = vadd.f32 %v4991, %v4992
    %v4994 = vrot.slane %v4993, 1
    %v4995 = vadd.f32 %v4993, %v4994
    %v4996 = vsel %vm264, %v4952, 0.0
    %v4997 = vrot.slane %v4996, 4
    %v4998 = vadd.f32 %v4996, %v4997
    %v4999 = vrot.slane %v4998, 2
    %v5000 = vadd.f32 %v4998, %v4999
    %v5001 = vrot.slane %v5000, 1
    %v5002 = vadd.f32 %v5000, %v5001
    %v5003 = vsel %vm264, %v4953, 0.0
    %v5004 = vrot.slane %v5003, 4
    %v5005 = vadd.f32 %v5003, %v5004
    %v5006 = vrot.slane %v5005, 2
    %v5007 = vadd.f32 %v5005, %v5006
    %v5008 = vrot.slane %v5007, 1
    %v5009 = vadd.f32 %v5007, %v5008
    %5010 = vrot.lane.b32.xlu0 %v172, 100
    %v5011 = vpop.permute.xlu0 %5010
    %5012 = vrot.lane.b32.xlu0 %v241, 100
    %v5013 = vpop.permute.xlu0 %5012
    %v5014 = vsel %vm264, %v5011, 0
    %v5016 = vsel %vm264, %v5013, 0
    %5018 = vmatpush.xpose.msra.mxu0 0.0
    %5019 = vmatpush.xpose.msra.mxu0 0.0
    %5020 = vmatpush.xpose.msra.mxu0 0.0
    %5021 = vmatpush.xpose.msra.mxu0 0.0
    %5022 = vmatpush.xpose.msra.mxu0 0.0
    %5023 = vmatpush.xpose.msra.mxu0 0.0
    %5024 = vmatpush.xpose.msra.mxu0 0.0
    %5025 = vmatpush.xpose.msra.mxu0 0.0
    %5026 = vmatpush.xpose.msra.mxu0 0.0
    %5027 = vmatpush.xpose.msra.mxu0 0.0
    %5028 = vmatpush.xpose.msra.mxu0 0.0
    %5029 = vmatpush.xpose.msra.mxu0 0.0
    %5030 = vmatpush.xpose.msra.mxu0 0.0
    %5031 = vmatpush.xpose.msra.mxu0 0.0
    %5032 = vmatpush.xpose.msra.mxu0 0.0
    %5033 = vmatpush.xpose.msra.mxu0 %v5016
    %5034 = vmatmul.f32.gmra.mxu0 %v5014
    %v5035 = vpop.f32.mrf.mxu0
    %v5036 = vadd.f32 0.0, %v5035
    %5037 = vdwg.mxu0
    %5038 = vrot.lane.b32.xlu0 %v175, 100
    %v5039 = vpop.permute.xlu0 %5038
    %5040 = vrot.lane.b32.xlu0 %v244, 100
    %v5041 = vpop.permute.xlu0 %5040
    %v5042 = vsel %vm264, %v5039, 0
    %v5044 = vsel %vm264, %v5041, 0
    %5046 = vmatpush.xpose.msra.mxu0 0.0
    %5047 = vmatpush.xpose.msra.mxu0 0.0
    %5048 = vmatpush.xpose.msra.mxu0 0.0
    %5049 = vmatpush.xpose.msra.mxu0 0.0
    %5050 = vmatpush.xpose.msra.mxu0 0.0
    %5051 = vmatpush.xpose.msra.mxu0 0.0
    %5052 = vmatpush.xpose.msra.mxu0 0.0
    %5053 = vmatpush.xpose.msra.mxu0 0.0
    %5054 = vmatpush.xpose.msra.mxu0 0.0
    %5055 = vmatpush.xpose.msra.mxu0 0.0
    %5056 = vmatpush.xpose.msra.mxu0 0.0
    %5057 = vmatpush.xpose.msra.mxu0 0.0
    %5058 = vmatpush.xpose.msra.mxu0 0.0
    %5059 = vmatpush.xpose.msra.mxu0 0.0
    %5060 = vmatpush.xpose.msra.mxu0 0.0
    %5061 = vmatpush.xpose.msra.mxu0 %v5044
    %5062 = vmatmul.f32.gmra.mxu0 %v5042
    %v5063 = vpop.f32.mrf.mxu0
    %v5064 = vadd.f32 0.0, %v5063
    %5065 = vdwg.mxu0
    %5066 = vrot.lane.b32.xlu0 %v178, 100
    %v5067 = vpop.permute.xlu0 %5066
    %5068 = vrot.lane.b32.xlu0 %v247, 100
    %v5069 = vpop.permute.xlu0 %5068
    %v5070 = vsel %vm264, %v5067, 0
    %v5072 = vsel %vm264, %v5069, 0
    %5074 = vmatpush.xpose.msra.mxu0 0.0
    %5075 = vmatpush.xpose.msra.mxu0 0.0
    %5076 = vmatpush.xpose.msra.mxu0 0.0
    %5077 = vmatpush.xpose.msra.mxu0 0.0
    %5078 = vmatpush.xpose.msra.mxu0 0.0
    %5079 = vmatpush.xpose.msra.mxu0 0.0
    %5080 = vmatpush.xpose.msra.mxu0 0.0
    %5081 = vmatpush.xpose.msra.mxu0 0.0
    %5082 = vmatpush.xpose.msra.mxu0 0.0
    %5083 = vmatpush.xpose.msra.mxu0 0.0
    %5084 = vmatpush.xpose.msra.mxu0 0.0
    %5085 = vmatpush.xpose.msra.mxu0 0.0
    %5086 = vmatpush.xpose.msra.mxu0 0.0
    %5087 = vmatpush.xpose.msra.mxu0 0.0
    %5088 = vmatpush.xpose.msra.mxu0 0.0
    %5089 = vmatpush.xpose.msra.mxu0 %v5072
    %5090 = vmatmul.f32.gmra.mxu0 %v5070
    %v5091 = vpop.f32.mrf.mxu0
    %v5092 = vadd.f32 0.0, %v5091
    %5093 = vdwg.mxu0
    %5094 = vrot.lane.b32.xlu0 %v181, 100
    %v5095 = vpop.permute.xlu0 %5094
    %5096 = vrot.lane.b32.xlu0 %v250, 100
    %v5097 = vpop.permute.xlu0 %5096
    %v5098 = vsel %vm264, %v5095, 0
    %v5100 = vsel %vm264, %v5097, 0
    %5102 = vmatpush.xpose.msra.mxu0 0.0
    %5103 = vmatpush.xpose.msra.mxu0 0.0
    %5104 = vmatpush.xpose.msra.mxu0 0.0
    %5105 = vmatpush.xpose.msra.mxu0 0.0
    %5106 = vmatpush.xpose.msra.mxu0 0.0
    %5107 = vmatpush.xpose.msra.mxu0 0.0
    %5108 = vmatpush.xpose.msra.mxu0 0.0
    %5109 = vmatpush.xpose.msra.mxu0 0.0
    %5110 = vmatpush.xpose.msra.mxu0 0.0
    %5111 = vmatpush.xpose.msra.mxu0 0.0
    %5112 = vmatpush.xpose.msra.mxu0 0.0
    %5113 = vmatpush.xpose.msra.mxu0 0.0
    %5114 = vmatpush.xpose.msra.mxu0 0.0
    %5115 = vmatpush.xpose.msra.mxu0 0.0
    %5116 = vmatpush.xpose.msra.mxu0 0.0
    %5117 = vmatpush.xpose.msra.mxu0 %v5100
    %5118 = vmatmul.f32.gmra.mxu0 %v5098
    %v5119 = vpop.f32.mrf.mxu0
    %v5120 = vadd.f32 0.0, %v5119
    %5121 = vdwg.mxu0
    %5122 = vrot.lane.b32.xlu0 %v184, 100
    %v5123 = vpop.permute.xlu0 %5122
    %5124 = vrot.lane.b32.xlu0 %v253, 100
    %v5125 = vpop.permute.xlu0 %5124
    %v5126 = vsel %vm264, %v5123, 0
    %v5128 = vsel %vm264, %v5125, 0
    %5130 = vmatpush.xpose.msra.mxu0 0.0
    %5131 = vmatpush.xpose.msra.mxu0 0.0
    %5132 = vmatpush.xpose.msra.mxu0 0.0
    %5133 = vmatpush.xpose.msra.mxu0 0.0
    %5134 = vmatpush.xpose.msra.mxu0 0.0
    %5135 = vmatpush.xpose.msra.mxu0 0.0
    %5136 = vmatpush.xpose.msra.mxu0 0.0
    %5137 = vmatpush.xpose.msra.mxu0 0.0
    %5138 = vmatpush.xpose.msra.mxu0 0.0
    %5139 = vmatpush.xpose.msra.mxu0 0.0
    %5140 = vmatpush.xpose.msra.mxu0 0.0
    %5141 = vmatpush.xpose.msra.mxu0 0.0
    %5142 = vmatpush.xpose.msra.mxu0 0.0
    %5143 = vmatpush.xpose.msra.mxu0 0.0
    %5144 = vmatpush.xpose.msra.mxu0 0.0
    %5145 = vmatpush.xpose.msra.mxu0 %v5128
    %5146 = vmatmul.f32.gmra.mxu0 %v5126
    %v5147 = vpop.f32.mrf.mxu0
    %v5148 = vadd.f32 0.0, %v5147
    %5149 = vdwg.mxu0
    %5150 = vrot.lane.b32.xlu0 %v187, 100
    %v5151 = vpop.permute.xlu0 %5150
    %5152 = vrot.lane.b32.xlu0 %v256, 100
    %v5153 = vpop.permute.xlu0 %5152
    %v5154 = vsel %vm264, %v5151, 0
    %v5156 = vsel %vm264, %v5153, 0
    %5158 = vmatpush.xpose.msra.mxu0 0.0
    %5159 = vmatpush.xpose.msra.mxu0 0.0
    %5160 = vmatpush.xpose.msra.mxu0 0.0
    %5161 = vmatpush.xpose.msra.mxu0 0.0
    %5162 = vmatpush.xpose.msra.mxu0 0.0
    %5163 = vmatpush.xpose.msra.mxu0 0.0
    %5164 = vmatpush.xpose.msra.mxu0 0.0
    %5165 = vmatpush.xpose.msra.mxu0 0.0
    %5166 = vmatpush.xpose.msra.mxu0 0.0
    %5167 = vmatpush.xpose.msra.mxu0 0.0
    %5168 = vmatpush.xpose.msra.mxu0 0.0
    %5169 = vmatpush.xpose.msra.mxu0 0.0
    %5170 = vmatpush.xpose.msra.mxu0 0.0
    %5171 = vmatpush.xpose.msra.mxu0 0.0
    %5172 = vmatpush.xpose.msra.mxu0 0.0
    %5173 = vmatpush.xpose.msra.mxu0 %v5156
    %5174 = vmatmul.f32.gmra.mxu0 %v5154
    %v5175 = vpop.f32.mrf.mxu0
    %v5176 = vadd.f32 0.0, %v5175
    %5177 = vdwg.mxu0
    %5178 = vrot.lane.b32.xlu0 %v190, 100
    %v5179 = vpop.permute.xlu0 %5178
    %5180 = vrot.lane.b32.xlu0 %v259, 100
    %v5181 = vpop.permute.xlu0 %5180
    %v5182 = vsel %vm264, %v5179, 0
    %v5184 = vsel %vm264, %v5181, 0
    %5186 = vmatpush.xpose.msra.mxu0 0.0
    %5187 = vmatpush.xpose.msra.mxu0 0.0
    %5188 = vmatpush.xpose.msra.mxu0 0.0
    %5189 = vmatpush.xpose.msra.mxu0 0.0
    %5190 = vmatpush.xpose.msra.mxu0 0.0
    %5191 = vmatpush.xpose.msra.mxu0 0.0
    %5192 = vmatpush.xpose.msra.mxu0 0.0
    %5193 = vmatpush.xpose.msra.mxu0 0.0
    %5194 = vmatpush.xpose.msra.mxu0 0.0
    %5195 = vmatpush.xpose.msra.mxu0 0.0
    %5196 = vmatpush.xpose.msra.mxu0 0.0
    %5197 = vmatpush.xpose.msra.mxu0 0.0
    %5198 = vmatpush.xpose.msra.mxu0 0.0
    %5199 = vmatpush.xpose.msra.mxu0 0.0
    %5200 = vmatpush.xpose.msra.mxu0 0.0
    %5201 = vmatpush.xpose.msra.mxu0 %v5184
    %5202 = vmatmul.f32.gmra.mxu0 %v5182
    %v5203 = vpop.f32.mrf.mxu0
    %v5204 = vadd.f32 0.0, %v5203
    %5205 = vdwg.mxu0
    %5206 = vrot.lane.b32.xlu0 %v193, 100
    %v5207 = vpop.permute.xlu0 %5206
    %5208 = vrot.lane.b32.xlu0 %v262, 100
    %v5209 = vpop.permute.xlu0 %5208
    %v5210 = vsel %vm264, %v5207, 0
    %v5212 = vsel %vm264, %v5209, 0
    %5214 = vmatpush.xpose.msra.mxu0 0.0
    %5215 = vmatpush.xpose.msra.mxu0 0.0
    %5216 = vmatpush.xpose.msra.mxu0 0.0
    %5217 = vmatpush.xpose.msra.mxu0 0.0
    %5218 = vmatpush.xpose.msra.mxu0 0.0
    %5219 = vmatpush.xpose.msra.mxu0 0.0
    %5220 = vmatpush.xpose.msra.mxu0 0.0
    %5221 = vmatpush.xpose.msra.mxu0 0.0
    %5222 = vmatpush.xpose.msra.mxu0 0.0
    %5223 = vmatpush.xpose.msra.mxu0 0.0
    %5224 = vmatpush.xpose.msra.mxu0 0.0
    %5225 = vmatpush.xpose.msra.mxu0 0.0
    %5226 = vmatpush.xpose.msra.mxu0 0.0
    %5227 = vmatpush.xpose.msra.mxu0 0.0
    %5228 = vmatpush.xpose.msra.mxu0 0.0
    %5229 = vmatpush.xpose.msra.mxu0 %v5212
    %5230 = vmatmul.f32.gmra.mxu0 %v5210
    %v5231 = vpop.f32.mrf.mxu0
    %v5232 = vadd.f32 0.0, %v5231
    %5233 = vdwg.mxu0
    %v5234 = vsel %vm473, %v5036, -inf
    %5235 = vmax.xlane.f32.xlu0 %v5234
    %v5236 = vpop.xlane.xlu0 %5235
    %v5237 = vsel %vm473, %v5064, -inf
    %5238 = vmax.xlane.f32.xlu0 %v5237
    %v5239 = vpop.xlane.xlu0 %5238
    %v5240 = vsel %vm473, %v5092, -inf
    %5241 = vmax.xlane.f32.xlu0 %v5240
    %v5242 = vpop.xlane.xlu0 %5241
    %v5243 = vsel %vm473, %v5120, -inf
    %5244 = vmax.xlane.f32.xlu0 %v5243
    %v5245 = vpop.xlane.xlu0 %5244
    %v5246 = vsel %vm473, %v5148, -inf
    %5247 = vmax.xlane.f32.xlu0 %v5246
    %v5248 = vpop.xlane.xlu0 %5247
    %v5249 = vsel %vm473, %v5176, -inf
    %5250 = vmax.xlane.f32.xlu0 %v5249
    %v5251 = vpop.xlane.xlu0 %5250
    %v5252 = vsel %vm473, %v5204, -inf
    %5253 = vmax.xlane.f32.xlu0 %v5252
    %v5254 = vpop.xlane.xlu0 %5253
    %v5255 = vsel %vm473, %v5232, -inf
    %5256 = vmax.xlane.f32.xlu0 %v5255
    %v5257 = vpop.xlane.xlu0 %5256
    %v5258 = vsub.f32 %v5036, %v5236
    %v5259 = vsub.f32 %v5064, %v5239
    %v5260 = vsub.f32 %v5092, %v5242
    %v5261 = vsub.f32 %v5120, %v5245
    %v5262 = vsub.f32 %v5148, %v5248
    %v5263 = vsub.f32 %v5176, %v5251
    %v5264 = vsub.f32 %v5204, %v5254
    %v5265 = vsub.f32 %v5232, %v5257
    %v5266 = vmul.f32 %v5258, 1.442695
    %v5267 = vpow.pop %v5266
    %v5268 = vmul.f32 %v5259, 1.442695
    %v5269 = vpow.pop %v5268
    %v5270 = vmul.f32 %v5260, 1.442695
    %v5271 = vpow.pop %v5270
    %v5272 = vmul.f32 %v5261, 1.442695
    %v5273 = vpow.pop %v5272
    %v5274 = vmul.f32 %v5262, 1.442695
    %v5275 = vpow.pop %v5274
    %v5276 = vmul.f32 %v5263, 1.442695
    %v5277 = vpow.pop %v5276
    %v5278 = vmul.f32 %v5264, 1.442695
    %v5279 = vpow.pop %v5278
    %v5280 = vmul.f32 %v5265, 1.442695
    %v5281 = vpow.pop %v5280
    %v5282 = vsel %vm473, %v5267, 0.0
    %5283 = vadd.xlane.f32.xlu0 %v5282
    %v5284 = vpop.xlane.xlu0 %5283
    %v5285 = vsel %vm473, %v5269, 0.0
    %5286 = vadd.xlane.f32.xlu0 %v5285
    %v5287 = vpop.xlane.xlu0 %5286
    %v5288 = vsel %vm473, %v5271, 0.0
    %5289 = vadd.xlane.f32.xlu0 %v5288
    %v5290 = vpop.xlane.xlu0 %5289
    %v5291 = vsel %vm473, %v5273, 0.0
    %5292 = vadd.xlane.f32.xlu0 %v5291
    %v5293 = vpop.xlane.xlu0 %5292
    %v5294 = vsel %vm473, %v5275, 0.0
    %5295 = vadd.xlane.f32.xlu0 %v5294
    %v5296 = vpop.xlane.xlu0 %5295
    %v5297 = vsel %vm473, %v5277, 0.0
    %5298 = vadd.xlane.f32.xlu0 %v5297
    %v5299 = vpop.xlane.xlu0 %5298
    %v5300 = vsel %vm473, %v5279, 0.0
    %5301 = vadd.xlane.f32.xlu0 %v5300
    %v5302 = vpop.xlane.xlu0 %5301
    %v5303 = vsel %vm473, %v5281, 0.0
    %5304 = vadd.xlane.f32.xlu0 %v5303
    %v5305 = vpop.xlane.xlu0 %5304
    %5306 = vrot.lane.b32.xlu0 %v241, 68
    %v5307 = vpop.permute.xlu0 %5306
    %v5310 = vsel %vm473, %v5267, 0
    %5312 = vmatpush.msra.mxu0 0.0
    %5313 = vmatpush.msra.mxu0 0.0
    %5314 = vmatpush.msra.mxu0 0.0
    %5315 = vmatpush.msra.mxu0 0.0
    %5316 = vmatpush.msra.mxu0 0.0
    %5317 = vmatpush.msra.mxu0 0.0
    %5318 = vmatpush.msra.mxu0 0.0
    %5319 = vmatpush.msra.mxu0 0.0
    %5320 = vmatpush.msra.mxu0 0.0
    %5321 = vmatpush.msra.mxu0 0.0
    %5322 = vmatpush.msra.mxu0 0.0
    %5323 = vmatpush.msra.mxu0 0.0
    %5324 = vmatpush.msra.mxu0 0.0
    %5325 = vmatpush.msra.mxu0 0.0
    %5326 = vmatpush.msra.mxu0 0.0
    %5327 = vmatpush.msra.mxu0 %v5307
    %5328 = vmatmul.f32.gmra.mxu0 %v5310
    %v5329 = vpop.f32.mrf.mxu0
    %v5330 = vadd.f32 0.0, %v5329
    %5331 = vdwg.mxu0
    %5332 = vrot.lane.b32.xlu0 %v244, 68
    %v5333 = vpop.permute.xlu0 %5332
    %v5336 = vsel %vm473, %v5269, 0
    %5338 = vmatpush.msra.mxu0 0.0
    %5339 = vmatpush.msra.mxu0 0.0
    %5340 = vmatpush.msra.mxu0 0.0
    %5341 = vmatpush.msra.mxu0 0.0
    %5342 = vmatpush.msra.mxu0 0.0
    %5343 = vmatpush.msra.mxu0 0.0
    %5344 = vmatpush.msra.mxu0 0.0
    %5345 = vmatpush.msra.mxu0 0.0
    %5346 = vmatpush.msra.mxu0 0.0
    %5347 = vmatpush.msra.mxu0 0.0
    %5348 = vmatpush.msra.mxu0 0.0
    %5349 = vmatpush.msra.mxu0 0.0
    %5350 = vmatpush.msra.mxu0 0.0
    %5351 = vmatpush.msra.mxu0 0.0
    %5352 = vmatpush.msra.mxu0 0.0
    %5353 = vmatpush.msra.mxu0 %v5333
    %5354 = vmatmul.f32.gmra.mxu0 %v5336
    %v5355 = vpop.f32.mrf.mxu0
    %v5356 = vadd.f32 0.0, %v5355
    %5357 = vdwg.mxu0
    %5358 = vrot.lane.b32.xlu0 %v247, 68
    %v5359 = vpop.permute.xlu0 %5358
    %v5362 = vsel %vm473, %v5271, 0
    %5364 = vmatpush.msra.mxu0 0.0
    %5365 = vmatpush.msra.mxu0 0.0
    %5366 = vmatpush.msra.mxu0 0.0
    %5367 = vmatpush.msra.mxu0 0.0
    %5368 = vmatpush.msra.mxu0 0.0
    %5369 = vmatpush.msra.mxu0 0.0
    %5370 = vmatpush.msra.mxu0 0.0
    %5371 = vmatpush.msra.mxu0 0.0
    %5372 = vmatpush.msra.mxu0 0.0
    %5373 = vmatpush.msra.mxu0 0.0
    %5374 = vmatpush.msra.mxu0 0.0
    %5375 = vmatpush.msra.mxu0 0.0
    %5376 = vmatpush.msra.mxu0 0.0
    %5377 = vmatpush.msra.mxu0 0.0
    %5378 = vmatpush.msra.mxu0 0.0
    %5379 = vmatpush.msra.mxu0 %v5359
    %5380 = vmatmul.f32.gmra.mxu0 %v5362
    %v5381 = vpop.f32.mrf.mxu0
    %v5382 = vadd.f32 0.0, %v5381
    %5383 = vdwg.mxu0
    %5384 = vrot.lane.b32.xlu0 %v250, 68
    %v5385 = vpop.permute.xlu0 %5384
    %v5388 = vsel %vm473, %v5273, 0
    %5390 = vmatpush.msra.mxu0 0.0
    %5391 = vmatpush.msra.mxu0 0.0
    %5392 = vmatpush.msra.mxu0 0.0
    %5393 = vmatpush.msra.mxu0 0.0
    %5394 = vmatpush.msra.mxu0 0.0
    %5395 = vmatpush.msra.mxu0 0.0
    %5396 = vmatpush.msra.mxu0 0.0
    %5397 = vmatpush.msra.mxu0 0.0
    %5398 = vmatpush.msra.mxu0 0.0
    %5399 = vmatpush.msra.mxu0 0.0
    %5400 = vmatpush.msra.mxu0 0.0
    %5401 = vmatpush.msra.mxu0 0.0
    %5402 = vmatpush.msra.mxu0 0.0
    %5403 = vmatpush.msra.mxu0 0.0
    %5404 = vmatpush.msra.mxu0 0.0
    %5405 = vmatpush.msra.mxu0 %v5385
    %5406 = vmatmul.f32.gmra.mxu0 %v5388
    %v5407 = vpop.f32.mrf.mxu0
    %v5408 = vadd.f32 0.0, %v5407
    %5409 = vdwg.mxu0
    %5410 = vrot.lane.b32.xlu0 %v253, 68
    %v5411 = vpop.permute.xlu0 %5410
    %v5414 = vsel %vm473, %v5275, 0
    %5416 = vmatpush.msra.mxu0 0.0
    %5417 = vmatpush.msra.mxu0 0.0
    %5418 = vmatpush.msra.mxu0 0.0
    %5419 = vmatpush.msra.mxu0 0.0
    %5420 = vmatpush.msra.mxu0 0.0
    %5421 = vmatpush.msra.mxu0 0.0
    %5422 = vmatpush.msra.mxu0 0.0
    %5423 = vmatpush.msra.mxu0 0.0
    %5424 = vmatpush.msra.mxu0 0.0
    %5425 = vmatpush.msra.mxu0 0.0
    %5426 = vmatpush.msra.mxu0 0.0
    %5427 = vmatpush.msra.mxu0 0.0
    %5428 = vmatpush.msra.mxu0 0.0
    %5429 = vmatpush.msra.mxu0 0.0
    %5430 = vmatpush.msra.mxu0 0.0
    %5431 = vmatpush.msra.mxu0 %v5411
    %5432 = vmatmul.f32.gmra.mxu0 %v5414
    %v5433 = vpop.f32.mrf.mxu0
    %v5434 = vadd.f32 0.0, %v5433
    %5435 = vdwg.mxu0
    %5436 = vrot.lane.b32.xlu0 %v256, 68
    %v5437 = vpop.permute.xlu0 %5436
    %v5440 = vsel %vm473, %v5277, 0
    %5442 = vmatpush.msra.mxu0 0.0
    %5443 = vmatpush.msra.mxu0 0.0
    %5444 = vmatpush.msra.mxu0 0.0
    %5445 = vmatpush.msra.mxu0 0.0
    %5446 = vmatpush.msra.mxu0 0.0
    %5447 = vmatpush.msra.mxu0 0.0
    %5448 = vmatpush.msra.mxu0 0.0
    %5449 = vmatpush.msra.mxu0 0.0
    %5450 = vmatpush.msra.mxu0 0.0
    %5451 = vmatpush.msra.mxu0 0.0
    %5452 = vmatpush.msra.mxu0 0.0
    %5453 = vmatpush.msra.mxu0 0.0
    %5454 = vmatpush.msra.mxu0 0.0
    %5455 = vmatpush.msra.mxu0 0.0
    %5456 = vmatpush.msra.mxu0 0.0
    %5457 = vmatpush.msra.mxu0 %v5437
    %5458 = vmatmul.f32.gmra.mxu0 %v5440
    %v5459 = vpop.f32.mrf.mxu0
    %v5460 = vadd.f32 0.0, %v5459
    %5461 = vdwg.mxu0
    %5462 = vrot.lane.b32.xlu0 %v259, 68
    %v5463 = vpop.permute.xlu0 %5462
    %v5466 = vsel %vm473, %v5279, 0
    %5468 = vmatpush.msra.mxu0 0.0
    %5469 = vmatpush.msra.mxu0 0.0
    %5470 = vmatpush.msra.mxu0 0.0
    %5471 = vmatpush.msra.mxu0 0.0
    %5472 = vmatpush.msra.mxu0 0.0
    %5473 = vmatpush.msra.mxu0 0.0
    %5474 = vmatpush.msra.mxu0 0.0
    %5475 = vmatpush.msra.mxu0 0.0
    %5476 = vmatpush.msra.mxu0 0.0
    %5477 = vmatpush.msra.mxu0 0.0
    %5478 = vmatpush.msra.mxu0 0.0
    %5479 = vmatpush.msra.mxu0 0.0
    %5480 = vmatpush.msra.mxu0 0.0
    %5481 = vmatpush.msra.mxu0 0.0
    %5482 = vmatpush.msra.mxu0 0.0
    %5483 = vmatpush.msra.mxu0 %v5463
    %5484 = vmatmul.f32.gmra.mxu0 %v5466
    %v5485 = vpop.f32.mrf.mxu0
    %v5486 = vadd.f32 0.0, %v5485
    %5487 = vdwg.mxu0
    %5488 = vrot.lane.b32.xlu0 %v262, 68
    %v5489 = vpop.permute.xlu0 %5488
    %v5492 = vsel %vm473, %v5281, 0
    %5494 = vmatpush.msra.mxu0 0.0
    %5495 = vmatpush.msra.mxu0 0.0
    %5496 = vmatpush.msra.mxu0 0.0
    %5497 = vmatpush.msra.mxu0 0.0
    %5498 = vmatpush.msra.mxu0 0.0
    %5499 = vmatpush.msra.mxu0 0.0
    %5500 = vmatpush.msra.mxu0 0.0
    %5501 = vmatpush.msra.mxu0 0.0
    %5502 = vmatpush.msra.mxu0 0.0
    %5503 = vmatpush.msra.mxu0 0.0
    %5504 = vmatpush.msra.mxu0 0.0
    %5505 = vmatpush.msra.mxu0 0.0
    %5506 = vmatpush.msra.mxu0 0.0
    %5507 = vmatpush.msra.mxu0 0.0
    %5508 = vmatpush.msra.mxu0 0.0
    %5509 = vmatpush.msra.mxu0 %v5489
    %5510 = vmatmul.f32.gmra.mxu0 %v5492
    %v5511 = vpop.f32.mrf.mxu0
    %v5512 = vadd.f32 0.0, %v5511
    %5513 = vdwg.mxu0
    %v5514 = vrcp.pop %v5284
    %v5515 = vmul.f32 %v5284, %v5514
    %v5516 = vsub.f32 1.0, %v5515
    %v5517 = vmul.f32 %v5514, %v5516
    %v5518 = vadd.f32 %v5514, %v5517
    %vm5519 = vweird.f32 %v5284
    %vm5520 = vweird.f32 %v5514
    %vm5521 = vmor %vm5519, %vm5520
    %v5522 = vsel %vm5521, %v5514, %v5518
    %v5523 = vand.u32 2147483647, %v5284
    %vm5524 = vcmp.eq.f32.partialorder %v5523, 8.507059e+37
    %v5525 = vand.u32 %v5284, 2147483648
    %v5526 = vor.u32 1.1754944e-38, %v5525
    %v5527 = vsel %vm5524, %v5526, %v5522
    %v5528 = vrcp.pop %v5287
    %v5529 = vmul.f32 %v5287, %v5528
    %v5530 = vsub.f32 1.0, %v5529
    %v5531 = vmul.f32 %v5528, %v5530
    %v5532 = vadd.f32 %v5528, %v5531
    %vm5533 = vweird.f32 %v5287
    %vm5534 = vweird.f32 %v5528
    %vm5535 = vmor %vm5533, %vm5534
    %v5536 = vsel %vm5535, %v5528, %v5532
    %v5537 = vand.u32 2147483647, %v5287
    %vm5538 = vcmp.eq.f32.partialorder %v5537, 8.507059e+37
    %v5539 = vand.u32 %v5287, 2147483648
    %v5540 = vor.u32 1.1754944e-38, %v5539
    %v5541 = vsel %vm5538, %v5540, %v5536
    %v5542 = vrcp.pop %v5290
    %v5543 = vmul.f32 %v5290, %v5542
    %v5544 = vsub.f32 1.0, %v5543
    %v5545 = vmul.f32 %v5542, %v5544
    %v5546 = vadd.f32 %v5542, %v5545
    %vm5547 = vweird.f32 %v5290
    %vm5548 = vweird.f32 %v5542
    %vm5549 = vmor %vm5547, %vm5548
    %v5550 = vsel %vm5549, %v5542, %v5546
    %v5551 = vand.u32 2147483647, %v5290
    %vm5552 = vcmp.eq.f32.partialorder %v5551, 8.507059e+37
    %v5553 = vand.u32 %v5290, 2147483648
    %v5554 = vor.u32 1.1754944e-38, %v5553
    %v5555 = vsel %vm5552, %v5554, %v5550
    %v5556 = vrcp.pop %v5293
    %v5557 = vmul.f32 %v5293, %v5556
    %v5558 = vsub.f32 1.0, %v5557
    %v5559 = vmul.f32 %v5556, %v5558
    %v5560 = vadd.f32 %v5556, %v5559
    %vm5561 = vweird.f32 %v5293
    %vm5562 = vweird.f32 %v5556
    %vm5563 = vmor %vm5561, %vm5562
    %v5564 = vsel %vm5563, %v5556, %v5560
    %v5565 = vand.u32 2147483647, %v5293
    %vm5566 = vcmp.eq.f32.partialorder %v5565, 8.507059e+37
    %v5567 = vand.u32 %v5293, 2147483648
    %v5568 = vor.u32 1.1754944e-38, %v5567
    %v5569 = vsel %vm5566, %v5568, %v5564
    %v5570 = vrcp.pop %v5296
    %v5571 = vmul.f32 %v5296, %v5570
    %v5572 = vsub.f32 1.0, %v5571
    %v5573 = vmul.f32 %v5570, %v5572
    %v5574 = vadd.f32 %v5570, %v5573
    %vm5575 = vweird.f32 %v5296
    %vm5576 = vweird.f32 %v5570
    %vm5577 = vmor %vm5575, %vm5576
    %v5578 = vsel %vm5577, %v5570, %v5574
    %v5579 = vand.u32 2147483647, %v5296
    %vm5580 = vcmp.eq.f32.partialorder %v5579, 8.507059e+37
    %v5581 = vand.u32 %v5296, 2147483648
    %v5582 = vor.u32 1.1754944e-38, %v5581
    %v5583 = vsel %vm5580, %v5582, %v5578
    %v5584 = vrcp.pop %v5299
    %v5585 = vmul.f32 %v5299, %v5584
    %v5586 = vsub.f32 1.0, %v5585
    %v5587 = vmul.f32 %v5584, %v5586
    %v5588 = vadd.f32 %v5584, %v5587
    %vm5589 = vweird.f32 %v5299
    %vm5590 = vweird.f32 %v5584
    %vm5591 = vmor %vm5589, %vm5590
    %v5592 = vsel %vm5591, %v5584, %v5588
    %v5593 = vand.u32 2147483647, %v5299
    %vm5594 = vcmp.eq.f32.partialorder %v5593, 8.507059e+37
    %v5595 = vand.u32 %v5299, 2147483648
    %v5596 = vor.u32 1.1754944e-38, %v5595
    %v5597 = vsel %vm5594, %v5596, %v5592
    %v5598 = vrcp.pop %v5302
    %v5599 = vmul.f32 %v5302, %v5598
    %v5600 = vsub.f32 1.0, %v5599
    %v5601 = vmul.f32 %v5598, %v5600
    %v5602 = vadd.f32 %v5598, %v5601
    %vm5603 = vweird.f32 %v5302
    %vm5604 = vweird.f32 %v5598
    %vm5605 = vmor %vm5603, %vm5604
    %v5606 = vsel %vm5605, %v5598, %v5602
    %v5607 = vand.u32 2147483647, %v5302
    %vm5608 = vcmp.eq.f32.partialorder %v5607, 8.507059e+37
    %v5609 = vand.u32 %v5302, 2147483648
    %v5610 = vor.u32 1.1754944e-38, %v5609
    %v5611 = vsel %vm5608, %v5610, %v5606
    %v5612 = vrcp.pop %v5305
    %v5613 = vmul.f32 %v5305, %v5612
    %v5614 = vsub.f32 1.0, %v5613
    %v5615 = vmul.f32 %v5612, %v5614
    %v5616 = vadd.f32 %v5612, %v5615
    %vm5617 = vweird.f32 %v5305
    %vm5618 = vweird.f32 %v5612
    %vm5619 = vmor %vm5617, %vm5618
    %v5620 = vsel %vm5619, %v5612, %v5616
    %v5621 = vand.u32 2147483647, %v5305
    %vm5622 = vcmp.eq.f32.partialorder %v5621, 8.507059e+37
    %v5623 = vand.u32 %v5305, 2147483648
    %v5624 = vor.u32 1.1754944e-38, %v5623
    %v5625 = vsel %vm5622, %v5624, %v5620
    %v5626 = vmul.f32 %v5330, %v5527
    %v5627 = vmul.f32 %v5356, %v5541
    %v5628 = vmul.f32 %v5382, %v5555
    %v5629 = vmul.f32 %v5408, %v5569
    %v5630 = vmul.f32 %v5434, %v5583
    %v5631 = vmul.f32 %v5460, %v5597
    %v5632 = vmul.f32 %v5486, %v5611
    %v5633 = vmul.f32 %v5512, %v5625
    %v5634 = vsel %vm264, %v5626, 0.0
    %v5635 = vrot.slane %v5634, 4
    %v5636 = vadd.f32 %v5634, %v5635
    %v5637 = vrot.slane %v5636, 2
    %v5638 = vadd.f32 %v5636, %v5637
    %v5639 = vrot.slane %v5638, 1
    %v5640 = vadd.f32 %v5638, %v5639
    %v5641 = vsel %vm264, %v5627, 0.0
    %v5642 = vrot.slane %v5641, 4
    %v5643 = vadd.f32 %v5641, %v5642
    %v5644 = vrot.slane %v5643, 2
    %v5645 = vadd.f32 %v5643, %v5644
    %v5646 = vrot.slane %v5645, 1
    %v5647 = vadd.f32 %v5645, %v5646
    %v5648 = vsel %vm264, %v5628, 0.0
    %v5649 = vrot.slane %v5648, 4
    %v5650 = vadd.f32 %v5648, %v5649
    %v5651 = vrot.slane %v5650, 2
    %v5652 = vadd.f32 %v5650, %v5651
    %v5653 = vrot.slane %v5652, 1
    %v5654 = vadd.f32 %v5652, %v5653
    %v5655 = vsel %vm264, %v5629, 0.0
    %v5656 = vrot.slane %v5655, 4
    %v5657 = vadd.f32 %v5655, %v5656
    %v5658 = vrot.slane %v5657, 2
    %v5659 = vadd.f32 %v5657, %v5658
    %v5660 = vrot.slane %v5659, 1
    %v5661 = vadd.f32 %v5659, %v5660
    %v5662 = vsel %vm264, %v5630, 0.0
    %v5663 = vrot.slane %v5662, 4
    %v5664 = vadd.f32 %v5662, %v5663
    %v5665 = vrot.slane %v5664, 2
    %v5666 = vadd.f32 %v5664, %v5665
    %v5667 = vrot.slane %v5666, 1
    %v5668 = vadd.f32 %v5666, %v5667
    %v5669 = vsel %vm264, %v5631, 0.0
    %v5670 = vrot.slane %v5669, 4
    %v5671 = vadd.f32 %v5669, %v5670
    %v5672 = vrot.slane %v5671, 2
    %v5673 = vadd.f32 %v5671, %v5672
    %v5674 = vrot.slane %v5673, 1
    %v5675 = vadd.f32 %v5673, %v5674
    %v5676 = vsel %vm264, %v5632, 0.0
    %v5677 = vrot.slane %v5676, 4
    %v5678 = vadd.f32 %v5676, %v5677
    %v5679 = vrot.slane %v5678, 2
    %v5680 = vadd.f32 %v5678, %v5679
    %v5681 = vrot.slane %v5680, 1
    %v5682 = vadd.f32 %v5680, %v5681
    %v5683 = vsel %vm264, %v5633, 0.0
    %v5684 = vrot.slane %v5683, 4
    %v5685 = vadd.f32 %v5683, %v5684
    %v5686 = vrot.slane %v5685, 2
    %v5687 = vadd.f32 %v5685, %v5686
    %v5688 = vrot.slane %v5687, 1
    %v5689 = vadd.f32 %v5687, %v5688
    %vm5698 = vcmask 1041409
    %v5699 = vsel %vm5698, %v887, %v880
    %vm5700 = vcmask 1042434
    %v5701 = vsel %vm5700, %v894, %v5699
    %vm5702 = vcmask 1043459
    %v5703 = vsel %vm5702, %v901, %v5701
    %vm5704 = vcmask 1044484
    %v5705 = vsel %vm5704, %v908, %v5703
    %vm5706 = vcmask 1045509
    %v5707 = vsel %vm5706, %v915, %v5705
    %vm5708 = vcmask 1046534
    %v5709 = vsel %vm5708, %v922, %v5707
    %vm5710 = vcmask 1047559
    %v5711 = vsel %vm5710, %v929, %v5709
    %v5721 = vsel %vm5698, %v1567, %v1560
    %v5722 = vsel %vm5700, %v1574, %v5721
    %v5723 = vsel %vm5702, %v1581, %v5722
    %v5724 = vsel %vm5704, %v1588, %v5723
    %v5725 = vsel %vm5706, %v1595, %v5724
    %v5726 = vsel %vm5708, %v1602, %v5725
    %v5727 = vsel %vm5710, %v1609, %v5726
    %5728 = vrot.lane.b32.xlu0 %v5727, 4
    %v5729 = vpop.permute.xlu0 %5728
    %v5739 = vsel %vm5698, %v2247, %v2240
    %v5740 = vsel %vm5700, %v2254, %v5739
    %v5741 = vsel %vm5702, %v2261, %v5740
    %v5742 = vsel %vm5704, %v2268, %v5741
    %v5743 = vsel %vm5706, %v2275, %v5742
    %v5744 = vsel %vm5708, %v2282, %v5743
    %v5745 = vsel %vm5710, %v2289, %v5744
    %5746 = vrot.lane.b32.xlu0 %v5745, 8
    %v5747 = vpop.permute.xlu0 %5746
    %v5757 = vsel %vm5698, %v2927, %v2920
    %v5758 = vsel %vm5700, %v2934, %v5757
    %v5759 = vsel %vm5702, %v2941, %v5758
    %v5760 = vsel %vm5704, %v2948, %v5759
    %v5761 = vsel %vm5706, %v2955, %v5760
    %v5762 = vsel %vm5708, %v2962, %v5761
    %v5763 = vsel %vm5710, %v2969, %v5762
    %5764 = vrot.lane.b32.xlu0 %v5763, 12
    %v5765 = vpop.permute.xlu0 %5764
    %v5775 = vsel %vm5698, %v3607, %v3600
    %v5776 = vsel %vm5700, %v3614, %v5775
    %v5777 = vsel %vm5702, %v3621, %v5776
    %v5778 = vsel %vm5704, %v3628, %v5777
    %v5779 = vsel %vm5706, %v3635, %v5778
    %v5780 = vsel %vm5708, %v3642, %v5779
    %v5781 = vsel %vm5710, %v3649, %v5780
    %5782 = vrot.lane.b32.xlu0 %v5781, 16
    %v5783 = vpop.permute.xlu0 %5782
    %v5793 = vsel %vm5698, %v4287, %v4280
    %v5794 = vsel %vm5700, %v4294, %v5793
    %v5795 = vsel %vm5702, %v4301, %v5794
    %v5796 = vsel %vm5704, %v4308, %v5795
    %v5797 = vsel %vm5706, %v4315, %v5796
    %v5798 = vsel %vm5708, %v4322, %v5797
    %v5799 = vsel %vm5710, %v4329, %v5798
    %5800 = vrot.lane.b32.xlu0 %v5799, 20
    %v5801 = vpop.permute.xlu0 %5800
    %v5811 = vsel %vm5698, %v4967, %v4960
    %v5812 = vsel %vm5700, %v4974, %v5811
    %v5813 = vsel %vm5702, %v4981, %v5812
    %v5814 = vsel %vm5704, %v4988, %v5813
    %v5815 = vsel %vm5706, %v4995, %v5814
    %v5816 = vsel %vm5708, %v5002, %v5815
    %v5817 = vsel %vm5710, %v5009, %v5816
    %5818 = vrot.lane.b32.xlu0 %v5817, 24
    %v5819 = vpop.permute.xlu0 %5818
    %v5829 = vsel %vm5698, %v5647, %v5640
    %v5830 = vsel %vm5700, %v5654, %v5829
    %v5831 = vsel %vm5702, %v5661, %v5830
    %v5832 = vsel %vm5704, %v5668, %v5831
    %v5833 = vsel %vm5706, %v5675, %v5832
    %v5834 = vsel %vm5708, %v5682, %v5833
    %v5835 = vsel %vm5710, %v5689, %v5834
    %5836 = vrot.lane.b32.xlu0 %v5835, 28
    %v5837 = vpop.permute.xlu0 %5836
    %v5839 = vsel %vm264, %v5711, %v5729
    %v5840 = vsel %vm473, %v5839, %v5747
    %vm5841 = vcmask 97280
    %v5842 = vsel %vm5841, %v5840, %v5765
    %vm5843 = vcmask 130048
    %v5844 = vsel %vm5843, %v5842, %v5783
    %vm5845 = vcmask 162816
    %v5846 = vsel %vm5845, %v5844, %v5801
    %vm5847 = vcmask 195584
    %v5848 = vsel %vm5847, %v5846, %v5819
    %vm5849 = vcmask 228352
    %v5850 = vsel %vm5849, %v5848, %v5837
    %v5851 = vld [vmem:[#allocation10] sm:$0xff]
    %v5852 = vld [vmem:[#allocation10 + $0x8] sm:$0xff]
    %v5853 = vld [vmem:[#allocation10 + $0x10] sm:$0xff]
    %v5854 = vld [vmem:[#allocation10 + $0x18] sm:$0xff]
    %v5856 = vsel %vm129, %v5850, 0
    %5858 = vmatpush.msra.mxu0 0.0
    %5859 = vmatpush.msra.mxu0 0.0
    %5860 = vmatpush.msra.mxu0 0.0
    %5861 = vmatpush.msra.mxu0 0.0
    %5862 = vmatpush.msra.mxu0 0.0
    %5863 = vmatpush.msra.mxu0 0.0
    %5864 = vmatpush.msra.mxu0 0.0
    %5865 = vmatpush.msra.mxu0 0.0
    %5866 = vmatpush.msra.mxu0 0.0
    %5867 = vmatpush.msra.mxu0 0.0
    %5868 = vmatpush.msra.mxu0 0.0
    %5869 = vmatpush.msra.mxu0 0.0
    %5870 = vmatpush.msra.mxu0 %v5854
    %5871 = vmatpush.msra.mxu0 %v5853
    %5872 = vmatpush.msra.mxu0 %v5852
    %5873 = vmatpush.msra.mxu0 %v5851
    %5874 = vmatmul.f32.gmra.mxu0 %v5856
    %v5875 = vpop.f32.mrf.mxu0
    %v5876 = vadd.f32 0.0, %v5875
    %5877 = vdwg.mxu0
    %v5878 = vmul.f32 %v5876, 0.125
    %v5879 = vld [vmem:[%s6] sm:$0x1]
    %v5881 = vperm.slane %v5879, 0
    %v5883 = vadd.f32 %v5878, %v5881
    %5884 = vst.msk [vmem:[#allocation11] sm:$0xff] %vm129, %v5883
    // Predicated region
    $region50: #{tpu_custom_call.1} parent=1 // pred_check
      _
    $region51: #{tpu_custom_call.1} parent=1 // pred_check_branch
      %5886 = sbr.rel (0) target = $region53
    $region52: #{tpu_custom_call.1} parent=1 // pred_region
      %5888 = vsyncadd [#allocation4], 0
      %s5890 = sshll.u32 [#allocation11], 4
      %s5891 = int_to_ptr.vmem [resolvable:$true] %s5890
      %s5892 = sshll.u32 %s7, 4
      %s5893 = int_to_ptr.hbm [resolvable:$true] %s5892
      %5895 = dma.vmem_to_hbm [thread:$0]  %s5891, 128, %s5893, [#allocation4]
    $region53: #{tpu_custom_call.1} parent=1 // pred_fallthru
      _
    // Predicated region
    $region54: #{tpu_custom_call.1} parent=1 // pred_check
      _
    $region55: #{tpu_custom_call.1} parent=1 // pred_check_branch
      %5897 = sbr.rel (0) target = $region57
    $region56: #{tpu_custom_call.1} parent=1 // pred_region
      %5899 = dma.done [#allocation4], 128
    $region57: #{tpu_custom_call.1} parent=1 // pred_fallthru
      _
    %5900 = vsyncpa [#allocation3], 1
    %5901 = vsyncpa [#allocation6], 1
    %5902 = vsyncpa [#allocation9], 1
    %5903 = vsyncpa [#allocation4], 1

// kernel: tpu_custom_call.1
$region0: #{tpu_custom_call.1}
  #allocation0 [shape = 'u32[]', space=smem, size = 0x4, offset = 0x4, fixed_abs, tag = 'smem constant byte address 0x4 - core index']
  #allocation1 [shape = 'u32[72,128]{1,0:T(1,128)}', space=vmem, size = 0x9000, scoped, tag = 'internal scratch']
  %s0 = inlined_call_operand.hbm [shape: f32[8,8,32], index: 0, kind: input, shape index: {}]
  %s1 = inlined_call_operand.hbm [shape: f32[8,8,32], index: 1, kind: input, shape index: {}]
  %s2 = inlined_call_operand.hbm [shape: f32[32,32], index: 2, kind: input, shape index: {}]
  %s3 = inlined_call_operand.vmem [shape: f32[1,32], index: 3, kind: input, shape index: {}]
  %s4 = inlined_call_operand.hbm [shape: f32[32,64], index: 4, kind: input, shape index: {}]
  %s5 = inlined_call_operand.hbm [shape: f32[32,32], index: 5, kind: input, shape index: {}]
  %s6 = inlined_call_operand.vmem [shape: f32[1,32], index: 6, kind: input, shape index: {}]
  %s7 = inlined_call_operand.hbm [shape: f32[8,32], index: 7, kind: output, shape index: {}]
  %s8 = sld [smem:[#allocation0]]
  $region58: #{tpu_custom_call.1} parent=0
    _
  %s10 = ssub.s32 1, %s8
  %s11 = scalar_select 0, %s10, %s8
  $region1: #{tpu_custom_call.1} parent=0
    #allocation2 [shape = 'u8[32768]{0}', space=vmem, size = 0x8000, scoped, tag = 'input window, operand 0, single buffered']
    #allocation3 [shape = 's32[1]{0}', space=sflag, size = 0x4, scoped, tag = 'scoped memory for tpu_custom_call.1']
    #allocation4 [shape = 's32[1]{0}', space=sflag, size = 0x4, scoped, tag = 'scoped memory for tpu_custom_call.1']
    #allocation5 [shape = 'u8[32768]{0}', space=vmem, size = 0x8000, scoped, tag = 'input window, operand 1, single buffered']
    #allocation6 [shape = 's32[1]{0}', space=sflag, size = 0x4, scoped, tag = 'scoped memory for tpu_custom_call.1']
    #allocation7 [shape = 'u8[16384]{0}', space=vmem, size = 0x4000, scoped, tag = 'input window, operand 2, single buffered']
    #allocation8 [shape = 'u8[16384]{0}', space=vmem, size = 0x4000, scoped, tag = 'input window, operand 4, single buffered']
    #allocation9 [shape = 's32[1]{0}', space=sflag, size = 0x4, scoped, tag = 'scoped memory for tpu_custom_call.1']
    #allocation10 [shape = 'u8[16384]{0}', space=vmem, size = 0x4000, scoped, tag = 'input window, operand 5, single buffered']
    #allocation11 [shape = 'u8[4096]{0}', space=vmem, size = 0x1000, scoped, tag = 'output window, operand 0, single buffered']
    %12 = vsyncpa [#allocation3], 0
    %13 = vsyncpa [#allocation6], 0
    %14 = vsyncpa [#allocation9], 0
    %15 = vsyncpa [#allocation4], 0
    // Predicated region
    $region2: #{tpu_custom_call.1} parent=1 // pred_check
      _
    $region3: #{tpu_custom_call.1} parent=1 // pred_check_branch
      %17 = sbr.rel (0) target = $region5
    $region4: #{tpu_custom_call.1} parent=1 // pred_region
      %19 = vsyncadd [#allocation3], 0
      %s20 = sshll.u32 %s0, 4
      %s21 = int_to_ptr.hbm [resolvable:$true] %s20
      %s22 = sshll.u32 [#allocation2], 4
      %s23 = int_to_ptr.vmem [resolvable:$true] %s22
      %28 = dma.hbm_to_vmem [thread:$0]  %s21, 1024, %s23, [#allocation3], 128, 128, 8
    $region5: #{tpu_custom_call.1} parent=1 // pred_fallthru
      _
    // Predicated region
    $region6: #{tpu_custom_call.1} parent=1 // pred_check
      _
    $region7: #{tpu_custom_call.1} parent=1 // pred_check_branch
      %30 = sbr.rel (0) target = $region9
    $region8: #{tpu_custom_call.1} parent=1 // pred_region
      %32 = vsyncadd [#allocation6], 0
      %s33 = sshll.u32 %s1, 4
      %s34 = int_to_ptr.hbm [resolvable:$true] %s33
      %s35 = sshll.u32 [#allocation5], 4
      %s36 = int_to_ptr.vmem [resolvable:$true] %s35
      %41 = dma.hbm_to_vmem [thread:$0]  %s34, 1024, %s36, [#allocation6], 128, 128, 8
    $region9: #{tpu_custom_call.1} parent=1 // pred_fallthru
      _
    // Predicated region
    $region10: #{tpu_custom_call.1} parent=1 // pred_check
      _
    $region11: #{tpu_custom_call.1} parent=1 // pred_check_branch
      %43 = sbr.rel (0) target = $region13
    $region12: #{tpu_custom_call.1} parent=1 // pred_region
      %45 = vsyncadd [#allocation6], 0
      %s46 = sshll.u32 %s2, 4
      %s47 = int_to_ptr.hbm [resolvable:$true] %s46
      %s48 = sshll.u32 [#allocation7], 4
      %s49 = int_to_ptr.vmem [resolvable:$true] %s48
      %54 = dma.hbm_to_vmem [thread:$0]  %s47, 512, %s49, [#allocation6], 128, 128, 8
    $region13: #{tpu_custom_call.1} parent=1 // pred_fallthru
      _
    // Predicated region
    $region14: #{tpu_custom_call.1} parent=1 // pred_check
      _
    $region15: #{tpu_custom_call.1} parent=1 // pred_check_branch
      %56 = sbr.rel (0) target = $region17
    $region16: #{tpu_custom_call.1} parent=1 // pred_region
      _
    $region17: #{tpu_custom_call.1} parent=1 // pred_fallthru
      _
    // Predicated region
    $region18: #{tpu_custom_call.1} parent=1 // pred_check
      _
    $region19: #{tpu_custom_call.1} parent=1 // pred_check_branch
      %58 = sbr.rel (0) target = $region21
    $region20: #{tpu_custom_call.1} parent=1 // pred_region
      %60 = vsyncadd [#allocation9], 0
      %s61 = sshll.u32 %s4, 4
      %s62 = int_to_ptr.hbm [resolvable:$true] %s61
      %s63 = sshll.u32 [#allocation8], 4
      %s64 = int_to_ptr.vmem [resolvable:$true] %s63
      %69 = dma.hbm_to_vmem [thread:$0]  %s62, 512, %s64, [#allocation9], 128, 128, 8
    $region21: #{tpu_custom_call.1} parent=1 // pred_fallthru
      _
    // Predicated region
    $region22: #{tpu_custom_call.1} parent=1 // pred_check
      _
    $region23: #{tpu_custom_call.1} parent=1 // pred_check_branch
      %71 = sbr.rel (0) target = $region25
    $region24: #{tpu_custom_call.1} parent=1 // pred_region
      %73 = vsyncadd [#allocation9], 0
      %s74 = sshll.u32 %s5, 4
      %s75 = int_to_ptr.hbm [resolvable:$true] %s74
      %s76 = sshll.u32 [#allocation10], 4
      %s77 = int_to_ptr.vmem [resolvable:$true] %s76
      %82 = dma.hbm_to_vmem [thread:$0]  %s75, 512, %s77, [#allocation9], 128, 128, 8
    $region25: #{tpu_custom_call.1} parent=1 // pred_fallthru
      _
    // Predicated region
    $region26: #{tpu_custom_call.1} parent=1 // pred_check
      _
    $region27: #{tpu_custom_call.1} parent=1 // pred_check_branch
      %84 = sbr.rel (0) target = $region29
    $region28: #{tpu_custom_call.1} parent=1 // pred_region
      _
    $region29: #{tpu_custom_call.1} parent=1 // pred_fallthru
      _
    // Predicated region
    $region30: #{tpu_custom_call.1} parent=1 // pred_check
      _
    $region31: #{tpu_custom_call.1} parent=1 // pred_check_branch
      %86 = sbr.rel (0) target = $region33
    $region32: #{tpu_custom_call.1} parent=1 // pred_region
      %88 = dma.done [#allocation3], 1024
    $region33: #{tpu_custom_call.1} parent=1 // pred_fallthru
      _
    // Predicated region
    $region34: #{tpu_custom_call.1} parent=1 // pred_check
      _
    $region35: #{tpu_custom_call.1} parent=1 // pred_check_branch
      %90 = sbr.rel (0) target = $region37
    $region36: #{tpu_custom_call.1} parent=1 // pred_region
      %92 = dma.done [#allocation6], 1024
    $region37: #{tpu_custom_call.1} parent=1 // pred_fallthru
      _
    // Predicated region
    $region38: #{tpu_custom_call.1} parent=1 // pred_check
      _
    $region39: #{tpu_custom_call.1} parent=1 // pred_check_branch
      %94 = sbr.rel (0) target = $region41
    $region40: #{tpu_custom_call.1} parent=1 // pred_region
      %96 = dma.done [#allocation6], 512
    $region41: #{tpu_custom_call.1} parent=1 // pred_fallthru
      _
    // Predicated region
    $region42: #{tpu_custom_call.1} parent=1 // pred_check
      _
    $region43: #{tpu_custom_call.1} parent=1 // pred_check_branch
      %98 = sbr.rel (0) target = $region45
    $region44: #{tpu_custom_call.1} parent=1 // pred_region
      %100 = dma.done [#allocation9], 512
    $region45: #{tpu_custom_call.1} parent=1 // pred_fallthru
      _
    // Predicated region
    $region46: #{tpu_custom_call.1} parent=1 // pred_check
      _
    $region47: #{tpu_custom_call.1} parent=1 // pred_check_branch
      %102 = sbr.rel (0) target = $region49
    $region48: #{tpu_custom_call.1} parent=1 // pred_region
      %104 = dma.done [#allocation9], 512
    $region49: #{tpu_custom_call.1} parent=1 // pred_fallthru
      _
    %v105 = vld [vmem:[#allocation2] sm:$0xff]
    %v106 = vld [vmem:[#allocation2 + $0x8] sm:$0xff]
    %v107 = vld [vmem:[#allocation2 + $0x10] sm:$0xff]
    %v108 = vld [vmem:[#allocation2 + $0x18] sm:$0xff]
    %v109 = vld [vmem:[#allocation2 + $0x20] sm:$0xff]
    %v110 = vld [vmem:[#allocation2 + $0x28] sm:$0xff]
    %v111 = vld [vmem:[#allocation2 + $0x30] sm:$0xff]
    %v112 = vld [vmem:[#allocation2 + $0x38] sm:$0xff]
    %v113 = vld [vmem:[#allocation5] sm:$0xff]
    %v114 = vld [vmem:[#allocation5 + $0x8] sm:$0xff]
    %v115 = vld [vmem:[#allocation5 + $0x10] sm:$0xff]
    %v116 = vld [vmem:[#allocation5 + $0x18] sm:$0xff]
    %v117 = vld [vmem:[#allocation5 + $0x20] sm:$0xff]
    %v118 = vld [vmem:[#allocation5 + $0x28] sm:$0xff]
    %v119 = vld [vmem:[#allocation5 + $0x30] sm:$0xff]
    %v120 = vld [vmem:[#allocation5 + $0x38] sm:$0xff]
    %v121 = vld [vmem:[#allocation7] sm:$0xff]
    %v122 = vld [vmem:[#allocation7 + $0x8] sm:$0xff]
    %v123 = vld [vmem:[#allocation7 + $0x10] sm:$0xff]
    %v124 = vld [vmem:[#allocation7 + $0x18] sm:$0xff]
    %v125 = vld [vmem:[%s3] sm:$0x1]
    %v127 = vperm.slane %v125, 0
    %vm129 = vcmask 261120
    %v131 = vsel %vm129, %v105, 0
    %v134 = vsel %vm129, %v106, 0
    %v137 = vsel %vm129, %v107, 0
    %v140 = vsel %vm129, %v108, 0
    %v143 = vsel %vm129, %v109, 0
    %v146 = vsel %vm129, %v110, 0
    %v149 = vsel %vm129, %v111, 0
    %v152 = vsel %vm129, %v112, 0
    %154 = vmatpush.msra.mxu0 0.0
    %155 = vmatpush.msra.mxu0 0.0
    %156 = vmatpush.msra.mxu0 0.0
    %157 = vmatpush.msra.mxu0 0.0
    %158 = vmatpush.msra.mxu0 0.0
    %159 = vmatpush.msra.mxu0 0.0
    %160 = vmatpush.msra.mxu0 0.0
    %161 = vmatpush.msra.mxu0 0.0
    %162 = vmatpush.msra.mxu0 0.0
    %163 = vmatpush.msra.mxu0 0.0
    %164 = vmatpush.msra.mxu0 0.0
    %165 = vmatpush.msra.mxu0 0.0
    %166 = vmatpush.msra.mxu0 %v124
    %167 = vmatpush.msra.mxu0 %v123
    %168 = vmatpush.msra.mxu0 %v122
    %169 = vmatpush.msra.mxu0 %v121
    %170 = vmatmul.f32.gmra.mxu0 %v131
    %v171 = vpop.f32.mrf.mxu0
    %v172 = vadd.f32 %v127, %v171
    %173 = vmatmul.f32.gmra.mxu0 %v134
    %v174 = vpop.f32.mrf.mxu0
    %v175 = vadd.f32 %v127, %v174
    %176 = vmatmul.f32.gmra.mxu0 %v137
    %v177 = vpop.f32.mrf.mxu0
    %v178 = vadd.f32 %v127, %v177
    %179 = vmatmul.f32.gmra.mxu0 %v140
    %v180 = vpop.f32.mrf.mxu0
    %v181 = vadd.f32 %v127, %v180
    %182 = vmatmul.f32.gmra.mxu0 %v143
    %v183 = vpop.f32.mrf.mxu0
    %v184 = vadd.f32 %v127, %v183
    %185 = vmatmul.f32.gmra.mxu0 %v146
    %v186 = vpop.f32.mrf.mxu0
    %v187 = vadd.f32 %v127, %v186
    %188 = vmatmul.f32.gmra.mxu0 %v149
    %v189 = vpop.f32.mrf.mxu0
    %v190 = vadd.f32 %v127, %v189
    %191 = vmatmul.f32.gmra.mxu0 %v152
    %v192 = vpop.f32.mrf.mxu0
    %v193 = vadd.f32 %v127, %v192
    %194 = vdwg.mxu0
    %v195 = vld [vmem:[#allocation8] sm:$0xff]
    %v196 = vld [vmem:[#allocation8 + $0x8] sm:$0xff]
    %v197 = vld [vmem:[#allocation8 + $0x10] sm:$0xff]
    %v198 = vld [vmem:[#allocation8 + $0x18] sm:$0xff]
    %v200 = vsel %vm129, %v113, 0
    %v203 = vsel %vm129, %v114, 0
    %v206 = vsel %vm129, %v115, 0
    %v209 = vsel %vm129, %v116, 0
    %v212 = vsel %vm129, %v117, 0
    %v215 = vsel %vm129, %v118, 0
    %v218 = vsel %vm129, %v119, 0
    %v221 = vsel %vm129, %v120, 0
    %223 = vmatpush.msra.mxu0 0.0
    %224 = vmatpush.msra.mxu0 0.0
    %225 = vmatpush.msra.mxu0 0.0
    %226 = vmatpush.msra.mxu0 0.0
    %227 = vmatpush.msra.mxu0 0.0
    %228 = vmatpush.msra.mxu0 0.0
    %229 = vmatpush.msra.mxu0 0.0
    %230 = vmatpush.msra.mxu0 0.0
    %231 = vmatpush.msra.mxu0 0.0
    %232 = vmatpush.msra.mxu0 0.0
    %233 = vmatpush.msra.mxu0 0.0
    %234 = vmatpush.msra.mxu0 0.0
    %235 = vmatpush.msra.mxu0 %v198
    %236 = vmatpush.msra.mxu0 %v197
    %237 = vmatpush.msra.mxu0 %v196
    %238 = vmatpush.msra.mxu0 %v195
    %239 = vmatmul.f32.gmra.mxu0 %v200
    %v240 = vpop.f32.mrf.mxu0
    %v241 = vadd.f32 0.0, %v240
    %242 = vmatmul.f32.gmra.mxu0 %v203
    %v243 = vpop.f32.mrf.mxu0
    %v244 = vadd.f32 0.0, %v243
    %245 = vmatmul.f32.gmra.mxu0 %v206
    %v246 = vpop.f32.mrf.mxu0
    %v247 = vadd.f32 0.0, %v246
    %248 = vmatmul.f32.gmra.mxu0 %v209
    %v249 = vpop.f32.mrf.mxu0
    %v250 = vadd.f32 0.0, %v249
    %251 = vmatmul.f32.gmra.mxu0 %v212
    %v252 = vpop.f32.mrf.mxu0
    %v253 = vadd.f32 0.0, %v252
    %254 = vmatmul.f32.gmra.mxu0 %v215
    %v255 = vpop.f32.mrf.mxu0
    %v256 = vadd.f32 0.0, %v255
    %257 = vmatmul.f32.gmra.mxu0 %v218
    %v258 = vpop.f32.mrf.mxu0
    %v259 = vadd.f32 0.0, %v258
    %260 = vmatmul.f32.gmra.mxu0 %v221
    %v261 = vpop.f32.mrf.mxu0
    %v262 = vadd.f32 0.0, %v261
    %263 = vdwg.mxu0
    %vm264 = vcmask 31744
    %v266 = vsel %vm264, %v172, 0
    %v269 = vsel %vm264, %v241, 0
    %271 = vmatpush.xpose.msra.mxu0 0.0
    %272 = vmatpush.xpose.msra.mxu0 0.0
    %273 = vmatpush.xpose.msra.mxu0 0.0
    %274 = vmatpush.xpose.msra.mxu0 0.0
    %275 = vmatpush.xpose.msra.mxu0 0.0
    %276 = vmatpush.xpose.msra.mxu0 0.0
    %277 = vmatpush.xpose.msra.mxu0 0.0
    %278 = vmatpush.xpose.msra.mxu0 0.0
    %279 = vmatpush.xpose.msra.mxu0 0.0
    %280 = vmatpush.xpose.msra.mxu0 0.0
    %281 = vmatpush.xpose.msra.mxu0 0.0
    %282 = vmatpush.xpose.msra.mxu0 0.0
    %283 = vmatpush.xpose.msra.mxu0 0.0
    %284 = vmatpush.xpose.msra.mxu0 0.0
    %285 = vmatpush.xpose.msra.mxu0 0.0
    %286 = vmatpush.xpose.msra.mxu0 %v269
    %287 = vmatmul.f32.gmra.mxu0 %v266
    %v288 = vpop.f32.mrf.mxu0
    %v289 = vadd.f32 0.0, %v288
    %290 = vdwg.mxu0
    %v292 = vsel %vm264, %v175, 0
    %v295 = vsel %vm264, %v244, 0
    %297 = vmatpush.xpose.msra.mxu0 0.0
    %298 = vmatpush.xpose.msra.mxu0 0.0
    %299 = vmatpush.xpose.msra.mxu0 0.0
    %300 = vmatpush.xpose.msra.mxu0 0.0
    %301 = vmatpush.xpose.msra.mxu0 0.0
    %302 = vmatpush.xpose.msra.mxu0 0.0
    %303 = vmatpush.xpose.msra.mxu0 0.0
    %304 = vmatpush.xpose.msra.mxu0 0.0
    %305 = vmatpush.xpose.msra.mxu0 0.0
    %306 = vmatpush.xpose.msra.mxu0 0.0
    %307 = vmatpush.xpose.msra.mxu0 0.0
    %308 = vmatpush.xpose.msra.mxu0 0.0
    %309 = vmatpush.xpose.msra.mxu0 0.0
    %310 = vmatpush.xpose.msra.mxu0 0.0
    %311 = vmatpush.xpose.msra.mxu0 0.0
    %312 = vmatpush.xpose.msra.mxu0 %v295
    %313 = vmatmul.f32.gmra.mxu0 %v292
    %v314 = vpop.f32.mrf.mxu0
    %v315 = vadd.f32 0.0, %v314
    %316 = vdwg.mxu0
    %v318 = vsel %vm264, %v178, 0
    %v321 = vsel %vm264, %v247, 0
    %323 = vmatpush.xpose.msra.mxu0 0.0
    %324 = vmatpush.xpose.msra.mxu0 0.0
    %325 = vmatpush.xpose.msra.mxu0 0.0
    %326 = vmatpush.xpose.msra.mxu0 0.0
    %327 = vmatpush.xpose.msra.mxu0 0.0
    %328 = vmatpush.xpose.msra.mxu0 0.0
    %329 = vmatpush.xpose.msra.mxu0 0.0
    %330 = vmatpush.xpose.msra.mxu0 0.0
    %331 = vmatpush.xpose.msra.mxu0 0.0
    %332 = vmatpush.xpose.msra.mxu0 0.0
    %333 = vmatpush.xpose.msra.mxu0 0.0
    %334 = vmatpush.xpose.msra.mxu0 0.0
    %335 = vmatpush.xpose.msra.mxu0 0.0
    %336 = vmatpush.xpose.msra.mxu0 0.0
    %337 = vmatpush.xpose.msra.mxu0 0.0
    %338 = vmatpush.xpose.msra.mxu0 %v321
    %339 = vmatmul.f32.gmra.mxu0 %v318
    %v340 = vpop.f32.mrf.mxu0
    %v341 = vadd.f32 0.0, %v340
    %342 = vdwg.mxu0
    %v344 = vsel %vm264, %v181, 0
    %v347 = vsel %vm264, %v250, 0
    %349 = vmatpush.xpose.msra.mxu0 0.0
    %350 = vmatpush.xpose.msra.mxu0 0.0
    %351 = vmatpush.xpose.msra.mxu0 0.0
    %352 = vmatpush.xpose.msra.mxu0 0.0
    %353 = vmatpush.xpose.msra.mxu0 0.0
    %354 = vmatpush.xpose.msra.mxu0 0.0
    %355 = vmatpush.xpose.msra.mxu0 0.0
    %356 = vmatpush.xpose.msra.mxu0 0.0
    %357 = vmatpush.xpose.msra.mxu0 0.0
    %358 = vmatpush.xpose.msra.mxu0 0.0
    %359 = vmatpush.xpose.msra.mxu0 0.0
    %360 = vmatpush.xpose.msra.mxu0 0.0
    %361 = vmatpush.xpose.msra.mxu0 0.0
    %362 = vmatpush.xpose.msra.mxu0 0.0
    %363 = vmatpush.xpose.msra.mxu0 0.0
    %364 = vmatpush.xpose.msra.mxu0 %v347
    %365 = vmatmul.f32.gmra.mxu0 %v344
    %v366 = vpop.f32.mrf.mxu0
    %v367 = vadd.f32 0.0, %v366
    %368 = vdwg.mxu0
    %v370 = vsel %vm264, %v184, 0
    %v373 = vsel %vm264, %v253, 0
    %375 = vmatpush.xpose.msra.mxu0 0.0
    %376 = vmatpush.xpose.msra.mxu0 0.0
    %377 = vmatpush.xpose.msra.mxu0 0.0
    %378 = vmatpush.xpose.msra.mxu0 0.0
    %379 = vmatpush.xpose.msra.mxu0 0.0
    %380 = vmatpush.xpose.msra.mxu0 0.0
    %381 = vmatpush.xpose.msra.mxu0 0.0
    %382 = vmatpush.xpose.msra.mxu0 0.0
    %383 = vmatpush.xpose.msra.mxu0 0.0
    %384 = vmatpush.xpose.msra.mxu0 0.0
    %385 = vmatpush.xpose.msra.mxu0 0.0
    %386 = vmatpush.xpose.msra.mxu0 0.0
    %387 = vmatpush.xpose.msra.mxu0 0.0
    %388 = vmatpush.xpose.msra.mxu0 0.0
    %389 = vmatpush.xpose.msra.mxu0 0.0
    %390 = vmatpush.xpose.msra.mxu0 %v373
    %391 = vmatmul.f32.gmra.mxu0 %v370
    %v392 = vpop.f32.mrf.mxu0
    %v393 = vadd.f32 0.0, %v392
    %394 = vdwg.mxu0
    %v396 = vsel %vm264, %v187, 0
    %v399 = vsel %vm264, %v256, 0
    %401 = vmatpush.xpose.msra.mxu0 0.0
    %402 = vmatpush.xpose.msra.mxu0 0.0
    %403 = vmatpush.xpose.msra.mxu0 0.0
    %404 = vmatpush.xpose.msra.mxu0 0.0
    %405 = vmatpush.xpose.msra.mxu0 0.0
    %406 = vmatpush.xpose.msra.mxu0 0.0
    %407 = vmatpush.xpose.msra.mxu0 0.0
    %408 = vmatpush.xpose.msra.mxu0 0.0
    %409 = vmatpush.xpose.msra.mxu0 0.0
    %410 = vmatpush.xpose.msra.mxu0 0.0
    %411 = vmatpush.xpose.msra.mxu0 0.0
    %412 = vmatpush.xpose.msra.mxu0 0.0
    %413 = vmatpush.xpose.msra.mxu0 0.0
    %414 = vmatpush.xpose.msra.mxu0 0.0
    %415 = vmatpush.xpose.msra.mxu0 0.0
    %416 = vmatpush.xpose.msra.mxu0 %v399
    %417 = vmatmul.f32.gmra.mxu0 %v396
    %v418 = vpop.f32.mrf.mxu0
    %v419 = vadd.f32 0.0, %v418
    %420 = vdwg.mxu0
    %v422 = vsel %vm264, %v190, 0
    %v425 = vsel %vm264, %v259, 0
    %427 = vmatpush.xpose.msra.mxu0 0.0
    %428 = vmatpush.xpose.msra.mxu0 0.0
    %429 = vmatpush.xpose.msra.mxu0 0.0
    %430 = vmatpush.xpose.msra.mxu0 0.0
    %431 = vmatpush.xpose.msra.mxu0 0.0
    %432 = vmatpush.xpose.msra.mxu0 0.0
    %433 = vmatpush.xpose.msra.mxu0 0.0
    %434 = vmatpush.xpose.msra.mxu0 0.0
    %435 = vmatpush.xpose.msra.mxu0 0.0
    %436 = vmatpush.xpose.msra.mxu0 0.0
    %437 = vmatpush.xpose.msra.mxu0 0.0
    %438 = vmatpush.xpose.msra.mxu0 0.0
    %439 = vmatpush.xpose.msra.mxu0 0.0
    %440 = vmatpush.xpose.msra.mxu0 0.0
    %441 = vmatpush.xpose.msra.mxu0 0.0
    %442 = vmatpush.xpose.msra.mxu0 %v425
    %443 = vmatmul.f32.gmra.mxu0 %v422
    %v444 = vpop.f32.mrf.mxu0
    %v445 = vadd.f32 0.0, %v444
    %446 = vdwg.mxu0
    %v448 = vsel %vm264, %v193, 0
    %v451 = vsel %vm264, %v262, 0
    %453 = vmatpush.xpose.msra.mxu0 0.0
    %454 = vmatpush.xpose.msra.mxu0 0.0
    %455 = vmatpush.xpose.msra.mxu0 0.0
    %456 = vmatpush.xpose.msra.mxu0 0.0
    %457 = vmatpush.xpose.msra.mxu0 0.0
    %458 = vmatpush.xpose.msra.mxu0 0.0
    %459 = vmatpush.xpose.msra.mxu0 0.0
    %460 = vmatpush.xpose.msra.mxu0 0.0
    %461 = vmatpush.xpose.msra.mxu0 0.0
    %462 = vmatpush.xpose.msra.mxu0 0.0
    %463 = vmatpush.xpose.msra.mxu0 0.0
    %464 = vmatpush.xpose.msra.mxu0 0.0
    %465 = vmatpush.xpose.msra.mxu0 0.0
    %466 = vmatpush.xpose.msra.mxu0 0.0
    %467 = vmatpush.xpose.msra.mxu0 0.0
    %468 = vmatpush.xpose.msra.mxu0 %v451
    %469 = vmatmul.f32.gmra.mxu0 %v448
    %v470 = vpop.f32.mrf.mxu0
    %v471 = vadd.f32 0.0, %v470
    %472 = vdwg.mxu0
    %vm473 = vcmask 64512
    %v474 = vsel %vm473, %v289, -inf
    %475 = vmax.xlane.f32.xlu0 %v474
    %v476 = vpop.xlane.xlu0 %475
    %v477 = vsel %vm473, %v315, -inf
    %478 = vmax.xlane.f32.xlu0 %v477
    %v479 = vpop.xlane.xlu0 %478
    %v480 = vsel %vm473, %v341, -inf
    %481 = vmax.xlane.f32.xlu0 %v480
    %v482 = vpop.xlane.xlu0 %481
    %v483 = vsel %vm473, %v367, -inf
    %484 = vmax.xlane.f32.xlu0 %v483
    %v485 = vpop.xlane.xlu0 %484
    %v486 = vsel %vm473, %v393, -inf
    %487 = vmax.xlane.f32.xlu0 %v486
    %v488 = vpop.xlane.xlu0 %487
    %v489 = vsel %vm473, %v419, -inf
    %490 = vmax.xlane.f32.xlu0 %v489
    %v491 = vpop.xlane.xlu0 %490
    %v492 = vsel %vm473, %v445, -inf
    %493 = vmax.xlane.f32.xlu0 %v492
    %v494 = vpop.xlane.xlu0 %493
    %v495 = vsel %vm473, %v471, -inf
    %496 = vmax.xlane.f32.xlu0 %v495
    %v497 = vpop.xlane.xlu0 %496
    %v498 = vsub.f32 %v289, %v476
    %v499 = vsub.f32 %v315, %v479
    %v500 = vsub.f32 %v341, %v482
    %v501 = vsub.f32 %v367, %v485
    %v502 = vsub.f32 %v393, %v488
    %v503 = vsub.f32 %v419, %v491
    %v504 = vsub.f32 %v445, %v494
    %v505 = vsub.f32 %v471, %v497
    %v506 = vmul.f32 %v498, 1.442695
    %v507 = vpow.pop %v506
    %v508 = vmul.f32 %v499, 1.442695
    %v509 = vpow.pop %v508
    %v510 = vmul.f32 %v500, 1.442695
    %v511 = vpow.pop %v510
    %v512 = vmul.f32 %v501, 1.442695
    %v513 = vpow.pop %v512
    %v514 = vmul.f32 %v502, 1.442695
    %v515 = vpow.pop %v514
    %v516 = vmul.f32 %v503, 1.442695
    %v517 = vpow.pop %v516
    %v518 = vmul.f32 %v504, 1.442695
    %v519 = vpow.pop %v518
    %v520 = vmul.f32 %v505, 1.442695
    %v521 = vpow.pop %v520
    %v522 = vsel %vm473, %v507, 0.0
    %523 = vadd.xlane.f32.xlu0 %v522
    %v524 = vpop.xlane.xlu0 %523
    %v525 = vsel %vm473, %v509, 0.0
    %526 = vadd.xlane.f32.xlu0 %v525
    %v527 = vpop.xlane.xlu0 %526
    %v528 = vsel %vm473, %v511, 0.0
    %529 = vadd.xlane.f32.xlu0 %v528
    %v530 = vpop.xlane.xlu0 %529
    %v531 = vsel %vm473, %v513, 0.0
    %532 = vadd.xlane.f32.xlu0 %v531
    %v533 = vpop.xlane.xlu0 %532
    %v534 = vsel %vm473, %v515, 0.0
    %535 = vadd.xlane.f32.xlu0 %v534
    %v536 = vpop.xlane.xlu0 %535
    %v537 = vsel %vm473, %v517, 0.0
    %538 = vadd.xlane.f32.xlu0 %v537
    %v539 = vpop.xlane.xlu0 %538
    %v540 = vsel %vm473, %v519, 0.0
    %541 = vadd.xlane.f32.xlu0 %v540
    %v542 = vpop.xlane.xlu0 %541
    %v543 = vsel %vm473, %v521, 0.0
    %544 = vadd.xlane.f32.xlu0 %v543
    %v545 = vpop.xlane.xlu0 %544
    %546 = vrot.lane.b32.xlu0 %v241, 96
    %v547 = vpop.permute.xlu0 %546
    %v550 = vsel %vm473, %v507, 0
    %552 = vmatpush.msra.mxu0 0.0
    %553 = vmatpush.msra.mxu0 0.0
    %554 = vmatpush.msra.mxu0 0.0
    %555 = vmatpush.msra.mxu0 0.0
    %556 = vmatpush.msra.mxu0 0.0
    %557 = vmatpush.msra.mxu0 0.0
    %558 = vmatpush.msra.mxu0 0.0
    %559 = vmatpush.msra.mxu0 0.0
    %560 = vmatpush.msra.mxu0 0.0
    %561 = vmatpush.msra.mxu0 0.0
    %562 = vmatpush.msra.mxu0 0.0
    %563 = vmatpush.msra.mxu0 0.0
    %564 = vmatpush.msra.mxu0 0.0
    %565 = vmatpush.msra.mxu0 0.0
    %566 = vmatpush.msra.mxu0 0.0
    %567 = vmatpush.msra.mxu0 %v547
    %568 = vmatmul.f32.gmra.mxu0 %v550
    %v569 = vpop.f32.mrf.mxu0
    %v570 = vadd.f32 0.0, %v569
    %571 = vdwg.mxu0
    %572 = vrot.lane.b32.xlu0 %v244, 96
    %v573 = vpop.permute.xlu0 %572
    %v576 = vsel %vm473, %v509, 0
    %578 = vmatpush.msra.mxu0 0.0
    %579 = vmatpush.msra.mxu0 0.0
    %580 = vmatpush.msra.mxu0 0.0
    %581 = vmatpush.msra.mxu0 0.0
    %582 = vmatpush.msra.mxu0 0.0
    %583 = vmatpush.msra.mxu0 0.0
    %584 = vmatpush.msra.mxu0 0.0
    %585 = vmatpush.msra.mxu0 0.0
    %586 = vmatpush.msra.mxu0 0.0
    %587 = vmatpush.msra.mxu0 0.0
    %588 = vmatpush.msra.mxu0 0.0
    %589 = vmatpush.msra.mxu0 0.0
    %590 = vmatpush.msra.mxu0 0.0
    %591 = vmatpush.msra.mxu0 0.0
    %592 = vmatpush.msra.mxu0 0.0
    %593 = vmatpush.msra.mxu0 %v573
    %594 = vmatmul.f32.gmra.mxu0 %v576
    %v595 = vpop.f32.mrf.mxu0
    %v596 = vadd.f32 0.0, %v595
    %597 = vdwg.mxu0
    %598 = vrot.lane.b32.xlu0 %v247, 96
    %v599 = vpop.permute.xlu0 %598
    %v602 = vsel %vm473, %v511, 0
    %604 = vmatpush.msra.mxu0 0.0
    %605 = vmatpush.msra.mxu0 0.0
    %606 = vmatpush.msra.mxu0 0.0
    %607 = vmatpush.msra.mxu0 0.0
    %608 = vmatpush.msra.mxu0 0.0
    %609 = vmatpush.msra.mxu0 0.0
    %610 = vmatpush.msra.mxu0 0.0
    %611 = vmatpush.msra.mxu0 0.0
    %612 = vmatpush.msra.mxu0 0.0
    %613 = vmatpush.msra.mxu0 0.0
    %614 = vmatpush.msra.mxu0 0.0
    %615 = vmatpush.msra.mxu0 0.0
    %616 = vmatpush.msra.mxu0 0.0
    %617 = vmatpush.msra.mxu0 0.0
    %618 = vmatpush.msra.mxu0 0.0
    %619 = vmatpush.msra.mxu0 %v599
    %620 = vmatmul.f32.gmra.mxu0 %v602
    %v621 = vpop.f32.mrf.mxu0
    %v622 = vadd.f32 0.0, %v621
    %623 = vdwg.mxu0
    %624 = vrot.lane.b32.xlu0 %v250, 96
    %v625 = vpop.permute.xlu0 %624
    %v628 = vsel %vm473, %v513, 0
    %630 = vmatpush.msra.mxu0 0.0
    %631 = vmatpush.msra.mxu0 0.0
    %632 = vmatpush.msra.mxu0 0.0
    %633 = vmatpush.msra.mxu0 0.0
    %634 = vmatpush.msra.mxu0 0.0
    %635 = vmatpush.msra.mxu0 0.0
    %636 = vmatpush.msra.mxu0 0.0
    %637 = vmatpush.msra.mxu0 0.0
    %638 = vmatpush.msra.mxu0 0.0
    %639 = vmatpush.msra.mxu0 0.0
    %640 = vmatpush.msra.mxu0 0.0
    %641 = vmatpush.msra.mxu0 0.0
    %642 = vmatpush.msra.mxu0 0.0
    %643 = vmatpush.msra.mxu0 0.0
    %644 = vmatpush.msra.mxu0 0.0
    %645 = vmatpush.msra.mxu0 %v625
    %646 = vmatmul.f32.gmra.mxu0 %v628
    %v647 = vpop.f32.mrf.mxu0
    %v648 = vadd.f32 0.0, %v647
    %649 = vdwg.mxu0
    %650 = vrot.lane.b32.xlu0 %v253, 96
    %v651 = vpop.permute.xlu0 %650
    %v654 = vsel %vm473, %v515, 0
    %656 = vmatpush.msra.mxu0 0.0
    %657 = vmatpush.msra.mxu0 0.0
    %658 = vmatpush.msra.mxu0 0.0
    %659 = vmatpush.msra.mxu0 0.0
    %660 = vmatpush.msra.mxu0 0.0
    %661 = vmatpush.msra.mxu0 0.0
    %662 = vmatpush.msra.mxu0 0.0
    %663 = vmatpush.msra.mxu0 0.0
    %664 = vmatpush.msra.mxu0 0.0
    %665 = vmatpush.msra.mxu0 0.0
    %666 = vmatpush.msra.mxu0 0.0
    %667 = vmatpush.msra.mxu0 0.0
    %668 = vmatpush.msra.mxu0 0.0
    %669 = vmatpush.msra.mxu0 0.0
    %670 = vmatpush.msra.mxu0 0.0
    %671 = vmatpush.msra.mxu0 %v651
    %672 = vmatmul.f32.gmra.mxu0 %v654
    %v673 = vpop.f32.mrf.mxu0
    %v674 = vadd.f32 0.0, %v673
    %675 = vdwg.mxu0
    %676 = vrot.lane.b32.xlu0 %v256, 96
    %v677 = vpop.permute.xlu0 %676
    %v680 = vsel %vm473, %v517, 0
    %682 = vmatpush.msra.mxu0 0.0
    %683 = vmatpush.msra.mxu0 0.0
    %684 = vmatpush.msra.mxu0 0.0
    %685 = vmatpush.msra.mxu0 0.0
    %686 = vmatpush.msra.mxu0 0.0
    %687 = vmatpush.msra.mxu0 0.0
    %688 = vmatpush.msra.mxu0 0.0
    %689 = vmatpush.msra.mxu0 0.0
    %690 = vmatpush.msra.mxu0 0.0
    %691 = vmatpush.msra.mxu0 0.0
    %692 = vmatpush.msra.mxu0 0.0
    %693 = vmatpush.msra.mxu0 0.0
    %694 = vmatpush.msra.mxu0 0.0
    %695 = vmatpush.msra.mxu0 0.0
    %696 = vmatpush.msra.mxu0 0.0
    %697 = vmatpush.msra.mxu0 %v677
    %698 = vmatmul.f32.gmra.mxu0 %v680
    %v699 = vpop.f32.mrf.mxu0
    %v700 = vadd.f32 0.0, %v699
    %701 = vdwg.mxu0
    %702 = vrot.lane.b32.xlu0 %v259, 96
    %v703 = vpop.permute.xlu0 %702
    %v706 = vsel %vm473, %v519, 0
    %708 = vmatpush.msra.mxu0 0.0
    %709 = vmatpush.msra.mxu0 0.0
    %710 = vmatpush.msra.mxu0 0.0
    %711 = vmatpush.msra.mxu0 0.0
    %712 = vmatpush.msra.mxu0 0.0
    %713 = vmatpush.msra.mxu0 0.0
    %714 = vmatpush.msra.mxu0 0.0
    %715 = vmatpush.msra.mxu0 0.0
    %716 = vmatpush.msra.mxu0 0.0
    %717 = vmatpush.msra.mxu0 0.0
    %718 = vmatpush.msra.mxu0 0.0
    %719 = vmatpush.msra.mxu0 0.0
    %720 = vmatpush.msra.mxu0 0.0
    %721 = vmatpush.msra.mxu0 0.0
    %722 = vmatpush.msra.mxu0 0.0
    %723 = vmatpush.msra.mxu0 %v703
    %724 = vmatmul.f32.gmra.mxu0 %v706
    %v725 = vpop.f32.mrf.mxu0
    %v726 = vadd.f32 0.0, %v725
    %727 = vdwg.mxu0
    %728 = vrot.lane.b32.xlu0 %v262, 96
    %v729 = vpop.permute.xlu0 %728
    %v732 = vsel %vm473, %v521, 0
    %734 = vmatpush.msra.mxu0 0.0
    %735 = vmatpush.msra.mxu0 0.0
    %736 = vmatpush.msra.mxu0 0.0
    %737 = vmatpush.msra.mxu0 0.0
    %738 = vmatpush.msra.mxu0 0.0
    %739 = vmatpush.msra.mxu0 0.0
    %740 = vmatpush.msra.mxu0 0.0
    %741 = vmatpush.msra.mxu0 0.0
    %742 = vmatpush.msra.mxu0 0.0
    %743 = vmatpush.msra.mxu0 0.0
    %744 = vmatpush.msra.mxu0 0.0
    %745 = vmatpush.msra.mxu0 0.0
    %746 = vmatpush.msra.mxu0 0.0
    %747 = vmatpush.msra.mxu0 0.0
    %748 = vmatpush.msra.mxu0 0.0
    %749 = vmatpush.msra.mxu0 %v729
    %750 = vmatmul.f32.gmra.mxu0 %v732
    %v751 = vpop.f32.mrf.mxu0
    %v752 = vadd.f32 0.0, %v751
    %753 = vdwg.mxu0
    %v754 = vrcp.pop %v524
    %v755 = vmul.f32 %v524, %v754
    %v756 = vsub.f32 1.0, %v755
    %v757 = vmul.f32 %v754, %v756
    %v758 = vadd.f32 %v754, %v757
    %vm759 = vweird.f32 %v524
    %vm760 = vweird.f32 %v754
    %vm761 = vmor %vm759, %vm760
    %v762 = vsel %vm761, %v754, %v758
    %v763 = vand.u32 2147483647, %v524
    %vm764 = vcmp.eq.f32.partialorder %v763, 8.507059e+37
    %v765 = vand.u32 %v524, 2147483648
    %v766 = vor.u32 1.1754944e-38, %v765
    %v767 = vsel %vm764, %v766, %v762
    %v768 = vrcp.pop %v527
    %v769 = vmul.f32 %v527, %v768
    %v770 = vsub.f32 1.0, %v769
    %v771 = vmul.f32 %v768, %v770
    %v772 = vadd.f32 %v768, %v771
    %vm773 = vweird.f32 %v527
    %vm774 = vweird.f32 %v768
    %vm775 = vmor %vm773, %vm774
    %v776 = vsel %vm775, %v768, %v772
    %v777 = vand.u32 2147483647, %v527
    %vm778 = vcmp.eq.f32.partialorder %v777, 8.507059e+37
    %v779 = vand.u32 %v527, 2147483648
    %v780 = vor.u32 1.1754944e-38, %v779
    %v781 = vsel %vm778, %v780, %v776
    %v782 = vrcp.pop %v530
    %v783 = vmul.f32 %v530, %v782
    %v784 = vsub.f32 1.0, %v783
    %v785 = vmul.f32 %v782, %v784
    %v786 = vadd.f32 %v782, %v785
    %vm787 = vweird.f32 %v530
    %vm788 = vweird.f32 %v782
    %vm789 = vmor %vm787, %vm788
    %v790 = vsel %vm789, %v782, %v786
    %v791 = vand.u32 2147483647, %v530
    %vm792 = vcmp.eq.f32.partialorder %v791, 8.507059e+37
    %v793 = vand.u32 %v530, 2147483648
    %v794 = vor.u32 1.1754944e-38, %v793
    %v795 = vsel %vm792, %v794, %v790
    %v796 = vrcp.pop %v533
    %v797 = vmul.f32 %v533, %v796
    %v798 = vsub.f32 1.0, %v797
    %v799 = vmul.f32 %v796, %v798
    %v800 = vadd.f32 %v796, %v799
    %vm801 = vweird.f32 %v533
    %vm802 = vweird.f32 %v796
    %vm803 = vmor %vm801, %vm802
    %v804 = vsel %vm803, %v796, %v800
    %v805 = vand.u32 2147483647, %v533
    %vm806 = vcmp.eq.f32.partialorder %v805, 8.507059e+37
    %v807 = vand.u32 %v533, 2147483648
    %v808 = vor.u32 1.1754944e-38, %v807
    %v809 = vsel %vm806, %v808, %v804
    %v810 = vrcp.pop %v536
    %v811 = vmul.f32 %v536, %v810
    %v812 = vsub.f32 1.0, %v811
    %v813 = vmul.f32 %v810, %v812
    %v814 = vadd.f32 %v810, %v813
    %vm815 = vweird.f32 %v536
    %vm816 = vweird.f32 %v810
    %vm817 = vmor %vm815, %vm816
    %v818 = vsel %vm817, %v810, %v814
    %v819 = vand.u32 2147483647, %v536
    %vm820 = vcmp.eq.f32.partialorder %v819, 8.507059e+37
    %v821 = vand.u32 %v536, 2147483648
    %v822 = vor.u32 1.1754944e-38, %v821
    %v823 = vsel %vm820, %v822, %v818
    %v824 = vrcp.pop %v539
    %v825 = vmul.f32 %v539, %v824
    %v826 = vsub.f32 1.0, %v825
    %v827 = vmul.f32 %v824, %v826
    %v828 = vadd.f32 %v824, %v827
    %vm829 = vweird.f32 %v539
    %vm830 = vweird.f32 %v824
    %vm831 = vmor %vm829, %vm830
    %v832 = vsel %vm831, %v824, %v828
    %v833 = vand.u32 2147483647, %v539
    %vm834 = vcmp.eq.f32.partialorder %v833, 8.507059e+37
    %v835 = vand.u32 %v539, 2147483648
    %v836 = vor.u32 1.1754944e-38, %v835
    %v837 = vsel %vm834, %v836, %v832
    %v838 = vrcp.pop %v542
    %v839 = vmul.f32 %v542, %v838
    %v840 = vsub.f32 1.0, %v839
    %v841 = vmul.f32 %v838, %v840
    %v842 = vadd.f32 %v838, %v841
    %vm843 = vweird.f32 %v542
    %vm844 = vweird.f32 %v838
    %vm845 = vmor %vm843, %vm844
    %v846 = vsel %vm845, %v838, %v842
    %v847 = vand.u32 2147483647, %v542
    %vm848 = vcmp.eq.f32.partialorder %v847, 8.507059e+37
    %v849 = vand.u32 %v542, 2147483648
    %v850 = vor.u32 1.1754944e-38, %v849
    %v851 = vsel %vm848, %v850, %v846
    %v852 = vrcp.pop %v545
    %v853 = vmul.f32 %v545, %v852
    %v854 = vsub.f32 1.0, %v853
    %v855 = vmul.f32 %v852, %v854
    %v856 = vadd.f32 %v852, %v855
    %vm857 = vweird.f32 %v545
    %vm858 = vweird.f32 %v852
    %vm859 = vmor %vm857, %vm858
    %v860 = vsel %vm859, %v852, %v856
    %v861 = vand.u32 2147483647, %v545
    %vm862 = vcmp.eq.f32.partialorder %v861, 8.507059e+37
    %v863 = vand.u32 %v545, 2147483648
    %v864 = vor.u32 1.1754944e-38, %v863
    %v865 = vsel %vm862, %v864, %v860
    %v866 = vmul.f32 %v570, %v767
    %v867 = vmul.f32 %v596, %v781
    %v868 = vmul.f32 %v622, %v795
    %v869 = vmul.f32 %v648, %v809
    %v870 = vmul.f32 %v674, %v823
    %v871 = vmul.f32 %v700, %v837
    %v872 = vmul.f32 %v726, %v851
    %v873 = vmul.f32 %v752, %v865
    %v874 = vsel %vm264, %v866, 0.0
    %v875 = vrot.slane %v874, 4
    %v876 = vadd.f32 %v874, %v875
    %v877 = vrot.slane %v876, 2
    %v878 = vadd.f32 %v876, %v877
    %v879 = vrot.slane %v878, 1
    %v880 = vadd.f32 %v878, %v879
    %v881 = vsel %vm264, %v867, 0.0
    %v882 = vrot.slane %v881, 4
    %v883 = vadd.f32 %v881, %v882
    %v884 = vrot.slane %v883, 2
    %v885 = vadd.f32 %v883, %v884
    %v886 = vrot.slane %v885, 1
    %v887 = vadd.f32 %v885, %v886
    %v888 = vsel %vm264, %v868, 0.0
    %v889 = vrot.slane %v888, 4
    %v890 = vadd.f32 %v888, %v889
    %v891 = vrot.slane %v890, 2
    %v892 = vadd.f32 %v890, %v891
    %v893 = vrot.slane %v892, 1
    %v894 = vadd.f32 %v892, %v893
    %v895 = vsel %vm264, %v869, 0.0
    %v896 = vrot.slane %v895, 4
    %v897 = vadd.f32 %v895, %v896
    %v898 = vrot.slane %v897, 2
    %v899 = vadd.f32 %v897, %v898
    %v900 = vrot.slane %v899, 1
    %v901 = vadd.f32 %v899, %v900
    %v902 = vsel %vm264, %v870, 0.0
    %v903 = vrot.slane %v902, 4
    %v904 = vadd.f32 %v902, %v903
    %v905 = vrot.slane %v904, 2
    %v906 = vadd.f32 %v904, %v905
    %v907 = vrot.slane %v906, 1
    %v908 = vadd.f32 %v906, %v907
    %v909 = vsel %vm264, %v871, 0.0
    %v910 = vrot.slane %v909, 4
    %v911 = vadd.f32 %v909, %v910
    %v912 = vrot.slane %v911, 2
    %v913 = vadd.f32 %v911, %v912
    %v914 = vrot.slane %v913, 1
    %v915 = vadd.f32 %v913, %v914
    %v916 = vsel %vm264, %v872, 0.0
    %v917 = vrot.slane %v916, 4
    %v918 = vadd.f32 %v916, %v917
    %v919 = vrot.slane %v918, 2
    %v920 = vadd.f32 %v918, %v919
    %v921 = vrot.slane %v920, 1
    %v922 = vadd.f32 %v920, %v921
    %v923 = vsel %vm264, %v873, 0.0
    %v924 = vrot.slane %v923, 4
    %v925 = vadd.f32 %v923, %v924
    %v926 = vrot.slane %v925, 2
    %v927 = vadd.f32 %v925, %v926
    %v928 = vrot.slane %v927, 1
    %v929 = vadd.f32 %v927, %v928
    %930 = vrot.lane.b32.xlu0 %v172, 124
    %v931 = vpop.permute.xlu0 %930
    %932 = vrot.lane.b32.xlu0 %v241, 124
    %v933 = vpop.permute.xlu0 %932
    %v934 = vsel %vm264, %v931, 0
    %v936 = vsel %vm264, %v933, 0
    %938 = vmatpush.xpose.msra.mxu0 0.0
    %939 = vmatpush.xpose.msra.mxu0 0.0
    %940 = vmatpush.xpose.msra.mxu0 0.0
    %941 = vmatpush.xpose.msra.mxu0 0.0
    %942 = vmatpush.xpose.msra.mxu0 0.0
    %943 = vmatpush.xpose.msra.mxu0 0.0
    %944 = vmatpush.xpose.msra.mxu0 0.0
    %945 = vmatpush.xpose.msra.mxu0 0.0
    %946 = vmatpush.xpose.msra.mxu0 0.0
    %947 = vmatpush.xpose.msra.mxu0 0.0
    %948 = vmatpush.xpose.msra.mxu0 0.0
    %949 = vmatpush.xpose.msra.mxu0 0.0
    %950 = vmatpush.xpose.msra.mxu0 0.0
    %951 = vmatpush.xpose.msra.mxu0 0.0
    %952 = vmatpush.xpose.msra.mxu0 0.0
    %953 = vmatpush.xpose.msra.mxu0 %v936
    %954 = vmatmul.f32.gmra.mxu0 %v934
    %v955 = vpop.f32.mrf.mxu0
    %v956 = vadd.f32 0.0, %v955
    %957 = vdwg.mxu0
    %958 = vrot.lane.b32.xlu0 %v175, 124
    %v959 = vpop.permute.xlu0 %958
    %960 = vrot.lane.b32.xlu0 %v244, 124
    %v961 = vpop.permute.xlu0 %960
    %v962 = vsel %vm264, %v959, 0
    %v964 = vsel %vm264, %v961, 0
    %966 = vmatpush.xpose.msra.mxu0 0.0
    %967 = vmatpush.xpose.msra.mxu0 0.0
    %968 = vmatpush.xpose.msra.mxu0 0.0
    %969 = vmatpush.xpose.msra.mxu0 0.0
    %970 = vmatpush.xpose.msra.mxu0 0.0
    %971 = vmatpush.xpose.msra.mxu0 0.0
    %972 = vmatpush.xpose.msra.mxu0 0.0
    %973 = vmatpush.xpose.msra.mxu0 0.0
    %974 = vmatpush.xpose.msra.mxu0 0.0
    %975 = vmatpush.xpose.msra.mxu0 0.0
    %976 = vmatpush.xpose.msra.mxu0 0.0
    %977 = vmatpush.xpose.msra.mxu0 0.0
    %978 = vmatpush.xpose.msra.mxu0 0.0
    %979 = vmatpush.xpose.msra.mxu0 0.0
    %980 = vmatpush.xpose.msra.mxu0 0.0
    %981 = vmatpush.xpose.msra.mxu0 %v964
    %982 = vmatmul.f32.gmra.mxu0 %v962
    %v983 = vpop.f32.mrf.mxu0
    %v984 = vadd.f32 0.0, %v983
    %985 = vdwg.mxu0
    %986 = vrot.lane.b32.xlu0 %v178, 124
    %v987 = vpop.permute.xlu0 %986
    %988 = vrot.lane.b32.xlu0 %v247, 124
    %v989 = vpop.permute.xlu0 %988
    %v990 = vsel %vm264, %v987, 0
    %v992 = vsel %vm264, %v989, 0
    %994 = vmatpush.xpose.msra.mxu0 0.0
    %995 = vmatpush.xpose.msra.mxu0 0.0
    %996 = vmatpush.xpose.msra.mxu0 0.0
    %997 = vmatpush.xpose.msra.mxu0 0.0
    %998 = vmatpush.xpose.msra.mxu0 0.0
    %999 = vmatpush.xpose.msra.mxu0 0.0
    %1000 = vmatpush.xpose.msra.mxu0 0.0
    %1001 = vmatpush.xpose.msra.mxu0 0.0
    %1002 = vmatpush.xpose.msra.mxu0 0.0
    %1003 = vmatpush.xpose.msra.mxu0 0.0
    %1004 = vmatpush.xpose.msra.mxu0 0.0
    %1005 = vmatpush.xpose.msra.mxu0 0.0
    %1006 = vmatpush.xpose.msra.mxu0 0.0
    %1007 = vmatpush.xpose.msra.mxu0 0.0
    %1008 = vmatpush.xpose.msra.mxu0 0.0
    %1009 = vmatpush.xpose.msra.mxu0 %v992
    %1010 = vmatmul.f32.gmra.mxu0 %v990
    %v1011 = vpop.f32.mrf.mxu0
    %v1012 = vadd.f32 0.0, %v1011
    %1013 = vdwg.mxu0
    %1014 = vrot.lane.b32.xlu0 %v181, 124
    %v1015 = vpop.permute.xlu0 %1014
    %1016 = vrot.lane.b32.xlu0 %v250, 124
    %v1017 = vpop.permute.xlu0 %1016
    %v1018 = vsel %vm264, %v1015, 0
    %v1020 = vsel %vm264, %v1017, 0
    %1022 = vmatpush.xpose.msra.mxu0 0.0
    %1023 = vmatpush.xpose.msra.mxu0 0.0
    %1024 = vmatpush.xpose.msra.mxu0 0.0
    %1025 = vmatpush.xpose.msra.mxu0 0.0
    %1026 = vmatpush.xpose.msra.mxu0 0.0
    %1027 = vmatpush.xpose.msra.mxu0 0.0
    %1028 = vmatpush.xpose.msra.mxu0 0.0
    %1029 = vmatpush.xpose.msra.mxu0 0.0
    %1030 = vmatpush.xpose.msra.mxu0 0.0
    %1031 = vmatpush.xpose.msra.mxu0 0.0
    %1032 = vmatpush.xpose.msra.mxu0 0.0
    %1033 = vmatpush.xpose.msra.mxu0 0.0
    %1034 = vmatpush.xpose.msra.mxu0 0.0
    %1035 = vmatpush.xpose.msra.mxu0 0.0
    %1036 = vmatpush.xpose.msra.mxu0 0.0
    %1037 = vmatpush.xpose.msra.mxu0 %v1020
    %1038 = vmatmul.f32.gmra.mxu0 %v1018
    %v1039 = vpop.f32.mrf.mxu0
    %v1040 = vadd.f32 0.0, %v1039
    %1041 = vdwg.mxu0
    %1042 = vrot.lane.b32.xlu0 %v184, 124
    %v1043 = vpop.permute.xlu0 %1042
    %1044 = vrot.lane.b32.xlu0 %v253, 124
    %v1045 = vpop.permute.xlu0 %1044
    %v1046 = vsel %vm264, %v1043, 0
    %v1048 = vsel %vm264, %v1045, 0
    %1050 = vmatpush.xpose.msra.mxu0 0.0
    %1051 = vmatpush.xpose.msra.mxu0 0.0
    %1052 = vmatpush.xpose.msra.mxu0 0.0
    %1053 = vmatpush.xpose.msra.mxu0 0.0
    %1054 = vmatpush.xpose.msra.mxu0 0.0
    %1055 = vmatpush.xpose.msra.mxu0 0.0
    %1056 = vmatpush.xpose.msra.mxu0 0.0
    %1057 = vmatpush.xpose.msra.mxu0 0.0
    %1058 = vmatpush.xpose.msra.mxu0 0.0
    %1059 = vmatpush.xpose.msra.mxu0 0.0
    %1060 = vmatpush.xpose.msra.mxu0 0.0
    %1061 = vmatpush.xpose.msra.mxu0 0.0
    %1062 = vmatpush.xpose.msra.mxu0 0.0
    %1063 = vmatpush.xpose.msra.mxu0 0.0
    %1064 = vmatpush.xpose.msra.mxu0 0.0
    %1065 = vmatpush.xpose.msra.mxu0 %v1048
    %1066 = vmatmul.f32.gmra.mxu0 %v1046
    %v1067 = vpop.f32.mrf.mxu0
    %v1068 = vadd.f32 0.0, %v1067
    %1069 = vdwg.mxu0
    %1070 = vrot.lane.b32.xlu0 %v187, 124
    %v1071 = vpop.permute.xlu0 %1070
    %1072 = vrot.lane.b32.xlu0 %v256, 124
    %v1073 = vpop.permute.xlu0 %1072
    %v1074 = vsel %vm264, %v1071, 0
    %v1076 = vsel %vm264, %v1073, 0
    %1078 = vmatpush.xpose.msra.mxu0 0.0
    %1079 = vmatpush.xpose.msra.mxu0 0.0
    %1080 = vmatpush.xpose.msra.mxu0 0.0
    %1081 = vmatpush.xpose.msra.mxu0 0.0
    %1082 = vmatpush.xpose.msra.mxu0 0.0
    %1083 = vmatpush.xpose.msra.mxu0 0.0
    %1084 = vmatpush.xpose.msra.mxu0 0.0
    %1085 = vmatpush.xpose.msra.mxu0 0.0
    %1086 = vmatpush.xpose.msra.mxu0 0.0
    %1087 = vmatpush.xpose.msra.mxu0 0.0
    %1088 = vmatpush.xpose.msra.mxu0 0.0
    %1089 = vmatpush.xpose.msra.mxu0 0.0
    %1090 = vmatpush.xpose.msra.mxu0 0.0
    %1091 = vmatpush.xpose.msra.mxu0 0.0
    %1092 = vmatpush.xpose.msra.mxu0 0.0
    %1093 = vmatpush.xpose.msra.mxu0 %v1076
    %1094 = vmatmul.f32.gmra.mxu0 %v1074
    %v1095 = vpop.f32.mrf.mxu0
    %v1096 = vadd.f32 0.0, %v1095
    %1097 = vdwg.mxu0
    %1098 = vrot.lane.b32.xlu0 %v190, 124
    %v1099 = vpop.permute.xlu0 %1098
    %1100 = vrot.lane.b32.xlu0 %v259, 124
    %v1101 = vpop.permute.xlu0 %1100
    %v1102 = vsel %vm264, %v1099, 0
    %v1104 = vsel %vm264, %v1101, 0
    %1106 = vmatpush.xpose.msra.mxu0 0.0
    %1107 = vmatpush.xpose.msra.mxu0 0.0
    %1108 = vmatpush.xpose.msra.mxu0 0.0
    %1109 = vmatpush.xpose.msra.mxu0 0.0
    %1110 = vmatpush.xpose.msra.mxu0 0.0
    %1111 = vmatpush.xpose.msra.mxu0 0.0
    %1112 = vmatpush.xpose.msra.mxu0 0.0
    %1113 = vmatpush.xpose.msra.mxu0 0.0
    %1114 = vmatpush.xpose.msra.mxu0 0.0
    %1115 = vmatpush.xpose.msra.mxu0 0.0
    %1116 = vmatpush.xpose.msra.mxu0 0.0
    %1117 = vmatpush.xpose.msra.mxu0 0.0
    %1118 = vmatpush.xpose.msra.mxu0 0.0
    %1119 = vmatpush.xpose.msra.mxu0 0.0
    %1120 = vmatpush.xpose.msra.mxu0 0.0
    %1121 = vmatpush.xpose.msra.mxu0 %v1104
    %1122 = vmatmul.f32.gmra.mxu0 %v1102
    %v1123 = vpop.f32.mrf.mxu0
    %v1124 = vadd.f32 0.0, %v1123
    %1125 = vdwg.mxu0
    %1126 = vrot.lane.b32.xlu0 %v193, 124
    %v1127 = vpop.permute.xlu0 %1126
    %1128 = vrot.lane.b32.xlu0 %v262, 124
    %v1129 = vpop.permute.xlu0 %1128
    %v1130 = vsel %vm264, %v1127, 0
    %v1132 = vsel %vm264, %v1129, 0
    %1134 = vmatpush.xpose.msra.mxu0 0.0
    %1135 = vmatpush.xpose.msra.mxu0 0.0
    %1136 = vmatpush.xpose.msra.mxu0 0.0
    %1137 = vmatpush.xpose.msra.mxu0 0.0
    %1138 = vmatpush.xpose.msra.mxu0 0.0
    %1139 = vmatpush.xpose.msra.mxu0 0.0
    %1140 = vmatpush.xpose.msra.mxu0 0.0
    %1141 = vmatpush.xpose.msra.mxu0 0.0
    %1142 = vmatpush.xpose.msra.mxu0 0.0
    %1143 = vmatpush.xpose.msra.mxu0 0.0
    %1144 = vmatpush.xpose.msra.mxu0 0.0
    %1145 = vmatpush.xpose.msra.mxu0 0.0
    %1146 = vmatpush.xpose.msra.mxu0 0.0
    %1147 = vmatpush.xpose.msra.mxu0 0.0
    %1148 = vmatpush.xpose.msra.mxu0 0.0
    %1149 = vmatpush.xpose.msra.mxu0 %v1132
    %1150 = vmatmul.f32.gmra.mxu0 %v1130
    %v1151 = vpop.f32.mrf.mxu0
    %v1152 = vadd.f32 0.0, %v1151
    %1153 = vdwg.mxu0
    %v1154 = vsel %vm473, %v956, -inf
    %1155 = vmax.xlane.f32.xlu0 %v1154
    %v1156 = vpop.xlane.xlu0 %1155
    %v1157 = vsel %vm473, %v984, -inf
    %1158 = vmax.xlane.f32.xlu0 %v1157
    %v1159 = vpop.xlane.xlu0 %1158
    %v1160 = vsel %vm473, %v1012, -inf
    %1161 = vmax.xlane.f32.xlu0 %v1160
    %v1162 = vpop.xlane.xlu0 %1161
    %v1163 = vsel %vm473, %v1040, -inf
    %1164 = vmax.xlane.f32.xlu0 %v1163
    %v1165 = vpop.xlane.xlu0 %1164
    %v1166 = vsel %vm473, %v1068, -inf
    %1167 = vmax.xlane.f32.xlu0 %v1166
    %v1168 = vpop.xlane.xlu0 %1167
    %v1169 = vsel %vm473, %v1096, -inf
    %1170 = vmax.xlane.f32.xlu0 %v1169
    %v1171 = vpop.xlane.xlu0 %1170
    %v1172 = vsel %vm473, %v1124, -inf
    %1173 = vmax.xlane.f32.xlu0 %v1172
    %v1174 = vpop.xlane.xlu0 %1173
    %v1175 = vsel %vm473, %v1152, -inf
    %1176 = vmax.xlane.f32.xlu0 %v1175
    %v1177 = vpop.xlane.xlu0 %1176
    %v1178 = vsub.f32 %v956, %v1156
    %v1179 = vsub.f32 %v984, %v1159
    %v1180 = vsub.f32 %v1012, %v1162
    %v1181 = vsub.f32 %v1040, %v1165
    %v1182 = vsub.f32 %v1068, %v1168
    %v1183 = vsub.f32 %v1096, %v1171
    %v1184 = vsub.f32 %v1124, %v1174
    %v1185 = vsub.f32 %v1152, %v1177
    %v1186 = vmul.f32 %v1178, 1.442695
    %v1187 = vpow.pop %v1186
    %v1188 = vmul.f32 %v1179, 1.442695
    %v1189 = vpow.pop %v1188
    %v1190 = vmul.f32 %v1180, 1.442695
    %v1191 = vpow.pop %v1190
    %v1192 = vmul.f32 %v1181, 1.442695
    %v1193 = vpow.pop %v1192
    %v1194 = vmul.f32 %v1182, 1.442695
    %v1195 = vpow.pop %v1194
    %v1196 = vmul.f32 %v1183, 1.442695
    %v1197 = vpow.pop %v1196
    %v1198 = vmul.f32 %v1184, 1.442695
    %v1199 = vpow.pop %v1198
    %v1200 = vmul.f32 %v1185, 1.442695
    %v1201 = vpow.pop %v1200
    %v1202 = vsel %vm473, %v1187, 0.0
    %1203 = vadd.xlane.f32.xlu0 %v1202
    %v1204 = vpop.xlane.xlu0 %1203
    %v1205 = vsel %vm473, %v1189, 0.0
    %1206 = vadd.xlane.f32.xlu0 %v1205
    %v1207 = vpop.xlane.xlu0 %1206
    %v1208 = vsel %vm473, %v1191, 0.0
    %1209 = vadd.xlane.f32.xlu0 %v1208
    %v1210 = vpop.xlane.xlu0 %1209
    %v1211 = vsel %vm473, %v1193, 0.0
    %1212 = vadd.xlane.f32.xlu0 %v1211
    %v1213 = vpop.xlane.xlu0 %1212
    %v1214 = vsel %vm473, %v1195, 0.0
    %1215 = vadd.xlane.f32.xlu0 %v1214
    %v1216 = vpop.xlane.xlu0 %1215
    %v1217 = vsel %vm473, %v1197, 0.0
    %1218 = vadd.xlane.f32.xlu0 %v1217
    %v1219 = vpop.xlane.xlu0 %1218
    %v1220 = vsel %vm473, %v1199, 0.0
    %1221 = vadd.xlane.f32.xlu0 %v1220
    %v1222 = vpop.xlane.xlu0 %1221
    %v1223 = vsel %vm473, %v1201, 0.0
    %1224 = vadd.xlane.f32.xlu0 %v1223
    %v1225 = vpop.xlane.xlu0 %1224
    %1226 = vrot.lane.b32.xlu0 %v241, 92
    %v1227 = vpop.permute.xlu0 %1226
    %v1230 = vsel %vm473, %v1187, 0
    %1232 = vmatpush.msra.mxu0 0.0
    %1233 = vmatpush.msra.mxu0 0.0
    %1234 = vmatpush.msra.mxu0 0.0
    %1235 = vmatpush.msra.mxu0 0.0
    %1236 = vmatpush.msra.mxu0 0.0
    %1237 = vmatpush.msra.mxu0 0.0
    %1238 = vmatpush.msra.mxu0 0.0
    %1239 = vmatpush.msra.mxu0 0.0
    %1240 = vmatpush.msra.mxu0 0.0
    %1241 = vmatpush.msra.mxu0 0.0
    %1242 = vmatpush.msra.mxu0 0.0
    %1243 = vmatpush.msra.mxu0 0.0
    %1244 = vmatpush.msra.mxu0 0.0
    %1245 = vmatpush.msra.mxu0 0.0
    %1246 = vmatpush.msra.mxu0 0.0
    %1247 = vmatpush.msra.mxu0 %v1227
    %1248 = vmatmul.f32.gmra.mxu0 %v1230
    %v1249 = vpop.f32.mrf.mxu0
    %v1250 = vadd.f32 0.0, %v1249
    %1251 = vdwg.mxu0
    %1252 = vrot.lane.b32.xlu0 %v244, 92
    %v1253 = vpop.permute.xlu0 %1252
    %v1256 = vsel %vm473, %v1189, 0
    %1258 = vmatpush.msra.mxu0 0.0
    %1259 = vmatpush.msra.mxu0 0.0
    %1260 = vmatpush.msra.mxu0 0.0
    %1261 = vmatpush.msra.mxu0 0.0
    %1262 = vmatpush.msra.mxu0 0.0
    %1263 = vmatpush.msra.mxu0 0.0
    %1264 = vmatpush.msra.mxu0 0.0
    %1265 = vmatpush.msra.mxu0 0.0
    %1266 = vmatpush.msra.mxu0 0.0
    %1267 = vmatpush.msra.mxu0 0.0
    %1268 = vmatpush.msra.mxu0 0.0
    %1269 = vmatpush.msra.mxu0 0.0
    %1270 = vmatpush.msra.mxu0 0.0
    %1271 = vmatpush.msra.mxu0 0.0
    %1272 = vmatpush.msra.mxu0 0.0
    %1273 = vmatpush.msra.mxu0 %v1253
    %1274 = vmatmul.f32.gmra.mxu0 %v1256
    %v1275 = vpop.f32.mrf.mxu0
    %v1276 = vadd.f32 0.0, %v1275
    %1277 = vdwg.mxu0
    %1278 = vrot.lane.b32.xlu0 %v247, 92
    %v1279 = vpop.permute.xlu0 %1278
    %v1282 = vsel %vm473, %v1191, 0
    %1284 = vmatpush.msra.mxu0 0.0
    %1285 = vmatpush.msra.mxu0 0.0
    %1286 = vmatpush.msra.mxu0 0.0
    %1287 = vmatpush.msra.mxu0 0.0
    %1288 = vmatpush.msra.mxu0 0.0
    %1289 = vmatpush.msra.mxu0 0.0
    %1290 = vmatpush.msra.mxu0 0.0
    %1291 = vmatpush.msra.mxu0 0.0
    %1292 = vmatpush.msra.mxu0 0.0
    %1293 = vmatpush.msra.mxu0 0.0
    %1294 = vmatpush.msra.mxu0 0.0
    %1295 = vmatpush.msra.mxu0 0.0
    %1296 = vmatpush.msra.mxu0 0.0
    %1297 = vmatpush.msra.mxu0 0.0
    %1298 = vmatpush.msra.mxu0 0.0
    %1299 = vmatpush.msra.mxu0 %v1279
    %1300 = vmatmul.f32.gmra.mxu0 %v1282
    %v1301 = vpop.f32.mrf.mxu0
    %v1302 = vadd.f32 0.0, %v1301
    %1303 = vdwg.mxu0
    %1304 = vrot.lane.b32.xlu0 %v250, 92
    %v1305 = vpop.permute.xlu0 %1304
    %v1308 = vsel %vm473, %v1193, 0
    %1310 = vmatpush.msra.mxu0 0.0
    %1311 = vmatpush.msra.mxu0 0.0
    %1312 = vmatpush.msra.mxu0 0.0
    %1313 = vmatpush.msra.mxu0 0.0
    %1314 = vmatpush.msra.mxu0 0.0
    %1315 = vmatpush.msra.mxu0 0.0
    %1316 = vmatpush.msra.mxu0 0.0
    %1317 = vmatpush.msra.mxu0 0.0
    %1318 = vmatpush.msra.mxu0 0.0
    %1319 = vmatpush.msra.mxu0 0.0
    %1320 = vmatpush.msra.mxu0 0.0
    %1321 = vmatpush.msra.mxu0 0.0
    %1322 = vmatpush.msra.mxu0 0.0
    %1323 = vmatpush.msra.mxu0 0.0
    %1324 = vmatpush.msra.mxu0 0.0
    %1325 = vmatpush.msra.mxu0 %v1305
    %1326 = vmatmul.f32.gmra.mxu0 %v1308
    %v1327 = vpop.f32.mrf.mxu0
    %v1328 = vadd.f32 0.0, %v1327
    %1329 = vdwg.mxu0
    %1330 = vrot.lane.b32.xlu0 %v253, 92
    %v1331 = vpop.permute.xlu0 %1330
    %v1334 = vsel %vm473, %v1195, 0
    %1336 = vmatpush.msra.mxu0 0.0
    %1337 = vmatpush.msra.mxu0 0.0
    %1338 = vmatpush.msra.mxu0 0.0
    %1339 = vmatpush.msra.mxu0 0.0
    %1340 = vmatpush.msra.mxu0 0.0
    %1341 = vmatpush.msra.mxu0 0.0
    %1342 = vmatpush.msra.mxu0 0.0
    %1343 = vmatpush.msra.mxu0 0.0
    %1344 = vmatpush.msra.mxu0 0.0
    %1345 = vmatpush.msra.mxu0 0.0
    %1346 = vmatpush.msra.mxu0 0.0
    %1347 = vmatpush.msra.mxu0 0.0
    %1348 = vmatpush.msra.mxu0 0.0
    %1349 = vmatpush.msra.mxu0 0.0
    %1350 = vmatpush.msra.mxu0 0.0
    %1351 = vmatpush.msra.mxu0 %v1331
    %1352 = vmatmul.f32.gmra.mxu0 %v1334
    %v1353 = vpop.f32.mrf.mxu0
    %v1354 = vadd.f32 0.0, %v1353
    %1355 = vdwg.mxu0
    %1356 = vrot.lane.b32.xlu0 %v256, 92
    %v1357 = vpop.permute.xlu0 %1356
    %v1360 = vsel %vm473, %v1197, 0
    %1362 = vmatpush.msra.mxu0 0.0
    %1363 = vmatpush.msra.mxu0 0.0
    %1364 = vmatpush.msra.mxu0 0.0
    %1365 = vmatpush.msra.mxu0 0.0
    %1366 = vmatpush.msra.mxu0 0.0
    %1367 = vmatpush.msra.mxu0 0.0
    %1368 = vmatpush.msra.mxu0 0.0
    %1369 = vmatpush.msra.mxu0 0.0
    %1370 = vmatpush.msra.mxu0 0.0
    %1371 = vmatpush.msra.mxu0 0.0
    %1372 = vmatpush.msra.mxu0 0.0
    %1373 = vmatpush.msra.mxu0 0.0
    %1374 = vmatpush.msra.mxu0 0.0
    %1375 = vmatpush.msra.mxu0 0.0
    %1376 = vmatpush.msra.mxu0 0.0
    %1377 = vmatpush.msra.mxu0 %v1357
    %1378 = vmatmul.f32.gmra.mxu0 %v1360
    %v1379 = vpop.f32.mrf.mxu0
    %v1380 = vadd.f32 0.0, %v1379
    %1381 = vdwg.mxu0
    %1382 = vrot.lane.b32.xlu0 %v259, 92
    %v1383 = vpop.permute.xlu0 %1382
    %v1386 = vsel %vm473, %v1199, 0
    %1388 = vmatpush.msra.mxu0 0.0
    %1389 = vmatpush.msra.mxu0 0.0
    %1390 = vmatpush.msra.mxu0 0.0
    %1391 = vmatpush.msra.mxu0 0.0
    %1392 = vmatpush.msra.mxu0 0.0
    %1393 = vmatpush.msra.mxu0 0.0
    %1394 = vmatpush.msra.mxu0 0.0
    %1395 = vmatpush.msra.mxu0 0.0
    %1396 = vmatpush.msra.mxu0 0.0
    %1397 = vmatpush.msra.mxu0 0.0
    %1398 = vmatpush.msra.mxu0 0.0
    %1399 = vmatpush.msra.mxu0 0.0
    %1400 = vmatpush.msra.mxu0 0.0
    %1401 = vmatpush.msra.mxu0 0.0
    %1402 = vmatpush.msra.mxu0 0.0
    %1403 = vmatpush.msra.mxu0 %v1383
    %1404 = vmatmul.f32.gmra.mxu0 %v1386
    %v1405 = vpop.f32.mrf.mxu0
    %v1406 = vadd.f32 0.0, %v1405
    %1407 = vdwg.mxu0
    %1408 = vrot.lane.b32.xlu0 %v262, 92
    %v1409 = vpop.permute.xlu0 %1408
    %v1412 = vsel %vm473, %v1201, 0
    %1414 = vmatpush.msra.mxu0 0.0
    %1415 = vmatpush.msra.mxu0 0.0
    %1416 = vmatpush.msra.mxu0 0.0
    %1417 = vmatpush.msra.mxu0 0.0
    %1418 = vmatpush.msra.mxu0 0.0
    %1419 = vmatpush.msra.mxu0 0.0
    %1420 = vmatpush.msra.mxu0 0.0
    %1421 = vmatpush.msra.mxu0 0.0
    %1422 = vmatpush.msra.mxu0 0.0
    %1423 = vmatpush.msra.mxu0 0.0
    %1424 = vmatpush.msra.mxu0 0.0
    %1425 = vmatpush.msra.mxu0 0.0
    %1426 = vmatpush.msra.mxu0 0.0
    %1427 = vmatpush.msra.mxu0 0.0
    %1428 = vmatpush.msra.mxu0 0.0
    %1429 = vmatpush.msra.mxu0 %v1409
    %1430 = vmatmul.f32.gmra.mxu0 %v1412
    %v1431 = vpop.f32.mrf.mxu0
    %v1432 = vadd.f32 0.0, %v1431
    %1433 = vdwg.mxu0
    %v1434 = vrcp.pop %v1204
    %v1435 = vmul.f32 %v1204, %v1434
    %v1436 = vsub.f32 1.0, %v1435
    %v1437 = vmul.f32 %v1434, %v1436
    %v1438 = vadd.f32 %v1434, %v1437
    %vm1439 = vweird.f32 %v1204
    %vm1440 = vweird.f32 %v1434
    %vm1441 = vmor %vm1439, %vm1440
    %v1442 = vsel %vm1441, %v1434, %v1438
    %v1443 = vand.u32 2147483647, %v1204
    %vm1444 = vcmp.eq.f32.partialorder %v1443, 8.507059e+37
    %v1445 = vand.u32 %v1204, 2147483648
    %v1446 = vor.u32 1.1754944e-38, %v1445
    %v1447 = vsel %vm1444, %v1446, %v1442
    %v1448 = vrcp.pop %v1207
    %v1449 = vmul.f32 %v1207, %v1448
    %v1450 = vsub.f32 1.0, %v1449
    %v1451 = vmul.f32 %v1448, %v1450
    %v1452 = vadd.f32 %v1448, %v1451
    %vm1453 = vweird.f32 %v1207
    %vm1454 = vweird.f32 %v1448
    %vm1455 = vmor %vm1453, %vm1454
    %v1456 = vsel %vm1455, %v1448, %v1452
    %v1457 = vand.u32 2147483647, %v1207
    %vm1458 = vcmp.eq.f32.partialorder %v1457, 8.507059e+37
    %v1459 = vand.u32 %v1207, 2147483648
    %v1460 = vor.u32 1.1754944e-38, %v1459
    %v1461 = vsel %vm1458, %v1460, %v1456
    %v1462 = vrcp.pop %v1210
    %v1463 = vmul.f32 %v1210, %v1462
    %v1464 = vsub.f32 1.0, %v1463
    %v1465 = vmul.f32 %v1462, %v1464
    %v1466 = vadd.f32 %v1462, %v1465
    %vm1467 = vweird.f32 %v1210
    %vm1468 = vweird.f32 %v1462
    %vm1469 = vmor %vm1467, %vm1468
    %v1470 = vsel %vm1469, %v1462, %v1466
    %v1471 = vand.u32 2147483647, %v1210
    %vm1472 = vcmp.eq.f32.partialorder %v1471, 8.507059e+37
    %v1473 = vand.u32 %v1210, 2147483648
    %v1474 = vor.u32 1.1754944e-38, %v1473
    %v1475 = vsel %vm1472, %v1474, %v1470
    %v1476 = vrcp.pop %v1213
    %v1477 = vmul.f32 %v1213, %v1476
    %v1478 = vsub.f32 1.0, %v1477
    %v1479 = vmul.f32 %v1476, %v1478
    %v1480 = vadd.f32 %v1476, %v1479
    %vm1481 = vweird.f32 %v1213
    %vm1482 = vweird.f32 %v1476
    %vm1483 = vmor %vm1481, %vm1482
    %v1484 = vsel %vm1483, %v1476, %v1480
    %v1485 = vand.u32 2147483647, %v1213
    %vm1486 = vcmp.eq.f32.partialorder %v1485, 8.507059e+37
    %v1487 = vand.u32 %v1213, 2147483648
    %v1488 = vor.u32 1.1754944e-38, %v1487
    %v1489 = vsel %vm1486, %v1488, %v1484
    %v1490 = vrcp.pop %v1216
    %v1491 = vmul.f32 %v1216, %v1490
    %v1492 = vsub.f32 1.0, %v1491
    %v1493 = vmul.f32 %v1490, %v1492
    %v1494 = vadd.f32 %v1490, %v1493
    %vm1495 = vweird.f32 %v1216
    %vm1496 = vweird.f32 %v1490
    %vm1497 = vmor %vm1495, %vm1496
    %v1498 = vsel %vm1497, %v1490, %v1494
    %v1499 = vand.u32 2147483647, %v1216
    %vm1500 = vcmp.eq.f32.partialorder %v1499, 8.507059e+37
    %v1501 = vand.u32 %v1216, 2147483648
    %v1502 = vor.u32 1.1754944e-38, %v1501
    %v1503 = vsel %vm1500, %v1502, %v1498
    %v1504 = vrcp.pop %v1219
    %v1505 = vmul.f32 %v1219, %v1504
    %v1506 = vsub.f32 1.0, %v1505
    %v1507 = vmul.f32 %v1504, %v1506
    %v1508 = vadd.f32 %v1504, %v1507
    %vm1509 = vweird.f32 %v1219
    %vm1510 = vweird.f32 %v1504
    %vm1511 = vmor %vm1509, %vm1510
    %v1512 = vsel %vm1511, %v1504, %v1508
    %v1513 = vand.u32 2147483647, %v1219
    %vm1514 = vcmp.eq.f32.partialorder %v1513, 8.507059e+37
    %v1515 = vand.u32 %v1219, 2147483648
    %v1516 = vor.u32 1.1754944e-38, %v1515
    %v1517 = vsel %vm1514, %v1516, %v1512
    %v1518 = vrcp.pop %v1222
    %v1519 = vmul.f32 %v1222, %v1518
    %v1520 = vsub.f32 1.0, %v1519
    %v1521 = vmul.f32 %v1518, %v1520
    %v1522 = vadd.f32 %v1518, %v1521
    %vm1523 = vweird.f32 %v1222
    %vm1524 = vweird.f32 %v1518
    %vm1525 = vmor %vm1523, %vm1524
    %v1526 = vsel %vm1525, %v1518, %v1522
    %v1527 = vand.u32 2147483647, %v1222
    %vm1528 = vcmp.eq.f32.partialorder %v1527, 8.507059e+37
    %v1529 = vand.u32 %v1222, 2147483648
    %v1530 = vor.u32 1.1754944e-38, %v1529
    %v1531 = vsel %vm1528, %v1530, %v1526
    %v1532 = vrcp.pop %v1225
    %v1533 = vmul.f32 %v1225, %v1532
    %v1534 = vsub.f32 1.0, %v1533
    %v1535 = vmul.f32 %v1532, %v1534
    %v1536 = vadd.f32 %v1532, %v1535
    %vm1537 = vweird.f32 %v1225
    %vm1538 = vweird.f32 %v1532
    %vm1539 = vmor %vm1537, %vm1538
    %v1540 = vsel %vm1539, %v1532, %v1536
    %v1541 = vand.u32 2147483647, %v1225
    %vm1542 = vcmp.eq.f32.partialorder %v1541, 8.507059e+37
    %v1543 = vand.u32 %v1225, 2147483648
    %v1544 = vor.u32 1.1754944e-38, %v1543
    %v1545 = vsel %vm1542, %v1544, %v1540
    %v1546 = vmul.f32 %v1250, %v1447
    %v1547 = vmul.f32 %v1276, %v1461
    %v1548 = vmul.f32 %v1302, %v1475
    %v1549 = vmul.f32 %v1328, %v1489
    %v1550 = vmul.f32 %v1354, %v1503
    %v1551 = vmul.f32 %v1380, %v1517
    %v1552 = vmul.f32 %v1406, %v1531
    %v1553 = vmul.f32 %v1432, %v1545
    %v1554 = vsel %vm264, %v1546, 0.0
    %v1555 = vrot.slane %v1554, 4
    %v1556 = vadd.f32 %v1554, %v1555
    %v1557 = vrot.slane %v1556, 2
    %v1558 = vadd.f32 %v1556, %v1557
    %v1559 = vrot.slane %v1558, 1
    %v1560 = vadd.f32 %v1558, %v1559
    %v1561 = vsel %vm264, %v1547, 0.0
    %v1562 = vrot.slane %v1561, 4
    %v1563 = vadd.f32 %v1561, %v1562
    %v1564 = vrot.slane %v1563, 2
    %v1565 = vadd.f32 %v1563, %v1564
    %v1566 = vrot.slane %v1565, 1
    %v1567 = vadd.f32 %v1565, %v1566
    %v1568 = vsel %vm264, %v1548, 0.0
    %v1569 = vrot.slane %v1568, 4
    %v1570 = vadd.f32 %v1568, %v1569
    %v1571 = vrot.slane %v1570, 2
    %v1572 = vadd.f32 %v1570, %v1571
    %v1573 = vrot.slane %v1572, 1
    %v1574 = vadd.f32 %v1572, %v1573
    %v1575 = vsel %vm264, %v1549, 0.0
    %v1576 = vrot.slane %v1575, 4
    %v1577 = vadd.f32 %v1575, %v1576
    %v1578 = vrot.slane %v1577, 2
    %v1579 = vadd.f32 %v1577, %v1578
    %v1580 = vrot.slane %v1579, 1
    %v1581 = vadd.f32 %v1579, %v1580
    %v1582 = vsel %vm264, %v1550, 0.0
    %v1583 = vrot.slane %v1582, 4
    %v1584 = vadd.f32 %v1582, %v1583
    %v1585 = vrot.slane %v1584, 2
    %v1586 = vadd.f32 %v1584, %v1585
    %v1587 = vrot.slane %v1586, 1
    %v1588 = vadd.f32 %v1586, %v1587
    %v1589 = vsel %vm264, %v1551, 0.0
    %v1590 = vrot.slane %v1589, 4
    %v1591 = vadd.f32 %v1589, %v1590
    %v1592 = vrot.slane %v1591, 2
    %v1593 = vadd.f32 %v1591, %v1592
    %v1594 = vrot.slane %v1593, 1
    %v1595 = vadd.f32 %v1593, %v1594
    %v1596 = vsel %vm264, %v1552, 0.0
    %v1597 = vrot.slane %v1596, 4
    %v1598 = vadd.f32 %v1596, %v1597
    %v1599 = vrot.slane %v1598, 2
    %v1600 = vadd.f32 %v1598, %v1599
    %v1601 = vrot.slane %v1600, 1
    %v1602 = vadd.f32 %v1600, %v1601
    %v1603 = vsel %vm264, %v1553, 0.0
    %v1604 = vrot.slane %v1603, 4
    %v1605 = vadd.f32 %v1603, %v1604
    %v1606 = vrot.slane %v1605, 2
    %v1607 = vadd.f32 %v1605, %v1606
    %v1608 = vrot.slane %v1607, 1
    %v1609 = vadd.f32 %v1607, %v1608
    %1610 = vrot.lane.b32.xlu0 %v172, 120
    %v1611 = vpop.permute.xlu0 %1610
    %1612 = vrot.lane.b32.xlu0 %v241, 120
    %v1613 = vpop.permute.xlu0 %1612
    %v1614 = vsel %vm264, %v1611, 0
    %v1616 = vsel %vm264, %v1613, 0
    %1618 = vmatpush.xpose.msra.mxu0 0.0
    %1619 = vmatpush.xpose.msra.mxu0 0.0
    %1620 = vmatpush.xpose.msra.mxu0 0.0
    %1621 = vmatpush.xpose.msra.mxu0 0.0
    %1622 = vmatpush.xpose.msra.mxu0 0.0
    %1623 = vmatpush.xpose.msra.mxu0 0.0
    %1624 = vmatpush.xpose.msra.mxu0 0.0
    %1625 = vmatpush.xpose.msra.mxu0 0.0
    %1626 = vmatpush.xpose.msra.mxu0 0.0
    %1627 = vmatpush.xpose.msra.mxu0 0.0
    %1628 = vmatpush.xpose.msra.mxu0 0.0
    %1629 = vmatpush.xpose.msra.mxu0 0.0
    %1630 = vmatpush.xpose.msra.mxu0 0.0
    %1631 = vmatpush.xpose.msra.mxu0 0.0
    %1632 = vmatpush.xpose.msra.mxu0 0.0
    %1633 = vmatpush.xpose.msra.mxu0 %v1616
    %1634 = vmatmul.f32.gmra.mxu0 %v1614
    %v1635 = vpop.f32.mrf.mxu0
    %v1636 = vadd.f32 0.0, %v1635
    %1637 = vdwg.mxu0
    %1638 = vrot.lane.b32.xlu0 %v175, 120
    %v1639 = vpop.permute.xlu0 %1638
    %1640 = vrot.lane.b32.xlu0 %v244, 120
    %v1641 = vpop.permute.xlu0 %1640
    %v1642 = vsel %vm264, %v1639, 0
    %v1644 = vsel %vm264, %v1641, 0
    %1646 = vmatpush.xpose.msra.mxu0 0.0
    %1647 = vmatpush.xpose.msra.mxu0 0.0
    %1648 = vmatpush.xpose.msra.mxu0 0.0
    %1649 = vmatpush.xpose.msra.mxu0 0.0
    %1650 = vmatpush.xpose.msra.mxu0 0.0
    %1651 = vmatpush.xpose.msra.mxu0 0.0
    %1652 = vmatpush.xpose.msra.mxu0 0.0
    %1653 = vmatpush.xpose.msra.mxu0 0.0
    %1654 = vmatpush.xpose.msra.mxu0 0.0
    %1655 = vmatpush.xpose.msra.mxu0 0.0
    %1656 = vmatpush.xpose.msra.mxu0 0.0
    %1657 = vmatpush.xpose.msra.mxu0 0.0
    %1658 = vmatpush.xpose.msra.mxu0 0.0
    %1659 = vmatpush.xpose.msra.mxu0 0.0
    %1660 = vmatpush.xpose.msra.mxu0 0.0
    %1661 = vmatpush.xpose.msra.mxu0 %v1644
    %1662 = vmatmul.f32.gmra.mxu0 %v1642
    %v1663 = vpop.f32.mrf.mxu0
    %v1664 = vadd.f32 0.0, %v1663
    %1665 = vdwg.mxu0
    %1666 = vrot.lane.b32.xlu0 %v178, 120
    %v1667 = vpop.permute.xlu0 %1666
    %1668 = vrot.lane.b32.xlu0 %v247, 120
    %v1669 = vpop.permute.xlu0 %1668
    %v1670 = vsel %vm264, %v1667, 0
    %v1672 = vsel %vm264, %v1669, 0
    %1674 = vmatpush.xpose.msra.mxu0 0.0
    %1675 = vmatpush.xpose.msra.mxu0 0.0
    %1676 = vmatpush.xpose.msra.mxu0 0.0
    %1677 = vmatpush.xpose.msra.mxu0 0.0
    %1678 = vmatpush.xpose.msra.mxu0 0.0
    %1679 = vmatpush.xpose.msra.mxu0 0.0
    %1680 = vmatpush.xpose.msra.mxu0 0.0
    %1681 = vmatpush.xpose.msra.mxu0 0.0
    %1682 = vmatpush.xpose.msra.mxu0 0.0
    %1683 = vmatpush.xpose.msra.mxu0 0.0
    %1684 = vmatpush.xpose.msra.mxu0 0.0
    %1685 = vmatpush.xpose.msra.mxu0 0.0
    %1686 = vmatpush.xpose.msra.mxu0 0.0
    %1687 = vmatpush.xpose.msra.mxu0 0.0
    %1688 = vmatpush.xpose.msra.mxu0 0.0
    %1689 = vmatpush.xpose.msra.mxu0 %v1672
    %1690 = vmatmul.f32.gmra.mxu0 %v1670
    %v1691 = vpop.f32.mrf.mxu0
    %v1692 = vadd.f32 0.0, %v1691
    %1693 = vdwg.mxu0
    %1694 = vrot.lane.b32.xlu0 %v181, 120
    %v1695 = vpop.permute.xlu0 %1694
    %1696 = vrot.lane.b32.xlu0 %v250, 120
    %v1697 = vpop.permute.xlu0 %1696
    %v1698 = vsel %vm264, %v1695, 0
    %v1700 = vsel %vm264, %v1697, 0
    %1702 = vmatpush.xpose.msra.mxu0 0.0
    %1703 = vmatpush.xpose.msra.mxu0 0.0
    %1704 = vmatpush.xpose.msra.mxu0 0.0
    %1705 = vmatpush.xpose.msra.mxu0 0.0
    %1706 = vmatpush.xpose.msra.mxu0 0.0
    %1707 = vmatpush.xpose.msra.mxu0 0.0
    %1708 = vmatpush.xpose.msra.mxu0 0.0
    %1709 = vmatpush.xpose.msra.mxu0 0.0
    %1710 = vmatpush.xpose.msra.mxu0 0.0
    %1711 = vmatpush.xpose.msra.mxu0 0.0
    %1712 = vmatpush.xpose.msra.mxu0 0.0
    %1713 = vmatpush.xpose.msra.mxu0 0.0
    %1714 = vmatpush.xpose.msra.mxu0 0.0
    %1715 = vmatpush.xpose.msra.mxu0 0.0
    %1716 = vmatpush.xpose.msra.mxu0 0.0
    %1717 = vmatpush.xpose.msra.mxu0 %v1700
    %1718 = vmatmul.f32.gmra.mxu0 %v1698
    %v1719 = vpop.f32.mrf.mxu0
    %v1720 = vadd.f32 0.0, %v1719
    %1721 = vdwg.mxu0
    %1722 = vrot.lane.b32.xlu0 %v184, 120
    %v1723 = vpop.permute.xlu0 %1722
    %1724 = vrot.lane.b32.xlu0 %v253, 120
    %v1725 = vpop.permute.xlu0 %1724
    %v1726 = vsel %vm264, %v1723, 0
    %v1728 = vsel %vm264, %v1725, 0
    %1730 = vmatpush.xpose.msra.mxu0 0.0
    %1731 = vmatpush.xpose.msra.mxu0 0.0
    %1732 = vmatpush.xpose.msra.mxu0 0.0
    %1733 = vmatpush.xpose.msra.mxu0 0.0
    %1734 = vmatpush.xpose.msra.mxu0 0.0
    %1735 = vmatpush.xpose.msra.mxu0 0.0
    %1736 = vmatpush.xpose.msra.mxu0 0.0
    %1737 = vmatpush.xpose.msra.mxu0 0.0
    %1738 = vmatpush.xpose.msra.mxu0 0.0
    %1739 = vmatpush.xpose.msra.mxu0 0.0
    %1740 = vmatpush.xpose.msra.mxu0 0.0
    %1741 = vmatpush.xpose.msra.mxu0 0.0
    %1742 = vmatpush.xpose.msra.mxu0 0.0
    %1743 = vmatpush.xpose.msra.mxu0 0.0
    %1744 = vmatpush.xpose.msra.mxu0 0.0
    %1745 = vmatpush.xpose.msra.mxu0 %v1728
    %1746 = vmatmul.f32.gmra.mxu0 %v1726
    %v1747 = vpop.f32.mrf.mxu0
    %v1748 = vadd.f32 0.0, %v1747
    %1749 = vdwg.mxu0
    %1750 = vrot.lane.b32.xlu0 %v187, 120
    %v1751 = vpop.permute.xlu0 %1750
    %1752 = vrot.lane.b32.xlu0 %v256, 120
    %v1753 = vpop.permute.xlu0 %1752
    %v1754 = vsel %vm264, %v1751, 0
    %v1756 = vsel %vm264, %v1753, 0
    %1758 = vmatpush.xpose.msra.mxu0 0.0
    %1759 = vmatpush.xpose.msra.mxu0 0.0
    %1760 = vmatpush.xpose.msra.mxu0 0.0
    %1761 = vmatpush.xpose.msra.mxu0 0.0
    %1762 = vmatpush.xpose.msra.mxu0 0.0
    %1763 = vmatpush.xpose.msra.mxu0 0.0
    %1764 = vmatpush.xpose.msra.mxu0 0.0
    %1765 = vmatpush.xpose.msra.mxu0 0.0
    %1766 = vmatpush.xpose.msra.mxu0 0.0
    %1767 = vmatpush.xpose.msra.mxu0 0.0
    %1768 = vmatpush.xpose.msra.mxu0 0.0
    %1769 = vmatpush.xpose.msra.mxu0 0.0
    %1770 = vmatpush.xpose.msra.mxu0 0.0
    %1771 = vmatpush.xpose.msra.mxu0 0.0
    %1772 = vmatpush.xpose.msra.mxu0 0.0
    %1773 = vmatpush.xpose.msra.mxu0 %v1756
    %1774 = vmatmul.f32.gmra.mxu0 %v1754
    %v1775 = vpop.f32.mrf.mxu0
    %v1776 = vadd.f32 0.0, %v1775
    %1777 = vdwg.mxu0
    %1778 = vrot.lane.b32.xlu0 %v190, 120
    %v1779 = vpop.permute.xlu0 %1778
    %1780 = vrot.lane.b32.xlu0 %v259, 120
    %v1781 = vpop.permute.xlu0 %1780
    %v1782 = vsel %vm264, %v1779, 0
    %v1784 = vsel %vm264, %v1781, 0
    %1786 = vmatpush.xpose.msra.mxu0 0.0
    %1787 = vmatpush.xpose.msra.mxu0 0.0
    %1788 = vmatpush.xpose.msra.mxu0 0.0
    %1789 = vmatpush.xpose.msra.mxu0 0.0
    %1790 = vmatpush.xpose.msra.mxu0 0.0
    %1791 = vmatpush.xpose.msra.mxu0 0.0
    %1792 = vmatpush.xpose.msra.mxu0 0.0
    %1793 = vmatpush.xpose.msra.mxu0 0.0
    %1794 = vmatpush.xpose.msra.mxu0 0.0
    %1795 = vmatpush.xpose.msra.mxu0 0.0
    %1796 = vmatpush.xpose.msra.mxu0 0.0
    %1797 = vmatpush.xpose.msra.mxu0 0.0
    %1798 = vmatpush.xpose.msra.mxu0 0.0
    %1799 = vmatpush.xpose.msra.mxu0 0.0
    %1800 = vmatpush.xpose.msra.mxu0 0.0
    %1801 = vmatpush.xpose.msra.mxu0 %v1784
    %1802 = vmatmul.f32.gmra.mxu0 %v1782
    %v1803 = vpop.f32.mrf.mxu0
    %v1804 = vadd.f32 0.0, %v1803
    %1805 = vdwg.mxu0
    %1806 = vrot.lane.b32.xlu0 %v193, 120
    %v1807 = vpop.permute.xlu0 %1806
    %1808 = vrot.lane.b32.xlu0 %v262, 120
    %v1809 = vpop.permute.xlu0 %1808
    %v1810 = vsel %vm264, %v1807, 0
    %v1812 = vsel %vm264, %v1809, 0
    %1814 = vmatpush.xpose.msra.mxu0 0.0
    %1815 = vmatpush.xpose.msra.mxu0 0.0
    %1816 = vmatpush.xpose.msra.mxu0 0.0
    %1817 = vmatpush.xpose.msra.mxu0 0.0
    %1818 = vmatpush.xpose.msra.mxu0 0.0
    %1819 = vmatpush.xpose.msra.mxu0 0.0
    %1820 = vmatpush.xpose.msra.mxu0 0.0
    %1821 = vmatpush.xpose.msra.mxu0 0.0
    %1822 = vmatpush.xpose.msra.mxu0 0.0
    %1823 = vmatpush.xpose.msra.mxu0 0.0
    %1824 = vmatpush.xpose.msra.mxu0 0.0
    %1825 = vmatpush.xpose.msra.mxu0 0.0
    %1826 = vmatpush.xpose.msra.mxu0 0.0
    %1827 = vmatpush.xpose.msra.mxu0 0.0
    %1828 = vmatpush.xpose.msra.mxu0 0.0
    %1829 = vmatpush.xpose.msra.mxu0 %v1812
    %1830 = vmatmul.f32.gmra.mxu0 %v1810
    %v1831 = vpop.f32.mrf.mxu0
    %v1832 = vadd.f32 0.0, %v1831
    %1833 = vdwg.mxu0
    %v1834 = vsel %vm473, %v1636, -inf
    %1835 = vmax.xlane.f32.xlu0 %v1834
    %v1836 = vpop.xlane.xlu0 %1835
    %v1837 = vsel %vm473, %v1664, -inf
    %1838 = vmax.xlane.f32.xlu0 %v1837
    %v1839 = vpop.xlane.xlu0 %1838
    %v1840 = vsel %vm473, %v1692, -inf
    %1841 = vmax.xlane.f32.xlu0 %v1840
    %v1842 = vpop.xlane.xlu0 %1841
    %v1843 = vsel %vm473, %v1720, -inf
    %1844 = vmax.xlane.f32.xlu0 %v1843
    %v1845 = vpop.xlane.xlu0 %1844
    %v1846 = vsel %vm473, %v1748, -inf
    %1847 = vmax.xlane.f32.xlu0 %v1846
    %v1848 = vpop.xlane.xlu0 %1847
    %v1849 = vsel %vm473, %v1776, -inf
    %1850 = vmax.xlane.f32.xlu0 %v1849
    %v1851 = vpop.xlane.xlu0 %1850
    %v1852 = vsel %vm473, %v1804, -inf
    %1853 = vmax.xlane.f32.xlu0 %v1852
    %v1854 = vpop.xlane.xlu0 %1853
    %v1855 = vsel %vm473, %v1832, -inf
    %1856 = vmax.xlane.f32.xlu0 %v1855
    %v1857 = vpop.xlane.xlu0 %1856
    %v1858 = vsub.f32 %v1636, %v1836
    %v1859 = vsub.f32 %v1664, %v1839
    %v1860 = vsub.f32 %v1692, %v1842
    %v1861 = vsub.f32 %v1720, %v1845
    %v1862 = vsub.f32 %v1748, %v1848
    %v1863 = vsub.f32 %v1776, %v1851
    %v1864 = vsub.f32 %v1804, %v1854
    %v1865 = vsub.f32 %v1832, %v1857
    %v1866 = vmul.f32 %v1858, 1.442695
    %v1867 = vpow.pop %v1866
    %v1868 = vmul.f32 %v1859, 1.442695
    %v1869 = vpow.pop %v1868
    %v1870 = vmul.f32 %v1860, 1.442695
    %v1871 = vpow.pop %v1870
    %v1872 = vmul.f32 %v1861, 1.442695
    %v1873 = vpow.pop %v1872
    %v1874 = vmul.f32 %v1862, 1.442695
    %v1875 = vpow.pop %v1874
    %v1876 = vmul.f32 %v1863, 1.442695
    %v1877 = vpow.pop %v1876
    %v1878 = vmul.f32 %v1864, 1.442695
    %v1879 = vpow.pop %v1878
    %v1880 = vmul.f32 %v1865, 1.442695
    %v1881 = vpow.pop %v1880
    %v1882 = vsel %vm473, %v1867, 0.0
    %1883 = vadd.xlane.f32.xlu0 %v1882
    %v1884 = vpop.xlane.xlu0 %1883
    %v1885 = vsel %vm473, %v1869, 0.0
    %1886 = vadd.xlane.f32.xlu0 %v1885
    %v1887 = vpop.xlane.xlu0 %1886
    %v1888 = vsel %vm473, %v1871, 0.0
    %1889 = vadd.xlane.f32.xlu0 %v1888
    %v1890 = vpop.xlane.xlu0 %1889
    %v1891 = vsel %vm473, %v1873, 0.0
    %1892 = vadd.xlane.f32.xlu0 %v1891
    %v1893 = vpop.xlane.xlu0 %1892
    %v1894 = vsel %vm473, %v1875, 0.0
    %1895 = vadd.xlane.f32.xlu0 %v1894
    %v1896 = vpop.xlane.xlu0 %1895
    %v1897 = vsel %vm473, %v1877, 0.0
    %1898 = vadd.xlane.f32.xlu0 %v1897
    %v1899 = vpop.xlane.xlu0 %1898
    %v1900 = vsel %vm473, %v1879, 0.0
    %1901 = vadd.xlane.f32.xlu0 %v1900
    %v1902 = vpop.xlane.xlu0 %1901
    %v1903 = vsel %vm473, %v1881, 0.0
    %1904 = vadd.xlane.f32.xlu0 %v1903
    %v1905 = vpop.xlane.xlu0 %1904
    %1906 = vrot.lane.b32.xlu0 %v241, 88
    %v1907 = vpop.permute.xlu0 %1906
    %v1910 = vsel %vm473, %v1867, 0
    %1912 = vmatpush.msra.mxu0 0.0
    %1913 = vmatpush.msra.mxu0 0.0
    %1914 = vmatpush.msra.mxu0 0.0
    %1915 = vmatpush.msra.mxu0 0.0
    %1916 = vmatpush.msra.mxu0 0.0
    %1917 = vmatpush.msra.mxu0 0.0
    %1918 = vmatpush.msra.mxu0 0.0
    %1919 = vmatpush.msra.mxu0 0.0
    %1920 = vmatpush.msra.mxu0 0.0
    %1921 = vmatpush.msra.mxu0 0.0
    %1922 = vmatpush.msra.mxu0 0.0
    %1923 = vmatpush.msra.mxu0 0.0
    %1924 = vmatpush.msra.mxu0 0.0
    %1925 = vmatpush.msra.mxu0 0.0
    %1926 = vmatpush.msra.mxu0 0.0
    %1927 = vmatpush.msra.mxu0 %v1907
    %1928 = vmatmul.f32.gmra.mxu0 %v1910
    %v1929 = vpop.f32.mrf.mxu0
    %v1930 = vadd.f32 0.0, %v1929
    %1931 = vdwg.mxu0
    %1932 = vrot.lane.b32.xlu0 %v244, 88
    %v1933 = vpop.permute.xlu0 %1932
    %v1936 = vsel %vm473, %v1869, 0
    %1938 = vmatpush.msra.mxu0 0.0
    %1939 = vmatpush.msra.mxu0 0.0
    %1940 = vmatpush.msra.mxu0 0.0
    %1941 = vmatpush.msra.mxu0 0.0
    %1942 = vmatpush.msra.mxu0 0.0
    %1943 = vmatpush.msra.mxu0 0.0
    %1944 = vmatpush.msra.mxu0 0.0
    %1945 = vmatpush.msra.mxu0 0.0
    %1946 = vmatpush.msra.mxu0 0.0
    %1947 = vmatpush.msra.mxu0 0.0
    %1948 = vmatpush.msra.mxu0 0.0
    %1949 = vmatpush.msra.mxu0 0.0
    %1950 = vmatpush.msra.mxu0 0.0
    %1951 = vmatpush.msra.mxu0 0.0
    %1952 = vmatpush.msra.mxu0 0.0
    %1953 = vmatpush.msra.mxu0 %v1933
    %1954 = vmatmul.f32.gmra.mxu0 %v1936
    %v1955 = vpop.f32.mrf.mxu0
    %v1956 = vadd.f32 0.0, %v1955
    %1957 = vdwg.mxu0
    %1958 = vrot.lane.b32.xlu0 %v247, 88
    %v1959 = vpop.permute.xlu0 %1958
    %v1962 = vsel %vm473, %v1871, 0
    %1964 = vmatpush.msra.mxu0 0.0
    %1965 = vmatpush.msra.mxu0 0.0
    %1966 = vmatpush.msra.mxu0 0.0
    %1967 = vmatpush.msra.mxu0 0.0
    %1968 = vmatpush.msra.mxu0 0.0
    %1969 = vmatpush.msra.mxu0 0.0
    %1970 = vmatpush.msra.mxu0 0.0
    %1971 = vmatpush.msra.mxu0 0.0
    %1972 = vmatpush.msra.mxu0 0.0
    %1973 = vmatpush.msra.mxu0 0.0
    %1974 = vmatpush.msra.mxu0 0.0
    %1975 = vmatpush.msra.mxu0 0.0
    %1976 = vmatpush.msra.mxu0 0.0
    %1977 = vmatpush.msra.mxu0 0.0
    %1978 = vmatpush.msra.mxu0 0.0
    %1979 = vmatpush.msra.mxu0 %v1959
    %1980 = vmatmul.f32.gmra.mxu0 %v1962
    %v1981 = vpop.f32.mrf.mxu0
    %v1982 = vadd.f32 0.0, %v1981
    %1983 = vdwg.mxu0
    %1984 = vrot.lane.b32.xlu0 %v250, 88
    %v1985 = vpop.permute.xlu0 %1984
    %v1988 = vsel %vm473, %v1873, 0
    %1990 = vmatpush.msra.mxu0 0.0
    %1991 = vmatpush.msra.mxu0 0.0
    %1992 = vmatpush.msra.mxu0 0.0
    %1993 = vmatpush.msra.mxu0 0.0
    %1994 = vmatpush.msra.mxu0 0.0
    %1995 = vmatpush.msra.mxu0 0.0
    %1996 = vmatpush.msra.mxu0 0.0
    %1997 = vmatpush.msra.mxu0 0.0
    %1998 = vmatpush.msra.mxu0 0.0
    %1999 = vmatpush.msra.mxu0 0.0
    %2000 = vmatpush.msra.mxu0 0.0
    %2001 = vmatpush.msra.mxu0 0.0
    %2002 = vmatpush.msra.mxu0 0.0
    %2003 = vmatpush.msra.mxu0 0.0
    %2004 = vmatpush.msra.mxu0 0.0
    %2005 = vmatpush.msra.mxu0 %v1985
    %2006 = vmatmul.f32.gmra.mxu0 %v1988
    %v2007 = vpop.f32.mrf.mxu0
    %v2008 = vadd.f32 0.0, %v2007
    %2009 = vdwg.mxu0
    %2010 = vrot.lane.b32.xlu0 %v253, 88
    %v2011 = vpop.permute.xlu0 %2010
    %v2014 = vsel %vm473, %v1875, 0
    %2016 = vmatpush.msra.mxu0 0.0
    %2017 = vmatpush.msra.mxu0 0.0
    %2018 = vmatpush.msra.mxu0 0.0
    %2019 = vmatpush.msra.mxu0 0.0
    %2020 = vmatpush.msra.mxu0 0.0
    %2021 = vmatpush.msra.mxu0 0.0
    %2022 = vmatpush.msra.mxu0 0.0
    %2023 = vmatpush.msra.mxu0 0.0
    %2024 = vmatpush.msra.mxu0 0.0
    %2025 = vmatpush.msra.mxu0 0.0
    %2026 = vmatpush.msra.mxu0 0.0
    %2027 = vmatpush.msra.mxu0 0.0
    %2028 = vmatpush.msra.mxu0 0.0
    %2029 = vmatpush.msra.mxu0 0.0
    %2030 = vmatpush.msra.mxu0 0.0
    %2031 = vmatpush.msra.mxu0 %v2011
    %2032 = vmatmul.f32.gmra.mxu0 %v2014
    %v2033 = vpop.f32.mrf.mxu0
    %v2034 = vadd.f32 0.0, %v2033
    %2035 = vdwg.mxu0
    %2036 = vrot.lane.b32.xlu0 %v256, 88
    %v2037 = vpop.permute.xlu0 %2036
    %v2040 = vsel %vm473, %v1877, 0
    %2042 = vmatpush.msra.mxu0 0.0
    %2043 = vmatpush.msra.mxu0 0.0
    %2044 = vmatpush.msra.mxu0 0.0
    %2045 = vmatpush.msra.mxu0 0.0
    %2046 = vmatpush.msra.mxu0 0.0
    %2047 = vmatpush.msra.mxu0 0.0
    %2048 = vmatpush.msra.mxu0 0.0
    %2049 = vmatpush.msra.mxu0 0.0
    %2050 = vmatpush.msra.mxu0 0.0
    %2051 = vmatpush.msra.mxu0 0.0
    %2052 = vmatpush.msra.mxu0 0.0
    %2053 = vmatpush.msra.mxu0 0.0
    %2054 = vmatpush.msra.mxu0 0.0
    %2055 = vmatpush.msra.mxu0 0.0
    %2056 = vmatpush.msra.mxu0 0.0
    %2057 = vmatpush.msra.mxu0 %v2037
    %2058 = vmatmul.f32.gmra.mxu0 %v2040
    %v2059 = vpop.f32.mrf.mxu0
    %v2060 = vadd.f32 0.0, %v2059
    %2061 = vdwg.mxu0
    %2062 = vrot.lane.b32.xlu0 %v259, 88
    %v2063 = vpop.permute.xlu0 %2062
    %v2066 = vsel %vm473, %v1879, 0
    %2068 = vmatpush.msra.mxu0 0.0
    %2069 = vmatpush.msra.mxu0 0.0
    %2070 = vmatpush.msra.mxu0 0.0
    %2071 = vmatpush.msra.mxu0 0.0
    %2072 = vmatpush.msra.mxu0 0.0
    %2073 = vmatpush.msra.mxu0 0.0
    %2074 = vmatpush.msra.mxu0 0.0
    %2075 = vmatpush.msra.mxu0 0.0
    %2076 = vmatpush.msra.mxu0 0.0
    %2077 = vmatpush.msra.mxu0 0.0
    %2078 = vmatpush.msra.mxu0 0.0
    %2079 = vmatpush.msra.mxu0 0.0
    %2080 = vmatpush.msra.mxu0 0.0
    %2081 = vmatpush.msra.mxu0 0.0
    %2082 = vmatpush.msra.mxu0 0.0
    %2083 = vmatpush.msra.mxu0 %v2063
    %2084 = vmatmul.f32.gmra.mxu0 %v2066
    %v2085 = vpop.f32.mrf.mxu0
    %v2086 = vadd.f32 0.0, %v2085
    %2087 = vdwg.mxu0
    %2088 = vrot.lane.b32.xlu0 %v262, 88
    %v2089 = vpop.permute.xlu0 %2088
    %v2092 = vsel %vm473, %v1881, 0
    %2094 = vmatpush.msra.mxu0 0.0
    %2095 = vmatpush.msra.mxu0 0.0
    %2096 = vmatpush.msra.mxu0 0.0
    %2097 = vmatpush.msra.mxu0 0.0
    %2098 = vmatpush.msra.mxu0 0.0
    %2099 = vmatpush.msra.mxu0 0.0
    %2100 = vmatpush.msra.mxu0 0.0
    %2101 = vmatpush.msra.mxu0 0.0
    %2102 = vmatpush.msra.mxu0 0.0
    %2103 = vmatpush.msra.mxu0 0.0
    %2104 = vmatpush.msra.mxu0 0.0
    %2105 = vmatpush.msra.mxu0 0.0
    %2106 = vmatpush.msra.mxu0 0.0
    %2107 = vmatpush.msra.mxu0 0.0
    %2108 = vmatpush.msra.mxu0 0.0
    %2109 = vmatpush.msra.mxu0 %v2089
    %2110 = vmatmul.f32.gmra.mxu0 %v2092
    %v2111 = vpop.f32.mrf.mxu0
    %v2112 = vadd.f32 0.0, %v2111
    %2113 = vdwg.mxu0
    %v2114 = vrcp.pop %v1884
    %v2115 = vmul.f32 %v1884, %v2114
    %v2116 = vsub.f32 1.0, %v2115
    %v2117 = vmul.f32 %v2114, %v2116
    %v2118 = vadd.f32 %v2114, %v2117
    %vm2119 = vweird.f32 %v1884
    %vm2120 = vweird.f32 %v2114
    %vm2121 = vmor %vm2119, %vm2120
    %v2122 = vsel %vm2121, %v2114, %v2118
    %v2123 = vand.u32 2147483647, %v1884
    %vm2124 = vcmp.eq.f32.partialorder %v2123, 8.507059e+37
    %v2125 = vand.u32 %v1884, 2147483648
    %v2126 = vor.u32 1.1754944e-38, %v2125
    %v2127 = vsel %vm2124, %v2126, %v2122
    %v2128 = vrcp.pop %v1887
    %v2129 = vmul.f32 %v1887, %v2128
    %v2130 = vsub.f32 1.0, %v2129
    %v2131 = vmul.f32 %v2128, %v2130
    %v2132 = vadd.f32 %v2128, %v2131
    %vm2133 = vweird.f32 %v1887
    %vm2134 = vweird.f32 %v2128
    %vm2135 = vmor %vm2133, %vm2134
    %v2136 = vsel %vm2135, %v2128, %v2132
    %v2137 = vand.u32 2147483647, %v1887
    %vm2138 = vcmp.eq.f32.partialorder %v2137, 8.507059e+37
    %v2139 = vand.u32 %v1887, 2147483648
    %v2140 = vor.u32 1.1754944e-38, %v2139
    %v2141 = vsel %vm2138, %v2140, %v2136
    %v2142 = vrcp.pop %v1890
    %v2143 = vmul.f32 %v1890, %v2142
    %v2144 = vsub.f32 1.0, %v2143
    %v2145 = vmul.f32 %v2142, %v2144
    %v2146 = vadd.f32 %v2142, %v2145
    %vm2147 = vweird.f32 %v1890
    %vm2148 = vweird.f32 %v2142
    %vm2149 = vmor %vm2147, %vm2148
    %v2150 = vsel %vm2149, %v2142, %v2146
    %v2151 = vand.u32 2147483647, %v1890
    %vm2152 = vcmp.eq.f32.partialorder %v2151, 8.507059e+37
    %v2153 = vand.u32 %v1890, 2147483648
    %v2154 = vor.u32 1.1754944e-38, %v2153
    %v2155 = vsel %vm2152, %v2154, %v2150
    %v2156 = vrcp.pop %v1893
    %v2157 = vmul.f32 %v1893, %v2156
    %v2158 = vsub.f32 1.0, %v2157
    %v2159 = vmul.f32 %v2156, %v2158
    %v2160 = vadd.f32 %v2156, %v2159
    %vm2161 = vweird.f32 %v1893
    %vm2162 = vweird.f32 %v2156
    %vm2163 = vmor %vm2161, %vm2162
    %v2164 = vsel %vm2163, %v2156, %v2160
    %v2165 = vand.u32 2147483647, %v1893
    %vm2166 = vcmp.eq.f32.partialorder %v2165, 8.507059e+37
    %v2167 = vand.u32 %v1893, 2147483648
    %v2168 = vor.u32 1.1754944e-38, %v2167
    %v2169 = vsel %vm2166, %v2168, %v2164
    %v2170 = vrcp.pop %v1896
    %v2171 = vmul.f32 %v1896, %v2170
    %v2172 = vsub.f32 1.0, %v2171
    %v2173 = vmul.f32 %v2170, %v2172
    %v2174 = vadd.f32 %v2170, %v2173
    %vm2175 = vweird.f32 %v1896
    %vm2176 = vweird.f32 %v2170
    %vm2177 = vmor %vm2175, %vm2176
    %v2178 = vsel %vm2177, %v2170, %v2174
    %v2179 = vand.u32 2147483647, %v1896
    %vm2180 = vcmp.eq.f32.partialorder %v2179, 8.507059e+37
    %v2181 = vand.u32 %v1896, 2147483648
    %v2182 = vor.u32 1.1754944e-38, %v2181
    %v2183 = vsel %vm2180, %v2182, %v2178
    %v2184 = vrcp.pop %v1899
    %v2185 = vmul.f32 %v1899, %v2184
    %v2186 = vsub.f32 1.0, %v2185
    %v2187 = vmul.f32 %v2184, %v2186
    %v2188 = vadd.f32 %v2184, %v2187
    %vm2189 = vweird.f32 %v1899
    %vm2190 = vweird.f32 %v2184
    %vm2191 = vmor %vm2189, %vm2190
    %v2192 = vsel %vm2191, %v2184, %v2188
    %v2193 = vand.u32 2147483647, %v1899
    %vm2194 = vcmp.eq.f32.partialorder %v2193, 8.507059e+37
    %v2195 = vand.u32 %v1899, 2147483648
    %v2196 = vor.u32 1.1754944e-38, %v2195
    %v2197 = vsel %vm2194, %v2196, %v2192
    %v2198 = vrcp.pop %v1902
    %v2199 = vmul.f32 %v1902, %v2198
    %v2200 = vsub.f32 1.0, %v2199
    %v2201 = vmul.f32 %v2198, %v2200
    %v2202 = vadd.f32 %v2198, %v2201
    %vm2203 = vweird.f32 %v1902
    %vm2204 = vweird.f32 %v2198
    %vm2205 = vmor %vm2203, %vm2204
    %v2206 = vsel %vm2205, %v2198, %v2202
    %v2207 = vand.u32 2147483647, %v1902
    %vm2208 = vcmp.eq.f32.partialorder %v2207, 8.507059e+37
    %v2209 = vand.u32 %v1902, 2147483648
    %v2210 = vor.u32 1.1754944e-38, %v2209
    %v2211 = vsel %vm2208, %v2210, %v2206
    %v2212 = vrcp.pop %v1905
    %v2213 = vmul.f32 %v1905, %v2212
    %v2214 = vsub.f32 1.0, %v2213
    %v2215 = vmul.f32 %v2212, %v2214
    %v2216 = vadd.f32 %v2212, %v2215
    %vm2217 = vweird.f32 %v1905
    %vm2218 = vweird.f32 %v2212
    %vm2219 = vmor %vm2217, %vm2218
    %v2220 = vsel %vm2219, %v2212, %v2216
    %v2221 = vand.u32 2147483647, %v1905
    %vm2222 = vcmp.eq.f32.partialorder %v2221, 8.507059e+37
    %v2223 = vand.u32 %v1905, 2147483648
    %v2224 = vor.u32 1.1754944e-38, %v2223
    %v2225 = vsel %vm2222, %v2224, %v2220
    %v2226 = vmul.f32 %v1930, %v2127
    %v2227 = vmul.f32 %v1956, %v2141
    %v2228 = vmul.f32 %v1982, %v2155
    %v2229 = vmul.f32 %v2008, %v2169
    %v2230 = vmul.f32 %v2034, %v2183
    %v2231 = vmul.f32 %v2060, %v2197
    %v2232 = vmul.f32 %v2086, %v2211
    %v2233 = vmul.f32 %v2112, %v2225
    %v2234 = vsel %vm264, %v2226, 0.0
    %v2235 = vrot.slane %v2234, 4
    %v2236 = vadd.f32 %v2234, %v2235
    %v2237 = vrot.slane %v2236, 2
    %v2238 = vadd.f32 %v2236, %v2237
    %v2239 = vrot.slane %v2238, 1
    %v2240 = vadd.f32 %v2238, %v2239
    %v2241 = vsel %vm264, %v2227, 0.0
    %v2242 = vrot.slane %v2241, 4
    %v2243 = vadd.f32 %v2241, %v2242
    %v2244 = vrot.slane %v2243, 2
    %v2245 = vadd.f32 %v2243, %v2244
    %v2246 = vrot.slane %v2245, 1
    %v2247 = vadd.f32 %v2245, %v2246
    %v2248 = vsel %vm264, %v2228, 0.0
    %v2249 = vrot.slane %v2248, 4
    %v2250 = vadd.f32 %v2248, %v2249
    %v2251 = vrot.slane %v2250, 2
    %v2252 = vadd.f32 %v2250, %v2251
    %v2253 = vrot.slane %v2252, 1
    %v2254 = vadd.f32 %v2252, %v2253
    %v2255 = vsel %vm264, %v2229, 0.0
    %v2256 = vrot.slane %v2255, 4
    %v2257 = vadd.f32 %v2255, %v2256
    %v2258 = vrot.slane %v2257, 2
    %v2259 = vadd.f32 %v2257, %v2258
    %v2260 = vrot.slane %v2259, 1
    %v2261 = vadd.f32 %v2259, %v2260
    %v2262 = vsel %vm264, %v2230, 0.0
    %v2263 = vrot.slane %v2262, 4
    %v2264 = vadd.f32 %v2262, %v2263
    %v2265 = vrot.slane %v2264, 2
    %v2266 = vadd.f32 %v2264, %v2265
    %v2267 = vrot.slane %v2266, 1
    %v2268 = vadd.f32 %v2266, %v2267
    %v2269 = vsel %vm264, %v2231, 0.0
    %v2270 = vrot.slane %v2269, 4
    %v2271 = vadd.f32 %v2269, %v2270
    %v2272 = vrot.slane %v2271, 2
    %v2273 = vadd.f32 %v2271, %v2272
    %v2274 = vrot.slane %v2273, 1
    %v2275 = vadd.f32 %v2273, %v2274
    %v2276 = vsel %vm264, %v2232, 0.0
    %v2277 = vrot.slane %v2276, 4
    %v2278 = vadd.f32 %v2276, %v2277
    %v2279 = vrot.slane %v2278, 2
    %v2280 = vadd.f32 %v2278, %v2279
    %v2281 = vrot.slane %v2280, 1
    %v2282 = vadd.f32 %v2280, %v2281
    %v2283 = vsel %vm264, %v2233, 0.0
    %v2284 = vrot.slane %v2283, 4
    %v2285 = vadd.f32 %v2283, %v2284
    %v2286 = vrot.slane %v2285, 2
    %v2287 = vadd.f32 %v2285, %v2286
    %v2288 = vrot.slane %v2287, 1
    %v2289 = vadd.f32 %v2287, %v2288
    %2290 = vrot.lane.b32.xlu0 %v172, 116
    %v2291 = vpop.permute.xlu0 %2290
    %2292 = vrot.lane.b32.xlu0 %v241, 116
    %v2293 = vpop.permute.xlu0 %2292
    %v2294 = vsel %vm264, %v2291, 0
    %v2296 = vsel %vm264, %v2293, 0
    %2298 = vmatpush.xpose.msra.mxu0 0.0
    %2299 = vmatpush.xpose.msra.mxu0 0.0
    %2300 = vmatpush.xpose.msra.mxu0 0.0
    %2301 = vmatpush.xpose.msra.mxu0 0.0
    %2302 = vmatpush.xpose.msra.mxu0 0.0
    %2303 = vmatpush.xpose.msra.mxu0 0.0
    %2304 = vmatpush.xpose.msra.mxu0 0.0
    %2305 = vmatpush.xpose.msra.mxu0 0.0
    %2306 = vmatpush.xpose.msra.mxu0 0.0
    %2307 = vmatpush.xpose.msra.mxu0 0.0
    %2308 = vmatpush.xpose.msra.mxu0 0.0
    %2309 = vmatpush.xpose.msra.mxu0 0.0
    %2310 = vmatpush.xpose.msra.mxu0 0.0
    %2311 = vmatpush.xpose.msra.mxu0 0.0
    %2312 = vmatpush.xpose.msra.mxu0 0.0
    %2313 = vmatpush.xpose.msra.mxu0 %v2296
    %2314 = vmatmul.f32.gmra.mxu0 %v2294
    %v2315 = vpop.f32.mrf.mxu0
    %v2316 = vadd.f32 0.0, %v2315
    %2317 = vdwg.mxu0
    %2318 = vrot.lane.b32.xlu0 %v175, 116
    %v2319 = vpop.permute.xlu0 %2318
    %2320 = vrot.lane.b32.xlu0 %v244, 116
    %v2321 = vpop.permute.xlu0 %2320
    %v2322 = vsel %vm264, %v2319, 0
    %v2324 = vsel %vm264, %v2321, 0
    %2326 = vmatpush.xpose.msra.mxu0 0.0
    %2327 = vmatpush.xpose.msra.mxu0 0.0
    %2328 = vmatpush.xpose.msra.mxu0 0.0
    %2329 = vmatpush.xpose.msra.mxu0 0.0
    %2330 = vmatpush.xpose.msra.mxu0 0.0
    %2331 = vmatpush.xpose.msra.mxu0 0.0
    %2332 = vmatpush.xpose.msra.mxu0 0.0
    %2333 = vmatpush.xpose.msra.mxu0 0.0
    %2334 = vmatpush.xpose.msra.mxu0 0.0
    %2335 = vmatpush.xpose.msra.mxu0 0.0
    %2336 = vmatpush.xpose.msra.mxu0 0.0
    %2337 = vmatpush.xpose.msra.mxu0 0.0
    %2338 = vmatpush.xpose.msra.mxu0 0.0
    %2339 = vmatpush.xpose.msra.mxu0 0.0
    %2340 = vmatpush.xpose.msra.mxu0 0.0
    %2341 = vmatpush.xpose.msra.mxu0 %v2324
    %2342 = vmatmul.f32.gmra.mxu0 %v2322
    %v2343 = vpop.f32.mrf.mxu0
    %v2344 = vadd.f32 0.0, %v2343
    %2345 = vdwg.mxu0
    %2346 = vrot.lane.b32.xlu0 %v178, 116
    %v2347 = vpop.permute.xlu0 %2346
    %2348 = vrot.lane.b32.xlu0 %v247, 116
    %v2349 = vpop.permute.xlu0 %2348
    %v2350 = vsel %vm264, %v2347, 0
    %v2352 = vsel %vm264, %v2349, 0
    %2354 = vmatpush.xpose.msra.mxu0 0.0
    %2355 = vmatpush.xpose.msra.mxu0 0.0
    %2356 = vmatpush.xpose.msra.mxu0 0.0
    %2357 = vmatpush.xpose.msra.mxu0 0.0
    %2358 = vmatpush.xpose.msra.mxu0 0.0
    %2359 = vmatpush.xpose.msra.mxu0 0.0
    %2360 = vmatpush.xpose.msra.mxu0 0.0
    %2361 = vmatpush.xpose.msra.mxu0 0.0
    %2362 = vmatpush.xpose.msra.mxu0 0.0
    %2363 = vmatpush.xpose.msra.mxu0 0.0
    %2364 = vmatpush.xpose.msra.mxu0 0.0
    %2365 = vmatpush.xpose.msra.mxu0 0.0
    %2366 = vmatpush.xpose.msra.mxu0 0.0
    %2367 = vmatpush.xpose.msra.mxu0 0.0
    %2368 = vmatpush.xpose.msra.mxu0 0.0
    %2369 = vmatpush.xpose.msra.mxu0 %v2352
    %2370 = vmatmul.f32.gmra.mxu0 %v2350
    %v2371 = vpop.f32.mrf.mxu0
    %v2372 = vadd.f32 0.0, %v2371
    %2373 = vdwg.mxu0
    %2374 = vrot.lane.b32.xlu0 %v181, 116
    %v2375 = vpop.permute.xlu0 %2374
    %2376 = vrot.lane.b32.xlu0 %v250, 116
    %v2377 = vpop.permute.xlu0 %2376
    %v2378 = vsel %vm264, %v2375, 0
    %v2380 = vsel %vm264, %v2377, 0
    %2382 = vmatpush.xpose.msra.mxu0 0.0
    %2383 = vmatpush.xpose.msra.mxu0 0.0
    %2384 = vmatpush.xpose.msra.mxu0 0.0
    %2385 = vmatpush.xpose.msra.mxu0 0.0
    %2386 = vmatpush.xpose.msra.mxu0 0.0
    %2387 = vmatpush.xpose.msra.mxu0 0.0
    %2388 = vmatpush.xpose.msra.mxu0 0.0
    %2389 = vmatpush.xpose.msra.mxu0 0.0
    %2390 = vmatpush.xpose.msra.mxu0 0.0
    %2391 = vmatpush.xpose.msra.mxu0 0.0
    %2392 = vmatpush.xpose.msra.mxu0 0.0
    %2393 = vmatpush.xpose.msra.mxu0 0.0
    %2394 = vmatpush.xpose.msra.mxu0 0.0
    %2395 = vmatpush.xpose.msra.mxu0 0.0
    %2396 = vmatpush.xpose.msra.mxu0 0.0
    %2397 = vmatpush.xpose.msra.mxu0 %v2380
    %2398 = vmatmul.f32.gmra.mxu0 %v2378
    %v2399 = vpop.f32.mrf.mxu0
    %v2400 = vadd.f32 0.0, %v2399
    %2401 = vdwg.mxu0
    %2402 = vrot.lane.b32.xlu0 %v184, 116
    %v2403 = vpop.permute.xlu0 %2402
    %2404 = vrot.lane.b32.xlu0 %v253, 116
    %v2405 = vpop.permute.xlu0 %2404
    %v2406 = vsel %vm264, %v2403, 0
    %v2408 = vsel %vm264, %v2405, 0
    %2410 = vmatpush.xpose.msra.mxu0 0.0
    %2411 = vmatpush.xpose.msra.mxu0 0.0
    %2412 = vmatpush.xpose.msra.mxu0 0.0
    %2413 = vmatpush.xpose.msra.mxu0 0.0
    %2414 = vmatpush.xpose.msra.mxu0 0.0
    %2415 = vmatpush.xpose.msra.mxu0 0.0
    %2416 = vmatpush.xpose.msra.mxu0 0.0
    %2417 = vmatpush.xpose.msra.mxu0 0.0
    %2418 = vmatpush.xpose.msra.mxu0 0.0
    %2419 = vmatpush.xpose.msra.mxu0 0.0
    %2420 = vmatpush.xpose.msra.mxu0 0.0
    %2421 = vmatpush.xpose.msra.mxu0 0.0
    %2422 = vmatpush.xpose.msra.mxu0 0.0
    %2423 = vmatpush.xpose.msra.mxu0 0.0
    %2424 = vmatpush.xpose.msra.mxu0 0.0
    %2425 = vmatpush.xpose.msra.mxu0 %v2408
    %2426 = vmatmul.f32.gmra.mxu0 %v2406
    %v2427 = vpop.f32.mrf.mxu0
    %v2428 = vadd.f32 0.0, %v2427
    %2429 = vdwg.mxu0
    %2430 = vrot.lane.b32.xlu0 %v187, 116
    %v2431 = vpop.permute.xlu0 %2430
    %2432 = vrot.lane.b32.xlu0 %v256, 116
    %v2433 = vpop.permute.xlu0 %2432
    %v2434 = vsel %vm264, %v2431, 0
    %v2436 = vsel %vm264, %v2433, 0
    %2438 = vmatpush.xpose.msra.mxu0 0.0
    %2439 = vmatpush.xpose.msra.mxu0 0.0
    %2440 = vmatpush.xpose.msra.mxu0 0.0
    %2441 = vmatpush.xpose.msra.mxu0 0.0
    %2442 = vmatpush.xpose.msra.mxu0 0.0
    %2443 = vmatpush.xpose.msra.mxu0 0.0
    %2444 = vmatpush.xpose.msra.mxu0 0.0
    %2445 = vmatpush.xpose.msra.mxu0 0.0
    %2446 = vmatpush.xpose.msra.mxu0 0.0
    %2447 = vmatpush.xpose.msra.mxu0 0.0
    %2448 = vmatpush.xpose.msra.mxu0 0.0
    %2449 = vmatpush.xpose.msra.mxu0 0.0
    %2450 = vmatpush.xpose.msra.mxu0 0.0
    %2451 = vmatpush.xpose.msra.mxu0 0.0
    %2452 = vmatpush.xpose.msra.mxu0 0.0
    %2453 = vmatpush.xpose.msra.mxu0 %v2436
    %2454 = vmatmul.f32.gmra.mxu0 %v2434
    %v2455 = vpop.f32.mrf.mxu0
    %v2456 = vadd.f32 0.0, %v2455
    %2457 = vdwg.mxu0
    %2458 = vrot.lane.b32.xlu0 %v190, 116
    %v2459 = vpop.permute.xlu0 %2458
    %2460 = vrot.lane.b32.xlu0 %v259, 116
    %v2461 = vpop.permute.xlu0 %2460
    %v2462 = vsel %vm264, %v2459, 0
    %v2464 = vsel %vm264, %v2461, 0
    %2466 = vmatpush.xpose.msra.mxu0 0.0
    %2467 = vmatpush.xpose.msra.mxu0 0.0
    %2468 = vmatpush.xpose.msra.mxu0 0.0
    %2469 = vmatpush.xpose.msra.mxu0 0.0
    %2470 = vmatpush.xpose.msra.mxu0 0.0
    %2471 = vmatpush.xpose.msra.mxu0 0.0
    %2472 = vmatpush.xpose.msra.mxu0 0.0
    %2473 = vmatpush.xpose.msra.mxu0 0.0
    %2474 = vmatpush.xpose.msra.mxu0 0.0
    %2475 = vmatpush.xpose.msra.mxu0 0.0
    %2476 = vmatpush.xpose.msra.mxu0 0.0
    %2477 = vmatpush.xpose.msra.mxu0 0.0
    %2478 = vmatpush.xpose.msra.mxu0 0.0
    %2479 = vmatpush.xpose.msra.mxu0 0.0
    %2480 = vmatpush.xpose.msra.mxu0 0.0
    %2481 = vmatpush.xpose.msra.mxu0 %v2464
    %2482 = vmatmul.f32.gmra.mxu0 %v2462
    %v2483 = vpop.f32.mrf.mxu0
    %v2484 = vadd.f32 0.0, %v2483
    %2485 = vdwg.mxu0
    %2486 = vrot.lane.b32.xlu0 %v193, 116
    %v2487 = vpop.permute.xlu0 %2486
    %2488 = vrot.lane.b32.xlu0 %v262, 116
    %v2489 = vpop.permute.xlu0 %2488
    %v2490 = vsel %vm264, %v2487, 0
    %v2492 = vsel %vm264, %v2489, 0
    %2494 = vmatpush.xpose.msra.mxu0 0.0
    %2495 = vmatpush.xpose.msra.mxu0 0.0
    %2496 = vmatpush.xpose.msra.mxu0 0.0
    %2497 = vmatpush.xpose.msra.mxu0 0.0
    %2498 = vmatpush.xpose.msra.mxu0 0.0
    %2499 = vmatpush.xpose.msra.mxu0 0.0
    %2500 = vmatpush.xpose.msra.mxu0 0.0
    %2501 = vmatpush.xpose.msra.mxu0 0.0
    %2502 = vmatpush.xpose.msra.mxu0 0.0
    %2503 = vmatpush.xpose.msra.mxu0 0.0
    %2504 = vmatpush.xpose.msra.mxu0 0.0
    %2505 = vmatpush.xpose.msra.mxu0 0.0
    %2506 = vmatpush.xpose.msra.mxu0 0.0
    %2507 = vmatpush.xpose.msra.mxu0 0.0
    %2508 = vmatpush.xpose.msra.mxu0 0.0
    %2509 = vmatpush.xpose.msra.mxu0 %v2492
    %2510 = vmatmul.f32.gmra.mxu0 %v2490
    %v2511 = vpop.f32.mrf.mxu0
    %v2512 = vadd.f32 0.0, %v2511
    %2513 = vdwg.mxu0
    %v2514 = vsel %vm473, %v2316, -inf
    %2515 = vmax.xlane.f32.xlu0 %v2514
    %v2516 = vpop.xlane.xlu0 %2515
    %v2517 = vsel %vm473, %v2344, -inf
    %2518 = vmax.xlane.f32.xlu0 %v2517
    %v2519 = vpop.xlane.xlu0 %2518
    %v2520 = vsel %vm473, %v2372, -inf
    %2521 = vmax.xlane.f32.xlu0 %v2520
    %v2522 = vpop.xlane.xlu0 %2521
    %v2523 = vsel %vm473, %v2400, -inf
    %2524 = vmax.xlane.f32.xlu0 %v2523
    %v2525 = vpop.xlane.xlu0 %2524
    %v2526 = vsel %vm473, %v2428, -inf
    %2527 = vmax.xlane.f32.xlu0 %v2526
    %v2528 = vpop.xlane.xlu0 %2527
    %v2529 = vsel %vm473, %v2456, -inf
    %2530 = vmax.xlane.f32.xlu0 %v2529
    %v2531 = vpop.xlane.xlu0 %2530
    %v2532 = vsel %vm473, %v2484, -inf
    %2533 = vmax.xlane.f32.xlu0 %v2532
    %v2534 = vpop.xlane.xlu0 %2533
    %v2535 = vsel %vm473, %v2512, -inf
    %2536 = vmax.xlane.f32.xlu0 %v2535
    %v2537 = vpop.xlane.xlu0 %2536
    %v2538 = vsub.f32 %v2316, %v2516
    %v2539 = vsub.f32 %v2344, %v2519
    %v2540 = vsub.f32 %v2372, %v2522
    %v2541 = vsub.f32 %v2400, %v2525
    %v2542 = vsub.f32 %v2428, %v2528
    %v2543 = vsub.f32 %v2456, %v2531
    %v2544 = vsub.f32 %v2484, %v2534
    %v2545 = vsub.f32 %v2512, %v2537
    %v2546 = vmul.f32 %v2538, 1.442695
    %v2547 = vpow.pop %v2546
    %v2548 = vmul.f32 %v2539, 1.442695
    %v2549 = vpow.pop %v2548
    %v2550 = vmul.f32 %v2540, 1.442695
    %v2551 = vpow.pop %v2550
    %v2552 = vmul.f32 %v2541, 1.442695
    %v2553 = vpow.pop %v2552
    %v2554 = vmul.f32 %v2542, 1.442695
    %v2555 = vpow.pop %v2554
    %v2556 = vmul.f32 %v2543, 1.442695
    %v2557 = vpow.pop %v2556
    %v2558 = vmul.f32 %v2544, 1.442695
    %v2559 = vpow.pop %v2558
    %v2560 = vmul.f32 %v2545, 1.442695
    %v2561 = vpow.pop %v2560
    %v2562 = vsel %vm473, %v2547, 0.0
    %2563 = vadd.xlane.f32.xlu0 %v2562
    %v2564 = vpop.xlane.xlu0 %2563
    %v2565 = vsel %vm473, %v2549, 0.0
    %2566 = vadd.xlane.f32.xlu0 %v2565
    %v2567 = vpop.xlane.xlu0 %2566
    %v2568 = vsel %vm473, %v2551, 0.0
    %2569 = vadd.xlane.f32.xlu0 %v2568
    %v2570 = vpop.xlane.xlu0 %2569
    %v2571 = vsel %vm473, %v2553, 0.0
    %2572 = vadd.xlane.f32.xlu0 %v2571
    %v2573 = vpop.xlane.xlu0 %2572
    %v2574 = vsel %vm473, %v2555, 0.0
    %2575 = vadd.xlane.f32.xlu0 %v2574
    %v2576 = vpop.xlane.xlu0 %2575
    %v2577 = vsel %vm473, %v2557, 0.0
    %2578 = vadd.xlane.f32.xlu0 %v2577
    %v2579 = vpop.xlane.xlu0 %2578
    %v2580 = vsel %vm473, %v2559, 0.0
    %2581 = vadd.xlane.f32.xlu0 %v2580
    %v2582 = vpop.xlane.xlu0 %2581
    %v2583 = vsel %vm473, %v2561, 0.0
    %2584 = vadd.xlane.f32.xlu0 %v2583
    %v2585 = vpop.xlane.xlu0 %2584
    %2586 = vrot.lane.b32.xlu0 %v241, 84
    %v2587 = vpop.permute.xlu0 %2586
    %v2590 = vsel %vm473, %v2547, 0
    %2592 = vmatpush.msra.mxu0 0.0
    %2593 = vmatpush.msra.mxu0 0.0
    %2594 = vmatpush.msra.mxu0 0.0
    %2595 = vmatpush.msra.mxu0 0.0
    %2596 = vmatpush.msra.mxu0 0.0
    %2597 = vmatpush.msra.mxu0 0.0
    %2598 = vmatpush.msra.mxu0 0.0
    %2599 = vmatpush.msra.mxu0 0.0
    %2600 = vmatpush.msra.mxu0 0.0
    %2601 = vmatpush.msra.mxu0 0.0
    %2602 = vmatpush.msra.mxu0 0.0
    %2603 = vmatpush.msra.mxu0 0.0
    %2604 = vmatpush.msra.mxu0 0.0
    %2605 = vmatpush.msra.mxu0 0.0
    %2606 = vmatpush.msra.mxu0 0.0
    %2607 = vmatpush.msra.mxu0 %v2587
    %2608 = vmatmul.f32.gmra.mxu0 %v2590
    %v2609 = vpop.f32.mrf.mxu0
    %v2610 = vadd.f32 0.0, %v2609
    %2611 = vdwg.mxu0
    %2612 = vrot.lane.b32.xlu0 %v244, 84
    %v2613 = vpop.permute.xlu0 %2612
    %v2616 = vsel %vm473, %v2549, 0
    %2618 = vmatpush.msra.mxu0 0.0
    %2619 = vmatpush.msra.mxu0 0.0
    %2620 = vmatpush.msra.mxu0 0.0
    %2621 = vmatpush.msra.mxu0 0.0
    %2622 = vmatpush.msra.mxu0 0.0
    %2623 = vmatpush.msra.mxu0 0.0
    %2624 = vmatpush.msra.mxu0 0.0
    %2625 = vmatpush.msra.mxu0 0.0
    %2626 = vmatpush.msra.mxu0 0.0
    %2627 = vmatpush.msra.mxu0 0.0
    %2628 = vmatpush.msra.mxu0 0.0
    %2629 = vmatpush.msra.mxu0 0.0
    %2630 = vmatpush.msra.mxu0 0.0
    %2631 = vmatpush.msra.mxu0 0.0
    %2632 = vmatpush.msra.mxu0 0.0
    %2633 = vmatpush.msra.mxu0 %v2613
    %2634 = vmatmul.f32.gmra.mxu0 %v2616
    %v2635 = vpop.f32.mrf.mxu0
    %v2636 = vadd.f32 0.0, %v2635
    %2637 = vdwg.mxu0
    %2638 = vrot.lane.b32.xlu0 %v247, 84
    %v2639 = vpop.permute.xlu0 %2638
    %v2642 = vsel %vm473, %v2551, 0
    %2644 = vmatpush.msra.mxu0 0.0
    %2645 = vmatpush.msra.mxu0 0.0
    %2646 = vmatpush.msra.mxu0 0.0
    %2647 = vmatpush.msra.mxu0 0.0
    %2648 = vmatpush.msra.mxu0 0.0
    %2649 = vmatpush.msra.mxu0 0.0
    %2650 = vmatpush.msra.mxu0 0.0
    %2651 = vmatpush.msra.mxu0 0.0
    %2652 = vmatpush.msra.mxu0 0.0
    %2653 = vmatpush.msra.mxu0 0.0
    %2654 = vmatpush.msra.mxu0 0.0
    %2655 = vmatpush.msra.mxu0 0.0
    %2656 = vmatpush.msra.mxu0 0.0
    %2657 = vmatpush.msra.mxu0 0.0
    %2658 = vmatpush.msra.mxu0 0.0
    %2659 = vmatpush.msra.mxu0 %v2639
    %2660 = vmatmul.f32.gmra.mxu0 %v2642
    %v2661 = vpop.f32.mrf.mxu0
    %v2662 = vadd.f32 0.0, %v2661
    %2663 = vdwg.mxu0
    %2664 = vrot.lane.b32.xlu0 %v250, 84
    %v2665 = vpop.permute.xlu0 %2664
    %v2668 = vsel %vm473, %v2553, 0
    %2670 = vmatpush.msra.mxu0 0.0
    %2671 = vmatpush.msra.mxu0 0.0
    %2672 = vmatpush.msra.mxu0 0.0
    %2673 = vmatpush.msra.mxu0 0.0
    %2674 = vmatpush.msra.mxu0 0.0
    %2675 = vmatpush.msra.mxu0 0.0
    %2676 = vmatpush.msra.mxu0 0.0
    %2677 = vmatpush.msra.mxu0 0.0
    %2678 = vmatpush.msra.mxu0 0.0
    %2679 = vmatpush.msra.mxu0 0.0
    %2680 = vmatpush.msra.mxu0 0.0
    %2681 = vmatpush.msra.mxu0 0.0
    %2682 = vmatpush.msra.mxu0 0.0
    %2683 = vmatpush.msra.mxu0 0.0
    %2684 = vmatpush.msra.mxu0 0.0
    %2685 = vmatpush.msra.mxu0 %v2665
    %2686 = vmatmul.f32.gmra.mxu0 %v2668
    %v2687 = vpop.f32.mrf.mxu0
    %v2688 = vadd.f32 0.0, %v2687
    %2689 = vdwg.mxu0
    %2690 = vrot.lane.b32.xlu0 %v253, 84
    %v2691 = vpop.permute.xlu0 %2690
    %v2694 = vsel %vm473, %v2555, 0
    %2696 = vmatpush.msra.mxu0 0.0
    %2697 = vmatpush.msra.mxu0 0.0
    %2698 = vmatpush.msra.mxu0 0.0
    %2699 = vmatpush.msra.mxu0 0.0
    %2700 = vmatpush.msra.mxu0 0.0
    %2701 = vmatpush.msra.mxu0 0.0
    %2702 = vmatpush.msra.mxu0 0.0
    %2703 = vmatpush.msra.mxu0 0.0
    %2704 = vmatpush.msra.mxu0 0.0
    %2705 = vmatpush.msra.mxu0 0.0
    %2706 = vmatpush.msra.mxu0 0.0
    %2707 = vmatpush.msra.mxu0 0.0
    %2708 = vmatpush.msra.mxu0 0.0
    %2709 = vmatpush.msra.mxu0 0.0
    %2710 = vmatpush.msra.mxu0 0.0
    %2711 = vmatpush.msra.mxu0 %v2691
    %2712 = vmatmul.f32.gmra.mxu0 %v2694
    %v2713 = vpop.f32.mrf.mxu0
    %v2714 = vadd.f32 0.0, %v2713
    %2715 = vdwg.mxu0
    %2716 = vrot.lane.b32.xlu0 %v256, 84
    %v2717 = vpop.permute.xlu0 %2716
    %v2720 = vsel %vm473, %v2557, 0
    %2722 = vmatpush.msra.mxu0 0.0
    %2723 = vmatpush.msra.mxu0 0.0
    %2724 = vmatpush.msra.mxu0 0.0
    %2725 = vmatpush.msra.mxu0 0.0
    %2726 = vmatpush.msra.mxu0 0.0
    %2727 = vmatpush.msra.mxu0 0.0
    %2728 = vmatpush.msra.mxu0 0.0
    %2729 = vmatpush.msra.mxu0 0.0
    %2730 = vmatpush.msra.mxu0 0.0
    %2731 = vmatpush.msra.mxu0 0.0
    %2732 = vmatpush.msra.mxu0 0.0
    %2733 = vmatpush.msra.mxu0 0.0
    %2734 = vmatpush.msra.mxu0 0.0
    %2735 = vmatpush.msra.mxu0 0.0
    %2736 = vmatpush.msra.mxu0 0.0
    %2737 = vmatpush.msra.mxu0 %v2717
    %2738 = vmatmul.f32.gmra.mxu0 %v2720
    %v2739 = vpop.f32.mrf.mxu0
    %v2740 = vadd.f32 0.0, %v2739
    %2741 = vdwg.mxu0
    %2742 = vrot.lane.b32.xlu0 %v259, 84
    %v2743 = vpop.permute.xlu0 %2742
    %v2746 = vsel %vm473, %v2559, 0
    %2748 = vmatpush.msra.mxu0 0.0
    %2749 = vmatpush.msra.mxu0 0.0
    %2750 = vmatpush.msra.mxu0 0.0
    %2751 = vmatpush.msra.mxu0 0.0
    %2752 = vmatpush.msra.mxu0 0.0
    %2753 = vmatpush.msra.mxu0 0.0
    %2754 = vmatpush.msra.mxu0 0.0
    %2755 = vmatpush.msra.mxu0 0.0
    %2756 = vmatpush.msra.mxu0 0.0
    %2757 = vmatpush.msra.mxu0 0.0
    %2758 = vmatpush.msra.mxu0 0.0
    %2759 = vmatpush.msra.mxu0 0.0
    %2760 = vmatpush.msra.mxu0 0.0
    %2761 = vmatpush.msra.mxu0 0.0
    %2762 = vmatpush.msra.mxu0 0.0
    %2763 = vmatpush.msra.mxu0 %v2743
    %2764 = vmatmul.f32.gmra.mxu0 %v2746
    %v2765 = vpop.f32.mrf.mxu0
    %v2766 = vadd.f32 0.0, %v2765
    %2767 = vdwg.mxu0
    %2768 = vrot.lane.b32.xlu0 %v262, 84
    %v2769 = vpop.permute.xlu0 %2768
    %v2772 = vsel %vm473, %v2561, 0
    %2774 = vmatpush.msra.mxu0 0.0
    %2775 = vmatpush.msra.mxu0 0.0
    %2776 = vmatpush.msra.mxu0 0.0
    %2777 = vmatpush.msra.mxu0 0.0
    %2778 = vmatpush.msra.mxu0 0.0
    %2779 = vmatpush.msra.mxu0 0.0
    %2780 = vmatpush.msra.mxu0 0.0
    %2781 = vmatpush.msra.mxu0 0.0
    %2782 = vmatpush.msra.mxu0 0.0
    %2783 = vmatpush.msra.mxu0 0.0
    %2784 = vmatpush.msra.mxu0 0.0
    %2785 = vmatpush.msra.mxu0 0.0
    %2786 = vmatpush.msra.mxu0 0.0
    %2787 = vmatpush.msra.mxu0 0.0
    %2788 = vmatpush.msra.mxu0 0.0
    %2789 = vmatpush.msra.mxu0 %v2769
    %2790 = vmatmul.f32.gmra.mxu0 %v2772
    %v2791 = vpop.f32.mrf.mxu0
    %v2792 = vadd.f32 0.0, %v2791
    %2793 = vdwg.mxu0
    %v2794 = vrcp.pop %v2564
    %v2795 = vmul.f32 %v2564, %v2794
    %v2796 = vsub.f32 1.0, %v2795
    %v2797 = vmul.f32 %v2794, %v2796
    %v2798 = vadd.f32 %v2794, %v2797
    %vm2799 = vweird.f32 %v2564
    %vm2800 = vweird.f32 %v2794
    %vm2801 = vmor %vm2799, %vm2800
    %v2802 = vsel %vm2801, %v2794, %v2798
    %v2803 = vand.u32 2147483647, %v2564
    %vm2804 = vcmp.eq.f32.partialorder %v2803, 8.507059e+37
    %v2805 = vand.u32 %v2564, 2147483648
    %v2806 = vor.u32 1.1754944e-38, %v2805
    %v2807 = vsel %vm2804, %v2806, %v2802
    %v2808 = vrcp.pop %v2567
    %v2809 = vmul.f32 %v2567, %v2808
    %v2810 = vsub.f32 1.0, %v2809
    %v2811 = vmul.f32 %v2808, %v2810
    %v2812 = vadd.f32 %v2808, %v2811
    %vm2813 = vweird.f32 %v2567
    %vm2814 = vweird.f32 %v2808
    %vm2815 = vmor %vm2813, %vm2814
    %v2816 = vsel %vm2815, %v2808, %v2812
    %v2817 = vand.u32 2147483647, %v2567
    %vm2818 = vcmp.eq.f32.partialorder %v2817, 8.507059e+37
    %v2819 = vand.u32 %v2567, 2147483648
    %v2820 = vor.u32 1.1754944e-38, %v2819
    %v2821 = vsel %vm2818, %v2820, %v2816
    %v2822 = vrcp.pop %v2570
    %v2823 = vmul.f32 %v2570, %v2822
    %v2824 = vsub.f32 1.0, %v2823
    %v2825 = vmul.f32 %v2822, %v2824
    %v2826 = vadd.f32 %v2822, %v2825
    %vm2827 = vweird.f32 %v2570
    %vm2828 = vweird.f32 %v2822
    %vm2829 = vmor %vm2827, %vm2828
    %v2830 = vsel %vm2829, %v2822, %v2826
    %v2831 = vand.u32 2147483647, %v2570
    %vm2832 = vcmp.eq.f32.partialorder %v2831, 8.507059e+37
    %v2833 = vand.u32 %v2570, 2147483648
    %v2834 = vor.u32 1.1754944e-38, %v2833
    %v2835 = vsel %vm2832, %v2834, %v2830
    %v2836 = vrcp.pop %v2573
    %v2837 = vmul.f32 %v2573, %v2836
    %v2838 = vsub.f32 1.0, %v2837
    %v2839 = vmul.f32 %v2836, %v2838
    %v2840 = vadd.f32 %v2836, %v2839
    %vm2841 = vweird.f32 %v2573
    %vm2842 = vweird.f32 %v2836
    %vm2843 = vmor %vm2841, %vm2842
    %v2844 = vsel %vm2843, %v2836, %v2840
    %v2845 = vand.u32 2147483647, %v2573
    %vm2846 = vcmp.eq.f32.partialorder %v2845, 8.507059e+37
    %v2847 = vand.u32 %v2573, 2147483648
    %v2848 = vor.u32 1.1754944e-38, %v2847
    %v2849 = vsel %vm2846, %v2848, %v2844
    %v2850 = vrcp.pop %v2576
    %v2851 = vmul.f32 %v2576, %v2850
    %v2852 = vsub.f32 1.0, %v2851
    %v2853 = vmul.f32 %v2850, %v2852
    %v2854 = vadd.f32 %v2850, %v2853
    %vm2855 = vweird.f32 %v2576
    %vm2856 = vweird.f32 %v2850
    %vm2857 = vmor %vm2855, %vm2856
    %v2858 = vsel %vm2857, %v2850, %v2854
    %v2859 = vand.u32 2147483647, %v2576
    %vm2860 = vcmp.eq.f32.partialorder %v2859, 8.507059e+37
    %v2861 = vand.u32 %v2576, 2147483648
    %v2862 = vor.u32 1.1754944e-38, %v2861
    %v2863 = vsel %vm2860, %v2862, %v2858
    %v2864 = vrcp.pop %v2579
    %v2865 = vmul.f32 %v2579, %v2864
    %v2866 = vsub.f32 1.0, %v2865
    %v2867 = vmul.f32 %v2864, %v2866
    %v2868 = vadd.f32 %v2864, %v2867
    %vm2869 = vweird.f32 %v2579
    %vm2870 = vweird.f32 %v2864
    %vm2871 = vmor %vm2869, %vm2870
    %v2872 = vsel %vm2871, %v2864, %v2868
    %v2873 = vand.u32 2147483647, %v2579
    %vm2874 = vcmp.eq.f32.partialorder %v2873, 8.507059e+37
    %v2875 = vand.u32 %v2579, 2147483648
    %v2876 = vor.u32 1.1754944e-38, %v2875
    %v2877 = vsel %vm2874, %v2876, %v2872
    %v2878 = vrcp.pop %v2582
    %v2879 = vmul.f32 %v2582, %v2878
    %v2880 = vsub.f32 1.0, %v2879
    %v2881 = vmul.f32 %v2878, %v2880
    %v2882 = vadd.f32 %v2878, %v2881
    %vm2883 = vweird.f32 %v2582
    %vm2884 = vweird.f32 %v2878
    %vm2885 = vmor %vm2883, %vm2884
    %v2886 = vsel %vm2885, %v2878, %v2882
    %v2887 = vand.u32 2147483647, %v2582
    %vm2888 = vcmp.eq.f32.partialorder %v2887, 8.507059e+37
    %v2889 = vand.u32 %v2582, 2147483648
    %v2890 = vor.u32 1.1754944e-38, %v2889
    %v2891 = vsel %vm2888, %v2890, %v2886
    %v2892 = vrcp.pop %v2585
    %v2893 = vmul.f32 %v2585, %v2892
    %v2894 = vsub.f32 1.0, %v2893
    %v2895 = vmul.f32 %v2892, %v2894
    %v2896 = vadd.f32 %v2892, %v2895
    %vm2897 = vweird.f32 %v2585
    %vm2898 = vweird.f32 %v2892
    %vm2899 = vmor %vm2897, %vm2898
    %v2900 = vsel %vm2899, %v2892, %v2896
    %v2901 = vand.u32 2147483647, %v2585
    %vm2902 = vcmp.eq.f32.partialorder %v2901, 8.507059e+37
    %v2903 = vand.u32 %v2585, 2147483648
    %v2904 = vor.u32 1.1754944e-38, %v2903
    %v2905 = vsel %vm2902, %v2904, %v2900
    %v2906 = vmul.f32 %v2610, %v2807
    %v2907 = vmul.f32 %v2636, %v2821
    %v2908 = vmul.f32 %v2662, %v2835
    %v2909 = vmul.f32 %v2688, %v2849
    %v2910 = vmul.f32 %v2714, %v2863
    %v2911 = vmul.f32 %v2740, %v2877
    %v2912 = vmul.f32 %v2766, %v2891
    %v2913 = vmul.f32 %v2792, %v2905
    %v2914 = vsel %vm264, %v2906, 0.0
    %v2915 = vrot.slane %v2914, 4
    %v2916 = vadd.f32 %v2914, %v2915
    %v2917 = vrot.slane %v2916, 2
    %v2918 = vadd.f32 %v2916, %v2917
    %v2919 = vrot.slane %v2918, 1
    %v2920 = vadd.f32 %v2918, %v2919
    %v2921 = vsel %vm264, %v2907, 0.0
    %v2922 = vrot.slane %v2921, 4
    %v2923 = vadd.f32 %v2921, %v2922
    %v2924 = vrot.slane %v2923, 2
    %v2925 = vadd.f32 %v2923, %v2924
    %v2926 = vrot.slane %v2925, 1
    %v2927 = vadd.f32 %v2925, %v2926
    %v2928 = vsel %vm264, %v2908, 0.0
    %v2929 = vrot.slane %v2928, 4
    %v2930 = vadd.f32 %v2928, %v2929
    %v2931 = vrot.slane %v2930, 2
    %v2932 = vadd.f32 %v2930, %v2931
    %v2933 = vrot.slane %v2932, 1
    %v2934 = vadd.f32 %v2932, %v2933
    %v2935 = vsel %vm264, %v2909, 0.0
    %v2936 = vrot.slane %v2935, 4
    %v2937 = vadd.f32 %v2935, %v2936
    %v2938 = vrot.slane %v2937, 2
    %v2939 = vadd.f32 %v2937, %v2938
    %v2940 = vrot.slane %v2939, 1
    %v2941 = vadd.f32 %v2939, %v2940
    %v2942 = vsel %vm264, %v2910, 0.0
    %v2943 = vrot.slane %v2942, 4
    %v2944 = vadd.f32 %v2942, %v2943
    %v2945 = vrot.slane %v2944, 2
    %v2946 = vadd.f32 %v2944, %v2945
    %v2947 = vrot.slane %v2946, 1
    %v2948 = vadd.f32 %v2946, %v2947
    %v2949 = vsel %vm264, %v2911, 0.0
    %v2950 = vrot.slane %v2949, 4
    %v2951 = vadd.f32 %v2949, %v2950
    %v2952 = vrot.slane %v2951, 2
    %v2953 = vadd.f32 %v2951, %v2952
    %v2954 = vrot.slane %v2953, 1
    %v2955 = vadd.f32 %v2953, %v2954
    %v2956 = vsel %vm264, %v2912, 0.0
    %v2957 = vrot.slane %v2956, 4
    %v2958 = vadd.f32 %v2956, %v2957
    %v2959 = vrot.slane %v2958, 2
    %v2960 = vadd.f32 %v2958, %v2959
    %v2961 = vrot.slane %v2960, 1
    %v2962 = vadd.f32 %v2960, %v2961
    %v2963 = vsel %vm264, %v2913, 0.0
    %v2964 = vrot.slane %v2963, 4
    %v2965 = vadd.f32 %v2963, %v2964
    %v2966 = vrot.slane %v2965, 2
    %v2967 = vadd.f32 %v2965, %v2966
    %v2968 = vrot.slane %v2967, 1
    %v2969 = vadd.f32 %v2967, %v2968
    %2970 = vrot.lane.b32.xlu0 %v172, 112
    %v2971 = vpop.permute.xlu0 %2970
    %2972 = vrot.lane.b32.xlu0 %v241, 112
    %v2973 = vpop.permute.xlu0 %2972
    %v2974 = vsel %vm264, %v2971, 0
    %v2976 = vsel %vm264, %v2973, 0
    %2978 = vmatpush.xpose.msra.mxu0 0.0
    %2979 = vmatpush.xpose.msra.mxu0 0.0
    %2980 = vmatpush.xpose.msra.mxu0 0.0
    %2981 = vmatpush.xpose.msra.mxu0 0.0
    %2982 = vmatpush.xpose.msra.mxu0 0.0
    %2983 = vmatpush.xpose.msra.mxu0 0.0
    %2984 = vmatpush.xpose.msra.mxu0 0.0
    %2985 = vmatpush.xpose.msra.mxu0 0.0
    %2986 = vmatpush.xpose.msra.mxu0 0.0
    %2987 = vmatpush.xpose.msra.mxu0 0.0
    %2988 = vmatpush.xpose.msra.mxu0 0.0
    %2989 = vmatpush.xpose.msra.mxu0 0.0
    %2990 = vmatpush.xpose.msra.mxu0 0.0
    %2991 = vmatpush.xpose.msra.mxu0 0.0
    %2992 = vmatpush.xpose.msra.mxu0 0.0
    %2993 = vmatpush.xpose.msra.mxu0 %v2976
    %2994 = vmatmul.f32.gmra.mxu0 %v2974
    %v2995 = vpop.f32.mrf.mxu0
    %v2996 = vadd.f32 0.0, %v2995
    %2997 = vdwg.mxu0
    %2998 = vrot.lane.b32.xlu0 %v175, 112
    %v2999 = vpop.permute.xlu0 %2998
    %3000 = vrot.lane.b32.xlu0 %v244, 112
    %v3001 = vpop.permute.xlu0 %3000
    %v3002 = vsel %vm264, %v2999, 0
    %v3004 = vsel %vm264, %v3001, 0
    %3006 = vmatpush.xpose.msra.mxu0 0.0
    %3007 = vmatpush.xpose.msra.mxu0 0.0
    %3008 = vmatpush.xpose.msra.mxu0 0.0
    %3009 = vmatpush.xpose.msra.mxu0 0.0
    %3010 = vmatpush.xpose.msra.mxu0 0.0
    %3011 = vmatpush.xpose.msra.mxu0 0.0
    %3012 = vmatpush.xpose.msra.mxu0 0.0
    %3013 = vmatpush.xpose.msra.mxu0 0.0
    %3014 = vmatpush.xpose.msra.mxu0 0.0
    %3015 = vmatpush.xpose.msra.mxu0 0.0
    %3016 = vmatpush.xpose.msra.mxu0 0.0
    %3017 = vmatpush.xpose.msra.mxu0 0.0
    %3018 = vmatpush.xpose.msra.mxu0 0.0
    %3019 = vmatpush.xpose.msra.mxu0 0.0
    %3020 = vmatpush.xpose.msra.mxu0 0.0
    %3021 = vmatpush.xpose.msra.mxu0 %v3004
    %3022 = vmatmul.f32.gmra.mxu0 %v3002
    %v3023 = vpop.f32.mrf.mxu0
    %v3024 = vadd.f32 0.0, %v3023
    %3025 = vdwg.mxu0
    %3026 = vrot.lane.b32.xlu0 %v178, 112
    %v3027 = vpop.permute.xlu0 %3026
    %3028 = vrot.lane.b32.xlu0 %v247, 112
    %v3029 = vpop.permute.xlu0 %3028
    %v3030 = vsel %vm264, %v3027, 0
    %v3032 = vsel %vm264, %v3029, 0
    %3034 = vmatpush.xpose.msra.mxu0 0.0
    %3035 = vmatpush.xpose.msra.mxu0 0.0
    %3036 = vmatpush.xpose.msra.mxu0 0.0
    %3037 = vmatpush.xpose.msra.mxu0 0.0
    %3038 = vmatpush.xpose.msra.mxu0 0.0
    %3039 = vmatpush.xpose.msra.mxu0 0.0
    %3040 = vmatpush.xpose.msra.mxu0 0.0
    %3041 = vmatpush.xpose.msra.mxu0 0.0
    %3042 = vmatpush.xpose.msra.mxu0 0.0
    %3043 = vmatpush.xpose.msra.mxu0 0.0
    %3044 = vmatpush.xpose.msra.mxu0 0.0
    %3045 = vmatpush.xpose.msra.mxu0 0.0
    %3046 = vmatpush.xpose.msra.mxu0 0.0
    %3047 = vmatpush.xpose.msra.mxu0 0.0
    %3048 = vmatpush.xpose.msra.mxu0 0.0
    %3049 = vmatpush.xpose.msra.mxu0 %v3032
    %3050 = vmatmul.f32.gmra.mxu0 %v3030
    %v3051 = vpop.f32.mrf.mxu0
    %v3052 = vadd.f32 0.0, %v3051
    %3053 = vdwg.mxu0
    %3054 = vrot.lane.b32.xlu0 %v181, 112
    %v3055 = vpop.permute.xlu0 %3054
    %3056 = vrot.lane.b32.xlu0 %v250, 112
    %v3057 = vpop.permute.xlu0 %3056
    %v3058 = vsel %vm264, %v3055, 0
    %v3060 = vsel %vm264, %v3057, 0
    %3062 = vmatpush.xpose.msra.mxu0 0.0
    %3063 = vmatpush.xpose.msra.mxu0 0.0
    %3064 = vmatpush.xpose.msra.mxu0 0.0
    %3065 = vmatpush.xpose.msra.mxu0 0.0
    %3066 = vmatpush.xpose.msra.mxu0 0.0
    %3067 = vmatpush.xpose.msra.mxu0 0.0
    %3068 = vmatpush.xpose.msra.mxu0 0.0
    %3069 = vmatpush.xpose.msra.mxu0 0.0
    %3070 = vmatpush.xpose.msra.mxu0 0.0
    %3071 = vmatpush.xpose.msra.mxu0 0.0
    %3072 = vmatpush.xpose.msra.mxu0 0.0
    %3073 = vmatpush.xpose.msra.mxu0 0.0
    %3074 = vmatpush.xpose.msra.mxu0 0.0
    %3075 = vmatpush.xpose.msra.mxu0 0.0
    %3076 = vmatpush.xpose.msra.mxu0 0.0
    %3077 = vmatpush.xpose.msra.mxu0 %v3060
    %3078 = vmatmul.f32.gmra.mxu0 %v3058
    %v3079 = vpop.f32.mrf.mxu0
    %v3080 = vadd.f32 0.0, %v3079
    %3081 = vdwg.mxu0
    %3082 = vrot.lane.b32.xlu0 %v184, 112
    %v3083 = vpop.permute.xlu0 %3082
    %3084 = vrot.lane.b32.xlu0 %v253, 112
    %v3085 = vpop.permute.xlu0 %3084
    %v3086 = vsel %vm264, %v3083, 0
    %v3088 = vsel %vm264, %v3085, 0
    %3090 = vmatpush.xpose.msra.mxu0 0.0
    %3091 = vmatpush.xpose.msra.mxu0 0.0
    %3092 = vmatpush.xpose.msra.mxu0 0.0
    %3093 = vmatpush.xpose.msra.mxu0 0.0
    %3094 = vmatpush.xpose.msra.mxu0 0.0
    %3095 = vmatpush.xpose.msra.mxu0 0.0
    %3096 = vmatpush.xpose.msra.mxu0 0.0
    %3097 = vmatpush.xpose.msra.mxu0 0.0
    %3098 = vmatpush.xpose.msra.mxu0 0.0
    %3099 = vmatpush.xpose.msra.mxu0 0.0
    %3100 = vmatpush.xpose.msra.mxu0 0.0
    %3101 = vmatpush.xpose.msra.mxu0 0.0
    %3102 = vmatpush.xpose.msra.mxu0 0.0
    %3103 = vmatpush.xpose.msra.mxu0 0.0
    %3104 = vmatpush.xpose.msra.mxu0 0.0
    %3105 = vmatpush.xpose.msra.mxu0 %v3088
    %3106 = vmatmul.f32.gmra.mxu0 %v3086
    %v3107 = vpop.f32.mrf.mxu0
    %v3108 = vadd.f32 0.0, %v3107
    %3109 = vdwg.mxu0
    %3110 = vrot.lane.b32.xlu0 %v187, 112
    %v3111 = vpop.permute.xlu0 %3110
    %3112 = vrot.lane.b32.xlu0 %v256, 112
    %v3113 = vpop.permute.xlu0 %3112
    %v3114 = vsel %vm264, %v3111, 0
    %v3116 = vsel %vm264, %v3113, 0
    %3118 = vmatpush.xpose.msra.mxu0 0.0
    %3119 = vmatpush.xpose.msra.mxu0 0.0
    %3120 = vmatpush.xpose.msra.mxu0 0.0
    %3121 = vmatpush.xpose.msra.mxu0 0.0
    %3122 = vmatpush.xpose.msra.mxu0 0.0
    %3123 = vmatpush.xpose.msra.mxu0 0.0
    %3124 = vmatpush.xpose.msra.mxu0 0.0
    %3125 = vmatpush.xpose.msra.mxu0 0.0
    %3126 = vmatpush.xpose.msra.mxu0 0.0
    %3127 = vmatpush.xpose.msra.mxu0 0.0
    %3128 = vmatpush.xpose.msra.mxu0 0.0
    %3129 = vmatpush.xpose.msra.mxu0 0.0
    %3130 = vmatpush.xpose.msra.mxu0 0.0
    %3131 = vmatpush.xpose.msra.mxu0 0.0
    %3132 = vmatpush.xpose.msra.mxu0 0.0
    %3133 = vmatpush.xpose.msra.mxu0 %v3116
    %3134 = vmatmul.f32.gmra.mxu0 %v3114
    %v3135 = vpop.f32.mrf.mxu0
    %v3136 = vadd.f32 0.0, %v3135
    %3137 = vdwg.mxu0
    %3138 = vrot.lane.b32.xlu0 %v190, 112
    %v3139 = vpop.permute.xlu0 %3138
    %3140 = vrot.lane.b32.xlu0 %v259, 112
    %v3141 = vpop.permute.xlu0 %3140
    %v3142 = vsel %vm264, %v3139, 0
    %v3144 = vsel %vm264, %v3141, 0
    %3146 = vmatpush.xpose.msra.mxu0 0.0
    %3147 = vmatpush.xpose.msra.mxu0 0.0
    %3148 = vmatpush.xpose.msra.mxu0 0.0
    %3149 = vmatpush.xpose.msra.mxu0 0.0
    %3150 = vmatpush.xpose.msra.mxu0 0.0
    %3151 = vmatpush.xpose.msra.mxu0 0.0
    %3152 = vmatpush.xpose.msra.mxu0 0.0
    %3153 = vmatpush.xpose.msra.mxu0 0.0
    %3154 = vmatpush.xpose.msra.mxu0 0.0
    %3155 = vmatpush.xpose.msra.mxu0 0.0
    %3156 = vmatpush.xpose.msra.mxu0 0.0
    %3157 = vmatpush.xpose.msra.mxu0 0.0
    %3158 = vmatpush.xpose.msra.mxu0 0.0
    %3159 = vmatpush.xpose.msra.mxu0 0.0
    %3160 = vmatpush.xpose.msra.mxu0 0.0
    %3161 = vmatpush.xpose.msra.mxu0 %v3144
    %3162 = vmatmul.f32.gmra.mxu0 %v3142
    %v3163 = vpop.f32.mrf.mxu0
    %v3164 = vadd.f32 0.0, %v3163
    %3165 = vdwg.mxu0
    %3166 = vrot.lane.b32.xlu0 %v193, 112
    %v3167 = vpop.permute.xlu0 %3166
    %3168 = vrot.lane.b32.xlu0 %v262, 112
    %v3169 = vpop.permute.xlu0 %3168
    %v3170 = vsel %vm264, %v3167, 0
    %v3172 = vsel %vm264, %v3169, 0
    %3174 = vmatpush.xpose.msra.mxu0 0.0
    %3175 = vmatpush.xpose.msra.mxu0 0.0
    %3176 = vmatpush.xpose.msra.mxu0 0.0
    %3177 = vmatpush.xpose.msra.mxu0 0.0
    %3178 = vmatpush.xpose.msra.mxu0 0.0
    %3179 = vmatpush.xpose.msra.mxu0 0.0
    %3180 = vmatpush.xpose.msra.mxu0 0.0
    %3181 = vmatpush.xpose.msra.mxu0 0.0
    %3182 = vmatpush.xpose.msra.mxu0 0.0
    %3183 = vmatpush.xpose.msra.mxu0 0.0
    %3184 = vmatpush.xpose.msra.mxu0 0.0
    %3185 = vmatpush.xpose.msra.mxu0 0.0
    %3186 = vmatpush.xpose.msra.mxu0 0.0
    %3187 = vmatpush.xpose.msra.mxu0 0.0
    %3188 = vmatpush.xpose.msra.mxu0 0.0
    %3189 = vmatpush.xpose.msra.mxu0 %v3172
    %3190 = vmatmul.f32.gmra.mxu0 %v3170
    %v3191 = vpop.f32.mrf.mxu0
    %v3192 = vadd.f32 0.0, %v3191
    %3193 = vdwg.mxu0
    %v3194 = vsel %vm473, %v2996, -inf
    %3195 = vmax.xlane.f32.xlu0 %v3194
    %v3196 = vpop.xlane.xlu0 %3195
    %v3197 = vsel %vm473, %v3024, -inf
    %3198 = vmax.xlane.f32.xlu0 %v3197
    %v3199 = vpop.xlane.xlu0 %3198
    %v3200 = vsel %vm473, %v3052, -inf
    %3201 = vmax.xlane.f32.xlu0 %v3200
    %v3202 = vpop.xlane.xlu0 %3201
    %v3203 = vsel %vm473, %v3080, -inf
    %3204 = vmax.xlane.f32.xlu0 %v3203
    %v3205 = vpop.xlane.xlu0 %3204
    %v3206 = vsel %vm473, %v3108, -inf
    %3207 = vmax.xlane.f32.xlu0 %v3206
    %v3208 = vpop.xlane.xlu0 %3207
    %v3209 = vsel %vm473, %v3136, -inf
    %3210 = vmax.xlane.f32.xlu0 %v3209
    %v3211 = vpop.xlane.xlu0 %3210
    %v3212 = vsel %vm473, %v3164, -inf
    %3213 = vmax.xlane.f32.xlu0 %v3212
    %v3214 = vpop.xlane.xlu0 %3213
    %v3215 = vsel %vm473, %v3192, -inf
    %3216 = vmax.xlane.f32.xlu0 %v3215
    %v3217 = vpop.xlane.xlu0 %3216
    %v3218 = vsub.f32 %v2996, %v3196
    %v3219 = vsub.f32 %v3024, %v3199
    %v3220 = vsub.f32 %v3052, %v3202
    %v3221 = vsub.f32 %v3080, %v3205
    %v3222 = vsub.f32 %v3108, %v3208
    %v3223 = vsub.f32 %v3136, %v3211
    %v3224 = vsub.f32 %v3164, %v3214
    %v3225 = vsub.f32 %v3192, %v3217
    %v3226 = vmul.f32 %v3218, 1.442695
    %v3227 = vpow.pop %v3226
    %v3228 = vmul.f32 %v3219, 1.442695
    %v3229 = vpow.pop %v3228
    %v3230 = vmul.f32 %v3220, 1.442695
    %v3231 = vpow.pop %v3230
    %v3232 = vmul.f32 %v3221, 1.442695
    %v3233 = vpow.pop %v3232
    %v3234 = vmul.f32 %v3222, 1.442695
    %v3235 = vpow.pop %v3234
    %v3236 = vmul.f32 %v3223, 1.442695
    %v3237 = vpow.pop %v3236
    %v3238 = vmul.f32 %v3224, 1.442695
    %v3239 = vpow.pop %v3238
    %v3240 = vmul.f32 %v3225, 1.442695
    %v3241 = vpow.pop %v3240
    %v3242 = vsel %vm473, %v3227, 0.0
    %3243 = vadd.xlane.f32.xlu0 %v3242
    %v3244 = vpop.xlane.xlu0 %3243
    %v3245 = vsel %vm473, %v3229, 0.0
    %3246 = vadd.xlane.f32.xlu0 %v3245
    %v3247 = vpop.xlane.xlu0 %3246
    %v3248 = vsel %vm473, %v3231, 0.0
    %3249 = vadd.xlane.f32.xlu0 %v3248
    %v3250 = vpop.xlane.xlu0 %3249
    %v3251 = vsel %vm473, %v3233, 0.0
    %3252 = vadd.xlane.f32.xlu0 %v3251
    %v3253 = vpop.xlane.xlu0 %3252
    %v3254 = vsel %vm473, %v3235, 0.0
    %3255 = vadd.xlane.f32.xlu0 %v3254
    %v3256 = vpop.xlane.xlu0 %3255
    %v3257 = vsel %vm473, %v3237, 0.0
    %3258 = vadd.xlane.f32.xlu0 %v3257
    %v3259 = vpop.xlane.xlu0 %3258
    %v3260 = vsel %vm473, %v3239, 0.0
    %3261 = vadd.xlane.f32.xlu0 %v3260
    %v3262 = vpop.xlane.xlu0 %3261
    %v3263 = vsel %vm473, %v3241, 0.0
    %3264 = vadd.xlane.f32.xlu0 %v3263
    %v3265 = vpop.xlane.xlu0 %3264
    %3266 = vrot.lane.b32.xlu0 %v241, 80
    %v3267 = vpop.permute.xlu0 %3266
    %v3270 = vsel %vm473, %v3227, 0
    %3272 = vmatpush.msra.mxu0 0.0
    %3273 = vmatpush.msra.mxu0 0.0
    %3274 = vmatpush.msra.mxu0 0.0
    %3275 = vmatpush.msra.mxu0 0.0
    %3276 = vmatpush.msra.mxu0 0.0
    %3277 = vmatpush.msra.mxu0 0.0
    %3278 = vmatpush.msra.mxu0 0.0
    %3279 = vmatpush.msra.mxu0 0.0
    %3280 = vmatpush.msra.mxu0 0.0
    %3281 = vmatpush.msra.mxu0 0.0
    %3282 = vmatpush.msra.mxu0 0.0
    %3283 = vmatpush.msra.mxu0 0.0
    %3284 = vmatpush.msra.mxu0 0.0
    %3285 = vmatpush.msra.mxu0 0.0
    %3286 = vmatpush.msra.mxu0 0.0
    %3287 = vmatpush.msra.mxu0 %v3267
    %3288 = vmatmul.f32.gmra.mxu0 %v3270
    %v3289 = vpop.f32.mrf.mxu0
    %v3290 = vadd.f32 0.0, %v3289
    %3291 = vdwg.mxu0
    %3292 = vrot.lane.b32.xlu0 %v244, 80
    %v3293 = vpop.permute.xlu0 %3292
    %v3296 = vsel %vm473, %v3229, 0
    %3298 = vmatpush.msra.mxu0 0.0
    %3299 = vmatpush.msra.mxu0 0.0
    %3300 = vmatpush.msra.mxu0 0.0
    %3301 = vmatpush.msra.mxu0 0.0
    %3302 = vmatpush.msra.mxu0 0.0
    %3303 = vmatpush.msra.mxu0 0.0
    %3304 = vmatpush.msra.mxu0 0.0
    %3305 = vmatpush.msra.mxu0 0.0
    %3306 = vmatpush.msra.mxu0 0.0
    %3307 = vmatpush.msra.mxu0 0.0
    %3308 = vmatpush.msra.mxu0 0.0
    %3309 = vmatpush.msra.mxu0 0.0
    %3310 = vmatpush.msra.mxu0 0.0
    %3311 = vmatpush.msra.mxu0 0.0
    %3312 = vmatpush.msra.mxu0 0.0
    %3313 = vmatpush.msra.mxu0 %v3293
    %3314 = vmatmul.f32.gmra.mxu0 %v3296
    %v3315 = vpop.f32.mrf.mxu0
    %v3316 = vadd.f32 0.0, %v3315
    %3317 = vdwg.mxu0
    %3318 = vrot.lane.b32.xlu0 %v247, 80
    %v3319 = vpop.permute.xlu0 %3318
    %v3322 = vsel %vm473, %v3231, 0
    %3324 = vmatpush.msra.mxu0 0.0
    %3325 = vmatpush.msra.mxu0 0.0
    %3326 = vmatpush.msra.mxu0 0.0
    %3327 = vmatpush.msra.mxu0 0.0
    %3328 = vmatpush.msra.mxu0 0.0
    %3329 = vmatpush.msra.mxu0 0.0
    %3330 = vmatpush.msra.mxu0 0.0
    %3331 = vmatpush.msra.mxu0 0.0
    %3332 = vmatpush.msra.mxu0 0.0
    %3333 = vmatpush.msra.mxu0 0.0
    %3334 = vmatpush.msra.mxu0 0.0
    %3335 = vmatpush.msra.mxu0 0.0
    %3336 = vmatpush.msra.mxu0 0.0
    %3337 = vmatpush.msra.mxu0 0.0
    %3338 = vmatpush.msra.mxu0 0.0
    %3339 = vmatpush.msra.mxu0 %v3319
    %3340 = vmatmul.f32.gmra.mxu0 %v3322
    %v3341 = vpop.f32.mrf.mxu0
    %v3342 = vadd.f32 0.0, %v3341
    %3343 = vdwg.mxu0
    %3344 = vrot.lane.b32.xlu0 %v250, 80
    %v3345 = vpop.permute.xlu0 %3344
    %v3348 = vsel %vm473, %v3233, 0
    %3350 = vmatpush.msra.mxu0 0.0
    %3351 = vmatpush.msra.mxu0 0.0
    %3352 = vmatpush.msra.mxu0 0.0
    %3353 = vmatpush.msra.mxu0 0.0
    %3354 = vmatpush.msra.mxu0 0.0
    %3355 = vmatpush.msra.mxu0 0.0
    %3356 = vmatpush.msra.mxu0 0.0
    %3357 = vmatpush.msra.mxu0 0.0
    %3358 = vmatpush.msra.mxu0 0.0
    %3359 = vmatpush.msra.mxu0 0.0
    %3360 = vmatpush.msra.mxu0 0.0
    %3361 = vmatpush.msra.mxu0 0.0
    %3362 = vmatpush.msra.mxu0 0.0
    %3363 = vmatpush.msra.mxu0 0.0
    %3364 = vmatpush.msra.mxu0 0.0
    %3365 = vmatpush.msra.mxu0 %v3345
    %3366 = vmatmul.f32.gmra.mxu0 %v3348
    %v3367 = vpop.f32.mrf.mxu0
    %v3368 = vadd.f32 0.0, %v3367
    %3369 = vdwg.mxu0
    %3370 = vrot.lane.b32.xlu0 %v253, 80
    %v3371 = vpop.permute.xlu0 %3370
    %v3374 = vsel %vm473, %v3235, 0
    %3376 = vmatpush.msra.mxu0 0.0
    %3377 = vmatpush.msra.mxu0 0.0
    %3378 = vmatpush.msra.mxu0 0.0
    %3379 = vmatpush.msra.mxu0 0.0
    %3380 = vmatpush.msra.mxu0 0.0
    %3381 = vmatpush.msra.mxu0 0.0
    %3382 = vmatpush.msra.mxu0 0.0
    %3383 = vmatpush.msra.mxu0 0.0
    %3384 = vmatpush.msra.mxu0 0.0
    %3385 = vmatpush.msra.mxu0 0.0
    %3386 = vmatpush.msra.mxu0 0.0
    %3387 = vmatpush.msra.mxu0 0.0
    %3388 = vmatpush.msra.mxu0 0.0
    %3389 = vmatpush.msra.mxu0 0.0
    %3390 = vmatpush.msra.mxu0 0.0
    %3391 = vmatpush.msra.mxu0 %v3371
    %3392 = vmatmul.f32.gmra.mxu0 %v3374
    %v3393 = vpop.f32.mrf.mxu0
    %v3394 = vadd.f32 0.0, %v3393
    %3395 = vdwg.mxu0
    %3396 = vrot.lane.b32.xlu0 %v256, 80
    %v3397 = vpop.permute.xlu0 %3396
    %v3400 = vsel %vm473, %v3237, 0
    %3402 = vmatpush.msra.mxu0 0.0
    %3403 = vmatpush.msra.mxu0 0.0
    %3404 = vmatpush.msra.mxu0 0.0
    %3405 = vmatpush.msra.mxu0 0.0
    %3406 = vmatpush.msra.mxu0 0.0
    %3407 = vmatpush.msra.mxu0 0.0
    %3408 = vmatpush.msra.mxu0 0.0
    %3409 = vmatpush.msra.mxu0 0.0
    %3410 = vmatpush.msra.mxu0 0.0
    %3411 = vmatpush.msra.mxu0 0.0
    %3412 = vmatpush.msra.mxu0 0.0
    %3413 = vmatpush.msra.mxu0 0.0
    %3414 = vmatpush.msra.mxu0 0.0
    %3415 = vmatpush.msra.mxu0 0.0
    %3416 = vmatpush.msra.mxu0 0.0
    %3417 = vmatpush.msra.mxu0 %v3397
    %3418 = vmatmul.f32.gmra.mxu0 %v3400
    %v3419 = vpop.f32.mrf.mxu0
    %v3420 = vadd.f32 0.0, %v3419
    %3421 = vdwg.mxu0
    %3422 = vrot.lane.b32.xlu0 %v259, 80
    %v3423 = vpop.permute.xlu0 %3422
    %v3426 = vsel %vm473, %v3239, 0
    %3428 = vmatpush.msra.mxu0 0.0
    %3429 = vmatpush.msra.mxu0 0.0
    %3430 = vmatpush.msra.mxu0 0.0
    %3431 = vmatpush.msra.mxu0 0.0
    %3432 = vmatpush.msra.mxu0 0.0
    %3433 = vmatpush.msra.mxu0 0.0
    %3434 = vmatpush.msra.mxu0 0.0
    %3435 = vmatpush.msra.mxu0 0.0
    %3436 = vmatpush.msra.mxu0 0.0
    %3437 = vmatpush.msra.mxu0 0.0
    %3438 = vmatpush.msra.mxu0 0.0
    %3439 = vmatpush.msra.mxu0 0.0
    %3440 = vmatpush.msra.mxu0 0.0
    %3441 = vmatpush.msra.mxu0 0.0
    %3442 = vmatpush.msra.mxu0 0.0
    %3443 = vmatpush.msra.mxu0 %v3423
    %3444 = vmatmul.f32.gmra.mxu0 %v3426
    %v3445 = vpop.f32.mrf.mxu0
    %v3446 = vadd.f32 0.0, %v3445
    %3447 = vdwg.mxu0
    %3448 = vrot.lane.b32.xlu0 %v262, 80
    %v3449 = vpop.permute.xlu0 %3448
    %v3452 = vsel %vm473, %v3241, 0
    %3454 = vmatpush.msra.mxu0 0.0
    %3455 = vmatpush.msra.mxu0 0.0
    %3456 = vmatpush.msra.mxu0 0.0
    %3457 = vmatpush.msra.mxu0 0.0
    %3458 = vmatpush.msra.mxu0 0.0
    %3459 = vmatpush.msra.mxu0 0.0
    %3460 = vmatpush.msra.mxu0 0.0
    %3461 = vmatpush.msra.mxu0 0.0
    %3462 = vmatpush.msra.mxu0 0.0
    %3463 = vmatpush.msra.mxu0 0.0
    %3464 = vmatpush.msra.mxu0 0.0
    %3465 = vmatpush.msra.mxu0 0.0
    %3466 = vmatpush.msra.mxu0 0.0
    %3467 = vmatpush.msra.mxu0 0.0
    %3468 = vmatpush.msra.mxu0 0.0
    %3469 = vmatpush.msra.mxu0 %v3449
    %3470 = vmatmul.f32.gmra.mxu0 %v3452
    %v3471 = vpop.f32.mrf.mxu0
    %v3472 = vadd.f32 0.0, %v3471
    %3473 = vdwg.mxu0
    %v3474 = vrcp.pop %v3244
    %v3475 = vmul.f32 %v3244, %v3474
    %v3476 = vsub.f32 1.0, %v3475
    %v3477 = vmul.f32 %v3474, %v3476
    %v3478 = vadd.f32 %v3474, %v3477
    %vm3479 = vweird.f32 %v3244
    %vm3480 = vweird.f32 %v3474
    %vm3481 = vmor %vm3479, %vm3480
    %v3482 = vsel %vm3481, %v3474, %v3478
    %v3483 = vand.u32 2147483647, %v3244
    %vm3484 = vcmp.eq.f32.partialorder %v3483, 8.507059e+37
    %v3485 = vand.u32 %v3244, 2147483648
    %v3486 = vor.u32 1.1754944e-38, %v3485
    %v3487 = vsel %vm3484, %v3486, %v3482
    %v3488 = vrcp.pop %v3247
    %v3489 = vmul.f32 %v3247, %v3488
    %v3490 = vsub.f32 1.0, %v3489
    %v3491 = vmul.f32 %v3488, %v3490
    %v3492 = vadd.f32 %v3488, %v3491
    %vm3493 = vweird.f32 %v3247
    %vm3494 = vweird.f32 %v3488
    %vm3495 = vmor %vm3493, %vm3494
    %v3496 = vsel %vm3495, %v3488, %v3492
    %v3497 = vand.u32 2147483647, %v3247
    %vm3498 = vcmp.eq.f32.partialorder %v3497, 8.507059e+37
    %v3499 = vand.u32 %v3247, 2147483648
    %v3500 = vor.u32 1.1754944e-38, %v3499
    %v3501 = vsel %vm3498, %v3500, %v3496
    %v3502 = vrcp.pop %v3250
    %v3503 = vmul.f32 %v3250, %v3502
    %v3504 = vsub.f32 1.0, %v3503
    %v3505 = vmul.f32 %v3502, %v3504
    %v3506 = vadd.f32 %v3502, %v3505
    %vm3507 = vweird.f32 %v3250
    %vm3508 = vweird.f32 %v3502
    %vm3509 = vmor %vm3507, %vm3508
    %v3510 = vsel %vm3509, %v3502, %v3506
    %v3511 = vand.u32 2147483647, %v3250
    %vm3512 = vcmp.eq.f32.partialorder %v3511, 8.507059e+37
    %v3513 = vand.u32 %v3250, 2147483648
    %v3514 = vor.u32 1.1754944e-38, %v3513
    %v3515 = vsel %vm3512, %v3514, %v3510
    %v3516 = vrcp.pop %v3253
    %v3517 = vmul.f32 %v3253, %v3516
    %v3518 = vsub.f32 1.0, %v3517
    %v3519 = vmul.f32 %v3516, %v3518
    %v3520 = vadd.f32 %v3516, %v3519
    %vm3521 = vweird.f32 %v3253
    %vm3522 = vweird.f32 %v3516
    %vm3523 = vmor %vm3521, %vm3522
    %v3524 = vsel %vm3523, %v3516, %v3520
    %v3525 = vand.u32 2147483647, %v3253
    %vm3526 = vcmp.eq.f32.partialorder %v3525, 8.507059e+37
    %v3527 = vand.u32 %v3253, 2147483648
    %v3528 = vor.u32 1.1754944e-38, %v3527
    %v3529 = vsel %vm3526, %v3528, %v3524
    %v3530 = vrcp.pop %v3256
    %v3531 = vmul.f32 %v3256, %v3530
    %v3532 = vsub.f32 1.0, %v3531
    %v3533 = vmul.f32 %v3530, %v3532
    %v3534 = vadd.f32 %v3530, %v3533
    %vm3535 = vweird.f32 %v3256
    %vm3536 = vweird.f32 %v3530
    %vm3537 = vmor %vm3535, %vm3536
    %v3538 = vsel %vm3537, %v3530, %v3534
    %v3539 = vand.u32 2147483647, %v3256
    %vm3540 = vcmp.eq.f32.partialorder %v3539, 8.507059e+37
    %v3541 = vand.u32 %v3256, 2147483648
    %v3542 = vor.u32 1.1754944e-38, %v3541
    %v3543 = vsel %vm3540, %v3542, %v3538
    %v3544 = vrcp.pop %v3259
    %v3545 = vmul.f32 %v3259, %v3544
    %v3546 = vsub.f32 1.0, %v3545
    %v3547 = vmul.f32 %v3544, %v3546
    %v3548 = vadd.f32 %v3544, %v3547
    %vm3549 = vweird.f32 %v3259
    %vm3550 = vweird.f32 %v3544
    %vm3551 = vmor %vm3549, %vm3550
    %v3552 = vsel %vm3551, %v3544, %v3548
    %v3553 = vand.u32 2147483647, %v3259
    %vm3554 = vcmp.eq.f32.partialorder %v3553, 8.507059e+37
    %v3555 = vand.u32 %v3259, 2147483648
    %v3556 = vor.u32 1.1754944e-38, %v3555
    %v3557 = vsel %vm3554, %v3556, %v3552
    %v3558 = vrcp.pop %v3262
    %v3559 = vmul.f32 %v3262, %v3558
    %v3560 = vsub.f32 1.0, %v3559
    %v3561 = vmul.f32 %v3558, %v3560
    %v3562 = vadd.f32 %v3558, %v3561
    %vm3563 = vweird.f32 %v3262
    %vm3564 = vweird.f32 %v3558
    %vm3565 = vmor %vm3563, %vm3564
    %v3566 = vsel %vm3565, %v3558, %v3562
    %v3567 = vand.u32 2147483647, %v3262
    %vm3568 = vcmp.eq.f32.partialorder %v3567, 8.507059e+37
    %v3569 = vand.u32 %v3262, 2147483648
    %v3570 = vor.u32 1.1754944e-38, %v3569
    %v3571 = vsel %vm3568, %v3570, %v3566
    %v3572 = vrcp.pop %v3265
    %v3573 = vmul.f32 %v3265, %v3572
    %v3574 = vsub.f32 1.0, %v3573
    %v3575 = vmul.f32 %v3572, %v3574
    %v3576 = vadd.f32 %v3572, %v3575
    %vm3577 = vweird.f32 %v3265
    %vm3578 = vweird.f32 %v3572
    %vm3579 = vmor %vm3577, %vm3578
    %v3580 = vsel %vm3579, %v3572, %v3576
    %v3581 = vand.u32 2147483647, %v3265
    %vm3582 = vcmp.eq.f32.partialorder %v3581, 8.507059e+37
    %v3583 = vand.u32 %v3265, 2147483648
    %v3584 = vor.u32 1.1754944e-38, %v3583
    %v3585 = vsel %vm3582, %v3584, %v3580
    %v3586 = vmul.f32 %v3290, %v3487
    %v3587 = vmul.f32 %v3316, %v3501
    %v3588 = vmul.f32 %v3342, %v3515
    %v3589 = vmul.f32 %v3368, %v3529
    %v3590 = vmul.f32 %v3394, %v3543
    %v3591 = vmul.f32 %v3420, %v3557
    %v3592 = vmul.f32 %v3446, %v3571
    %v3593 = vmul.f32 %v3472, %v3585
    %v3594 = vsel %vm264, %v3586, 0.0
    %v3595 = vrot.slane %v3594, 4
    %v3596 = vadd.f32 %v3594, %v3595
    %v3597 = vrot.slane %v3596, 2
    %v3598 = vadd.f32 %v3596, %v3597
    %v3599 = vrot.slane %v3598, 1
    %v3600 = vadd.f32 %v3598, %v3599
    %v3601 = vsel %vm264, %v3587, 0.0
    %v3602 = vrot.slane %v3601, 4
    %v3603 = vadd.f32 %v3601, %v3602
    %v3604 = vrot.slane %v3603, 2
    %v3605 = vadd.f32 %v3603, %v3604
    %v3606 = vrot.slane %v3605, 1
    %v3607 = vadd.f32 %v3605, %v3606
    %v3608 = vsel %vm264, %v3588, 0.0
    %v3609 = vrot.slane %v3608, 4
    %v3610 = vadd.f32 %v3608, %v3609
    %v3611 = vrot.slane %v3610, 2
    %v3612 = vadd.f32 %v3610, %v3611
    %v3613 = vrot.slane %v3612, 1
    %v3614 = vadd.f32 %v3612, %v3613
    %v3615 = vsel %vm264, %v3589, 0.0
    %v3616 = vrot.slane %v3615, 4
    %v3617 = vadd.f32 %v3615, %v3616
    %v3618 = vrot.slane %v3617, 2
    %v3619 = vadd.f32 %v3617, %v3618
    %v3620 = vrot.slane %v3619, 1
    %v3621 = vadd.f32 %v3619, %v3620
    %v3622 = vsel %vm264, %v3590, 0.0
    %v3623 = vrot.slane %v3622, 4
    %v3624 = vadd.f32 %v3622, %v3623
    %v3625 = vrot.slane %v3624, 2
    %v3626 = vadd.f32 %v3624, %v3625
    %v3627 = vrot.slane %v3626, 1
    %v3628 = vadd.f32 %v3626, %v3627
    %v3629 = vsel %vm264, %v3591, 0.0
    %v3630 = vrot.slane %v3629, 4
    %v3631 = vadd.f32 %v3629, %v3630
    %v3632 = vrot.slane %v3631, 2
    %v3633 = vadd.f32 %v3631, %v3632
    %v3634 = vrot.slane %v3633, 1
    %v3635 = vadd.f32 %v3633, %v3634
    %v3636 = vsel %vm264, %v3592, 0.0
    %v3637 = vrot.slane %v3636, 4
    %v3638 = vadd.f32 %v3636, %v3637
    %v3639 = vrot.slane %v3638, 2
    %v3640 = vadd.f32 %v3638, %v3639
    %v3641 = vrot.slane %v3640, 1
    %v3642 = vadd.f32 %v3640, %v3641
    %v3643 = vsel %vm264, %v3593, 0.0
    %v3644 = vrot.slane %v3643, 4
    %v3645 = vadd.f32 %v3643, %v3644
    %v3646 = vrot.slane %v3645, 2
    %v3647 = vadd.f32 %v3645, %v3646
    %v3648 = vrot.slane %v3647, 1
    %v3649 = vadd.f32 %v3647, %v3648
    %3650 = vrot.lane.b32.xlu0 %v172, 108
    %v3651 = vpop.permute.xlu0 %3650
    %3652 = vrot.lane.b32.xlu0 %v241, 108
    %v3653 = vpop.permute.xlu0 %3652
    %v3654 = vsel %vm264, %v3651, 0
    %v3656 = vsel %vm264, %v3653, 0
    %3658 = vmatpush.xpose.msra.mxu0 0.0
    %3659 = vmatpush.xpose.msra.mxu0 0.0
    %3660 = vmatpush.xpose.msra.mxu0 0.0
    %3661 = vmatpush.xpose.msra.mxu0 0.0
    %3662 = vmatpush.xpose.msra.mxu0 0.0
    %3663 = vmatpush.xpose.msra.mxu0 0.0
    %3664 = vmatpush.xpose.msra.mxu0 0.0
    %3665 = vmatpush.xpose.msra.mxu0 0.0
    %3666 = vmatpush.xpose.msra.mxu0 0.0
    %3667 = vmatpush.xpose.msra.mxu0 0.0
    %3668 = vmatpush.xpose.msra.mxu0 0.0
    %3669 = vmatpush.xpose.msra.mxu0 0.0
    %3670 = vmatpush.xpose.msra.mxu0 0.0
    %3671 = vmatpush.xpose.msra.mxu0 0.0
    %3672 = vmatpush.xpose.msra.mxu0 0.0
    %3673 = vmatpush.xpose.msra.mxu0 %v3656
    %3674 = vmatmul.f32.gmra.mxu0 %v3654
    %v3675 = vpop.f32.mrf.mxu0
    %v3676 = vadd.f32 0.0, %v3675
    %3677 = vdwg.mxu0
    %3678 = vrot.lane.b32.xlu0 %v175, 108
    %v3679 = vpop.permute.xlu0 %3678
    %3680 = vrot.lane.b32.xlu0 %v244, 108
    %v3681 = vpop.permute.xlu0 %3680
    %v3682 = vsel %vm264, %v3679, 0
    %v3684 = vsel %vm264, %v3681, 0
    %3686 = vmatpush.xpose.msra.mxu0 0.0
    %3687 = vmatpush.xpose.msra.mxu0 0.0
    %3688 = vmatpush.xpose.msra.mxu0 0.0
    %3689 = vmatpush.xpose.msra.mxu0 0.0
    %3690 = vmatpush.xpose.msra.mxu0 0.0
    %3691 = vmatpush.xpose.msra.mxu0 0.0
    %3692 = vmatpush.xpose.msra.mxu0 0.0
    %3693 = vmatpush.xpose.msra.mxu0 0.0
    %3694 = vmatpush.xpose.msra.mxu0 0.0
    %3695 = vmatpush.xpose.msra.mxu0 0.0
    %3696 = vmatpush.xpose.msra.mxu0 0.0
    %3697 = vmatpush.xpose.msra.mxu0 0.0
    %3698 = vmatpush.xpose.msra.mxu0 0.0
    %3699 = vmatpush.xpose.msra.mxu0 0.0
    %3700 = vmatpush.xpose.msra.mxu0 0.0
    %3701 = vmatpush.xpose.msra.mxu0 %v3684
    %3702 = vmatmul.f32.gmra.mxu0 %v3682
    %v3703 = vpop.f32.mrf.mxu0
    %v3704 = vadd.f32 0.0, %v3703
    %3705 = vdwg.mxu0
    %3706 = vrot.lane.b32.xlu0 %v178, 108
    %v3707 = vpop.permute.xlu0 %3706
    %3708 = vrot.lane.b32.xlu0 %v247, 108
    %v3709 = vpop.permute.xlu0 %3708
    %v3710 = vsel %vm264, %v3707, 0
    %v3712 = vsel %vm264, %v3709, 0
    %3714 = vmatpush.xpose.msra.mxu0 0.0
    %3715 = vmatpush.xpose.msra.mxu0 0.0
    %3716 = vmatpush.xpose.msra.mxu0 0.0
    %3717 = vmatpush.xpose.msra.mxu0 0.0
    %3718 = vmatpush.xpose.msra.mxu0 0.0
    %3719 = vmatpush.xpose.msra.mxu0 0.0
    %3720 = vmatpush.xpose.msra.mxu0 0.0
    %3721 = vmatpush.xpose.msra.mxu0 0.0
    %3722 = vmatpush.xpose.msra.mxu0 0.0
    %3723 = vmatpush.xpose.msra.mxu0 0.0
    %3724 = vmatpush.xpose.msra.mxu0 0.0
    %3725 = vmatpush.xpose.msra.mxu0 0.0
    %3726 = vmatpush.xpose.msra.mxu0 0.0
    %3727 = vmatpush.xpose.msra.mxu0 0.0
    %3728 = vmatpush.xpose.msra.mxu0 0.0
    %3729 = vmatpush.xpose.msra.mxu0 %v3712
    %3730 = vmatmul.f32.gmra.mxu0 %v3710
    %v3731 = vpop.f32.mrf.mxu0
    %v3732 = vadd.f32 0.0, %v3731
    %3733 = vdwg.mxu0
    %3734 = vrot.lane.b32.xlu0 %v181, 108
    %v3735 = vpop.permute.xlu0 %3734
    %3736 = vrot.lane.b32.xlu0 %v250, 108
    %v3737 = vpop.permute.xlu0 %3736
    %v3738 = vsel %vm264, %v3735, 0
    %v3740 = vsel %vm264, %v3737, 0
    %3742 = vmatpush.xpose.msra.mxu0 0.0
    %3743 = vmatpush.xpose.msra.mxu0 0.0
    %3744 = vmatpush.xpose.msra.mxu0 0.0
    %3745 = vmatpush.xpose.msra.mxu0 0.0
    %3746 = vmatpush.xpose.msra.mxu0 0.0
    %3747 = vmatpush.xpose.msra.mxu0 0.0
    %3748 = vmatpush.xpose.msra.mxu0 0.0
    %3749 = vmatpush.xpose.msra.mxu0 0.0
    %3750 = vmatpush.xpose.msra.mxu0 0.0
    %3751 = vmatpush.xpose.msra.mxu0 0.0
    %3752 = vmatpush.xpose.msra.mxu0 0.0
    %3753 = vmatpush.xpose.msra.mxu0 0.0
    %3754 = vmatpush.xpose.msra.mxu0 0.0
    %3755 = vmatpush.xpose.msra.mxu0 0.0
    %3756 = vmatpush.xpose.msra.mxu0 0.0
    %3757 = vmatpush.xpose.msra.mxu0 %v3740
    %3758 = vmatmul.f32.gmra.mxu0 %v3738
    %v3759 = vpop.f32.mrf.mxu0
    %v3760 = vadd.f32 0.0, %v3759
    %3761 = vdwg.mxu0
    %3762 = vrot.lane.b32.xlu0 %v184, 108
    %v3763 = vpop.permute.xlu0 %3762
    %3764 = vrot.lane.b32.xlu0 %v253, 108
    %v3765 = vpop.permute.xlu0 %3764
    %v3766 = vsel %vm264, %v3763, 0
    %v3768 = vsel %vm264, %v3765, 0
    %3770 = vmatpush.xpose.msra.mxu0 0.0
    %3771 = vmatpush.xpose.msra.mxu0 0.0
    %3772 = vmatpush.xpose.msra.mxu0 0.0
    %3773 = vmatpush.xpose.msra.mxu0 0.0
    %3774 = vmatpush.xpose.msra.mxu0 0.0
    %3775 = vmatpush.xpose.msra.mxu0 0.0
    %3776 = vmatpush.xpose.msra.mxu0 0.0
    %3777 = vmatpush.xpose.msra.mxu0 0.0
    %3778 = vmatpush.xpose.msra.mxu0 0.0
    %3779 = vmatpush.xpose.msra.mxu0 0.0
    %3780 = vmatpush.xpose.msra.mxu0 0.0
    %3781 = vmatpush.xpose.msra.mxu0 0.0
    %3782 = vmatpush.xpose.msra.mxu0 0.0
    %3783 = vmatpush.xpose.msra.mxu0 0.0
    %3784 = vmatpush.xpose.msra.mxu0 0.0
    %3785 = vmatpush.xpose.msra.mxu0 %v3768
    %3786 = vmatmul.f32.gmra.mxu0 %v3766
    %v3787 = vpop.f32.mrf.mxu0
    %v3788 = vadd.f32 0.0, %v3787
    %3789 = vdwg.mxu0
    %3790 = vrot.lane.b32.xlu0 %v187, 108
    %v3791 = vpop.permute.xlu0 %3790
    %3792 = vrot.lane.b32.xlu0 %v256, 108
    %v3793 = vpop.permute.xlu0 %3792
    %v3794 = vsel %vm264, %v3791, 0
    %v3796 = vsel %vm264, %v3793, 0
    %3798 = vmatpush.xpose.msra.mxu0 0.0
    %3799 = vmatpush.xpose.msra.mxu0 0.0
    %3800 = vmatpush.xpose.msra.mxu0 0.0
    %3801 = vmatpush.xpose.msra.mxu0 0.0
    %3802 = vmatpush.xpose.msra.mxu0 0.0
    %3803 = vmatpush.xpose.msra.mxu0 0.0
    %3804 = vmatpush.xpose.msra.mxu0 0.0
    %3805 = vmatpush.xpose.msra.mxu0 0.0
    %3806 = vmatpush.xpose.msra.mxu0 0.0
    %3807 = vmatpush.xpose.msra.mxu0 0.0
    %3808 = vmatpush.xpose.msra.mxu0 0.0
    %3809 = vmatpush.xpose.msra.mxu0 0.0
    %3810 = vmatpush.xpose.msra.mxu0 0.0
    %3811 = vmatpush.xpose.msra.mxu0 0.0
    %3812 = vmatpush.xpose.msra.mxu0 0.0
    %3813 = vmatpush.xpose.msra.mxu0 %v3796
    %3814 = vmatmul.f32.gmra.mxu0 %v3794
    %v3815 = vpop.f32.mrf.mxu0
    %v3816 = vadd.f32 0.0, %v3815
    %3817 = vdwg.mxu0
    %3818 = vrot.lane.b32.xlu0 %v190, 108
    %v3819 = vpop.permute.xlu0 %3818
    %3820 = vrot.lane.b32.xlu0 %v259, 108
    %v3821 = vpop.permute.xlu0 %3820
    %v3822 = vsel %vm264, %v3819, 0
    %v3824 = vsel %vm264, %v3821, 0
    %3826 = vmatpush.xpose.msra.mxu0 0.0
    %3827 = vmatpush.xpose.msra.mxu0 0.0
    %3828 = vmatpush.xpose.msra.mxu0 0.0
    %3829 = vmatpush.xpose.msra.mxu0 0.0
    %3830 = vmatpush.xpose.msra.mxu0 0.0
    %3831 = vmatpush.xpose.msra.mxu0 0.0
    %3832 = vmatpush.xpose.msra.mxu0 0.0
    %3833 = vmatpush.xpose.msra.mxu0 0.0
    %3834 = vmatpush.xpose.msra.mxu0 0.0
    %3835 = vmatpush.xpose.msra.mxu0 0.0
    %3836 = vmatpush.xpose.msra.mxu0 0.0
    %3837 = vmatpush.xpose.msra.mxu0 0.0
    %3838 = vmatpush.xpose.msra.mxu0 0.0
    %3839 = vmatpush.xpose.msra.mxu0 0.0
    %3840 = vmatpush.xpose.msra.mxu0 0.0
    %3841 = vmatpush.xpose.msra.mxu0 %v3824
    %3842 = vmatmul.f32.gmra.mxu0 %v3822
    %v3843 = vpop.f32.mrf.mxu0
    %v3844 = vadd.f32 0.0, %v3843
    %3845 = vdwg.mxu0
    %3846 = vrot.lane.b32.xlu0 %v193, 108
    %v3847 = vpop.permute.xlu0 %3846
    %3848 = vrot.lane.b32.xlu0 %v262, 108
    %v3849 = vpop.permute.xlu0 %3848
    %v3850 = vsel %vm264, %v3847, 0
    %v3852 = vsel %vm264, %v3849, 0
    %3854 = vmatpush.xpose.msra.mxu0 0.0
    %3855 = vmatpush.xpose.msra.mxu0 0.0
    %3856 = vmatpush.xpose.msra.mxu0 0.0
    %3857 = vmatpush.xpose.msra.mxu0 0.0
    %3858 = vmatpush.xpose.msra.mxu0 0.0
    %3859 = vmatpush.xpose.msra.mxu0 0.0
    %3860 = vmatpush.xpose.msra.mxu0 0.0
    %3861 = vmatpush.xpose.msra.mxu0 0.0
    %3862 = vmatpush.xpose.msra.mxu0 0.0
    %3863 = vmatpush.xpose.msra.mxu0 0.0
    %3864 = vmatpush.xpose.msra.mxu0 0.0
    %3865 = vmatpush.xpose.msra.mxu0 0.0
    %3866 = vmatpush.xpose.msra.mxu0 0.0
    %3867 = vmatpush.xpose.msra.mxu0 0.0
    %3868 = vmatpush.xpose.msra.mxu0 0.0
    %3869 = vmatpush.xpose.msra.mxu0 %v3852
    %3870 = vmatmul.f32.gmra.mxu0 %v3850
    %v3871 = vpop.f32.mrf.mxu0
    %v3872 = vadd.f32 0.0, %v3871
    %3873 = vdwg.mxu0
    %v3874 = vsel %vm473, %v3676, -inf
    %3875 = vmax.xlane.f32.xlu0 %v3874
    %v3876 = vpop.xlane.xlu0 %3875
    %v3877 = vsel %vm473, %v3704, -inf
    %3878 = vmax.xlane.f32.xlu0 %v3877
    %v3879 = vpop.xlane.xlu0 %3878
    %v3880 = vsel %vm473, %v3732, -inf
    %3881 = vmax.xlane.f32.xlu0 %v3880
    %v3882 = vpop.xlane.xlu0 %3881
    %v3883 = vsel %vm473, %v3760, -inf
    %3884 = vmax.xlane.f32.xlu0 %v3883
    %v3885 = vpop.xlane.xlu0 %3884
    %v3886 = vsel %vm473, %v3788, -inf
    %3887 = vmax.xlane.f32.xlu0 %v3886
    %v3888 = vpop.xlane.xlu0 %3887
    %v3889 = vsel %vm473, %v3816, -inf
    %3890 = vmax.xlane.f32.xlu0 %v3889
    %v3891 = vpop.xlane.xlu0 %3890
    %v3892 = vsel %vm473, %v3844, -inf
    %3893 = vmax.xlane.f32.xlu0 %v3892
    %v3894 = vpop.xlane.xlu0 %3893
    %v3895 = vsel %vm473, %v3872, -inf
    %3896 = vmax.xlane.f32.xlu0 %v3895
    %v3897 = vpop.xlane.xlu0 %3896
    %v3898 = vsub.f32 %v3676, %v3876
    %v3899 = vsub.f32 %v3704, %v3879
    %v3900 = vsub.f32 %v3732, %v3882
    %v3901 = vsub.f32 %v3760, %v3885
    %v3902 = vsub.f32 %v3788, %v3888
    %v3903 = vsub.f32 %v3816, %v3891
    %v3904 = vsub.f32 %v3844, %v3894
    %v3905 = vsub.f32 %v3872, %v3897
    %v3906 = vmul.f32 %v3898, 1.442695
    %v3907 = vpow.pop %v3906
    %v3908 = vmul.f32 %v3899, 1.442695
    %v3909 = vpow.pop %v3908
    %v3910 = vmul.f32 %v3900, 1.442695
    %v3911 = vpow.pop %v3910
    %v3912 = vmul.f32 %v3901, 1.442695
    %v3913 = vpow.pop %v3912
    %v3914 = vmul.f32 %v3902, 1.442695
    %v3915 = vpow.pop %v3914
    %v3916 = vmul.f32 %v3903, 1.442695
    %v3917 = vpow.pop %v3916
    %v3918 = vmul.f32 %v3904, 1.442695
    %v3919 = vpow.pop %v3918
    %v3920 = vmul.f32 %v3905, 1.442695
    %v3921 = vpow.pop %v3920
    %v3922 = vsel %vm473, %v3907, 0.0
    %3923 = vadd.xlane.f32.xlu0 %v3922
    %v3924 = vpop.xlane.xlu0 %3923
    %v3925 = vsel %vm473, %v3909, 0.0
    %3926 = vadd.xlane.f32.xlu0 %v3925
    %v3927 = vpop.xlane.xlu0 %3926
    %v3928 = vsel %vm473, %v3911, 0.0
    %3929 = vadd.xlane.f32.xlu0 %v3928
    %v3930 = vpop.xlane.xlu0 %3929
    %v3931 = vsel %vm473, %v3913, 0.0
    %3932 = vadd.xlane.f32.xlu0 %v3931
    %v3933 = vpop.xlane.xlu0 %3932
    %v3934 = vsel %vm473, %v3915, 0.0
    %3935 = vadd.xlane.f32.xlu0 %v3934
    %v3936 = vpop.xlane.xlu0 %3935
    %v3937 = vsel %vm473, %v3917, 0.0
    %3938 = vadd.xlane.f32.xlu0 %v3937
    %v3939 = vpop.xlane.xlu0 %3938
    %v3940 = vsel %vm473, %v3919, 0.0
    %3941 = vadd.xlane.f32.xlu0 %v3940
    %v3942 = vpop.xlane.xlu0 %3941
    %v3943 = vsel %vm473, %v3921, 0.0
    %3944 = vadd.xlane.f32.xlu0 %v3943
    %v3945 = vpop.xlane.xlu0 %3944
    %3946 = vrot.lane.b32.xlu0 %v241, 76
    %v3947 = vpop.permute.xlu0 %3946
    %v3950 = vsel %vm473, %v3907, 0
    %3952 = vmatpush.msra.mxu0 0.0
    %3953 = vmatpush.msra.mxu0 0.0
    %3954 = vmatpush.msra.mxu0 0.0
    %3955 = vmatpush.msra.mxu0 0.0
    %3956 = vmatpush.msra.mxu0 0.0
    %3957 = vmatpush.msra.mxu0 0.0
    %3958 = vmatpush.msra.mxu0 0.0
    %3959 = vmatpush.msra.mxu0 0.0
    %3960 = vmatpush.msra.mxu0 0.0
    %3961 = vmatpush.msra.mxu0 0.0
    %3962 = vmatpush.msra.mxu0 0.0
    %3963 = vmatpush.msra.mxu0 0.0
    %3964 = vmatpush.msra.mxu0 0.0
    %3965 = vmatpush.msra.mxu0 0.0
    %3966 = vmatpush.msra.mxu0 0.0
    %3967 = vmatpush.msra.mxu0 %v3947
    %3968 = vmatmul.f32.gmra.mxu0 %v3950
    %v3969 = vpop.f32.mrf.mxu0
    %v3970 = vadd.f32 0.0, %v3969
    %3971 = vdwg.mxu0
    %3972 = vrot.lane.b32.xlu0 %v244, 76
    %v3973 = vpop.permute.xlu0 %3972
    %v3976 = vsel %vm473, %v3909, 0
    %3978 = vmatpush.msra.mxu0 0.0
    %3979 = vmatpush.msra.mxu0 0.0
    %3980 = vmatpush.msra.mxu0 0.0
    %3981 = vmatpush.msra.mxu0 0.0
    %3982 = vmatpush.msra.mxu0 0.0
    %3983 = vmatpush.msra.mxu0 0.0
    %3984 = vmatpush.msra.mxu0 0.0
    %3985 = vmatpush.msra.mxu0 0.0
    %3986 = vmatpush.msra.mxu0 0.0
    %3987 = vmatpush.msra.mxu0 0.0
    %3988 = vmatpush.msra.mxu0 0.0
    %3989 = vmatpush.msra.mxu0 0.0
    %3990 = vmatpush.msra.mxu0 0.0
    %3991 = vmatpush.msra.mxu0 0.0
    %3992 = vmatpush.msra.mxu0 0.0
    %3993 = vmatpush.msra.mxu0 %v3973
    %3994 = vmatmul.f32.gmra.mxu0 %v3976
    %v3995 = vpop.f32.mrf.mxu0
    %v3996 = vadd.f32 0.0, %v3995
    %3997 = vdwg.mxu0
    %3998 = vrot.lane.b32.xlu0 %v247, 76
    %v3999 = vpop.permute.xlu0 %3998
    %v4002 = vsel %vm473, %v3911, 0
    %4004 = vmatpush.msra.mxu0 0.0
    %4005 = vmatpush.msra.mxu0 0.0
    %4006 = vmatpush.msra.mxu0 0.0
    %4007 = vmatpush.msra.mxu0 0.0
    %4008 = vmatpush.msra.mxu0 0.0
    %4009 = vmatpush.msra.mxu0 0.0
    %4010 = vmatpush.msra.mxu0 0.0
    %4011 = vmatpush.msra.mxu0 0.0
    %4012 = vmatpush.msra.mxu0 0.0
    %4013 = vmatpush.msra.mxu0 0.0
    %4014 = vmatpush.msra.mxu0 0.0
    %4015 = vmatpush.msra.mxu0 0.0
    %4016 = vmatpush.msra.mxu0 0.0
    %4017 = vmatpush.msra.mxu0 0.0
    %4018 = vmatpush.msra.mxu0 0.0
    %4019 = vmatpush.msra.mxu0 %v3999
    %4020 = vmatmul.f32.gmra.mxu0 %v4002
    %v4021 = vpop.f32.mrf.mxu0
    %v4022 = vadd.f32 0.0, %v4021
    %4023 = vdwg.mxu0
    %4024 = vrot.lane.b32.xlu0 %v250, 76
    %v4025 = vpop.permute.xlu0 %4024
    %v4028 = vsel %vm473, %v3913, 0
    %4030 = vmatpush.msra.mxu0 0.0
    %4031 = vmatpush.msra.mxu0 0.0
    %4032 = vmatpush.msra.mxu0 0.0
    %4033 = vmatpush.msra.mxu0 0.0
    %4034 = vmatpush.msra.mxu0 0.0
    %4035 = vmatpush.msra.mxu0 0.0
    %4036 = vmatpush.msra.mxu0 0.0
    %4037 = vmatpush.msra.mxu0 0.0
    %4038 = vmatpush.msra.mxu0 0.0
    %4039 = vmatpush.msra.mxu0 0.0
    %4040 = vmatpush.msra.mxu0 0.0
    %4041 = vmatpush.msra.mxu0 0.0
    %4042 = vmatpush.msra.mxu0 0.0
    %4043 = vmatpush.msra.mxu0 0.0
    %4044 = vmatpush.msra.mxu0 0.0
    %4045 = vmatpush.msra.mxu0 %v4025
    %4046 = vmatmul.f32.gmra.mxu0 %v4028
    %v4047 = vpop.f32.mrf.mxu0
    %v4048 = vadd.f32 0.0, %v4047
    %4049 = vdwg.mxu0
    %4050 = vrot.lane.b32.xlu0 %v253, 76
    %v4051 = vpop.permute.xlu0 %4050
    %v4054 = vsel %vm473, %v3915, 0
    %4056 = vmatpush.msra.mxu0 0.0
    %4057 = vmatpush.msra.mxu0 0.0
    %4058 = vmatpush.msra.mxu0 0.0
    %4059 = vmatpush.msra.mxu0 0.0
    %4060 = vmatpush.msra.mxu0 0.0
    %4061 = vmatpush.msra.mxu0 0.0
    %4062 = vmatpush.msra.mxu0 0.0
    %4063 = vmatpush.msra.mxu0 0.0
    %4064 = vmatpush.msra.mxu0 0.0
    %4065 = vmatpush.msra.mxu0 0.0
    %4066 = vmatpush.msra.mxu0 0.0
    %4067 = vmatpush.msra.mxu0 0.0
    %4068 = vmatpush.msra.mxu0 0.0
    %4069 = vmatpush.msra.mxu0 0.0
    %4070 = vmatpush.msra.mxu0 0.0
    %4071 = vmatpush.msra.mxu0 %v4051
    %4072 = vmatmul.f32.gmra.mxu0 %v4054
    %v4073 = vpop.f32.mrf.mxu0
    %v4074 = vadd.f32 0.0, %v4073
    %4075 = vdwg.mxu0
    %4076 = vrot.lane.b32.xlu0 %v256, 76
    %v4077 = vpop.permute.xlu0 %4076
    %v4080 = vsel %vm473, %v3917, 0
    %4082 = vmatpush.msra.mxu0 0.0
    %4083 = vmatpush.msra.mxu0 0.0
    %4084 = vmatpush.msra.mxu0 0.0
    %4085 = vmatpush.msra.mxu0 0.0
    %4086 = vmatpush.msra.mxu0 0.0
    %4087 = vmatpush.msra.mxu0 0.0
    %4088 = vmatpush.msra.mxu0 0.0
    %4089 = vmatpush.msra.mxu0 0.0
    %4090 = vmatpush.msra.mxu0 0.0
    %4091 = vmatpush.msra.mxu0 0.0
    %4092 = vmatpush.msra.mxu0 0.0
    %4093 = vmatpush.msra.mxu0 0.0
    %4094 = vmatpush.msra.mxu0 0.0
    %4095 = vmatpush.msra.mxu0 0.0
    %4096 = vmatpush.msra.mxu0 0.0
    %4097 = vmatpush.msra.mxu0 %v4077
    %4098 = vmatmul.f32.gmra.mxu0 %v4080
    %v4099 = vpop.f32.mrf.mxu0
    %v4100 = vadd.f32 0.0, %v4099
    %4101 = vdwg.mxu0
    %4102 = vrot.lane.b32.xlu0 %v259, 76
    %v4103 = vpop.permute.xlu0 %4102
    %v4106 = vsel %vm473, %v3919, 0
    %4108 = vmatpush.msra.mxu0 0.0
    %4109 = vmatpush.msra.mxu0 0.0
    %4110 = vmatpush.msra.mxu0 0.0
    %4111 = vmatpush.msra.mxu0 0.0
    %4112 = vmatpush.msra.mxu0 0.0
    %4113 = vmatpush.msra.mxu0 0.0
    %4114 = vmatpush.msra.mxu0 0.0
    %4115 = vmatpush.msra.mxu0 0.0
    %4116 = vmatpush.msra.mxu0 0.0
    %4117 = vmatpush.msra.mxu0 0.0
    %4118 = vmatpush.msra.mxu0 0.0
    %4119 = vmatpush.msra.mxu0 0.0
    %4120 = vmatpush.msra.mxu0 0.0
    %4121 = vmatpush.msra.mxu0 0.0
    %4122 = vmatpush.msra.mxu0 0.0
    %4123 = vmatpush.msra.mxu0 %v4103
    %4124 = vmatmul.f32.gmra.mxu0 %v4106
    %v4125 = vpop.f32.mrf.mxu0
    %v4126 = vadd.f32 0.0, %v4125
    %4127 = vdwg.mxu0
    %4128 = vrot.lane.b32.xlu0 %v262, 76
    %v4129 = vpop.permute.xlu0 %4128
    %v4132 = vsel %vm473, %v3921, 0
    %4134 = vmatpush.msra.mxu0 0.0
    %4135 = vmatpush.msra.mxu0 0.0
    %4136 = vmatpush.msra.mxu0 0.0
    %4137 = vmatpush.msra.mxu0 0.0
    %4138 = vmatpush.msra.mxu0 0.0
    %4139 = vmatpush.msra.mxu0 0.0
    %4140 = vmatpush.msra.mxu0 0.0
    %4141 = vmatpush.msra.mxu0 0.0
    %4142 = vmatpush.msra.mxu0 0.0
    %4143 = vmatpush.msra.mxu0 0.0
    %4144 = vmatpush.msra.mxu0 0.0
    %4145 = vmatpush.msra.mxu0 0.0
    %4146 = vmatpush.msra.mxu0 0.0
    %4147 = vmatpush.msra.mxu0 0.0
    %4148 = vmatpush.msra.mxu0 0.0
    %4149 = vmatpush.msra.mxu0 %v4129
    %4150 = vmatmul.f32.gmra.mxu0 %v4132
    %v4151 = vpop.f32.mrf.mxu0
    %v4152 = vadd.f32 0.0, %v4151
    %4153 = vdwg.mxu0
    %v4154 = vrcp.pop %v3924
    %v4155 = vmul.f32 %v3924, %v4154
    %v4156 = vsub.f32 1.0, %v4155
    %v4157 = vmul.f32 %v4154, %v4156
    %v4158 = vadd.f32 %v4154, %v4157
    %vm4159 = vweird.f32 %v3924
    %vm4160 = vweird.f32 %v4154
    %vm4161 = vmor %vm4159, %vm4160
    %v4162 = vsel %vm4161, %v4154, %v4158
    %v4163 = vand.u32 2147483647, %v3924
    %vm4164 = vcmp.eq.f32.partialorder %v4163, 8.507059e+37
    %v4165 = vand.u32 %v3924, 2147483648
    %v4166 = vor.u32 1.1754944e-38, %v4165
    %v4167 = vsel %vm4164, %v4166, %v4162
    %v4168 = vrcp.pop %v3927
    %v4169 = vmul.f32 %v3927, %v4168
    %v4170 = vsub.f32 1.0, %v4169
    %v4171 = vmul.f32 %v4168, %v4170
    %v4172 = vadd.f32 %v4168, %v4171
    %vm4173 = vweird.f32 %v3927
    %vm4174 = vweird.f32 %v4168
    %vm4175 = vmor %vm4173, %vm4174
    %v4176 = vsel %vm4175, %v4168, %v4172
    %v4177 = vand.u32 2147483647, %v3927
    %vm4178 = vcmp.eq.f32.partialorder %v4177, 8.507059e+37
    %v4179 = vand.u32 %v3927, 2147483648
    %v4180 = vor.u32 1.1754944e-38, %v4179
    %v4181 = vsel %vm4178, %v4180, %v4176
    %v4182 = vrcp.pop %v3930
    %v4183 = vmul.f32 %v3930, %v4182
    %v4184 = vsub.f32 1.0, %v4183
    %v4185 = vmul.f32 %v4182, %v4184
    %v4186 = vadd.f32 %v4182, %v4185
    %vm4187 = vweird.f32 %v3930
    %vm4188 = vweird.f32 %v4182
    %vm4189 = vmor %vm4187, %vm4188
    %v4190 = vsel %vm4189, %v4182, %v4186
    %v4191 = vand.u32 2147483647, %v3930
    %vm4192 = vcmp.eq.f32.partialorder %v4191, 8.507059e+37
    %v4193 = vand.u32 %v3930, 2147483648
    %v4194 = vor.u32 1.1754944e-38, %v4193
    %v4195 = vsel %vm4192, %v4194, %v4190
    %v4196 = vrcp.pop %v3933
    %v4197 = vmul.f32 %v3933, %v4196
    %v4198 = vsub.f32 1.0, %v4197
    %v4199 = vmul.f32 %v4196, %v4198
    %v4200 = vadd.f32 %v4196, %v4199
    %vm4201 = vweird.f32 %v3933
    %vm4202 = vweird.f32 %v4196
    %vm4203 = vmor %vm4201, %vm4202
    %v4204 = vsel %vm4203, %v4196, %v4200
    %v4205 = vand.u32 2147483647, %v3933
    %vm4206 = vcmp.eq.f32.partialorder %v4205, 8.507059e+37
    %v4207 = vand.u32 %v3933, 2147483648
    %v4208 = vor.u32 1.1754944e-38, %v4207
    %v4209 = vsel %vm4206, %v4208, %v4204
    %v4210 = vrcp.pop %v3936
    %v4211 = vmul.f32 %v3936, %v4210
    %v4212 = vsub.f32 1.0, %v4211
    %v4213 = vmul.f32 %v4210, %v4212
    %v4214 = vadd.f32 %v4210, %v4213
    %vm4215 = vweird.f32 %v3936
    %vm4216 = vweird.f32 %v4210
    %vm4217 = vmor %vm4215, %vm4216
    %v4218 = vsel %vm4217, %v4210, %v4214
    %v4219 = vand.u32 2147483647, %v3936
    %vm4220 = vcmp.eq.f32.partialorder %v4219, 8.507059e+37
    %v4221 = vand.u32 %v3936, 2147483648
    %v4222 = vor.u32 1.1754944e-38, %v4221
    %v4223 = vsel %vm4220, %v4222, %v4218
    %v4224 = vrcp.pop %v3939
    %v4225 = vmul.f32 %v3939, %v4224
    %v4226 = vsub.f32 1.0, %v4225
    %v4227 = vmul.f32 %v4224, %v4226
    %v4228 = vadd.f32 %v4224, %v4227
    %vm4229 = vweird.f32 %v3939
    %vm4230 = vweird.f32 %v4224
    %vm4231 = vmor %vm4229, %vm4230
    %v4232 = vsel %vm4231, %v4224, %v4228
    %v4233 = vand.u32 2147483647, %v3939
    %vm4234 = vcmp.eq.f32.partialorder %v4233, 8.507059e+37
    %v4235 = vand.u32 %v3939, 2147483648
    %v4236 = vor.u32 1.1754944e-38, %v4235
    %v4237 = vsel %vm4234, %v4236, %v4232
    %v4238 = vrcp.pop %v3942
    %v4239 = vmul.f32 %v3942, %v4238
    %v4240 = vsub.f32 1.0, %v4239
    %v4241 = vmul.f32 %v4238, %v4240
    %v4242 = vadd.f32 %v4238, %v4241
    %vm4243 = vweird.f32 %v3942
    %vm4244 = vweird.f32 %v4238
    %vm4245 = vmor %vm4243, %vm4244
    %v4246 = vsel %vm4245, %v4238, %v4242
    %v4247 = vand.u32 2147483647, %v3942
    %vm4248 = vcmp.eq.f32.partialorder %v4247, 8.507059e+37
    %v4249 = vand.u32 %v3942, 2147483648
    %v4250 = vor.u32 1.1754944e-38, %v4249
    %v4251 = vsel %vm4248, %v4250, %v4246
    %v4252 = vrcp.pop %v3945
    %v4253 = vmul.f32 %v3945, %v4252
    %v4254 = vsub.f32 1.0, %v4253
    %v4255 = vmul.f32 %v4252, %v4254
    %v4256 = vadd.f32 %v4252, %v4255
    %vm4257 = vweird.f32 %v3945
    %vm4258 = vweird.f32 %v4252
    %vm4259 = vmor %vm4257, %vm4258
    %v4260 = vsel %vm4259, %v4252, %v4256
    %v4261 = vand.u32 2147483647, %v3945
    %vm4262 = vcmp.eq.f32.partialorder %v4261, 8.507059e+37
    %v4263 = vand.u32 %v3945, 2147483648
    %v4264 = vor.u32 1.1754944e-38, %v4263
    %v4265 = vsel %vm4262, %v4264, %v4260
    %v4266 = vmul.f32 %v3970, %v4167
    %v4267 = vmul.f32 %v3996, %v4181
    %v4268 = vmul.f32 %v4022, %v4195
    %v4269 = vmul.f32 %v4048, %v4209
    %v4270 = vmul.f32 %v4074, %v4223
    %v4271 = vmul.f32 %v4100, %v4237
    %v4272 = vmul.f32 %v4126, %v4251
    %v4273 = vmul.f32 %v4152, %v4265
    %v4274 = vsel %vm264, %v4266, 0.0
    %v4275 = vrot.slane %v4274, 4
    %v4276 = vadd.f32 %v4274, %v4275
    %v4277 = vrot.slane %v4276, 2
    %v4278 = vadd.f32 %v4276, %v4277
    %v4279 = vrot.slane %v4278, 1
    %v4280 = vadd.f32 %v4278, %v4279
    %v4281 = vsel %vm264, %v4267, 0.0
    %v4282 = vrot.slane %v4281, 4
    %v4283 = vadd.f32 %v4281, %v4282
    %v4284 = vrot.slane %v4283, 2
    %v4285 = vadd.f32 %v4283, %v4284
    %v4286 = vrot.slane %v4285, 1
    %v4287 = vadd.f32 %v4285, %v4286
    %v4288 = vsel %vm264, %v4268, 0.0
    %v4289 = vrot.slane %v4288, 4
    %v4290 = vadd.f32 %v4288, %v4289
    %v4291 = vrot.slane %v4290, 2
    %v4292 = vadd.f32 %v4290, %v4291
    %v4293 = vrot.slane %v4292, 1
    %v4294 = vadd.f32 %v4292, %v4293
    %v4295 = vsel %vm264, %v4269, 0.0
    %v4296 = vrot.slane %v4295, 4
    %v4297 = vadd.f32 %v4295, %v4296
    %v4298 = vrot.slane %v4297, 2
    %v4299 = vadd.f32 %v4297, %v4298
    %v4300 = vrot.slane %v4299, 1
    %v4301 = vadd.f32 %v4299, %v4300
    %v4302 = vsel %vm264, %v4270, 0.0
    %v4303 = vrot.slane %v4302, 4
    %v4304 = vadd.f32 %v4302, %v4303
    %v4305 = vrot.slane %v4304, 2
    %v4306 = vadd.f32 %v4304, %v4305
    %v4307 = vrot.slane %v4306, 1
    %v4308 = vadd.f32 %v4306, %v4307
    %v4309 = vsel %vm264, %v4271, 0.0
    %v4310 = vrot.slane %v4309, 4
    %v4311 = vadd.f32 %v4309, %v4310
    %v4312 = vrot.slane %v4311, 2
    %v4313 = vadd.f32 %v4311, %v4312
    %v4314 = vrot.slane %v4313, 1
    %v4315 = vadd.f32 %v4313, %v4314
    %v4316 = vsel %vm264, %v4272, 0.0
    %v4317 = vrot.slane %v4316, 4
    %v4318 = vadd.f32 %v4316, %v4317
    %v4319 = vrot.slane %v4318, 2
    %v4320 = vadd.f32 %v4318, %v4319
    %v4321 = vrot.slane %v4320, 1
    %v4322 = vadd.f32 %v4320, %v4321
    %v4323 = vsel %vm264, %v4273, 0.0
    %v4324 = vrot.slane %v4323, 4
    %v4325 = vadd.f32 %v4323, %v4324
    %v4326 = vrot.slane %v4325, 2
    %v4327 = vadd.f32 %v4325, %v4326
    %v4328 = vrot.slane %v4327, 1
    %v4329 = vadd.f32 %v4327, %v4328
    %4330 = vrot.lane.b32.xlu0 %v172, 104
    %v4331 = vpop.permute.xlu0 %4330
    %4332 = vrot.lane.b32.xlu0 %v241, 104
    %v4333 = vpop.permute.xlu0 %4332
    %v4334 = vsel %vm264, %v4331, 0
    %v4336 = vsel %vm264, %v4333, 0
    %4338 = vmatpush.xpose.msra.mxu0 0.0
    %4339 = vmatpush.xpose.msra.mxu0 0.0
    %4340 = vmatpush.xpose.msra.mxu0 0.0
    %4341 = vmatpush.xpose.msra.mxu0 0.0
    %4342 = vmatpush.xpose.msra.mxu0 0.0
    %4343 = vmatpush.xpose.msra.mxu0 0.0
    %4344 = vmatpush.xpose.msra.mxu0 0.0
    %4345 = vmatpush.xpose.msra.mxu0 0.0
    %4346 = vmatpush.xpose.msra.mxu0 0.0
    %4347 = vmatpush.xpose.msra.mxu0 0.0
    %4348 = vmatpush.xpose.msra.mxu0 0.0
    %4349 = vmatpush.xpose.msra.mxu0 0.0
    %4350 = vmatpush.xpose.msra.mxu0 0.0
    %4351 = vmatpush.xpose.msra.mxu0 0.0
    %4352 = vmatpush.xpose.msra.mxu0 0.0
    %4353 = vmatpush.xpose.msra.mxu0 %v4336
    %4354 = vmatmul.f32.gmra.mxu0 %v4334
    %v4355 = vpop.f32.mrf.mxu0
    %v4356 = vadd.f32 0.0, %v4355
    %4357 = vdwg.mxu0
    %4358 = vrot.lane.b32.xlu0 %v175, 104
    %v4359 = vpop.permute.xlu0 %4358
    %4360 = vrot.lane.b32.xlu0 %v244, 104
    %v4361 = vpop.permute.xlu0 %4360
    %v4362 = vsel %vm264, %v4359, 0
    %v4364 = vsel %vm264, %v4361, 0
    %4366 = vmatpush.xpose.msra.mxu0 0.0
    %4367 = vmatpush.xpose.msra.mxu0 0.0
    %4368 = vmatpush.xpose.msra.mxu0 0.0
    %4369 = vmatpush.xpose.msra.mxu0 0.0
    %4370 = vmatpush.xpose.msra.mxu0 0.0
    %4371 = vmatpush.xpose.msra.mxu0 0.0
    %4372 = vmatpush.xpose.msra.mxu0 0.0
    %4373 = vmatpush.xpose.msra.mxu0 0.0
    %4374 = vmatpush.xpose.msra.mxu0 0.0
    %4375 = vmatpush.xpose.msra.mxu0 0.0
    %4376 = vmatpush.xpose.msra.mxu0 0.0
    %4377 = vmatpush.xpose.msra.mxu0 0.0
    %4378 = vmatpush.xpose.msra.mxu0 0.0
    %4379 = vmatpush.xpose.msra.mxu0 0.0
    %4380 = vmatpush.xpose.msra.mxu0 0.0
    %4381 = vmatpush.xpose.msra.mxu0 %v4364
    %4382 = vmatmul.f32.gmra.mxu0 %v4362
    %v4383 = vpop.f32.mrf.mxu0
    %v4384 = vadd.f32 0.0, %v4383
    %4385 = vdwg.mxu0
    %4386 = vrot.lane.b32.xlu0 %v178, 104
    %v4387 = vpop.permute.xlu0 %4386
    %4388 = vrot.lane.b32.xlu0 %v247, 104
    %v4389 = vpop.permute.xlu0 %4388
    %v4390 = vsel %vm264, %v4387, 0
    %v4392 = vsel %vm264, %v4389, 0
    %4394 = vmatpush.xpose.msra.mxu0 0.0
    %4395 = vmatpush.xpose.msra.mxu0 0.0
    %4396 = vmatpush.xpose.msra.mxu0 0.0
    %4397 = vmatpush.xpose.msra.mxu0 0.0
    %4398 = vmatpush.xpose.msra.mxu0 0.0
    %4399 = vmatpush.xpose.msra.mxu0 0.0
    %4400 = vmatpush.xpose.msra.mxu0 0.0
    %4401 = vmatpush.xpose.msra.mxu0 0.0
    %4402 = vmatpush.xpose.msra.mxu0 0.0
    %4403 = vmatpush.xpose.msra.mxu0 0.0
    %4404 = vmatpush.xpose.msra.mxu0 0.0
    %4405 = vmatpush.xpose.msra.mxu0 0.0
    %4406 = vmatpush.xpose.msra.mxu0 0.0
    %4407 = vmatpush.xpose.msra.mxu0 0.0
    %4408 = vmatpush.xpose.msra.mxu0 0.0
    %4409 = vmatpush.xpose.msra.mxu0 %v4392
    %4410 = vmatmul.f32.gmra.mxu0 %v4390
    %v4411 = vpop.f32.mrf.mxu0
    %v4412 = vadd.f32 0.0, %v4411
    %4413 = vdwg.mxu0
    %4414 = vrot.lane.b32.xlu0 %v181, 104
    %v4415 = vpop.permute.xlu0 %4414
    %4416 = vrot.lane.b32.xlu0 %v250, 104
    %v4417 = vpop.permute.xlu0 %4416
    %v4418 = vsel %vm264, %v4415, 0
    %v4420 = vsel %vm264, %v4417, 0
    %4422 = vmatpush.xpose.msra.mxu0 0.0
    %4423 = vmatpush.xpose.msra.mxu0 0.0
    %4424 = vmatpush.xpose.msra.mxu0 0.0
    %4425 = vmatpush.xpose.msra.mxu0 0.0
    %4426 = vmatpush.xpose.msra.mxu0 0.0
    %4427 = vmatpush.xpose.msra.mxu0 0.0
    %4428 = vmatpush.xpose.msra.mxu0 0.0
    %4429 = vmatpush.xpose.msra.mxu0 0.0
    %4430 = vmatpush.xpose.msra.mxu0 0.0
    %4431 = vmatpush.xpose.msra.mxu0 0.0
    %4432 = vmatpush.xpose.msra.mxu0 0.0
    %4433 = vmatpush.xpose.msra.mxu0 0.0
    %4434 = vmatpush.xpose.msra.mxu0 0.0
    %4435 = vmatpush.xpose.msra.mxu0 0.0
    %4436 = vmatpush.xpose.msra.mxu0 0.0
    %4437 = vmatpush.xpose.msra.mxu0 %v4420
    %4438 = vmatmul.f32.gmra.mxu0 %v4418
    %v4439 = vpop.f32.mrf.mxu0
    %v4440 = vadd.f32 0.0, %v4439
    %4441 = vdwg.mxu0
    %4442 = vrot.lane.b32.xlu0 %v184, 104
    %v4443 = vpop.permute.xlu0 %4442
    %4444 = vrot.lane.b32.xlu0 %v253, 104
    %v4445 = vpop.permute.xlu0 %4444
    %v4446 = vsel %vm264, %v4443, 0
    %v4448 = vsel %vm264, %v4445, 0
    %4450 = vmatpush.xpose.msra.mxu0 0.0
    %4451 = vmatpush.xpose.msra.mxu0 0.0
    %4452 = vmatpush.xpose.msra.mxu0 0.0
    %4453 = vmatpush.xpose.msra.mxu0 0.0
    %4454 = vmatpush.xpose.msra.mxu0 0.0
    %4455 = vmatpush.xpose.msra.mxu0 0.0
    %4456 = vmatpush.xpose.msra.mxu0 0.0
    %4457 = vmatpush.xpose.msra.mxu0 0.0
    %4458 = vmatpush.xpose.msra.mxu0 0.0
    %4459 = vmatpush.xpose.msra.mxu0 0.0
    %4460 = vmatpush.xpose.msra.mxu0 0.0
    %4461 = vmatpush.xpose.msra.mxu0 0.0
    %4462 = vmatpush.xpose.msra.mxu0 0.0
    %4463 = vmatpush.xpose.msra.mxu0 0.0
    %4464 = vmatpush.xpose.msra.mxu0 0.0
    %4465 = vmatpush.xpose.msra.mxu0 %v4448
    %4466 = vmatmul.f32.gmra.mxu0 %v4446
    %v4467 = vpop.f32.mrf.mxu0
    %v4468 = vadd.f32 0.0, %v4467
    %4469 = vdwg.mxu0
    %4470 = vrot.lane.b32.xlu0 %v187, 104
    %v4471 = vpop.permute.xlu0 %4470
    %4472 = vrot.lane.b32.xlu0 %v256, 104
    %v4473 = vpop.permute.xlu0 %4472
    %v4474 = vsel %vm264, %v4471, 0
    %v4476 = vsel %vm264, %v4473, 0
    %4478 = vmatpush.xpose.msra.mxu0 0.0
    %4479 = vmatpush.xpose.msra.mxu0 0.0
    %4480 = vmatpush.xpose.msra.mxu0 0.0
    %4481 = vmatpush.xpose.msra.mxu0 0.0
    %4482 = vmatpush.xpose.msra.mxu0 0.0
    %4483 = vmatpush.xpose.msra.mxu0 0.0
    %4484 = vmatpush.xpose.msra.mxu0 0.0
    %4485 = vmatpush.xpose.msra.mxu0 0.0
    %4486 = vmatpush.xpose.msra.mxu0 0.0
    %4487 = vmatpush.xpose.msra.mxu0 0.0
    %4488 = vmatpush.xpose.msra.mxu0 0.0
    %4489 = vmatpush.xpose.msra.mxu0 0.0
    %4490 = vmatpush.xpose.msra.mxu0 0.0
    %4491 = vmatpush.xpose.msra.mxu0 0.0
    %4492 = vmatpush.xpose.msra.mxu0 0.0
    %4493 = vmatpush.xpose.msra.mxu0 %v4476
    %4494 = vmatmul.f32.gmra.mxu0 %v4474
    %v4495 = vpop.f32.mrf.mxu0
    %v4496 = vadd.f32 0.0, %v4495
    %4497 = vdwg.mxu0
    %4498 = vrot.lane.b32.xlu0 %v190, 104
    %v4499 = vpop.permute.xlu0 %4498
    %4500 = vrot.lane.b32.xlu0 %v259, 104
    %v4501 = vpop.permute.xlu0 %4500
    %v4502 = vsel %vm264, %v4499, 0
    %v4504 = vsel %vm264, %v4501, 0
    %4506 = vmatpush.xpose.msra.mxu0 0.0
    %4507 = vmatpush.xpose.msra.mxu0 0.0
    %4508 = vmatpush.xpose.msra.mxu0 0.0
    %4509 = vmatpush.xpose.msra.mxu0 0.0
    %4510 = vmatpush.xpose.msra.mxu0 0.0
    %4511 = vmatpush.xpose.msra.mxu0 0.0
    %4512 = vmatpush.xpose.msra.mxu0 0.0
    %4513 = vmatpush.xpose.msra.mxu0 0.0
    %4514 = vmatpush.xpose.msra.mxu0 0.0
    %4515 = vmatpush.xpose.msra.mxu0 0.0
    %4516 = vmatpush.xpose.msra.mxu0 0.0
    %4517 = vmatpush.xpose.msra.mxu0 0.0
    %4518 = vmatpush.xpose.msra.mxu0 0.0
    %4519 = vmatpush.xpose.msra.mxu0 0.0
    %4520 = vmatpush.xpose.msra.mxu0 0.0
    %4521 = vmatpush.xpose.msra.mxu0 %v4504
    %4522 = vmatmul.f32.gmra.mxu0 %v4502
    %v4523 = vpop.f32.mrf.mxu0
    %v4524 = vadd.f32 0.0, %v4523
    %4525 = vdwg.mxu0
    %4526 = vrot.lane.b32.xlu0 %v193, 104
    %v4527 = vpop.permute.xlu0 %4526
    %4528 = vrot.lane.b32.xlu0 %v262, 104
    %v4529 = vpop.permute.xlu0 %4528
    %v4530 = vsel %vm264, %v4527, 0
    %v4532 = vsel %vm264, %v4529, 0
    %4534 = vmatpush.xpose.msra.mxu0 0.0
    %4535 = vmatpush.xpose.msra.mxu0 0.0
    %4536 = vmatpush.xpose.msra.mxu0 0.0
    %4537 = vmatpush.xpose.msra.mxu0 0.0
    %4538 = vmatpush.xpose.msra.mxu0 0.0
    %4539 = vmatpush.xpose.msra.mxu0 0.0
    %4540 = vmatpush.xpose.msra.mxu0 0.0
    %4541 = vmatpush.xpose.msra.mxu0 0.0
    %4542 = vmatpush.xpose.msra.mxu0 0.0
    %4543 = vmatpush.xpose.msra.mxu0 0.0
    %4544 = vmatpush.xpose.msra.mxu0 0.0
    %4545 = vmatpush.xpose.msra.mxu0 0.0
    %4546 = vmatpush.xpose.msra.mxu0 0.0
    %4547 = vmatpush.xpose.msra.mxu0 0.0
    %4548 = vmatpush.xpose.msra.mxu0 0.0
    %4549 = vmatpush.xpose.msra.mxu0 %v4532
    %4550 = vmatmul.f32.gmra.mxu0 %v4530
    %v4551 = vpop.f32.mrf.mxu0
    %v4552 = vadd.f32 0.0, %v4551
    %4553 = vdwg.mxu0
    %v4554 = vsel %vm473, %v4356, -inf
    %4555 = vmax.xlane.f32.xlu0 %v4554
    %v4556 = vpop.xlane.xlu0 %4555
    %v4557 = vsel %vm473, %v4384, -inf
    %4558 = vmax.xlane.f32.xlu0 %v4557
    %v4559 = vpop.xlane.xlu0 %4558
    %v4560 = vsel %vm473, %v4412, -inf
    %4561 = vmax.xlane.f32.xlu0 %v4560
    %v4562 = vpop.xlane.xlu0 %4561
    %v4563 = vsel %vm473, %v4440, -inf
    %4564 = vmax.xlane.f32.xlu0 %v4563
    %v4565 = vpop.xlane.xlu0 %4564
    %v4566 = vsel %vm473, %v4468, -inf
    %4567 = vmax.xlane.f32.xlu0 %v4566
    %v4568 = vpop.xlane.xlu0 %4567
    %v4569 = vsel %vm473, %v4496, -inf
    %4570 = vmax.xlane.f32.xlu0 %v4569
    %v4571 = vpop.xlane.xlu0 %4570
    %v4572 = vsel %vm473, %v4524, -inf
    %4573 = vmax.xlane.f32.xlu0 %v4572
    %v4574 = vpop.xlane.xlu0 %4573
    %v4575 = vsel %vm473, %v4552, -inf
    %4576 = vmax.xlane.f32.xlu0 %v4575
    %v4577 = vpop.xlane.xlu0 %4576
    %v4578 = vsub.f32 %v4356, %v4556
    %v4579 = vsub.f32 %v4384, %v4559
    %v4580 = vsub.f32 %v4412, %v4562
    %v4581 = vsub.f32 %v4440, %v4565
    %v4582 = vsub.f32 %v4468, %v4568
    %v4583 = vsub.f32 %v4496, %v4571
    %v4584 = vsub.f32 %v4524, %v4574
    %v4585 = vsub.f32 %v4552, %v4577
    %v4586 = vmul.f32 %v4578, 1.442695
    %v4587 = vpow.pop %v4586
    %v4588 = vmul.f32 %v4579, 1.442695
    %v4589 = vpow.pop %v4588
    %v4590 = vmul.f32 %v4580, 1.442695
    %v4591 = vpow.pop %v4590
    %v4592 = vmul.f32 %v4581, 1.442695
    %v4593 = vpow.pop %v4592
    %v4594 = vmul.f32 %v4582, 1.442695
    %v4595 = vpow.pop %v4594
    %v4596 = vmul.f32 %v4583, 1.442695
    %v4597 = vpow.pop %v4596
    %v4598 = vmul.f32 %v4584, 1.442695
    %v4599 = vpow.pop %v4598
    %v4600 = vmul.f32 %v4585, 1.442695
    %v4601 = vpow.pop %v4600
    %v4602 = vsel %vm473, %v4587, 0.0
    %4603 = vadd.xlane.f32.xlu0 %v4602
    %v4604 = vpop.xlane.xlu0 %4603
    %v4605 = vsel %vm473, %v4589, 0.0
    %4606 = vadd.xlane.f32.xlu0 %v4605
    %v4607 = vpop.xlane.xlu0 %4606
    %v4608 = vsel %vm473, %v4591, 0.0
    %4609 = vadd.xlane.f32.xlu0 %v4608
    %v4610 = vpop.xlane.xlu0 %4609
    %v4611 = vsel %vm473, %v4593, 0.0
    %4612 = vadd.xlane.f32.xlu0 %v4611
    %v4613 = vpop.xlane.xlu0 %4612
    %v4614 = vsel %vm473, %v4595, 0.0
    %4615 = vadd.xlane.f32.xlu0 %v4614
    %v4616 = vpop.xlane.xlu0 %4615
    %v4617 = vsel %vm473, %v4597, 0.0
    %4618 = vadd.xlane.f32.xlu0 %v4617
    %v4619 = vpop.xlane.xlu0 %4618
    %v4620 = vsel %vm473, %v4599, 0.0
    %4621 = vadd.xlane.f32.xlu0 %v4620
    %v4622 = vpop.xlane.xlu0 %4621
    %v4623 = vsel %vm473, %v4601, 0.0
    %4624 = vadd.xlane.f32.xlu0 %v4623
    %v4625 = vpop.xlane.xlu0 %4624
    %4626 = vrot.lane.b32.xlu0 %v241, 72
    %v4627 = vpop.permute.xlu0 %4626
    %v4630 = vsel %vm473, %v4587, 0
    %4632 = vmatpush.msra.mxu0 0.0
    %4633 = vmatpush.msra.mxu0 0.0
    %4634 = vmatpush.msra.mxu0 0.0
    %4635 = vmatpush.msra.mxu0 0.0
    %4636 = vmatpush.msra.mxu0 0.0
    %4637 = vmatpush.msra.mxu0 0.0
    %4638 = vmatpush.msra.mxu0 0.0
    %4639 = vmatpush.msra.mxu0 0.0
    %4640 = vmatpush.msra.mxu0 0.0
    %4641 = vmatpush.msra.mxu0 0.0
    %4642 = vmatpush.msra.mxu0 0.0
    %4643 = vmatpush.msra.mxu0 0.0
    %4644 = vmatpush.msra.mxu0 0.0
    %4645 = vmatpush.msra.mxu0 0.0
    %4646 = vmatpush.msra.mxu0 0.0
    %4647 = vmatpush.msra.mxu0 %v4627
    %4648 = vmatmul.f32.gmra.mxu0 %v4630
    %v4649 = vpop.f32.mrf.mxu0
    %v4650 = vadd.f32 0.0, %v4649
    %4651 = vdwg.mxu0
    %4652 = vrot.lane.b32.xlu0 %v244, 72
    %v4653 = vpop.permute.xlu0 %4652
    %v4656 = vsel %vm473, %v4589, 0
    %4658 = vmatpush.msra.mxu0 0.0
    %4659 = vmatpush.msra.mxu0 0.0
    %4660 = vmatpush.msra.mxu0 0.0
    %4661 = vmatpush.msra.mxu0 0.0
    %4662 = vmatpush.msra.mxu0 0.0
    %4663 = vmatpush.msra.mxu0 0.0
    %4664 = vmatpush.msra.mxu0 0.0
    %4665 = vmatpush.msra.mxu0 0.0
    %4666 = vmatpush.msra.mxu0 0.0
    %4667 = vmatpush.msra.mxu0 0.0
    %4668 = vmatpush.msra.mxu0 0.0
    %4669 = vmatpush.msra.mxu0 0.0
    %4670 = vmatpush.msra.mxu0 0.0
    %4671 = vmatpush.msra.mxu0 0.0
    %4672 = vmatpush.msra.mxu0 0.0
    %4673 = vmatpush.msra.mxu0 %v4653
    %4674 = vmatmul.f32.gmra.mxu0 %v4656
    %v4675 = vpop.f32.mrf.mxu0
    %v4676 = vadd.f32 0.0, %v4675
    %4677 = vdwg.mxu0
    %4678 = vrot.lane.b32.xlu0 %v247, 72
    %v4679 = vpop.permute.xlu0 %4678
    %v4682 = vsel %vm473, %v4591, 0
    %4684 = vmatpush.msra.mxu0 0.0
    %4685 = vmatpush.msra.mxu0 0.0
    %4686 = vmatpush.msra.mxu0 0.0
    %4687 = vmatpush.msra.mxu0 0.0
    %4688 = vmatpush.msra.mxu0 0.0
    %4689 = vmatpush.msra.mxu0 0.0
    %4690 = vmatpush.msra.mxu0 0.0
    %4691 = vmatpush.msra.mxu0 0.0
    %4692 = vmatpush.msra.mxu0 0.0
    %4693 = vmatpush.msra.mxu0 0.0
    %4694 = vmatpush.msra.mxu0 0.0
    %4695 = vmatpush.msra.mxu0 0.0
    %4696 = vmatpush.msra.mxu0 0.0
    %4697 = vmatpush.msra.mxu0 0.0
    %4698 = vmatpush.msra.mxu0 0.0
    %4699 = vmatpush.msra.mxu0 %v4679
    %4700 = vmatmul.f32.gmra.mxu0 %v4682
    %v4701 = vpop.f32.mrf.mxu0
    %v4702 = vadd.f32 0.0, %v4701
    %4703 = vdwg.mxu0
    %4704 = vrot.lane.b32.xlu0 %v250, 72
    %v4705 = vpop.permute.xlu0 %4704
    %v4708 = vsel %vm473, %v4593, 0
    %4710 = vmatpush.msra.mxu0 0.0
    %4711 = vmatpush.msra.mxu0 0.0
    %4712 = vmatpush.msra.mxu0 0.0
    %4713 = vmatpush.msra.mxu0 0.0
    %4714 = vmatpush.msra.mxu0 0.0
    %4715 = vmatpush.msra.mxu0 0.0
    %4716 = vmatpush.msra.mxu0 0.0
    %4717 = vmatpush.msra.mxu0 0.0
    %4718 = vmatpush.msra.mxu0 0.0
    %4719 = vmatpush.msra.mxu0 0.0
    %4720 = vmatpush.msra.mxu0 0.0
    %4721 = vmatpush.msra.mxu0 0.0
    %4722 = vmatpush.msra.mxu0 0.0
    %4723 = vmatpush.msra.mxu0 0.0
    %4724 = vmatpush.msra.mxu0 0.0
    %4725 = vmatpush.msra.mxu0 %v4705
    %4726 = vmatmul.f32.gmra.mxu0 %v4708
    %v4727 = vpop.f32.mrf.mxu0
    %v4728 = vadd.f32 0.0, %v4727
    %4729 = vdwg.mxu0
    %4730 = vrot.lane.b32.xlu0 %v253, 72
    %v4731 = vpop.permute.xlu0 %4730
    %v4734 = vsel %vm473, %v4595, 0
    %4736 = vmatpush.msra.mxu0 0.0
    %4737 = vmatpush.msra.mxu0 0.0
    %4738 = vmatpush.msra.mxu0 0.0
    %4739 = vmatpush.msra.mxu0 0.0
    %4740 = vmatpush.msra.mxu0 0.0
    %4741 = vmatpush.msra.mxu0 0.0
    %4742 = vmatpush.msra.mxu0 0.0
    %4743 = vmatpush.msra.mxu0 0.0
    %4744 = vmatpush.msra.mxu0 0.0
    %4745 = vmatpush.msra.mxu0 0.0
    %4746 = vmatpush.msra.mxu0 0.0
    %4747 = vmatpush.msra.mxu0 0.0
    %4748 = vmatpush.msra.mxu0 0.0
    %4749 = vmatpush.msra.mxu0 0.0
    %4750 = vmatpush.msra.mxu0 0.0
    %4751 = vmatpush.msra.mxu0 %v4731
    %4752 = vmatmul.f32.gmra.mxu0 %v4734
    %v4753 = vpop.f32.mrf.mxu0
    %v4754 = vadd.f32 0.0, %v4753
    %4755 = vdwg.mxu0
    %4756 = vrot.lane.b32.xlu0 %v256, 72
    %v4757 = vpop.permute.xlu0 %4756
    %v4760 = vsel %vm473, %v4597, 0
    %4762 = vmatpush.msra.mxu0 0.0
    %4763 = vmatpush.msra.mxu0 0.0
    %4764 = vmatpush.msra.mxu0 0.0
    %4765 = vmatpush.msra.mxu0 0.0
    %4766 = vmatpush.msra.mxu0 0.0
    %4767 = vmatpush.msra.mxu0 0.0
    %4768 = vmatpush.msra.mxu0 0.0
    %4769 = vmatpush.msra.mxu0 0.0
    %4770 = vmatpush.msra.mxu0 0.0
    %4771 = vmatpush.msra.mxu0 0.0
    %4772 = vmatpush.msra.mxu0 0.0
    %4773 = vmatpush.msra.mxu0 0.0
    %4774 = vmatpush.msra.mxu0 0.0
    %4775 = vmatpush.msra.mxu0 0.0
    %4776 = vmatpush.msra.mxu0 0.0
    %4777 = vmatpush.msra.mxu0 %v4757
    %4778 = vmatmul.f32.gmra.mxu0 %v4760
    %v4779 = vpop.f32.mrf.mxu0
    %v4780 = vadd.f32 0.0, %v4779
    %4781 = vdwg.mxu0
    %4782 = vrot.lane.b32.xlu0 %v259, 72
    %v4783 = vpop.permute.xlu0 %4782
    %v4786 = vsel %vm473, %v4599, 0
    %4788 = vmatpush.msra.mxu0 0.0
    %4789 = vmatpush.msra.mxu0 0.0
    %4790 = vmatpush.msra.mxu0 0.0
    %4791 = vmatpush.msra.mxu0 0.0
    %4792 = vmatpush.msra.mxu0 0.0
    %4793 = vmatpush.msra.mxu0 0.0
    %4794 = vmatpush.msra.mxu0 0.0
    %4795 = vmatpush.msra.mxu0 0.0
    %4796 = vmatpush.msra.mxu0 0.0
    %4797 = vmatpush.msra.mxu0 0.0
    %4798 = vmatpush.msra.mxu0 0.0
    %4799 = vmatpush.msra.mxu0 0.0
    %4800 = vmatpush.msra.mxu0 0.0
    %4801 = vmatpush.msra.mxu0 0.0
    %4802 = vmatpush.msra.mxu0 0.0
    %4803 = vmatpush.msra.mxu0 %v4783
    %4804 = vmatmul.f32.gmra.mxu0 %v4786
    %v4805 = vpop.f32.mrf.mxu0
    %v4806 = vadd.f32 0.0, %v4805
    %4807 = vdwg.mxu0
    %4808 = vrot.lane.b32.xlu0 %v262, 72
    %v4809 = vpop.permute.xlu0 %4808
    %v4812 = vsel %vm473, %v4601, 0
    %4814 = vmatpush.msra.mxu0 0.0
    %4815 = vmatpush.msra.mxu0 0.0
    %4816 = vmatpush.msra.mxu0 0.0
    %4817 = vmatpush.msra.mxu0 0.0
    %4818 = vmatpush.msra.mxu0 0.0
    %4819 = vmatpush.msra.mxu0 0.0
    %4820 = vmatpush.msra.mxu0 0.0
    %4821 = vmatpush.msra.mxu0 0.0
    %4822 = vmatpush.msra.mxu0 0.0
    %4823 = vmatpush.msra.mxu0 0.0
    %4824 = vmatpush.msra.mxu0 0.0
    %4825 = vmatpush.msra.mxu0 0.0
    %4826 = vmatpush.msra.mxu0 0.0
    %4827 = vmatpush.msra.mxu0 0.0
    %4828 = vmatpush.msra.mxu0 0.0
    %4829 = vmatpush.msra.mxu0 %v4809
    %4830 = vmatmul.f32.gmra.mxu0 %v4812
    %v4831 = vpop.f32.mrf.mxu0
    %v4832 = vadd.f32 0.0, %v4831
    %4833 = vdwg.mxu0
    %v4834 = vrcp.pop %v4604
    %v4835 = vmul.f32 %v4604, %v4834
    %v4836 = vsub.f32 1.0, %v4835
    %v4837 = vmul.f32 %v4834, %v4836
    %v4838 = vadd.f32 %v4834, %v4837
    %vm4839 = vweird.f32 %v4604
    %vm4840 = vweird.f32 %v4834
    %vm4841 = vmor %vm4839, %vm4840
    %v4842 = vsel %vm4841, %v4834, %v4838
    %v4843 = vand.u32 2147483647, %v4604
    %vm4844 = vcmp.eq.f32.partialorder %v4843, 8.507059e+37
    %v4845 = vand.u32 %v4604, 2147483648
    %v4846 = vor.u32 1.1754944e-38, %v4845
    %v4847 = vsel %vm4844, %v4846, %v4842
    %v4848 = vrcp.pop %v4607
    %v4849 = vmul.f32 %v4607, %v4848
    %v4850 = vsub.f32 1.0, %v4849
    %v4851 = vmul.f32 %v4848, %v4850
    %v4852 = vadd.f32 %v4848, %v4851
    %vm4853 = vweird.f32 %v4607
    %vm4854 = vweird.f32 %v4848
    %vm4855 = vmor %vm4853, %vm4854
    %v4856 = vsel %vm4855, %v4848, %v4852
    %v4857 = vand.u32 2147483647, %v4607
    %vm4858 = vcmp.eq.f32.partialorder %v4857, 8.507059e+37
    %v4859 = vand.u32 %v4607, 2147483648
    %v4860 = vor.u32 1.1754944e-38, %v4859
    %v4861 = vsel %vm4858, %v4860, %v4856
    %v4862 = vrcp.pop %v4610
    %v4863 = vmul.f32 %v4610, %v4862
    %v4864 = vsub.f32 1.0, %v4863
    %v4865 = vmul.f32 %v4862, %v4864
    %v4866 = vadd.f32 %v4862, %v4865
    %vm4867 = vweird.f32 %v4610
    %vm4868 = vweird.f32 %v4862
    %vm4869 = vmor %vm4867, %vm4868
    %v4870 = vsel %vm4869, %v4862, %v4866
    %v4871 = vand.u32 2147483647, %v4610
    %vm4872 = vcmp.eq.f32.partialorder %v4871, 8.507059e+37
    %v4873 = vand.u32 %v4610, 2147483648
    %v4874 = vor.u32 1.1754944e-38, %v4873
    %v4875 = vsel %vm4872, %v4874, %v4870
    %v4876 = vrcp.pop %v4613
    %v4877 = vmul.f32 %v4613, %v4876
    %v4878 = vsub.f32 1.0, %v4877
    %v4879 = vmul.f32 %v4876, %v4878
    %v4880 = vadd.f32 %v4876, %v4879
    %vm4881 = vweird.f32 %v4613
    %vm4882 = vweird.f32 %v4876
    %vm4883 = vmor %vm4881, %vm4882
    %v4884 = vsel %vm4883, %v4876, %v4880
    %v4885 = vand.u32 2147483647, %v4613
    %vm4886 = vcmp.eq.f32.partialorder %v4885, 8.507059e+37
    %v4887 = vand.u32 %v4613, 2147483648
    %v4888 = vor.u32 1.1754944e-38, %v4887
    %v4889 = vsel %vm4886, %v4888, %v4884
    %v4890 = vrcp.pop %v4616
    %v4891 = vmul.f32 %v4616, %v4890
    %v4892 = vsub.f32 1.0, %v4891
    %v4893 = vmul.f32 %v4890, %v4892
    %v4894 = vadd.f32 %v4890, %v4893
    %vm4895 = vweird.f32 %v4616
    %vm4896 = vweird.f32 %v4890
    %vm4897 = vmor %vm4895, %vm4896
    %v4898 = vsel %vm4897, %v4890, %v4894
    %v4899 = vand.u32 2147483647, %v4616
    %vm4900 = vcmp.eq.f32.partialorder %v4899, 8.507059e+37
    %v4901 = vand.u32 %v4616, 2147483648
    %v4902 = vor.u32 1.1754944e-38, %v4901
    %v4903 = vsel %vm4900, %v4902, %v4898
    %v4904 = vrcp.pop %v4619
    %v4905 = vmul.f32 %v4619, %v4904
    %v4906 = vsub.f32 1.0, %v4905
    %v4907 = vmul.f32 %v4904, %v4906
    %v4908 = vadd.f32 %v4904, %v4907
    %vm4909 = vweird.f32 %v4619
    %vm4910 = vweird.f32 %v4904
    %vm4911 = vmor %vm4909, %vm4910
    %v4912 = vsel %vm4911, %v4904, %v4908
    %v4913 = vand.u32 2147483647, %v4619
    %vm4914 = vcmp.eq.f32.partialorder %v4913, 8.507059e+37
    %v4915 = vand.u32 %v4619, 2147483648
    %v4916 = vor.u32 1.1754944e-38, %v4915
    %v4917 = vsel %vm4914, %v4916, %v4912
    %v4918 = vrcp.pop %v4622
    %v4919 = vmul.f32 %v4622, %v4918
    %v4920 = vsub.f32 1.0, %v4919
    %v4921 = vmul.f32 %v4918, %v4920
    %v4922 = vadd.f32 %v4918, %v4921
    %vm4923 = vweird.f32 %v4622
    %vm4924 = vweird.f32 %v4918
    %vm4925 = vmor %vm4923, %vm4924
    %v4926 = vsel %vm4925, %v4918, %v4922
    %v4927 = vand.u32 2147483647, %v4622
    %vm4928 = vcmp.eq.f32.partialorder %v4927, 8.507059e+37
    %v4929 = vand.u32 %v4622, 2147483648
    %v4930 = vor.u32 1.1754944e-38, %v4929
    %v4931 = vsel %vm4928, %v4930, %v4926
    %v4932 = vrcp.pop %v4625
    %v4933 = vmul.f32 %v4625, %v4932
    %v4934 = vsub.f32 1.0, %v4933
    %v4935 = vmul.f32 %v4932, %v4934
    %v4936 = vadd.f32 %v4932, %v4935
    %vm4937 = vweird.f32 %v4625
    %vm4938 = vweird.f32 %v4932
    %vm4939 = vmor %vm4937, %vm4938
    %v4940 = vsel %vm4939, %v4932, %v4936
    %v4941 = vand.u32 2147483647, %v4625
    %vm4942 = vcmp.eq.f32.partialorder %v4941, 8.507059e+37
    %v4943 = vand.u32 %v4625, 2147483648
    %v4944 = vor.u32 1.1754944e-38, %v4943
    %v4945 = vsel %vm4942, %v4944, %v4940
    %v4946 = vmul.f32 %v4650, %v4847
    %v4947 = vmul.f32 %v4676, %v4861
    %v4948 = vmul.f32 %v4702, %v4875
    %v4949 = vmul.f32 %v4728, %v4889
    %v4950 = vmul.f32 %v4754, %v4903
    %v4951 = vmul.f32 %v4780, %v4917
    %v4952 = vmul.f32 %v4806, %v4931
    %v4953 = vmul.f32 %v4832, %v4945
    %v4954 = vsel %vm264, %v4946, 0.0
    %v4955 = vrot.slane %v4954, 4
    %v4956 = vadd.f32 %v4954, %v4955
    %v4957 = vrot.slane %v4956, 2
    %v4958 = vadd.f32 %v4956, %v4957
    %v4959 = vrot.slane %v4958, 1
    %v4960 = vadd.f32 %v4958, %v4959
    %v4961 = vsel %vm264, %v4947, 0.0
    %v4962 = vrot.slane %v4961, 4
    %v4963 = vadd.f32 %v4961, %v4962
    %v4964 = vrot.slane %v4963, 2
    %v4965 = vadd.f32 %v4963, %v4964
    %v4966 = vrot.slane %v4965, 1
    %v4967 = vadd.f32 %v4965, %v4966
    %v4968 = vsel %vm264, %v4948, 0.0
    %v4969 = vrot.slane %v4968, 4
    %v4970 = vadd.f32 %v4968, %v4969
    %v4971 = vrot.slane %v4970, 2
    %v4972 = vadd.f32 %v4970, %v4971
    %v4973 = vrot.slane %v4972, 1
    %v4974 = vadd.f32 %v4972, %v4973
    %v4975 = vsel %vm264, %v4949, 0.0
    %v4976 = vrot.slane %v4975, 4
    %v4977 = vadd.f32 %v4975, %v4976
    %v4978 = vrot.slane %v4977, 2
    %v4979 = vadd.f32 %v4977, %v4978
    %v4980 = vrot.slane %v4979, 1
    %v4981 = vadd.f32 %v4979, %v4980
    %v4982 = vsel %vm264, %v4950, 0.0
    %v4983 = vrot.slane %v4982, 4
    %v4984 = vadd.f32 %v4982, %v4983
    %v4985 = vrot.slane %v4984, 2
    %v4986 = vadd.f32 %v4984, %v4985
    %v4987 = vrot.slane %v4986, 1
    %v4988 = vadd.f32 %v4986, %v4987
    %v4989 = vsel %vm264, %v4951, 0.0
    %v4990 = vrot.slane %v4989, 4
    %v4991 = vadd.f32 %v4989, %v4990
    %v4992 = vrot.slane %v4991, 2
    %v4993 = vadd.f32 %v4991, %v4992
    %v4994 = vrot.slane %v4993, 1
    %v4995 = vadd.f32 %v4993, %v4994
    %v4996 = vsel %vm264, %v4952, 0.0
    %v4997 = vrot.slane %v4996, 4
    %v4998 = vadd.f32 %v4996, %v4997
    %v4999 = vrot.slane %v4998, 2
    %v5000 = vadd.f32 %v4998, %v4999
    %v5001 = vrot.slane %v5000, 1
    %v5002 = vadd.f32 %v5000, %v5001
    %v5003 = vsel %vm264, %v4953, 0.0
    %v5004 = vrot.slane %v5003, 4
    %v5005 = vadd.f32 %v5003, %v5004
    %v5006 = vrot.slane %v5005, 2
    %v5007 = vadd.f32 %v5005, %v5006
    %v5008 = vrot.slane %v5007, 1
    %v5009 = vadd.f32 %v5007, %v5008
    %5010 = vrot.lane.b32.xlu0 %v172, 100
    %v5011 = vpop.permute.xlu0 %5010
    %5012 = vrot.lane.b32.xlu0 %v241, 100
    %v5013 = vpop.permute.xlu0 %5012
    %v5014 = vsel %vm264, %v5011, 0
    %v5016 = vsel %vm264, %v5013, 0
    %5018 = vmatpush.xpose.msra.mxu0 0.0
    %5019 = vmatpush.xpose.msra.mxu0 0.0
    %5020 = vmatpush.xpose.msra.mxu0 0.0
    %5021 = vmatpush.xpose.msra.mxu0 0.0
    %5022 = vmatpush.xpose.msra.mxu0 0.0
    %5023 = vmatpush.xpose.msra.mxu0 0.0
    %5024 = vmatpush.xpose.msra.mxu0 0.0
    %5025 = vmatpush.xpose.msra.mxu0 0.0
    %5026 = vmatpush.xpose.msra.mxu0 0.0
    %5027 = vmatpush.xpose.msra.mxu0 0.0
    %5028 = vmatpush.xpose.msra.mxu0 0.0
    %5029 = vmatpush.xpose.msra.mxu0 0.0
    %5030 = vmatpush.xpose.msra.mxu0 0.0
    %5031 = vmatpush.xpose.msra.mxu0 0.0
    %5032 = vmatpush.xpose.msra.mxu0 0.0
    %5033 = vmatpush.xpose.msra.mxu0 %v5016
    %5034 = vmatmul.f32.gmra.mxu0 %v5014
    %v5035 = vpop.f32.mrf.mxu0
    %v5036 = vadd.f32 0.0, %v5035
    %5037 = vdwg.mxu0
    %5038 = vrot.lane.b32.xlu0 %v175, 100
    %v5039 = vpop.permute.xlu0 %5038
    %5040 = vrot.lane.b32.xlu0 %v244, 100
    %v5041 = vpop.permute.xlu0 %5040
    %v5042 = vsel %vm264, %v5039, 0
    %v5044 = vsel %vm264, %v5041, 0
    %5046 = vmatpush.xpose.msra.mxu0 0.0
    %5047 = vmatpush.xpose.msra.mxu0 0.0
    %5048 = vmatpush.xpose.msra.mxu0 0.0
    %5049 = vmatpush.xpose.msra.mxu0 0.0
    %5050 = vmatpush.xpose.msra.mxu0 0.0
    %5051 = vmatpush.xpose.msra.mxu0 0.0
    %5052 = vmatpush.xpose.msra.mxu0 0.0
    %5053 = vmatpush.xpose.msra.mxu0 0.0
    %5054 = vmatpush.xpose.msra.mxu0 0.0
    %5055 = vmatpush.xpose.msra.mxu0 0.0
    %5056 = vmatpush.xpose.msra.mxu0 0.0
    %5057 = vmatpush.xpose.msra.mxu0 0.0
    %5058 = vmatpush.xpose.msra.mxu0 0.0
    %5059 = vmatpush.xpose.msra.mxu0 0.0
    %5060 = vmatpush.xpose.msra.mxu0 0.0
    %5061 = vmatpush.xpose.msra.mxu0 %v5044
    %5062 = vmatmul.f32.gmra.mxu0 %v5042
    %v5063 = vpop.f32.mrf.mxu0
    %v5064 = vadd.f32 0.0, %v5063
    %5065 = vdwg.mxu0
    %5066 = vrot.lane.b32.xlu0 %v178, 100
    %v5067 = vpop.permute.xlu0 %5066
    %5068 = vrot.lane.b32.xlu0 %v247, 100
    %v5069 = vpop.permute.xlu0 %5068
    %v5070 = vsel %vm264, %v5067, 0
    %v5072 = vsel %vm264, %v5069, 0
    %5074 = vmatpush.xpose.msra.mxu0 0.0
    %5075 = vmatpush.xpose.msra.mxu0 0.0
    %5076 = vmatpush.xpose.msra.mxu0 0.0
    %5077 = vmatpush.xpose.msra.mxu0 0.0
    %5078 = vmatpush.xpose.msra.mxu0 0.0
    %5079 = vmatpush.xpose.msra.mxu0 0.0
    %5080 = vmatpush.xpose.msra.mxu0 0.0
    %5081 = vmatpush.xpose.msra.mxu0 0.0
    %5082 = vmatpush.xpose.msra.mxu0 0.0
    %5083 = vmatpush.xpose.msra.mxu0 0.0
    %5084 = vmatpush.xpose.msra.mxu0 0.0
    %5085 = vmatpush.xpose.msra.mxu0 0.0
    %5086 = vmatpush.xpose.msra.mxu0 0.0
    %5087 = vmatpush.xpose.msra.mxu0 0.0
    %5088 = vmatpush.xpose.msra.mxu0 0.0
    %5089 = vmatpush.xpose.msra.mxu0 %v5072
    %5090 = vmatmul.f32.gmra.mxu0 %v5070
    %v5091 = vpop.f32.mrf.mxu0
    %v5092 = vadd.f32 0.0, %v5091
    %5093 = vdwg.mxu0
    %5094 = vrot.lane.b32.xlu0 %v181, 100
    %v5095 = vpop.permute.xlu0 %5094
    %5096 = vrot.lane.b32.xlu0 %v250, 100
    %v5097 = vpop.permute.xlu0 %5096
    %v5098 = vsel %vm264, %v5095, 0
    %v5100 = vsel %vm264, %v5097, 0
    %5102 = vmatpush.xpose.msra.mxu0 0.0
    %5103 = vmatpush.xpose.msra.mxu0 0.0
    %5104 = vmatpush.xpose.msra.mxu0 0.0
    %5105 = vmatpush.xpose.msra.mxu0 0.0
    %5106 = vmatpush.xpose.msra.mxu0 0.0
    %5107 = vmatpush.xpose.msra.mxu0 0.0
    %5108 = vmatpush.xpose.msra.mxu0 0.0
    %5109 = vmatpush.xpose.msra.mxu0 0.0
    %5110 = vmatpush.xpose.msra.mxu0 0.0
    %5111 = vmatpush.xpose.msra.mxu0 0.0
    %5112 = vmatpush.xpose.msra.mxu0 0.0
    %5113 = vmatpush.xpose.msra.mxu0 0.0
    %5114 = vmatpush.xpose.msra.mxu0 0.0
    %5115 = vmatpush.xpose.msra.mxu0 0.0
    %5116 = vmatpush.xpose.msra.mxu0 0.0
    %5117 = vmatpush.xpose.msra.mxu0 %v5100
    %5118 = vmatmul.f32.gmra.mxu0 %v5098
    %v5119 = vpop.f32.mrf.mxu0
    %v5120 = vadd.f32 0.0, %v5119
    %5121 = vdwg.mxu0
    %5122 = vrot.lane.b32.xlu0 %v184, 100
    %v5123 = vpop.permute.xlu0 %5122
    %5124 = vrot.lane.b32.xlu0 %v253, 100
    %v5125 = vpop.permute.xlu0 %5124
    %v5126 = vsel %vm264, %v5123, 0
    %v5128 = vsel %vm264, %v5125, 0
    %5130 = vmatpush.xpose.msra.mxu0 0.0
    %5131 = vmatpush.xpose.msra.mxu0 0.0
    %5132 = vmatpush.xpose.msra.mxu0 0.0
    %5133 = vmatpush.xpose.msra.mxu0 0.0
    %5134 = vmatpush.xpose.msra.mxu0 0.0
    %5135 = vmatpush.xpose.msra.mxu0 0.0
    %5136 = vmatpush.xpose.msra.mxu0 0.0
    %5137 = vmatpush.xpose.msra.mxu0 0.0
    %5138 = vmatpush.xpose.msra.mxu0 0.0
    %5139 = vmatpush.xpose.msra.mxu0 0.0
    %5140 = vmatpush.xpose.msra.mxu0 0.0
    %5141 = vmatpush.xpose.msra.mxu0 0.0
    %5142 = vmatpush.xpose.msra.mxu0 0.0
    %5143 = vmatpush.xpose.msra.mxu0 0.0
    %5144 = vmatpush.xpose.msra.mxu0 0.0
    %5145 = vmatpush.xpose.msra.mxu0 %v5128
    %5146 = vmatmul.f32.gmra.mxu0 %v5126
    %v5147 = vpop.f32.mrf.mxu0
    %v5148 = vadd.f32 0.0, %v5147
    %5149 = vdwg.mxu0
    %5150 = vrot.lane.b32.xlu0 %v187, 100
    %v5151 = vpop.permute.xlu0 %5150
    %5152 = vrot.lane.b32.xlu0 %v256, 100
    %v5153 = vpop.permute.xlu0 %5152
    %v5154 = vsel %vm264, %v5151, 0
    %v5156 = vsel %vm264, %v5153, 0
    %5158 = vmatpush.xpose.msra.mxu0 0.0
    %5159 = vmatpush.xpose.msra.mxu0 0.0
    %5160 = vmatpush.xpose.msra.mxu0 0.0
    %5161 = vmatpush.xpose.msra.mxu0 0.0
    %5162 = vmatpush.xpose.msra.mxu0 0.0
    %5163 = vmatpush.xpose.msra.mxu0 0.0
    %5164 = vmatpush.xpose.msra.mxu0 0.0
    %5165 = vmatpush.xpose.msra.mxu0 0.0
    %5166 = vmatpush.xpose.msra.mxu0 0.0
    %5167 = vmatpush.xpose.msra.mxu0 0.0
    %5168 = vmatpush.xpose.msra.mxu0 0.0
    %5169 = vmatpush.xpose.msra.mxu0 0.0
    %5170 = vmatpush.xpose.msra.mxu0 0.0
    %5171 = vmatpush.xpose.msra.mxu0 0.0
    %5172 = vmatpush.xpose.msra.mxu0 0.0
    %5173 = vmatpush.xpose.msra.mxu0 %v5156
    %5174 = vmatmul.f32.gmra.mxu0 %v5154
    %v5175 = vpop.f32.mrf.mxu0
    %v5176 = vadd.f32 0.0, %v5175
    %5177 = vdwg.mxu0
    %5178 = vrot.lane.b32.xlu0 %v190, 100
    %v5179 = vpop.permute.xlu0 %5178
    %5180 = vrot.lane.b32.xlu0 %v259, 100
    %v5181 = vpop.permute.xlu0 %5180
    %v5182 = vsel %vm264, %v5179, 0
    %v5184 = vsel %vm264, %v5181, 0
    %5186 = vmatpush.xpose.msra.mxu0 0.0
    %5187 = vmatpush.xpose.msra.mxu0 0.0
    %5188 = vmatpush.xpose.msra.mxu0 0.0
    %5189 = vmatpush.xpose.msra.mxu0 0.0
    %5190 = vmatpush.xpose.msra.mxu0 0.0
    %5191 = vmatpush.xpose.msra.mxu0 0.0
    %5192 = vmatpush.xpose.msra.mxu0 0.0
    %5193 = vmatpush.xpose.msra.mxu0 0.0
    %5194 = vmatpush.xpose.msra.mxu0 0.0
    %5195 = vmatpush.xpose.msra.mxu0 0.0
    %5196 = vmatpush.xpose.msra.mxu0 0.0
    %5197 = vmatpush.xpose.msra.mxu0 0.0
    %5198 = vmatpush.xpose.msra.mxu0 0.0
    %5199 = vmatpush.xpose.msra.mxu0 0.0
    %5200 = vmatpush.xpose.msra.mxu0 0.0
    %5201 = vmatpush.xpose.msra.mxu0 %v5184
    %5202 = vmatmul.f32.gmra.mxu0 %v5182
    %v5203 = vpop.f32.mrf.mxu0
    %v5204 = vadd.f32 0.0, %v5203
    %5205 = vdwg.mxu0
    %5206 = vrot.lane.b32.xlu0 %v193, 100
    %v5207 = vpop.permute.xlu0 %5206
    %5208 = vrot.lane.b32.xlu0 %v262, 100
    %v5209 = vpop.permute.xlu0 %5208
    %v5210 = vsel %vm264, %v5207, 0
    %v5212 = vsel %vm264, %v5209, 0
    %5214 = vmatpush.xpose.msra.mxu0 0.0
    %5215 = vmatpush.xpose.msra.mxu0 0.0
    %5216 = vmatpush.xpose.msra.mxu0 0.0
    %5217 = vmatpush.xpose.msra.mxu0 0.0
    %5218 = vmatpush.xpose.msra.mxu0 0.0
    %5219 = vmatpush.xpose.msra.mxu0 0.0
    %5220 = vmatpush.xpose.msra.mxu0 0.0
    %5221 = vmatpush.xpose.msra.mxu0 0.0
    %5222 = vmatpush.xpose.msra.mxu0 0.0
    %5223 = vmatpush.xpose.msra.mxu0 0.0
    %5224 = vmatpush.xpose.msra.mxu0 0.0
    %5225 = vmatpush.xpose.msra.mxu0 0.0
    %5226 = vmatpush.xpose.msra.mxu0 0.0
    %5227 = vmatpush.xpose.msra.mxu0 0.0
    %5228 = vmatpush.xpose.msra.mxu0 0.0
    %5229 = vmatpush.xpose.msra.mxu0 %v5212
    %5230 = vmatmul.f32.gmra.mxu0 %v5210
    %v5231 = vpop.f32.mrf.mxu0
    %v5232 = vadd.f32 0.0, %v5231
    %5233 = vdwg.mxu0
    %v5234 = vsel %vm473, %v5036, -inf
    %5235 = vmax.xlane.f32.xlu0 %v5234
    %v5236 = vpop.xlane.xlu0 %5235
    %v5237 = vsel %vm473, %v5064, -inf
    %5238 = vmax.xlane.f32.xlu0 %v5237
    %v5239 = vpop.xlane.xlu0 %5238
    %v5240 = vsel %vm473, %v5092, -inf
    %5241 = vmax.xlane.f32.xlu0 %v5240
    %v5242 = vpop.xlane.xlu0 %5241
    %v5243 = vsel %vm473, %v5120, -inf
    %5244 = vmax.xlane.f32.xlu0 %v5243
    %v5245 = vpop.xlane.xlu0 %5244
    %v5246 = vsel %vm473, %v5148, -inf
    %5247 = vmax.xlane.f32.xlu0 %v5246
    %v5248 = vpop.xlane.xlu0 %5247
    %v5249 = vsel %vm473, %v5176, -inf
    %5250 = vmax.xlane.f32.xlu0 %v5249
    %v5251 = vpop.xlane.xlu0 %5250
    %v5252 = vsel %vm473, %v5204, -inf
    %5253 = vmax.xlane.f32.xlu0 %v5252
    %v5254 = vpop.xlane.xlu0 %5253
    %v5255 = vsel %vm473, %v5232, -inf
    %5256 = vmax.xlane.f32.xlu0 %v5255
    %v5257 = vpop.xlane.xlu0 %5256
    %v5258 = vsub.f32 %v5036, %v5236
    %v5259 = vsub.f32 %v5064, %v5239
    %v5260 = vsub.f32 %v5092, %v5242
    %v5261 = vsub.f32 %v5120, %v5245
    %v5262 = vsub.f32 %v5148, %v5248
    %v5263 = vsub.f32 %v5176, %v5251
    %v5264 = vsub.f32 %v5204, %v5254
    %v5265 = vsub.f32 %v5232, %v5257
    %v5266 = vmul.f32 %v5258, 1.442695
    %v5267 = vpow.pop %v5266
    %v5268 = vmul.f32 %v5259, 1.442695
    %v5269 = vpow.pop %v5268
    %v5270 = vmul.f32 %v5260, 1.442695
    %v5271 = vpow.pop %v5270
    %v5272 = vmul.f32 %v5261, 1.442695
    %v5273 = vpow.pop %v5272
    %v5274 = vmul.f32 %v5262, 1.442695
    %v5275 = vpow.pop %v5274
    %v5276 = vmul.f32 %v5263, 1.442695
    %v5277 = vpow.pop %v5276
    %v5278 = vmul.f32 %v5264, 1.442695
    %v5279 = vpow.pop %v5278
    %v5280 = vmul.f32 %v5265, 1.442695
    %v5281 = vpow.pop %v5280
    %v5282 = vsel %vm473, %v5267, 0.0
    %5283 = vadd.xlane.f32.xlu0 %v5282
    %v5284 = vpop.xlane.xlu0 %5283
    %v5285 = vsel %vm473, %v5269, 0.0
    %5286 = vadd.xlane.f32.xlu0 %v5285
    %v5287 = vpop.xlane.xlu0 %5286
    %v5288 = vsel %vm473, %v5271, 0.0
    %5289 = vadd.xlane.f32.xlu0 %v5288
    %v5290 = vpop.xlane.xlu0 %5289
    %v5291 = vsel %vm473, %v5273, 0.0
    %5292 = vadd.xlane.f32.xlu0 %v5291
    %v5293 = vpop.xlane.xlu0 %5292
    %v5294 = vsel %vm473, %v5275, 0.0
    %5295 = vadd.xlane.f32.xlu0 %v5294
    %v5296 = vpop.xlane.xlu0 %5295
    %v5297 = vsel %vm473, %v5277, 0.0
    %5298 = vadd.xlane.f32.xlu0 %v5297
    %v5299 = vpop.xlane.xlu0 %5298
    %v5300 = vsel %vm473, %v5279, 0.0
    %5301 = vadd.xlane.f32.xlu0 %v5300
    %v5302 = vpop.xlane.xlu0 %5301
    %v5303 = vsel %vm473, %v5281, 0.0
    %5304 = vadd.xlane.f32.xlu0 %v5303
    %v5305 = vpop.xlane.xlu0 %5304
    %5306 = vrot.lane.b32.xlu0 %v241, 68
    %v5307 = vpop.permute.xlu0 %5306
    %v5310 = vsel %vm473, %v5267, 0
    %5312 = vmatpush.msra.mxu0 0.0
    %5313 = vmatpush.msra.mxu0 0.0
    %5314 = vmatpush.msra.mxu0 0.0
    %5315 = vmatpush.msra.mxu0 0.0
    %5316 = vmatpush.msra.mxu0 0.0
    %5317 = vmatpush.msra.mxu0 0.0
    %5318 = vmatpush.msra.mxu0 0.0
    %5319 = vmatpush.msra.mxu0 0.0
    %5320 = vmatpush.msra.mxu0 0.0
    %5321 = vmatpush.msra.mxu0 0.0
    %5322 = vmatpush.msra.mxu0 0.0
    %5323 = vmatpush.msra.mxu0 0.0
    %5324 = vmatpush.msra.mxu0 0.0
    %5325 = vmatpush.msra.mxu0 0.0
    %5326 = vmatpush.msra.mxu0 0.0
    %5327 = vmatpush.msra.mxu0 %v5307
    %5328 = vmatmul.f32.gmra.mxu0 %v5310
    %v5329 = vpop.f32.mrf.mxu0
    %v5330 = vadd.f32 0.0, %v5329
    %5331 = vdwg.mxu0
    %5332 = vrot.lane.b32.xlu0 %v244, 68
    %v5333 = vpop.permute.xlu0 %5332
    %v5336 = vsel %vm473, %v5269, 0
    %5338 = vmatpush.msra.mxu0 0.0
    %5339 = vmatpush.msra.mxu0 0.0
    %5340 = vmatpush.msra.mxu0 0.0
    %5341 = vmatpush.msra.mxu0 0.0
    %5342 = vmatpush.msra.mxu0 0.0
    %5343 = vmatpush.msra.mxu0 0.0
    %5344 = vmatpush.msra.mxu0 0.0
    %5345 = vmatpush.msra.mxu0 0.0
    %5346 = vmatpush.msra.mxu0 0.0
    %5347 = vmatpush.msra.mxu0 0.0
    %5348 = vmatpush.msra.mxu0 0.0
    %5349 = vmatpush.msra.mxu0 0.0
    %5350 = vmatpush.msra.mxu0 0.0
    %5351 = vmatpush.msra.mxu0 0.0
    %5352 = vmatpush.msra.mxu0 0.0
    %5353 = vmatpush.msra.mxu0 %v5333
    %5354 = vmatmul.f32.gmra.mxu0 %v5336
    %v5355 = vpop.f32.mrf.mxu0
    %v5356 = vadd.f32 0.0, %v5355
    %5357 = vdwg.mxu0
    %5358 = vrot.lane.b32.xlu0 %v247, 68
    %v5359 = vpop.permute.xlu0 %5358
    %v5362 = vsel %vm473, %v5271, 0
    %5364 = vmatpush.msra.mxu0 0.0
    %5365 = vmatpush.msra.mxu0 0.0
    %5366 = vmatpush.msra.mxu0 0.0
    %5367 = vmatpush.msra.mxu0 0.0
    %5368 = vmatpush.msra.mxu0 0.0
    %5369 = vmatpush.msra.mxu0 0.0
    %5370 = vmatpush.msra.mxu0 0.0
    %5371 = vmatpush.msra.mxu0 0.0
    %5372 = vmatpush.msra.mxu0 0.0
    %5373 = vmatpush.msra.mxu0 0.0
    %5374 = vmatpush.msra.mxu0 0.0
    %5375 = vmatpush.msra.mxu0 0.0
    %5376 = vmatpush.msra.mxu0 0.0
    %5377 = vmatpush.msra.mxu0 0.0
    %5378 = vmatpush.msra.mxu0 0.0
    %5379 = vmatpush.msra.mxu0 %v5359
    %5380 = vmatmul.f32.gmra.mxu0 %v5362
    %v5381 = vpop.f32.mrf.mxu0
    %v5382 = vadd.f32 0.0, %v5381
    %5383 = vdwg.mxu0
    %5384 = vrot.lane.b32.xlu0 %v250, 68
    %v5385 = vpop.permute.xlu0 %5384
    %v5388 = vsel %vm473, %v5273, 0
    %5390 = vmatpush.msra.mxu0 0.0
    %5391 = vmatpush.msra.mxu0 0.0
    %5392 = vmatpush.msra.mxu0 0.0
    %5393 = vmatpush.msra.mxu0 0.0
    %5394 = vmatpush.msra.mxu0 0.0
    %5395 = vmatpush.msra.mxu0 0.0
    %5396 = vmatpush.msra.mxu0 0.0
    %5397 = vmatpush.msra.mxu0 0.0
    %5398 = vmatpush.msra.mxu0 0.0
    %5399 = vmatpush.msra.mxu0 0.0
    %5400 = vmatpush.msra.mxu0 0.0
    %5401 = vmatpush.msra.mxu0 0.0
    %5402 = vmatpush.msra.mxu0 0.0
    %5403 = vmatpush.msra.mxu0 0.0
    %5404 = vmatpush.msra.mxu0 0.0
    %5405 = vmatpush.msra.mxu0 %v5385
    %5406 = vmatmul.f32.gmra.mxu0 %v5388
    %v5407 = vpop.f32.mrf.mxu0
    %v5408 = vadd.f32 0.0, %v5407
    %5409 = vdwg.mxu0
    %5410 = vrot.lane.b32.xlu0 %v253, 68
    %v5411 = vpop.permute.xlu0 %5410
    %v5414 = vsel %vm473, %v5275, 0
    %5416 = vmatpush.msra.mxu0 0.0
    %5417 = vmatpush.msra.mxu0 0.0
    %5418 = vmatpush.msra.mxu0 0.0
    %5419 = vmatpush.msra.mxu0 0.0
    %5420 = vmatpush.msra.mxu0 0.0
    %5421 = vmatpush.msra.mxu0 0.0
    %5422 = vmatpush.msra.mxu0 0.0
    %5423 = vmatpush.msra.mxu0 0.0
    %5424 = vmatpush.msra.mxu0 0.0
    %5425 = vmatpush.msra.mxu0 0.0
    %5426 = vmatpush.msra.mxu0 0.0
    %5427 = vmatpush.msra.mxu0 0.0
    %5428 = vmatpush.msra.mxu0 0.0
    %5429 = vmatpush.msra.mxu0 0.0
    %5430 = vmatpush.msra.mxu0 0.0
    %5431 = vmatpush.msra.mxu0 %v5411
    %5432 = vmatmul.f32.gmra.mxu0 %v5414
    %v5433 = vpop.f32.mrf.mxu0
    %v5434 = vadd.f32 0.0, %v5433
    %5435 = vdwg.mxu0
    %5436 = vrot.lane.b32.xlu0 %v256, 68
    %v5437 = vpop.permute.xlu0 %5436
    %v5440 = vsel %vm473, %v5277, 0
    %5442 = vmatpush.msra.mxu0 0.0
    %5443 = vmatpush.msra.mxu0 0.0
    %5444 = vmatpush.msra.mxu0 0.0
    %5445 = vmatpush.msra.mxu0 0.0
    %5446 = vmatpush.msra.mxu0 0.0
    %5447 = vmatpush.msra.mxu0 0.0
    %5448 = vmatpush.msra.mxu0 0.0
    %5449 = vmatpush.msra.mxu0 0.0
    %5450 = vmatpush.msra.mxu0 0.0
    %5451 = vmatpush.msra.mxu0 0.0
    %5452 = vmatpush.msra.mxu0 0.0
    %5453 = vmatpush.msra.mxu0 0.0
    %5454 = vmatpush.msra.mxu0 0.0
    %5455 = vmatpush.msra.mxu0 0.0
    %5456 = vmatpush.msra.mxu0 0.0
    %5457 = vmatpush.msra.mxu0 %v5437
    %5458 = vmatmul.f32.gmra.mxu0 %v5440
    %v5459 = vpop.f32.mrf.mxu0
    %v5460 = vadd.f32 0.0, %v5459
    %5461 = vdwg.mxu0
    %5462 = vrot.lane.b32.xlu0 %v259, 68
    %v5463 = vpop.permute.xlu0 %5462
    %v5466 = vsel %vm473, %v5279, 0
    %5468 = vmatpush.msra.mxu0 0.0
    %5469 = vmatpush.msra.mxu0 0.0
    %5470 = vmatpush.msra.mxu0 0.0
    %5471 = vmatpush.msra.mxu0 0.0
    %5472 = vmatpush.msra.mxu0 0.0
    %5473 = vmatpush.msra.mxu0 0.0
    %5474 = vmatpush.msra.mxu0 0.0
    %5475 = vmatpush.msra.mxu0 0.0
    %5476 = vmatpush.msra.mxu0 0.0
    %5477 = vmatpush.msra.mxu0 0.0
    %5478 = vmatpush.msra.mxu0 0.0
    %5479 = vmatpush.msra.mxu0 0.0
    %5480 = vmatpush.msra.mxu0 0.0
    %5481 = vmatpush.msra.mxu0 0.0
    %5482 = vmatpush.msra.mxu0 0.0
    %5483 = vmatpush.msra.mxu0 %v5463
    %5484 = vmatmul.f32.gmra.mxu0 %v5466
    %v5485 = vpop.f32.mrf.mxu0
    %v5486 = vadd.f32 0.0, %v5485
    %5487 = vdwg.mxu0
    %5488 = vrot.lane.b32.xlu0 %v262, 68
    %v5489 = vpop.permute.xlu0 %5488
    %v5492 = vsel %vm473, %v5281, 0
    %5494 = vmatpush.msra.mxu0 0.0
    %5495 = vmatpush.msra.mxu0 0.0
    %5496 = vmatpush.msra.mxu0 0.0
    %5497 = vmatpush.msra.mxu0 0.0
    %5498 = vmatpush.msra.mxu0 0.0
    %5499 = vmatpush.msra.mxu0 0.0
    %5500 = vmatpush.msra.mxu0 0.0
    %5501 = vmatpush.msra.mxu0 0.0
    %5502 = vmatpush.msra.mxu0 0.0
    %5503 = vmatpush.msra.mxu0 0.0
    %5504 = vmatpush.msra.mxu0 0.0
    %5505 = vmatpush.msra.mxu0 0.0
    %5506 = vmatpush.msra.mxu0 0.0
    %5507 = vmatpush.msra.mxu0 0.0
    %5508 = vmatpush.msra.mxu0 0.0
    %5509 = vmatpush.msra.mxu0 %v5489
    %5510 = vmatmul.f32.gmra.mxu0 %v5492
    %v5511 = vpop.f32.mrf.mxu0
    %v5512 = vadd.f32 0.0, %v5511
    %5513 = vdwg.mxu0
    %v5514 = vrcp.pop %v5284
    %v5515 = vmul.f32 %v5284, %v5514
    %v5516 = vsub.f32 1.0, %v5515
    %v5517 = vmul.f32 %v5514, %v5516
    %v5518 = vadd.f32 %v5514, %v5517
    %vm5519 = vweird.f32 %v5284
    %vm5520 = vweird.f32 %v5514
    %vm5521 = vmor %vm5519, %vm5520
    %v5522 = vsel %vm5521, %v5514, %v5518
    %v5523 = vand.u32 2147483647, %v5284
    %vm5524 = vcmp.eq.f32.partialorder %v5523, 8.507059e+37
    %v5525 = vand.u32 %v5284, 2147483648
    %v5526 = vor.u32 1.1754944e-38, %v5525
    %v5527 = vsel %vm5524, %v5526, %v5522
    %v5528 = vrcp.pop %v5287
    %v5529 = vmul.f32 %v5287, %v5528
    %v5530 = vsub.f32 1.0, %v5529
    %v5531 = vmul.f32 %v5528, %v5530
    %v5532 = vadd.f32 %v5528, %v5531
    %vm5533 = vweird.f32 %v5287
    %vm5534 = vweird.f32 %v5528
    %vm5535 = vmor %vm5533, %vm5534
    %v5536 = vsel %vm5535, %v5528, %v5532
    %v5537 = vand.u32 2147483647, %v5287
    %vm5538 = vcmp.eq.f32.partialorder %v5537, 8.507059e+37
    %v5539 = vand.u32 %v5287, 2147483648
    %v5540 = vor.u32 1.1754944e-38, %v5539
    %v5541 = vsel %vm5538, %v5540, %v5536
    %v5542 = vrcp.pop %v5290
    %v5543 = vmul.f32 %v5290, %v5542
    %v5544 = vsub.f32 1.0, %v5543
    %v5545 = vmul.f32 %v5542, %v5544
    %v5546 = vadd.f32 %v5542, %v5545
    %vm5547 = vweird.f32 %v5290
    %vm5548 = vweird.f32 %v5542
    %vm5549 = vmor %vm5547, %vm5548
    %v5550 = vsel %vm5549, %v5542, %v5546
    %v5551 = vand.u32 2147483647, %v5290
    %vm5552 = vcmp.eq.f32.partialorder %v5551, 8.507059e+37
    %v5553 = vand.u32 %v5290, 2147483648
    %v5554 = vor.u32 1.1754944e-38, %v5553
    %v5555 = vsel %vm5552, %v5554, %v5550
    %v5556 = vrcp.pop %v5293
    %v5557 = vmul.f32 %v5293, %v5556
    %v5558 = vsub.f32 1.0, %v5557
    %v5559 = vmul.f32 %v5556, %v5558
    %v5560 = vadd.f32 %v5556, %v5559
    %vm5561 = vweird.f32 %v5293
    %vm5562 = vweird.f32 %v5556
    %vm5563 = vmor %vm5561, %vm5562
    %v5564 = vsel %vm5563, %v5556, %v5560
    %v5565 = vand.u32 2147483647, %v5293
    %vm5566 = vcmp.eq.f32.partialorder %v5565, 8.507059e+37
    %v5567 = vand.u32 %v5293, 2147483648
    %v5568 = vor.u32 1.1754944e-38, %v5567
    %v5569 = vsel %vm5566, %v5568, %v5564
    %v5570 = vrcp.pop %v5296
    %v5571 = vmul.f32 %v5296, %v5570
    %v5572 = vsub.f32 1.0, %v5571
    %v5573 = vmul.f32 %v5570, %v5572
    %v5574 = vadd.f32 %v5570, %v5573
    %vm5575 = vweird.f32 %v5296
    %vm5576 = vweird.f32 %v5570
    %vm5577 = vmor %vm5575, %vm5576
    %v5578 = vsel %vm5577, %v5570, %v5574
    %v5579 = vand.u32 2147483647, %v5296
    %vm5580 = vcmp.eq.f32.partialorder %v5579, 8.507059e+37
    %v5581 = vand.u32 %v5296, 2147483648
    %v5582 = vor.u32 1.1754944e-38, %v5581
    %v5583 = vsel %vm5580, %v5582, %v5578
    %v5584 = vrcp.pop %v5299
    %v5585 = vmul.f32 %v5299, %v5584
    %v5586 = vsub.f32 1.0, %v5585
    %v5587 = vmul.f32 %v5584, %v5586
    %v5588 = vadd.f32 %v5584, %v5587
    %vm5589 = vweird.f32 %v5299
    %vm5590 = vweird.f32 %v5584
    %vm5591 = vmor %vm5589, %vm5590
    %v5592 = vsel %vm5591, %v5584, %v5588
    %v5593 = vand.u32 2147483647, %v5299
    %vm5594 = vcmp.eq.f32.partialorder %v5593, 8.507059e+37
    %v5595 = vand.u32 %v5299, 2147483648
    %v5596 = vor.u32 1.1754944e-38, %v5595
    %v5597 = vsel %vm5594, %v5596, %v5592
    %v5598 = vrcp.pop %v5302
    %v5599 = vmul.f32 %v5302, %v5598
    %v5600 = vsub.f32 1.0, %v5599
    %v5601 = vmul.f32 %v5598, %v5600
    %v5602 = vadd.f32 %v5598, %v5601
    %vm5603 = vweird.f32 %v5302
    %vm5604 = vweird.f32 %v5598
    %vm5605 = vmor %vm5603, %vm5604
    %v5606 = vsel %vm5605, %v5598, %v5602
    %v5607 = vand.u32 2147483647, %v5302
    %vm5608 = vcmp.eq.f32.partialorder %v5607, 8.507059e+37
    %v5609 = vand.u32 %v5302, 2147483648
    %v5610 = vor.u32 1.1754944e-38, %v5609
    %v5611 = vsel %vm5608, %v5610, %v5606
    %v5612 = vrcp.pop %v5305
    %v5613 = vmul.f32 %v5305, %v5612
    %v5614 = vsub.f32 1.0, %v5613
    %v5615 = vmul.f32 %v5612, %v5614
    %v5616 = vadd.f32 %v5612, %v5615
    %vm5617 = vweird.f32 %v5305
    %vm5618 = vweird.f32 %v5612
    %vm5619 = vmor %vm5617, %vm5618
    %v5620 = vsel %vm5619, %v5612, %v5616
    %v5621 = vand.u32 2147483647, %v5305
    %vm5622 = vcmp.eq.f32.partialorder %v5621, 8.507059e+37
    %v5623 = vand.u32 %v5305, 2147483648
    %v5624 = vor.u32 1.1754944e-38, %v5623
    %v5625 = vsel %vm5622, %v5624, %v5620
    %v5626 = vmul.f32 %v5330, %v5527
    %v5627 = vmul.f32 %v5356, %v5541
    %v5628 = vmul.f32 %v5382, %v5555
    %v5629 = vmul.f32 %v5408, %v5569
    %v5630 = vmul.f32 %v5434, %v5583
    %v5631 = vmul.f32 %v5460, %v5597
    %v5632 = vmul.f32 %v5486, %v5611
    %v5633 = vmul.f32 %v5512, %v5625
    %v5634 = vsel %vm264, %v5626, 0.0
    %v5635 = vrot.slane %v5634, 4
    %v5636 = vadd.f32 %v5634, %v5635
    %v5637 = vrot.slane %v5636, 2
    %v5638 = vadd.f32 %v5636, %v5637
    %v5639 = vrot.slane %v5638, 1
    %v5640 = vadd.f32 %v5638, %v5639
    %v5641 = vsel %vm264, %v5627, 0.0
    %v5642 = vrot.slane %v5641, 4
    %v5643 = vadd.f32 %v5641, %v5642
    %v5644 = vrot.slane %v5643, 2
    %v5645 = vadd.f32 %v5643, %v5644
    %v5646 = vrot.slane %v5645, 1
    %v5647 = vadd.f32 %v5645, %v5646
    %v5648 = vsel %vm264, %v5628, 0.0
    %v5649 = vrot.slane %v5648, 4
    %v5650 = vadd.f32 %v5648, %v5649
    %v5651 = vrot.slane %v5650, 2
    %v5652 = vadd.f32 %v5650, %v5651
    %v5653 = vrot.slane %v5652, 1
    %v5654 = vadd.f32 %v5652, %v5653
    %v5655 = vsel %vm264, %v5629, 0.0
    %v5656 = vrot.slane %v5655, 4
    %v5657 = vadd.f32 %v5655, %v5656
    %v5658 = vrot.slane %v5657, 2
    %v5659 = vadd.f32 %v5657, %v5658
    %v5660 = vrot.slane %v5659, 1
    %v5661 = vadd.f32 %v5659, %v5660
    %v5662 = vsel %vm264, %v5630, 0.0
    %v5663 = vrot.slane %v5662, 4
    %v5664 = vadd.f32 %v5662, %v5663
    %v5665 = vrot.slane %v5664, 2
    %v5666 = vadd.f32 %v5664, %v5665
    %v5667 = vrot.slane %v5666, 1
    %v5668 = vadd.f32 %v5666, %v5667
    %v5669 = vsel %vm264, %v5631, 0.0
    %v5670 = vrot.slane %v5669, 4
    %v5671 = vadd.f32 %v5669, %v5670
    %v5672 = vrot.slane %v5671, 2
    %v5673 = vadd.f32 %v5671, %v5672
    %v5674 = vrot.slane %v5673, 1
    %v5675 = vadd.f32 %v5673, %v5674
    %v5676 = vsel %vm264, %v5632, 0.0
    %v5677 = vrot.slane %v5676, 4
    %v5678 = vadd.f32 %v5676, %v5677
    %v5679 = vrot.slane %v5678, 2
    %v5680 = vadd.f32 %v5678, %v5679
    %v5681 = vrot.slane %v5680, 1
    %v5682 = vadd.f32 %v5680, %v5681
    %v5683 = vsel %vm264, %v5633, 0.0
    %v5684 = vrot.slane %v5683, 4
    %v5685 = vadd.f32 %v5683, %v5684
    %v5686 = vrot.slane %v5685, 2
    %v5687 = vadd.f32 %v5685, %v5686
    %v5688 = vrot.slane %v5687, 1
    %v5689 = vadd.f32 %v5687, %v5688
    %vm5698 = vcmask 1041409
    %v5699 = vsel %vm5698, %v887, %v880
    %vm5700 = vcmask 1042434
    %v5701 = vsel %vm5700, %v894, %v5699
    %vm5702 = vcmask 1043459
    %v5703 = vsel %vm5702, %v901, %v5701
    %vm5704 = vcmask 1044484
    %v5705 = vsel %vm5704, %v908, %v5703
    %vm5706 = vcmask 1045509
    %v5707 = vsel %vm5706, %v915, %v5705
    %vm5708 = vcmask 1046534
    %v5709 = vsel %vm5708, %v922, %v5707
    %vm5710 = vcmask 1047559
    %v5711 = vsel %vm5710, %v929, %v5709
    %v5721 = vsel %vm5698, %v1567, %v1560
    %v5722 = vsel %vm5700, %v1574, %v5721
    %v5723 = vsel %vm5702, %v1581, %v5722
    %v5724 = vsel %vm5704, %v1588, %v5723
    %v5725 = vsel %vm5706, %v1595, %v5724
    %v5726 = vsel %vm5708, %v1602, %v5725
    %v5727 = vsel %vm5710, %v1609, %v5726
    %5728 = vrot.lane.b32.xlu0 %v5727, 4
    %v5729 = vpop.permute.xlu0 %5728
    %v5739 = vsel %vm5698, %v2247, %v2240
    %v5740 = vsel %vm5700, %v2254, %v5739
    %v5741 = vsel %vm5702, %v2261, %v5740
    %v5742 = vsel %vm5704, %v2268, %v5741
    %v5743 = vsel %vm5706, %v2275, %v5742
    %v5744 = vsel %vm5708, %v2282, %v5743
    %v5745 = vsel %vm5710, %v2289, %v5744
    %5746 = vrot.lane.b32.xlu0 %v5745, 8
    %v5747 = vpop.permute.xlu0 %5746
    %v5757 = vsel %vm5698, %v2927, %v2920
    %v5758 = vsel %vm5700, %v2934, %v5757
    %v5759 = vsel %vm5702, %v2941, %v5758
    %v5760 = vsel %vm5704, %v2948, %v5759
    %v5761 = vsel %vm5706, %v2955, %v5760
    %v5762 = vsel %vm5708, %v2962, %v5761
    %v5763 = vsel %vm5710, %v2969, %v5762
    %5764 = vrot.lane.b32.xlu0 %v5763, 12
    %v5765 = vpop.permute.xlu0 %5764
    %v5775 = vsel %vm5698, %v3607, %v3600
    %v5776 = vsel %vm5700, %v3614, %v5775
    %v5777 = vsel %vm5702, %v3621, %v5776
    %v5778 = vsel %vm5704, %v3628, %v5777
    %v5779 = vsel %vm5706, %v3635, %v5778
    %v5780 = vsel %vm5708, %v3642, %v5779
    %v5781 = vsel %vm5710, %v3649, %v5780
    %5782 = vrot.lane.b32.xlu0 %v5781, 16
    %v5783 = vpop.permute.xlu0 %5782
    %v5793 = vsel %vm5698, %v4287, %v4280
    %v5794 = vsel %vm5700, %v4294, %v5793
    %v5795 = vsel %vm5702, %v4301, %v5794
    %v5796 = vsel %vm5704, %v4308, %v5795
    %v5797 = vsel %vm5706, %v4315, %v5796
    %v5798 = vsel %vm5708, %v4322, %v5797
    %v5799 = vsel %vm5710, %v4329, %v5798
    %5800 = vrot.lane.b32.xlu0 %v5799, 20
    %v5801 = vpop.permute.xlu0 %5800
    %v5811 = vsel %vm5698, %v4967, %v4960
    %v5812 = vsel %vm5700, %v4974, %v5811
    %v5813 = vsel %vm5702, %v4981, %v5812
    %v5814 = vsel %vm5704, %v4988, %v5813
    %v5815 = vsel %vm5706, %v4995, %v5814
    %v5816 = vsel %vm5708, %v5002, %v5815
    %v5817 = vsel %vm5710, %v5009, %v5816
    %5818 = vrot.lane.b32.xlu0 %v5817, 24
    %v5819 = vpop.permute.xlu0 %5818
    %v5829 = vsel %vm5698, %v5647, %v5640
    %v5830 = vsel %vm5700, %v5654, %v5829
    %v5831 = vsel %vm5702, %v5661, %v5830
    %v5832 = vsel %vm5704, %v5668, %v5831
    %v5833 = vsel %vm5706, %v5675, %v5832
    %v5834 = vsel %vm5708, %v5682, %v5833
    %v5835 = vsel %vm5710, %v5689, %v5834
    %5836 = vrot.lane.b32.xlu0 %v5835, 28
    %v5837 = vpop.permute.xlu0 %5836
    %v5839 = vsel %vm264, %v5711, %v5729
    %v5840 = vsel %vm473, %v5839, %v5747
    %vm5841 = vcmask 97280
    %v5842 = vsel %vm5841, %v5840, %v5765
    %vm5843 = vcmask 130048
    %v5844 = vsel %vm5843, %v5842, %v5783
    %vm5845 = vcmask 162816
    %v5846 = vsel %vm5845, %v5844, %v5801
    %vm5847 = vcmask 195584
    %v5848 = vsel %vm5847, %v5846, %v5819
    %vm5849 = vcmask 228352
    %v5850 = vsel %vm5849, %v5848, %v5837
    %v5851 = vld [vmem:[#allocation10] sm:$0xff]
    %v5852 = vld [vmem:[#allocation10 + $0x8] sm:$0xff]
    %v5853 = vld [vmem:[#allocation10 + $0x10] sm:$0xff]
    %v5854 = vld [vmem:[#allocation10 + $0x18] sm:$0xff]
    %v5856 = vsel %vm129, %v5850, 0
    %5858 = vmatpush.msra.mxu0 0.0
    %5859 = vmatpush.msra.mxu0 0.0
    %5860 = vmatpush.msra.mxu0 0.0
    %5861 = vmatpush.msra.mxu0 0.0
    %5862 = vmatpush.msra.mxu0 0.0
    %5863 = vmatpush.msra.mxu0 0.0
    %5864 = vmatpush.msra.mxu0 0.0
    %5865 = vmatpush.msra.mxu0 0.0
    %5866 = vmatpush.msra.mxu0 0.0
    %5867 = vmatpush.msra.mxu0 0.0
    %5868 = vmatpush.msra.mxu0 0.0
    %5869 = vmatpush.msra.mxu0 0.0
    %5870 = vmatpush.msra.mxu0 %v5854
    %5871 = vmatpush.msra.mxu0 %v5853
    %5872 = vmatpush.msra.mxu0 %v5852
    %5873 = vmatpush.msra.mxu0 %v5851
    %5874 = vmatmul.f32.gmra.mxu0 %v5856
    %v5875 = vpop.f32.mrf.mxu0
    %v5876 = vadd.f32 0.0, %v5875
    %5877 = vdwg.mxu0
    %v5878 = vmul.f32 %v5876, 0.125
    %v5879 = vld [vmem:[%s6] sm:$0x1]
    %v5881 = vperm.slane %v5879, 0
    %v5883 = vadd.f32 %v5878, %v5881
    %5884 = vst.msk [vmem:[#allocation11] sm:$0xff] %vm129, %v5883
    // Predicated region
    $region50: #{tpu_custom_call.1} parent=1 // pred_check
      _
    $region51: #{tpu_custom_call.1} parent=1 // pred_check_branch
      %5886 = sbr.rel (0) target = $region53
    $region52: #{tpu_custom_call.1} parent=1 // pred_region
      %5888 = vsyncadd [#allocation4], 0
      %s5890 = sshll.u32 [#allocation11], 4
      %s5891 = int_to_ptr.vmem [resolvable:$true] %s5890
      %s5892 = sshll.u32 %s7, 4
      %s5893 = int_to_ptr.hbm [resolvable:$true] %s5892
      %5895 = dma.vmem_to_hbm [thread:$0]  %s5891, 128, %s5893, [#allocation4]
    $region53: #{tpu_custom_call.1} parent=1 // pred_fallthru
      _
    // Predicated region
    $region54: #{tpu_custom_call.1} parent=1 // pred_check
      _
    $region55: #{tpu_custom_call.1} parent=1 // pred_check_branch
      %5897 = sbr.rel (0) target = $region57
    $region56: #{tpu_custom_call.1} parent=1 // pred_region
      %5899 = dma.done [#allocation4], 128
    $region57: #{tpu_custom_call.1} parent=1 // pred_fallthru
      _
    %5900 = vsyncpa [#allocation3], 1
    %5901 = vsyncpa [#allocation6], 1
    %5902 = vsyncpa [#allocation9], 1
    %5903 = vsyncpa [#allocation4], 1

</llo_original>
